<compile_context>
chip_gen: v6e
topology: v6e:2x2x1
jax: 0.10.0
libtpu: 0.0.40
codegen_flags: <defaults>
</compile_context>

<pallas_src>
import functools
import math

import jax
import jax.numpy as jnp
from jax.experimental import pallas as pl
from jax.experimental.pallas import tpu as pltpu


# ----------------------------- in-kernel helpers ----------------------------

def _ln(x, g, b, eps):
    """LayerNorm over the last dim. x:[M,D], g,b:[1,D] (all f32)."""
    mu = jnp.mean(x, axis=-1, keepdims=True)
    var = jnp.mean((x - mu) ** 2, axis=-1, keepdims=True)
    return (x - mu) * jax.lax.rsqrt(var + eps) * g + b


def _softmax_rows(s):
    """Row softmax; reciprocal on the EUP slot instead of a VALU divide."""
    s = s - jnp.max(s, axis=-1, keepdims=True)
    p = jnp.exp(s)
    return p * pl.reciprocal(jnp.sum(p, axis=-1, keepdims=True), approx=True)


# ----------------------- fused encoder-layer kernel --------------------------

def _encoder_kernel(x_ref, pos_ref,
                    bbw_ref, bbb_ref, pjw_ref, pjb_ref,
                    wqk_ref, bqk_ref, wv_ref, bv_ref, wo_ref, bo_ref,
                    lng_ref, lnb_ref,
                    w1_ref, b1_ref, w2_ref, b2_ref,
                    mem_ref, *, scale, eps):
    x = x_ref[0].astype(jnp.float32)            # [L, C_in]
    pos = pos_ref[0].astype(jnp.float32)        # [L, D]
    lng = lng_ref[...]                          # [2, D]
    lnb = lnb_ref[...]
    D = pos.shape[-1]

    # backbone 1x1 conv + ReLU, then input_proj 1x1 conv (token-wise matmuls)
    feat = jnp.maximum(
        jnp.dot(x, bbw_ref[...], preferred_element_type=jnp.float32)
        + bbb_ref[...], 0.0)
    src = (jnp.dot(feat, pjw_ref[...], preferred_element_type=jnp.float32)
           + pjb_ref[...])

    # --- encoder self-attention (nhead=1): q = k = src + pos, v = src ---
    qk_in = src + pos
    qk = (jnp.dot(qk_in, wqk_ref[...], preferred_element_type=jnp.float32)
          + bqk_ref[...])                       # fused q/k proj -> [L, 2D]
    q = qk[:, :D]
    k = qk[:, D:]
    v = jnp.dot(src, wv_ref[...], preferred_element_type=jnp.float32) + bv_ref[...]

    s = jax.lax.dot_general(q, k, (((1,), (1,)), ((), ())),
                            preferred_element_type=jnp.float32) * scale  # [L, L]
    p = _softmax_rows(s)
    o = jnp.dot(p, v, preferred_element_type=jnp.float32)
    attn = jnp.dot(o, wo_ref[...], preferred_element_type=jnp.float32) + bo_ref[...]

    # residual + LN1
    h = _ln(src + attn, lng[0:1], lnb[0:1], eps)

    # FFN + residual + LN2
    ff = jnp.maximum(
        jnp.dot(h, w1_ref[...], preferred_element_type=jnp.float32) + b1_ref[...],
        0.0)
    ff = jnp.dot(ff, w2_ref[...], preferred_element_type=jnp.float32) + b2_ref[...]
    out = _ln(h + ff, lng[1:2], lnb[1:2], eps)

    mem_ref[0] = out.astype(mem_ref.dtype)


def encoder_forward(x_tok, pos, p, *, eps=1e-5):
    """x_tok: [B, HW, C_in], pos: [1, HW, D] -> memory [B, HW, D]."""
    B, L, C_in = x_tok.shape
    D = pos.shape[-1]
    NC = p["bb_w"].shape[1]
    F = p["w1"].shape[1]
    scale = 1.0 / math.sqrt(D)

    def wspec(shape):
        n = len(shape)
        return pl.BlockSpec(shape, lambda b, n=n: (0,) * n)

    return pl.pallas_call(
        functools.partial(_encoder_kernel, scale=scale, eps=eps),
        grid=(B,),
        in_specs=[
            pl.BlockSpec((1, L, C_in), lambda b: (b, 0, 0)),
            pl.BlockSpec((1, L, D), lambda b: (0, 0, 0)),
            wspec((C_in, NC)), wspec((1, NC)),
            wspec((NC, D)), wspec((1, D)),
            wspec((D, 2 * D)), wspec((1, 2 * D)),
            wspec((D, D)), wspec((1, D)),
            wspec((D, D)), wspec((1, D)),
            wspec((2, D)), wspec((2, D)),
            wspec((D, F)), wspec((1, F)),
            wspec((F, D)), wspec((1, D)),
        ],
        out_specs=pl.BlockSpec((1, L, D), lambda b: (b, 0, 0)),
        out_shape=jax.ShapeDtypeStruct((B, L, D), jnp.float32),
        compiler_params=pltpu.CompilerParams(dimension_semantics=("parallel",)),
    )(x_tok, pos,
      p["bb_w"], p["bb_b"], p["pj_w"], p["pj_b"],
      p["wqk"], p["bqk"], p["wv"], p["bv"], p["wo"], p["bo"],
      p["ln_g"], p["ln_b"],
      p["w1"], p["b1"], p["w2"], p["b2"])


# ------------------ fused decoder-layer + mlp_head kernel --------------------

def _decoder_kernel(mem_ref, pos_ref, qe_ref,
                    swv_ref, sbv_ref, swo_ref, sbo_ref,
                    cwq_ref, cbq_ref, cwk_ref, cbk_ref, cwv_ref, cbv_ref,
                    cwo_ref, cbo_ref,
                    lng_ref, lnb_ref,
                    w1_ref, b1_ref, w2_ref, b2_ref,
                    hw_ref, hb_ref,
                    logits_ref, *, scale, eps):
    memory = mem_ref[0].astype(jnp.float32)     # [L, D]
    pos = pos_ref[0].astype(jnp.float32)        # [L, D]
    qp = qe_ref[...]                            # [1, D]  query_embed
    lng = lng_ref[...]                          # [5, D]  ln1,ln2,ln3,final,head
    lnb = lnb_ref[...]

    # --- decoder self-attention, num_queries == 1 ----------------------------
    # tgt starts as zeros (DETR). With one query attending to one key,
    # softmax([[s]]) == [[1.0]] exactly, so the output equals the value
    # projection and the q/k projections drop out algebraically.
    tgt = jnp.zeros_like(qp)                    # [1, D]
    v_self = (jnp.dot(tgt, swv_ref[...], preferred_element_type=jnp.float32)
              + sbv_ref[...])
    attn = (jnp.dot(v_self, swo_ref[...], preferred_element_type=jnp.float32)
            + sbo_ref[...])
    tgt = _ln(tgt + attn, lng[0:1], lnb[0:1], eps)

    # --- cross-attention: q = tgt + query_pos, k = memory + pos, v = memory --
    qc = (jnp.dot(tgt + qp, cwq_ref[...], preferred_element_type=jnp.float32)
          + cbq_ref[...])                                            # [1, D]
    kc = (jnp.dot(memory + pos, cwk_ref[...], preferred_element_type=jnp.float32)
          + cbk_ref[...])                                            # [L, D]
    vc = (jnp.dot(memory, cwv_ref[...], preferred_element_type=jnp.float32)
          + cbv_ref[...])                                            # [L, D]
    s = jax.lax.dot_general(qc, kc, (((1,), (1,)), ((), ())),
                            preferred_element_type=jnp.float32) * scale  # [1, L]
    p = _softmax_rows(s)
    o = jnp.dot(p, vc, preferred_element_type=jnp.float32)           # [1, D]
    attn = (jnp.dot(o, cwo_ref[...], preferred_element_type=jnp.float32)
            + cbo_ref[...])
    tgt = _ln(tgt + attn, lng[1:2], lnb[1:2], eps)

    # --- FFN + LN3 ------------------------------------------------------------
    ff = jnp.maximum(
        jnp.dot(tgt, w1_ref[...], preferred_element_type=jnp.float32) + b1_ref[...],
        0.0)
    ff = jnp.dot(ff, w2_ref[...], preferred_element_type=jnp.float32) + b2_ref[...]
    tgt = _ln(tgt + ff, lng[2:3], lnb[2:3], eps)

    # --- decoder final norm + mlp_head (LayerNorm -> Linear) ------------------
    hs = _ln(tgt, lng[3:4], lnb[3:4], eps)
    h2 = _ln(hs, lng[4:5], lnb[4:5], eps)
    logits = (jnp.dot(h2, hw_ref[...], preferred_element_type=jnp.float32)
              + hb_ref[...])                                         # [1, C]
    logits_ref[0] = logits.astype(logits_ref.dtype)


def decoder_forward(memory, pos, p, *, eps=1e-5):
    """memory: [B, HW, D], pos: [1, HW, D] -> logits [B, 1, num_classes]."""
    B, L, D = memory.shape
    F = p["w1"].shape[1]
    C = p["head_w"].shape[1]
    scale = 1.0 / math.sqrt(D)

    def wspec(shape):
        n = len(shape)
        return pl.BlockSpec(shape, lambda b, n=n: (0,) * n)

    return pl.pallas_call(
        functools.partial(_decoder_kernel, scale=scale, eps=eps),
        grid=(B,),
        in_specs=[
            pl.BlockSpec((1, L, D), lambda b: (b, 0, 0)),
            pl.BlockSpec((1, L, D), lambda b: (0, 0, 0)),
            wspec((1, D)),
            wspec((D, D)), wspec((1, D)), wspec((D, D)), wspec((1, D)),
            wspec((D, D)), wspec((1, D)), wspec((D, D)), wspec((1, D)),
            wspec((D, D)), wspec((1, D)), wspec((D, D)), wspec((1, D)),
            wspec((5, D)), wspec((5, D)),
            wspec((D, F)), wspec((1, F)), wspec((F, D)), wspec((1, D)),
            wspec((D, C)), wspec((1, C)),
        ],
        out_specs=pl.BlockSpec((1, 1, C), lambda b: (b, 0, 0)),
        out_shape=jax.ShapeDtypeStruct((B, 1, C), jnp.float32),
        compiler_params=pltpu.CompilerParams(dimension_semantics=("parallel",)),
    )(memory, pos, p["query_embed"],
      p["self_wv"], p["self_bv"], p["self_wo"], p["self_bo"],
      p["cross_wq"], p["cross_bq"], p["cross_wk"], p["cross_bk"],
      p["cross_wv"], p["cross_bv"], p["cross_wo"], p["cross_bo"],
      p["ln_g"], p["ln_b"],
      p["w1"], p["b1"], p["w2"], p["b2"],
      p["head_w"], p["head_b"])


# ----------------------------- positional embedding --------------------------

def sine_pos_embed(H, W, D):
    """DETR-style sinusoidal positional embedding, flattened to [1, H*W, D].

    Constant for fixed (H, W, D): compute once and reuse across forwards.
    """
    num_pos_feats = D // 2
    temperature = 10000.0
    scale = 2.0 * math.pi
    y_embed = (jnp.arange(1, H + 1, dtype=jnp.float32)[:, None]
               * jnp.ones((1, W), jnp.float32)) / H * scale
    x_embed = (jnp.arange(1, W + 1, dtype=jnp.float32)[None, :]
               * jnp.ones((H, 1), jnp.float32)) / W * scale
    dim_t = jnp.arange(num_pos_feats, dtype=jnp.float32)
    dim_t = temperature ** (2.0 * (dim_t // 2) / num_pos_feats)
    pos_x = x_embed[:, :, None] / dim_t
    pos_y = y_embed[:, :, None] / dim_t
    pos_x = jnp.stack([jnp.sin(pos_x[:, :, 0::2]),
                       jnp.cos(pos_x[:, :, 1::2])], axis=3).reshape(H, W, -1)
    pos_y = jnp.stack([jnp.sin(pos_y[:, :, 0::2]),
                       jnp.cos(pos_y[:, :, 1::2])], axis=3).reshape(H, W, -1)
    pos = jnp.concatenate([pos_y, pos_x], axis=-1)            # [H, W, D]
    return pos.reshape(1, H * W, D)


# ----------------------------- parameter init --------------------------------

def init_params(key, c_in=4, backbone_channels=8, hidden_dim=32,
                num_classes=10, dim_ff=64):
    keys = iter(jax.random.split(key, 64))

    def w(shape, scale=0.05):
        return jax.random.normal(next(keys), shape, jnp.float32) * scale

    def zeros(*s):
        return jnp.zeros(s, jnp.float32)

    D, F = hidden_dim, dim_ff
    enc = dict(
        bb_w=w((c_in, backbone_channels)), bb_b=zeros(1, backbone_channels),
        pj_w=w((backbone_channels, D)), pj_b=zeros(1, D),
        # fused q/k projection [D, 2D]: both are applied to (src + pos)
        wqk=w((D, 2 * D)), bqk=zeros(1, 2 * D),
        wv=w((D, D)), bv=zeros(1, D),
        wo=w((D, D)), bo=zeros(1, D),
        ln_g=jnp.ones((2, D), jnp.float32), ln_b=zeros(2, D),   # ln1, ln2
        w1=w((D, F)), b1=zeros(1, F),
        w2=w((F, D)), b2=zeros(1, D),
    )
    dec = dict(
        query_embed=w((1, D), scale=1.0),          # nn.Embedding(1, hidden_dim)
        # decoder self-attention: with num_queries == 1 only the value/output
        # projections influence the result (softmax over one key is exactly 1)
        self_wv=w((D, D)), self_bv=zeros(1, D),
        self_wo=w((D, D)), self_bo=zeros(1, D),
        cross_wq=w((D, D)), cross_bq=zeros(1, D),
        cross_wk=w((D, D)), cross_bk=zeros(1, D),
        cross_wv=w((D, D)), cross_bv=zeros(1, D),
        cross_wo=w((D, D)), cross_bo=zeros(1, D),
        # packed LayerNorms: [ln1, ln2, ln3, decoder final norm, mlp_head LN]
        ln_g=jnp.ones((5, D), jnp.float32), ln_b=zeros(5, D),
        w1=w((D, F)), b1=zeros(1, F),
        w2=w((F, D)), b2=zeros(1, D),
        head_w=w((D, num_classes)), head_b=zeros(1, num_classes),
    )
    return dict(enc=enc, dec=dec)


# ----------------------------- forward pass -----------------------------------

@jax.jit
def delicacynet_forward(params, x, pos_seq):
    """x: [B, C_in, H, W] (NCHW), pos_seq: [1, H*W, D]."""
    B, C_in, H, W = x.shape

    # NCHW -> [B, HW, C_in] token layout (channels on the lane axis); the
    # padding mask from nested_tensor_from_tensor_list is all-False, so the
    # key_padding_mask is a no-op and is omitted.
    x_tok = x.transpose(0, 2, 3, 1).reshape(B, H * W, C_in)

    # fused kernel 1: backbone + input_proj + encoder layer -> memory
    memory = encoder_forward(x_tok, pos_seq, params["enc"])       # [B, HW, D]

    # fused kernel 2: decoder layer + final norm + mlp_head LN/Linear
    logits = decoder_forward(memory, pos_seq, params["dec"])      # [B, 1, C]

    # hs has shape [num_dec_layers=1, B, Q=1, D]; nn.Softmax() with no dim on
    # the resulting 4-D logits uses the legacy default dim=1 (batch axis).
    # It is a 20-element tensor, so it is computed in plain JAX (no kernel).
    num_classes = logits.shape[-1]
    logits4 = logits.reshape(1, B, 1, num_classes)                # [L, B, Q, C]
    probs = jax.nn.softmax(logits4, axis=1)
    return {"pred_logits": probs[-1]}                             # [B, Q, C]


# --------------------------------- main ----------------------------------------

if __name__ == "__main__":
    B, C_in, H, W = 2, 4, 16, 16
    params = init_params(jax.random.PRNGKey(42))
    D = params["dec"]["query_embed"].shape[-1]
    num_classes = params["dec"]["head_w"].shape[-1]

    x = jax.random.normal(jax.random.PRNGKey(0), (B, C_in, H, W), jnp.float32)
    pos_seq = sine_pos_embed(H, W, D)          # constant; computed once, reused

    out = delicacynet_forward(params, x, pos_seq)
    jax.block_until_ready(out["pred_logits"])
    assert out["pred_logits"].shape == (B, 1, num_classes)
    print("KERNEL_OK")
</pallas_src>

<mosaic_0001>
module attributes {stable_mosaic.version = 11 : i64} {
  func.func @_encoder_kernel(%arg0: i32, %arg1: memref<1x256x4xf32, #tpu.memory_space<vmem>>, %arg2: memref<1x256x32xf32, #tpu.memory_space<vmem>>, %arg3: memref<4x8xf32, #tpu.memory_space<vmem>>, %arg4: memref<1x8xf32, #tpu.memory_space<vmem>>, %arg5: memref<8x32xf32, #tpu.memory_space<vmem>>, %arg6: memref<1x32xf32, #tpu.memory_space<vmem>>, %arg7: memref<32x64xf32, #tpu.memory_space<vmem>>, %arg8: memref<1x64xf32, #tpu.memory_space<vmem>>, %arg9: memref<32x32xf32, #tpu.memory_space<vmem>>, %arg10: memref<1x32xf32, #tpu.memory_space<vmem>>, %arg11: memref<32x32xf32, #tpu.memory_space<vmem>>, %arg12: memref<1x32xf32, #tpu.memory_space<vmem>>, %arg13: memref<2x32xf32, #tpu.memory_space<vmem>>, %arg14: memref<2x32xf32, #tpu.memory_space<vmem>>, %arg15: memref<32x64xf32, #tpu.memory_space<vmem>>, %arg16: memref<1x64xf32, #tpu.memory_space<vmem>>, %arg17: memref<64x32xf32, #tpu.memory_space<vmem>>, %arg18: memref<1x32xf32, #tpu.memory_space<vmem>>, %arg19: memref<1x256x32xf32, #tpu.memory_space<vmem>>) attributes {dimension_semantics = [#tpu.dimension_semantics<parallel>], iteration_bounds = array<i64: 2>, scalar_prefetch = 0 : i64, scratch_operands = 0 : i64, tpu.core_type = #tpu.core_type<tc>, window_params = [{transform_indices = @transform_0, window_bounds = array<i64: 1, 256, 4>}, {pipeline_mode = #tpu.pipeline_mode<synchronous>, transform_indices = @transform_1, window_bounds = array<i64: 1, 256, 32>}, {pipeline_mode = #tpu.pipeline_mode<synchronous>, transform_indices = @transform_2, window_bounds = array<i64: 4, 8>}, {pipeline_mode = #tpu.pipeline_mode<synchronous>, transform_indices = @transform_3, window_bounds = array<i64: 1, 8>}, {pipeline_mode = #tpu.pipeline_mode<synchronous>, transform_indices = @transform_4, window_bounds = array<i64: 8, 32>}, {pipeline_mode = #tpu.pipeline_mode<synchronous>, transform_indices = @transform_5, window_bounds = array<i64: 1, 32>}, {pipeline_mode = #tpu.pipeline_mode<synchronous>, transform_indices = @transform_6, window_bounds = array<i64: 32, 64>}, {pipeline_mode = #tpu.pipeline_mode<synchronous>, transform_indices = @transform_7, window_bounds = array<i64: 1, 64>}, {pipeline_mode = #tpu.pipeline_mode<synchronous>, transform_indices = @transform_8, window_bounds = array<i64: 32, 32>}, {pipeline_mode = #tpu.pipeline_mode<synchronous>, transform_indices = @transform_9, window_bounds = array<i64: 1, 32>}, {pipeline_mode = #tpu.pipeline_mode<synchronous>, transform_indices = @transform_10, window_bounds = array<i64: 32, 32>}, {pipeline_mode = #tpu.pipeline_mode<synchronous>, transform_indices = @transform_11, window_bounds = array<i64: 1, 32>}, {pipeline_mode = #tpu.pipeline_mode<synchronous>, transform_indices = @transform_12, window_bounds = array<i64: 2, 32>}, {pipeline_mode = #tpu.pipeline_mode<synchronous>, transform_indices = @transform_13, window_bounds = array<i64: 2, 32>}, {pipeline_mode = #tpu.pipeline_mode<synchronous>, transform_indices = @transform_14, window_bounds = array<i64: 32, 64>}, {pipeline_mode = #tpu.pipeline_mode<synchronous>, transform_indices = @transform_15, window_bounds = array<i64: 1, 64>}, {pipeline_mode = #tpu.pipeline_mode<synchronous>, transform_indices = @transform_16, window_bounds = array<i64: 64, 32>}, {pipeline_mode = #tpu.pipeline_mode<synchronous>, transform_indices = @transform_17, window_bounds = array<i64: 1, 32>}, {transform_indices = @transform_18, window_bounds = array<i64: 1, 256, 32>}]} {
    %c0 = arith.constant 0 : index
    %c0_0 = arith.constant 0 : index
    %c0_1 = arith.constant 0 : index
    %0 = vector.load %arg1[%c0, %c0_0, %c0_1] : memref<1x256x4xf32, #tpu.memory_space<vmem>>, vector<1x256x4xf32>
    %1 = vector.shape_cast %0 : vector<1x256x4xf32> to vector<256x4xf32>
    %c0_2 = arith.constant 0 : index
    %c0_3 = arith.constant 0 : index
    %c0_4 = arith.constant 0 : index
    %2 = vector.load %arg2[%c0_2, %c0_3, %c0_4] : memref<1x256x32xf32, #tpu.memory_space<vmem>>, vector<1x256x32xf32>
    %3 = vector.shape_cast %2 : vector<1x256x32xf32> to vector<256x32xf32>
    %c0_5 = arith.constant 0 : index
    %c0_6 = arith.constant 0 : index
    %4 = vector.load %arg13[%c0_5, %c0_6] : memref<2x32xf32, #tpu.memory_space<vmem>>, vector<2x32xf32>
    %c0_7 = arith.constant 0 : index
    %c0_8 = arith.constant 0 : index
    %5 = vector.load %arg14[%c0_7, %c0_8] : memref<2x32xf32, #tpu.memory_space<vmem>>, vector<2x32xf32>
    %c0_9 = arith.constant 0 : index
    %c0_10 = arith.constant 0 : index
    %6 = vector.load %arg3[%c0_9, %c0_10] : memref<4x8xf32, #tpu.memory_space<vmem>>, vector<4x8xf32>
    %cst = arith.constant dense<0.000000e+00> : vector<256x8xf32>
    %7 = tpu.matmul %1, %6, %cst {dimension_numbers = #tpu.dot_dimension_numbers<[1], [0], [0], [1], [0, 0, 1, 1], [], []>} : vector<256x4xf32>, vector<4x8xf32>, vector<256x8xf32> -> vector<256x8xf32>
    %c0_11 = arith.constant 0 : index
    %c0_12 = arith.constant 0 : index
    %8 = vector.load %arg4[%c0_11, %c0_12] : memref<1x8xf32, #tpu.memory_space<vmem>>, vector<1x8xf32>
    %9 = vector.broadcast %8 : vector<1x8xf32> to vector<256x8xf32>
    %10 = arith.addf %7, %9 : vector<256x8xf32>
    %cst_13 = arith.constant 0.000000e+00 : f32
    %11 = vector.broadcast %cst_13 : f32 to vector<256x8xf32>
    %12 = arith.maximumf %10, %11 : vector<256x8xf32>
    %c0_14 = arith.constant 0 : index
    %c0_15 = arith.constant 0 : index
    %13 = vector.load %arg5[%c0_14, %c0_15] : memref<8x32xf32, #tpu.memory_space<vmem>>, vector<8x32xf32>
    %cst_16 = arith.constant dense<0.000000e+00> : vector<256x32xf32>
    %14 = tpu.matmul %12, %13, %cst_16 {dimension_numbers = #tpu.dot_dimension_numbers<[1], [0], [0], [1], [0, 0, 1, 1], [], []>} : vector<256x8xf32>, vector<8x32xf32>, vector<256x32xf32> -> vector<256x32xf32>
    %c0_17 = arith.constant 0 : index
    %c0_18 = arith.constant 0 : index
    %15 = vector.load %arg6[%c0_17, %c0_18] : memref<1x32xf32, #tpu.memory_space<vmem>>, vector<1x32xf32>
    %16 = vector.broadcast %15 : vector<1x32xf32> to vector<256x32xf32>
    %17 = arith.addf %14, %16 : vector<256x32xf32>
    %18 = arith.addf %17, %3 : vector<256x32xf32>
    %c0_19 = arith.constant 0 : index
    %c0_20 = arith.constant 0 : index
    %19 = vector.load %arg7[%c0_19, %c0_20] : memref<32x64xf32, #tpu.memory_space<vmem>>, vector<32x64xf32>
    %cst_21 = arith.constant dense<0.000000e+00> : vector<256x64xf32>
    %20 = tpu.matmul %18, %19, %cst_21 {dimension_numbers = #tpu.dot_dimension_numbers<[1], [0], [0], [1], [0, 0, 1, 1], [], []>} : vector<256x32xf32>, vector<32x64xf32>, vector<256x64xf32> -> vector<256x64xf32>
    %c0_22 = arith.constant 0 : index
    %c0_23 = arith.constant 0 : index
    %21 = vector.load %arg8[%c0_22, %c0_23] : memref<1x64xf32, #tpu.memory_space<vmem>>, vector<1x64xf32>
    %22 = vector.broadcast %21 : vector<1x64xf32> to vector<256x64xf32>
    %23 = arith.addf %20, %22 : vector<256x64xf32>
    %24 = vector.extract_strided_slice %23 {offsets = [0, 0], sizes = [256, 32], strides = [1, 1]} : vector<256x64xf32> to vector<256x32xf32>
    %25 = vector.extract_strided_slice %23 {offsets = [0, 32], sizes = [256, 32], strides = [1, 1]} : vector<256x64xf32> to vector<256x32xf32>
    %c0_24 = arith.constant 0 : index
    %c0_25 = arith.constant 0 : index
    %26 = vector.load %arg9[%c0_24, %c0_25] : memref<32x32xf32, #tpu.memory_space<vmem>>, vector<32x32xf32>
    %cst_26 = arith.constant dense<0.000000e+00> : vector<256x32xf32>
    %27 = tpu.matmul %17, %26, %cst_26 {dimension_numbers = #tpu.dot_dimension_numbers<[1], [0], [0], [1], [0, 0, 1, 1], [], []>} : vector<256x32xf32>, vector<32x32xf32>, vector<256x32xf32> -> vector<256x32xf32>
    %c0_27 = arith.constant 0 : index
    %c0_28 = arith.constant 0 : index
    %28 = vector.load %arg10[%c0_27, %c0_28] : memref<1x32xf32, #tpu.memory_space<vmem>>, vector<1x32xf32>
    %29 = vector.broadcast %28 : vector<1x32xf32> to vector<256x32xf32>
    %30 = arith.addf %27, %29 : vector<256x32xf32>
    %cst_29 = arith.constant dense<0.000000e+00> : vector<256x256xf32>
    %31 = tpu.matmul %24, %25, %cst_29 {dimension_numbers = #tpu.dot_dimension_numbers<[1], [1], [0], [0], [0, 0, 1, 0], [], []>} : vector<256x32xf32>, vector<256x32xf32>, vector<256x256xf32> -> vector<256x256xf32>
    %cst_30 = arith.constant 0.176776692 : f32
    %32 = vector.broadcast %cst_30 : f32 to vector<256x256xf32>
    %33 = arith.mulf %31, %32 : vector<256x256xf32>
    %cst_31 = arith.constant dense<0xFF800000> : vector<256xf32>
    %34 = vector.multi_reduction <maximumf>, %33, %cst_31 [1] : vector<256x256xf32> to vector<256xf32>
    %35 = vector.shape_cast %34 : vector<256xf32> to vector<256x1xf32>
    %36 = vector.broadcast %35 : vector<256x1xf32> to vector<256x256xf32>
    %37 = arith.subf %33, %36 : vector<256x256xf32>
    %38 = math.exp %37 : vector<256x256xf32>
    %cst_32 = arith.constant dense<0.000000e+00> : vector<256xf32>
    %39 = vector.multi_reduction <add>, %38, %cst_32 [1] : vector<256x256xf32> to vector<256xf32>
    %40 = vector.shape_cast %39 : vector<256xf32> to vector<256x1xf32>
    %41 = tpu.reciprocal %40 {approx = true} : vector<256x1xf32> -> vector<256x1xf32>
    %42 = vector.broadcast %41 : vector<256x1xf32> to vector<256x256xf32>
    %43 = arith.mulf %38, %42 : vector<256x256xf32>
    %cst_33 = arith.constant dense<0.000000e+00> : vector<256x32xf32>
    %44 = tpu.matmul %43, %30, %cst_33 {dimension_numbers = #tpu.dot_dimension_numbers<[1], [0], [0], [1], [0, 0, 1, 1], [], []>} : vector<256x256xf32>, vector<256x32xf32>, vector<256x32xf32> -> vector<256x32xf32>
    %c0_34 = arith.constant 0 : index
    %c0_35 = arith.constant 0 : index
    %45 = vector.load %arg11[%c0_34, %c0_35] : memref<32x32xf32, #tpu.memory_space<vmem>>, vector<32x32xf32>
    %cst_36 = arith.constant dense<0.000000e+00> : vector<256x32xf32>
    %46 = tpu.matmul %44, %45, %cst_36 {dimension_numbers = #tpu.dot_dimension_numbers<[1], [0], [0], [1], [0, 0, 1, 1], [], []>} : vector<256x32xf32>, vector<32x32xf32>, vector<256x32xf32> -> vector<256x32xf32>
    %c0_37 = arith.constant 0 : index
    %c0_38 = arith.constant 0 : index
    %47 = vector.load %arg12[%c0_37, %c0_38] : memref<1x32xf32, #tpu.memory_space<vmem>>, vector<1x32xf32>
    %48 = vector.broadcast %47 : vector<1x32xf32> to vector<256x32xf32>
    %49 = arith.addf %46, %48 : vector<256x32xf32>
    %50 = arith.addf %17, %49 : vector<256x32xf32>
    %51 = vector.extract_strided_slice %4 {offsets = [0, 0], sizes = [1, 32], strides = [1, 1]} : vector<2x32xf32> to vector<1x32xf32>
    %52 = vector.extract_strided_slice %5 {offsets = [0, 0], sizes = [1, 32], strides = [1, 1]} : vector<2x32xf32> to vector<1x32xf32>
    %cst_39 = arith.constant dense<0.000000e+00> : vector<256xf32>
    %53 = vector.multi_reduction <add>, %50, %cst_39 [1] : vector<256x32xf32> to vector<256xf32>
    %54 = vector.shape_cast %53 : vector<256xf32> to vector<256x1xf32>
    %cst_40 = arith.constant 3.200000e+01 : f32
    %55 = vector.broadcast %cst_40 : f32 to vector<256x1xf32>
    %56 = arith.divf %54, %55 : vector<256x1xf32>
    %57 = vector.broadcast %56 : vector<256x1xf32> to vector<256x32xf32>
    %58 = arith.subf %50, %57 : vector<256x32xf32>
    %59 = arith.mulf %58, %58 : vector<256x32xf32>
    %cst_41 = arith.constant dense<0.000000e+00> : vector<256xf32>
    %60 = vector.multi_reduction <add>, %59, %cst_41 [1] : vector<256x32xf32> to vector<256xf32>
    %61 = vector.shape_cast %60 : vector<256xf32> to vector<256x1xf32>
    %cst_42 = arith.constant 3.200000e+01 : f32
    %62 = vector.broadcast %cst_42 : f32 to vector<256x1xf32>
    %63 = arith.divf %61, %62 : vector<256x1xf32>
    %64 = vector.broadcast %56 : vector<256x1xf32> to vector<256x32xf32>
    %65 = arith.subf %50, %64 : vector<256x32xf32>
    %cst_43 = arith.constant 9.99999974E-6 : f32
    %66 = vector.broadcast %cst_43 : f32 to vector<256x1xf32>
    %67 = arith.addf %63, %66 : vector<256x1xf32>
    %68 = math.rsqrt %67 : vector<256x1xf32>
    %69 = vector.broadcast %68 : vector<256x1xf32> to vector<256x32xf32>
    %70 = arith.mulf %65, %69 : vector<256x32xf32>
    %71 = vector.broadcast %51 : vector<1x32xf32> to vector<256x32xf32>
    %72 = arith.mulf %70, %71 : vector<256x32xf32>
    %73 = vector.broadcast %52 : vector<1x32xf32> to vector<256x32xf32>
    %74 = arith.addf %72, %73 : vector<256x32xf32>
    %c0_44 = arith.constant 0 : index
    %c0_45 = arith.constant 0 : index
    %75 = vector.load %arg15[%c0_44, %c0_45] : memref<32x64xf32, #tpu.memory_space<vmem>>, vector<32x64xf32>
    %cst_46 = arith.constant dense<0.000000e+00> : vector<256x64xf32>
    %76 = tpu.matmul %74, %75, %cst_46 {dimension_numbers = #tpu.dot_dimension_numbers<[1], [0], [0], [1], [0, 0, 1, 1], [], []>} : vector<256x32xf32>, vector<32x64xf32>, vector<256x64xf32> -> vector<256x64xf32>
    %c0_47 = arith.constant 0 : index
    %c0_48 = arith.constant 0 : index
    %77 = vector.load %arg16[%c0_47, %c0_48] : memref<1x64xf32, #tpu.memory_space<vmem>>, vector<1x64xf32>
    %78 = vector.broadcast %77 : vector<1x64xf32> to vector<256x64xf32>
    %79 = arith.addf %76, %78 : vector<256x64xf32>
    %cst_49 = arith.constant 0.000000e+00 : f32
    %80 = vector.broadcast %cst_49 : f32 to vector<256x64xf32>
    %81 = arith.maximumf %79, %80 : vector<256x64xf32>
    %c0_50 = arith.constant 0 : index
    %c0_51 = arith.constant 0 : index
    %82 = vector.load %arg17[%c0_50, %c0_51] : memref<64x32xf32, #tpu.memory_space<vmem>>, vector<64x32xf32>
    %cst_52 = arith.constant dense<0.000000e+00> : vector<256x32xf32>
    %83 = tpu.matmul %81, %82, %cst_52 {dimension_numbers = #tpu.dot_dimension_numbers<[1], [0], [0], [1], [0, 0, 1, 1], [], []>} : vector<256x64xf32>, vector<64x32xf32>, vector<256x32xf32> -> vector<256x32xf32>
    %c0_53 = arith.constant 0 : index
    %c0_54 = arith.constant 0 : index
    %84 = vector.load %arg18[%c0_53, %c0_54] : memref<1x32xf32, #tpu.memory_space<vmem>>, vector<1x32xf32>
    %85 = vector.broadcast %84 : vector<1x32xf32> to vector<256x32xf32>
    %86 = arith.addf %83, %85 : vector<256x32xf32>
    %87 = arith.addf %74, %86 : vector<256x32xf32>
    %88 = vector.extract_strided_slice %4 {offsets = [1, 0], sizes = [1, 32], strides = [1, 1]} : vector<2x32xf32> to vector<1x32xf32>
    %89 = vector.extract_strided_slice %5 {offsets = [1, 0], sizes = [1, 32], strides = [1, 1]} : vector<2x32xf32> to vector<1x32xf32>
    %cst_55 = arith.constant dense<0.000000e+00> : vector<256xf32>
    %90 = vector.multi_reduction <add>, %87, %cst_55 [1] : vector<256x32xf32> to vector<256xf32>
    %91 = vector.shape_cast %90 : vector<256xf32> to vector<256x1xf32>
    %cst_56 = arith.constant 3.200000e+01 : f32
    %92 = vector.broadcast %cst_56 : f32 to vector<256x1xf32>
    %93 = arith.divf %91, %92 : vector<256x1xf32>
    %94 = vector.broadcast %93 : vector<256x1xf32> to vector<256x32xf32>
    %95 = arith.subf %87, %94 : vector<256x32xf32>
    %96 = arith.mulf %95, %95 : vector<256x32xf32>
    %cst_57 = arith.constant dense<0.000000e+00> : vector<256xf32>
    %97 = vector.multi_reduction <add>, %96, %cst_57 [1] : vector<256x32xf32> to vector<256xf32>
    %98 = vector.shape_cast %97 : vector<256xf32> to vector<256x1xf32>
    %cst_58 = arith.constant 3.200000e+01 : f32
    %99 = vector.broadcast %cst_58 : f32 to vector<256x1xf32>
    %100 = arith.divf %98, %99 : vector<256x1xf32>
    %101 = vector.broadcast %93 : vector<256x1xf32> to vector<256x32xf32>
    %102 = arith.subf %87, %101 : vector<256x32xf32>
    %cst_59 = arith.constant 9.99999974E-6 : f32
    %103 = vector.broadcast %cst_59 : f32 to vector<256x1xf32>
    %104 = arith.addf %100, %103 : vector<256x1xf32>
    %105 = math.rsqrt %104 : vector<256x1xf32>
    %106 = vector.broadcast %105 : vector<256x1xf32> to vector<256x32xf32>
    %107 = arith.mulf %102, %106 : vector<256x32xf32>
    %108 = vector.broadcast %88 : vector<1x32xf32> to vector<256x32xf32>
    %109 = arith.mulf %107, %108 : vector<256x32xf32>
    %110 = vector.broadcast %89 : vector<1x32xf32> to vector<256x32xf32>
    %111 = arith.addf %109, %110 : vector<256x32xf32>
    %c0_60 = arith.constant 0 : index
    %c0_61 = arith.constant 0 : index
    %c0_62 = arith.constant 0 : index
    %112 = vector.load %arg19[%c0_60, %c0_61, %c0_62] : memref<1x256x32xf32, #tpu.memory_space<vmem>>, vector<1x256x32xf32>
    %113 = vector.shape_cast %112 : vector<1x256x32xf32> to vector<256x32xf32>
    %114 = vector.shape_cast %111 : vector<256x32xf32> to vector<1x256x32xf32>
    tpu.vector_store %arg19[%c0_60, %c0_61, %c0_62], %114 {strides = array<i32>} : memref<1x256x32xf32, #tpu.memory_space<vmem>>, vector<1x256x32xf32>,
    return
  }
  func.func @transform_0(%arg0: i32) -> (i32, i32, i32) {
    %c0_i32 = arith.constant 0 : i32
    %c0_i32_0 = arith.constant 0 : i32
    %c0_i32_1 = arith.constant 0 : i32
    return %arg0, %c0_i32, %c0_i32_0 : i32, i32, i32
  }
  func.func @transform_1(%arg0: i32) -> (i32, i32, i32) {
    %c0_i32 = arith.constant 0 : i32
    %c0_i32_0 = arith.constant 0 : i32
    %c0_i32_1 = arith.constant 0 : i32
    %c0_i32_2 = arith.constant 0 : i32
    return %c0_i32, %c0_i32_0, %c0_i32_1 : i32, i32, i32
  }
  func.func @transform_2(%arg0: i32) -> (i32, i32) {
    %c0_i32 = arith.constant 0 : i32
    %c0_i32_0 = arith.constant 0 : i32
    %c0_i32_1 = arith.constant 0 : i32
    return %c0_i32, %c0_i32_0 : i32, i32
  }
  func.func @transform_3(%arg0: i32) -> (i32, i32) {
    %c0_i32 = arith.constant 0 : i32
    %c0_i32_0 = arith.constant 0 : i32
    %c0_i32_1 = arith.constant 0 : i32
    return %c0_i32, %c0_i32_0 : i32, i32
  }
  func.func @transform_4(%arg0: i32) -> (i32, i32) {
    %c0_i32 = arith.constant 0 : i32
    %c0_i32_0 = arith.constant 0 : i32
    %c0_i32_1 = arith.constant 0 : i32
    return %c0_i32, %c0_i32_0 : i32, i32
  }
  func.func @transform_5(%arg0: i32) -> (i32, i32) {
    %c0_i32 = arith.constant 0 : i32
    %c0_i32_0 = arith.constant 0 : i32
    %c0_i32_1 = arith.constant 0 : i32
    return %c0_i32, %c0_i32_0 : i32, i32
  }
  func.func @transform_6(%arg0: i32) -> (i32, i32) {
    %c0_i32 = arith.constant 0 : i32
    %c0_i32_0 = arith.constant 0 : i32
    %c0_i32_1 = arith.constant 0 : i32
    return %c0_i32, %c0_i32_0 : i32, i32
  }
  func.func @transform_7(%arg0: i32) -> (i32, i32) {
    %c0_i32 = arith.constant 0 : i32
    %c0_i32_0 = arith.constant 0 : i32
    %c0_i32_1 = arith.constant 0 : i32
    return %c0_i32, %c0_i32_0 : i32, i32
  }
  func.func @transform_8(%arg0: i32) -> (i32, i32) {
    %c0_i32 = arith.constant 0 : i32
    %c0_i32_0 = arith.constant 0 : i32
    %c0_i32_1 = arith.constant 0 : i32
    return %c0_i32, %c0_i32_0 : i32, i32
  }
  func.func @transform_9(%arg0: i32) -> (i32, i32) {
    %c0_i32 = arith.constant 0 : i32
    %c0_i32_0 = arith.constant 0 : i32
    %c0_i32_1 = arith.constant 0 : i32
    return %c0_i32, %c0_i32_0 : i32, i32
  }
  func.func @transform_10(%arg0: i32) -> (i32, i32) {
    %c0_i32 = arith.constant 0 : i32
    %c0_i32_0 = arith.constant 0 : i32
    %c0_i32_1 = arith.constant 0 : i32
    return %c0_i32, %c0_i32_0 : i32, i32
  }
  func.func @transform_11(%arg0: i32) -> (i32, i32) {
    %c0_i32 = arith.constant 0 : i32
    %c0_i32_0 = arith.constant 0 : i32
    %c0_i32_1 = arith.constant 0 : i32
    return %c0_i32, %c0_i32_0 : i32, i32
  }
  func.func @transform_12(%arg0: i32) -> (i32, i32) {
    %c0_i32 = arith.constant 0 : i32
    %c0_i32_0 = arith.constant 0 : i32
    %c0_i32_1 = arith.constant 0 : i32
    return %c0_i32, %c0_i32_0 : i32, i32
  }
  func.func @transform_13(%arg0: i32) -> (i32, i32) {
    %c0_i32 = arith.constant 0 : i32
    %c0_i32_0 = arith.constant 0 : i32
    %c0_i32_1 = arith.constant 0 : i32
    return %c0_i32, %c0_i32_0 : i32, i32
  }
  func.func @transform_14(%arg0: i32) -> (i32, i32) {
    %c0_i32 = arith.constant 0 : i32
    %c0_i32_0 = arith.constant 0 : i32
    %c0_i32_1 = arith.constant 0 : i32
    return %c0_i32, %c0_i32_0 : i32, i32
  }
  func.func @transform_15(%arg0: i32) -> (i32, i32) {
    %c0_i32 = arith.constant 0 : i32
    %c0_i32_0 = arith.constant 0 : i32
    %c0_i32_1 = arith.constant 0 : i32
    return %c0_i32, %c0_i32_0 : i32, i32
  }
  func.func @transform_16(%arg0: i32) -> (i32, i32) {
    %c0_i32 = arith.constant 0 : i32
    %c0_i32_0 = arith.constant 0 : i32
    %c0_i32_1 = arith.constant 0 : i32
    return %c0_i32, %c0_i32_0 : i32, i32
  }
  func.func @transform_17(%arg0: i32) -> (i32, i32) {
    %c0_i32 = arith.constant 0 : i32
    %c0_i32_0 = arith.constant 0 : i32
    %c0_i32_1 = arith.constant 0 : i32
    return %c0_i32, %c0_i32_0 : i32, i32
  }
  func.func @transform_18(%arg0: i32) -> (i32, i32, i32) {
    %c0_i32 = arith.constant 0 : i32
    %c0_i32_0 = arith.constant 0 : i32
    %c0_i32_1 = arith.constant 0 : i32
    return %arg0, %c0_i32, %c0_i32_0 : i32, i32, i32
  }
}

module attributes {stable_mosaic.version = 11 : i64} {
  func.func @_decoder_kernel(%arg0: i32, %arg1: memref<1x256x32xf32, #tpu.memory_space<vmem>>, %arg2: memref<1x256x32xf32, #tpu.memory_space<vmem>>, %arg3: memref<1x32xf32, #tpu.memory_space<vmem>>, %arg4: memref<32x32xf32, #tpu.memory_space<vmem>>, %arg5: memref<1x32xf32, #tpu.memory_space<vmem>>, %arg6: memref<32x32xf32, #tpu.memory_space<vmem>>, %arg7: memref<1x32xf32, #tpu.memory_space<vmem>>, %arg8: memref<32x32xf32, #tpu.memory_space<vmem>>, %arg9: memref<1x32xf32, #tpu.memory_space<vmem>>, %arg10: memref<32x32xf32, #tpu.memory_space<vmem>>, %arg11: memref<1x32xf32, #tpu.memory_space<vmem>>, %arg12: memref<32x32xf32, #tpu.memory_space<vmem>>, %arg13: memref<1x32xf32, #tpu.memory_space<vmem>>, %arg14: memref<32x32xf32, #tpu.memory_space<vmem>>, %arg15: memref<1x32xf32, #tpu.memory_space<vmem>>, %arg16: memref<5x32xf32, #tpu.memory_space<vmem>>, %arg17: memref<5x32xf32, #tpu.memory_space<vmem>>, %arg18: memref<32x64xf32, #tpu.memory_space<vmem>>, %arg19: memref<1x64xf32, #tpu.memory_space<vmem>>, %arg20: memref<64x32xf32, #tpu.memory_space<vmem>>, %arg21: memref<1x32xf32, #tpu.memory_space<vmem>>, %arg22: memref<32x10xf32, #tpu.memory_space<vmem>>, %arg23: memref<1x10xf32, #tpu.memory_space<vmem>>, %arg24: memref<1x1x10xf32, #tpu.memory_space<vmem>>) attributes {dimension_semantics = [#tpu.dimension_semantics<parallel>], iteration_bounds = array<i64: 2>, scalar_prefetch = 0 : i64, scratch_operands = 0 : i64, tpu.core_type = #tpu.core_type<tc>, window_params = [{transform_indices = @transform_0, window_bounds = array<i64: 1, 256, 32>}, {pipeline_mode = #tpu.pipeline_mode<synchronous>, transform_indices = @transform_1, window_bounds = array<i64: 1, 256, 32>}, {pipeline_mode = #tpu.pipeline_mode<synchronous>, transform_indices = @transform_2, window_bounds = array<i64: 1, 32>}, {pipeline_mode = #tpu.pipeline_mode<synchronous>, transform_indices = @transform_3, window_bounds = array<i64: 32, 32>}, {pipeline_mode = #tpu.pipeline_mode<synchronous>, transform_indices = @transform_4, window_bounds = array<i64: 1, 32>}, {pipeline_mode = #tpu.pipeline_mode<synchronous>, transform_indices = @transform_5, window_bounds = array<i64: 32, 32>}, {pipeline_mode = #tpu.pipeline_mode<synchronous>, transform_indices = @transform_6, window_bounds = array<i64: 1, 32>}, {pipeline_mode = #tpu.pipeline_mode<synchronous>, transform_indices = @transform_7, window_bounds = array<i64: 32, 32>}, {pipeline_mode = #tpu.pipeline_mode<synchronous>, transform_indices = @transform_8, window_bounds = array<i64: 1, 32>}, {pipeline_mode = #tpu.pipeline_mode<synchronous>, transform_indices = @transform_9, window_bounds = array<i64: 32, 32>}, {pipeline_mode = #tpu.pipeline_mode<synchronous>, transform_indices = @transform_10, window_bounds = array<i64: 1, 32>}, {pipeline_mode = #tpu.pipeline_mode<synchronous>, transform_indices = @transform_11, window_bounds = array<i64: 32, 32>}, {pipeline_mode = #tpu.pipeline_mode<synchronous>, transform_indices = @transform_12, window_bounds = array<i64: 1, 32>}, {pipeline_mode = #tpu.pipeline_mode<synchronous>, transform_indices = @transform_13, window_bounds = array<i64: 32, 32>}, {pipeline_mode = #tpu.pipeline_mode<synchronous>, transform_indices = @transform_14, window_bounds = array<i64: 1, 32>}, {pipeline_mode = #tpu.pipeline_mode<synchronous>, transform_indices = @transform_15, window_bounds = array<i64: 5, 32>}, {pipeline_mode = #tpu.pipeline_mode<synchronous>, transform_indices = @transform_16, window_bounds = array<i64: 5, 32>}, {pipeline_mode = #tpu.pipeline_mode<synchronous>, transform_indices = @transform_17, window_bounds = array<i64: 32, 64>}, {pipeline_mode = #tpu.pipeline_mode<synchronous>, transform_indices = @transform_18, window_bounds = array<i64: 1, 64>}, {pipeline_mode = #tpu.pipeline_mode<synchronous>, transform_indices = @transform_19, window_bounds = array<i64: 64, 32>}, {pipeline_mode = #tpu.pipeline_mode<synchronous>, transform_indices = @transform_20, window_bounds = array<i64: 1, 32>}, {pipeline_mode = #tpu.pipeline_mode<synchronous>, transform_indices = @transform_21, window_bounds = array<i64: 32, 10>}, {pipeline_mode = #tpu.pipeline_mode<synchronous>, transform_indices = @transform_22, window_bounds = array<i64: 1, 10>}, {transform_indices = @transform_23, window_bounds = array<i64: 1, 1, 10>}]} {
    %c0 = arith.constant 0 : index
    %c0_0 = arith.constant 0 : index
    %c0_1 = arith.constant 0 : index
    %0 = vector.load %arg1[%c0, %c0_0, %c0_1] : memref<1x256x32xf32, #tpu.memory_space<vmem>>, vector<1x256x32xf32>
    %1 = vector.shape_cast %0 : vector<1x256x32xf32> to vector<256x32xf32>
    %c0_2 = arith.constant 0 : index
    %c0_3 = arith.constant 0 : index
    %c0_4 = arith.constant 0 : index
    %2 = vector.load %arg2[%c0_2, %c0_3, %c0_4] : memref<1x256x32xf32, #tpu.memory_space<vmem>>, vector<1x256x32xf32>
    %3 = vector.shape_cast %2 : vector<1x256x32xf32> to vector<256x32xf32>
    %c0_5 = arith.constant 0 : index
    %c0_6 = arith.constant 0 : index
    %4 = vector.load %arg3[%c0_5, %c0_6] : memref<1x32xf32, #tpu.memory_space<vmem>>, vector<1x32xf32>
    %c0_7 = arith.constant 0 : index
    %c0_8 = arith.constant 0 : index
    %5 = vector.load %arg16[%c0_7, %c0_8] : memref<5x32xf32, #tpu.memory_space<vmem>>, vector<5x32xf32>
    %c0_9 = arith.constant 0 : index
    %c0_10 = arith.constant 0 : index
    %6 = vector.load %arg17[%c0_9, %c0_10] : memref<5x32xf32, #tpu.memory_space<vmem>>, vector<5x32xf32>
    %cst = arith.constant 0.000000e+00 : f32
    %7 = vector.broadcast %cst : f32 to vector<1x32xf32>
    %c0_11 = arith.constant 0 : index
    %c0_12 = arith.constant 0 : index
    %8 = vector.load %arg4[%c0_11, %c0_12] : memref<32x32xf32, #tpu.memory_space<vmem>>, vector<32x32xf32>
    %cst_13 = arith.constant dense<0.000000e+00> : vector<1x32xf32>
    %9 = tpu.matmul %7, %8, %cst_13 {dimension_numbers = #tpu.dot_dimension_numbers<[1], [0], [0], [1], [0, 0, 1, 1], [], []>} : vector<1x32xf32>, vector<32x32xf32>, vector<1x32xf32> -> vector<1x32xf32>
    %c0_14 = arith.constant 0 : index
    %c0_15 = arith.constant 0 : index
    %10 = vector.load %arg5[%c0_14, %c0_15] : memref<1x32xf32, #tpu.memory_space<vmem>>, vector<1x32xf32>
    %11 = arith.addf %9, %10 : vector<1x32xf32>
    %c0_16 = arith.constant 0 : index
    %c0_17 = arith.constant 0 : index
    %12 = vector.load %arg6[%c0_16, %c0_17] : memref<32x32xf32, #tpu.memory_space<vmem>>, vector<32x32xf32>
    %cst_18 = arith.constant dense<0.000000e+00> : vector<1x32xf32>
    %13 = tpu.matmul %11, %12, %cst_18 {dimension_numbers = #tpu.dot_dimension_numbers<[1], [0], [0], [1], [0, 0, 1, 1], [], []>} : vector<1x32xf32>, vector<32x32xf32>, vector<1x32xf32> -> vector<1x32xf32>
    %c0_19 = arith.constant 0 : index
    %c0_20 = arith.constant 0 : index
    %14 = vector.load %arg7[%c0_19, %c0_20] : memref<1x32xf32, #tpu.memory_space<vmem>>, vector<1x32xf32>
    %15 = arith.addf %13, %14 : vector<1x32xf32>
    %16 = arith.addf %7, %15 : vector<1x32xf32>
    %17 = vector.extract_strided_slice %5 {offsets = [0, 0], sizes = [1, 32], strides = [1, 1]} : vector<5x32xf32> to vector<1x32xf32>
    %18 = vector.extract_strided_slice %6 {offsets = [0, 0], sizes = [1, 32], strides = [1, 1]} : vector<5x32xf32> to vector<1x32xf32>
    %cst_21 = arith.constant dense<0.000000e+00> : vector<1xf32>
    %19 = vector.multi_reduction <add>, %16, %cst_21 [1] : vector<1x32xf32> to vector<1xf32>
    %20 = vector.shape_cast %19 : vector<1xf32> to vector<1x1xf32>
    %cst_22 = arith.constant 3.200000e+01 : f32
    %21 = vector.broadcast %cst_22 : f32 to vector<1x1xf32>
    %22 = arith.divf %20, %21 : vector<1x1xf32>
    %23 = vector.broadcast %22 : vector<1x1xf32> to vector<1x32xf32>
    %24 = arith.subf %16, %23 : vector<1x32xf32>
    %25 = arith.mulf %24, %24 : vector<1x32xf32>
    %cst_23 = arith.constant dense<0.000000e+00> : vector<1xf32>
    %26 = vector.multi_reduction <add>, %25, %cst_23 [1] : vector<1x32xf32> to vector<1xf32>
    %27 = vector.shape_cast %26 : vector<1xf32> to vector<1x1xf32>
    %cst_24 = arith.constant 3.200000e+01 : f32
    %28 = vector.broadcast %cst_24 : f32 to vector<1x1xf32>
    %29 = arith.divf %27, %28 : vector<1x1xf32>
    %30 = vector.broadcast %22 : vector<1x1xf32> to vector<1x32xf32>
    %31 = arith.subf %16, %30 : vector<1x32xf32>
    %cst_25 = arith.constant 9.99999974E-6 : f32
    %32 = vector.broadcast %cst_25 : f32 to vector<1x1xf32>
    %33 = arith.addf %29, %32 : vector<1x1xf32>
    %34 = math.rsqrt %33 : vector<1x1xf32>
    %35 = vector.broadcast %34 : vector<1x1xf32> to vector<1x32xf32>
    %36 = arith.mulf %31, %35 : vector<1x32xf32>
    %37 = arith.mulf %36, %17 : vector<1x32xf32>
    %38 = arith.addf %37, %18 : vector<1x32xf32>
    %39 = arith.addf %38, %4 : vector<1x32xf32>
    %c0_26 = arith.constant 0 : index
    %c0_27 = arith.constant 0 : index
    %40 = vector.load %arg8[%c0_26, %c0_27] : memref<32x32xf32, #tpu.memory_space<vmem>>, vector<32x32xf32>
    %cst_28 = arith.constant dense<0.000000e+00> : vector<1x32xf32>
    %41 = tpu.matmul %39, %40, %cst_28 {dimension_numbers = #tpu.dot_dimension_numbers<[1], [0], [0], [1], [0, 0, 1, 1], [], []>} : vector<1x32xf32>, vector<32x32xf32>, vector<1x32xf32> -> vector<1x32xf32>
    %c0_29 = arith.constant 0 : index
    %c0_30 = arith.constant 0 : index
    %42 = vector.load %arg9[%c0_29, %c0_30] : memref<1x32xf32, #tpu.memory_space<vmem>>, vector<1x32xf32>
    %43 = arith.addf %41, %42 : vector<1x32xf32>
    %44 = arith.addf %1, %3 : vector<256x32xf32>
    %c0_31 = arith.constant 0 : index
    %c0_32 = arith.constant 0 : index
    %45 = vector.load %arg10[%c0_31, %c0_32] : memref<32x32xf32, #tpu.memory_space<vmem>>, vector<32x32xf32>
    %cst_33 = arith.constant dense<0.000000e+00> : vector<256x32xf32>
    %46 = tpu.matmul %44, %45, %cst_33 {dimension_numbers = #tpu.dot_dimension_numbers<[1], [0], [0], [1], [0, 0, 1, 1], [], []>} : vector<256x32xf32>, vector<32x32xf32>, vector<256x32xf32> -> vector<256x32xf32>
    %c0_34 = arith.constant 0 : index
    %c0_35 = arith.constant 0 : index
    %47 = vector.load %arg11[%c0_34, %c0_35] : memref<1x32xf32, #tpu.memory_space<vmem>>, vector<1x32xf32>
    %48 = vector.broadcast %47 : vector<1x32xf32> to vector<256x32xf32>
    %49 = arith.addf %46, %48 : vector<256x32xf32>
    %c0_36 = arith.constant 0 : index
    %c0_37 = arith.constant 0 : index
    %50 = vector.load %arg12[%c0_36, %c0_37] : memref<32x32xf32, #tpu.memory_space<vmem>>, vector<32x32xf32>
    %cst_38 = arith.constant dense<0.000000e+00> : vector<256x32xf32>
    %51 = tpu.matmul %1, %50, %cst_38 {dimension_numbers = #tpu.dot_dimension_numbers<[1], [0], [0], [1], [0, 0, 1, 1], [], []>} : vector<256x32xf32>, vector<32x32xf32>, vector<256x32xf32> -> vector<256x32xf32>
    %c0_39 = arith.constant 0 : index
    %c0_40 = arith.constant 0 : index
    %52 = vector.load %arg13[%c0_39, %c0_40] : memref<1x32xf32, #tpu.memory_space<vmem>>, vector<1x32xf32>
    %53 = vector.broadcast %52 : vector<1x32xf32> to vector<256x32xf32>
    %54 = arith.addf %51, %53 : vector<256x32xf32>
    %cst_41 = arith.constant dense<0.000000e+00> : vector<1x256xf32>
    %55 = tpu.matmul %43, %49, %cst_41 {dimension_numbers = #tpu.dot_dimension_numbers<[1], [1], [0], [0], [0, 0, 1, 0], [], []>} : vector<1x32xf32>, vector<256x32xf32>, vector<1x256xf32> -> vector<1x256xf32>
    %cst_42 = arith.constant 0.176776692 : f32
    %56 = vector.broadcast %cst_42 : f32 to vector<1x256xf32>
    %57 = arith.mulf %55, %56 : vector<1x256xf32>
    %cst_43 = arith.constant dense<0xFF800000> : vector<1xf32>
    %58 = vector.multi_reduction <maximumf>, %57, %cst_43 [1] : vector<1x256xf32> to vector<1xf32>
    %59 = vector.shape_cast %58 : vector<1xf32> to vector<1x1xf32>
    %60 = vector.broadcast %59 : vector<1x1xf32> to vector<1x256xf32>
    %61 = arith.subf %57, %60 : vector<1x256xf32>
    %62 = math.exp %61 : vector<1x256xf32>
    %cst_44 = arith.constant dense<0.000000e+00> : vector<1xf32>
    %63 = vector.multi_reduction <add>, %62, %cst_44 [1] : vector<1x256xf32> to vector<1xf32>
    %64 = vector.shape_cast %63 : vector<1xf32> to vector<1x1xf32>
    %65 = tpu.reciprocal %64 {approx = true} : vector<1x1xf32> -> vector<1x1xf32>
    %66 = vector.broadcast %65 : vector<1x1xf32> to vector<1x256xf32>
    %67 = arith.mulf %62, %66 : vector<1x256xf32>
    %cst_45 = arith.constant dense<0.000000e+00> : vector<1x32xf32>
    %68 = tpu.matmul %67, %54, %cst_45 {dimension_numbers = #tpu.dot_dimension_numbers<[1], [0], [0], [1], [0, 0, 1, 1], [], []>} : vector<1x256xf32>, vector<256x32xf32>, vector<1x32xf32> -> vector<1x32xf32>
    %c0_46 = arith.constant 0 : index
    %c0_47 = arith.constant 0 : index
    %69 = vector.load %arg14[%c0_46, %c0_47] : memref<32x32xf32, #tpu.memory_space<vmem>>, vector<32x32xf32>
    %cst_48 = arith.constant dense<0.000000e+00> : vector<1x32xf32>
    %70 = tpu.matmul %68, %69, %cst_48 {dimension_numbers = #tpu.dot_dimension_numbers<[1], [0], [0], [1], [0, 0, 1, 1], [], []>} : vector<1x32xf32>, vector<32x32xf32>, vector<1x32xf32> -> vector<1x32xf32>
    %c0_49 = arith.constant 0 : index
    %c0_50 = arith.constant 0 : index
    %71 = vector.load %arg15[%c0_49, %c0_50] : memref<1x32xf32, #tpu.memory_space<vmem>>, vector<1x32xf32>
    %72 = arith.addf %70, %71 : vector<1x32xf32>
    %73 = arith.addf %38, %72 : vector<1x32xf32>
    %74 = vector.extract_strided_slice %5 {offsets = [1, 0], sizes = [1, 32], strides = [1, 1]} : vector<5x32xf32> to vector<1x32xf32>
    %75 = vector.extract_strided_slice %6 {offsets = [1, 0], sizes = [1, 32], strides = [1, 1]} : vector<5x32xf32> to vector<1x32xf32>
    %cst_51 = arith.constant dense<0.000000e+00> : vector<1xf32>
    %76 = vector.multi_reduction <add>, %73, %cst_51 [1] : vector<1x32xf32> to vector<1xf32>
    %77 = vector.shape_cast %76 : vector<1xf32> to vector<1x1xf32>
    %cst_52 = arith.constant 3.200000e+01 : f32
    %78 = vector.broadcast %cst_52 : f32 to vector<1x1xf32>
    %79 = arith.divf %77, %78 : vector<1x1xf32>
    %80 = vector.broadcast %79 : vector<1x1xf32> to vector<1x32xf32>
    %81 = arith.subf %73, %80 : vector<1x32xf32>
    %82 = arith.mulf %81, %81 : vector<1x32xf32>
    %cst_53 = arith.constant dense<0.000000e+00> : vector<1xf32>
    %83 = vector.multi_reduction <add>, %82, %cst_53 [1] : vector<1x32xf32> to vector<1xf32>
    %84 = vector.shape_cast %83 : vector<1xf32> to vector<1x1xf32>
    %cst_54 = arith.constant 3.200000e+01 : f32
    %85 = vector.broadcast %cst_54 : f32 to vector<1x1xf32>
    %86 = arith.divf %84, %85 : vector<1x1xf32>
    %87 = vector.broadcast %79 : vector<1x1xf32> to vector<1x32xf32>
    %88 = arith.subf %73, %87 : vector<1x32xf32>
    %cst_55 = arith.constant 9.99999974E-6 : f32
    %89 = vector.broadcast %cst_55 : f32 to vector<1x1xf32>
    %90 = arith.addf %86, %89 : vector<1x1xf32>
    %91 = math.rsqrt %90 : vector<1x1xf32>
    %92 = vector.broadcast %91 : vector<1x1xf32> to vector<1x32xf32>
    %93 = arith.mulf %88, %92 : vector<1x32xf32>
    %94 = arith.mulf %93, %74 : vector<1x32xf32>
    %95 = arith.addf %94, %75 : vector<1x32xf32>
    %c0_56 = arith.constant 0 : index
    %c0_57 = arith.constant 0 : index
    %96 = vector.load %arg18[%c0_56, %c0_57] : memref<32x64xf32, #tpu.memory_space<vmem>>, vector<32x64xf32>
    %cst_58 = arith.constant dense<0.000000e+00> : vector<1x64xf32>
    %97 = tpu.matmul %95, %96, %cst_58 {dimension_numbers = #tpu.dot_dimension_numbers<[1], [0], [0], [1], [0, 0, 1, 1], [], []>} : vector<1x32xf32>, vector<32x64xf32>, vector<1x64xf32> -> vector<1x64xf32>
    %c0_59 = arith.constant 0 : index
    %c0_60 = arith.constant 0 : index
    %98 = vector.load %arg19[%c0_59, %c0_60] : memref<1x64xf32, #tpu.memory_space<vmem>>, vector<1x64xf32>
    %99 = arith.addf %97, %98 : vector<1x64xf32>
    %cst_61 = arith.constant 0.000000e+00 : f32
    %100 = vector.broadcast %cst_61 : f32 to vector<1x64xf32>
    %101 = arith.maximumf %99, %100 : vector<1x64xf32>
    %c0_62 = arith.constant 0 : index
    %c0_63 = arith.constant 0 : index
    %102 = vector.load %arg20[%c0_62, %c0_63] : memref<64x32xf32, #tpu.memory_space<vmem>>, vector<64x32xf32>
    %cst_64 = arith.constant dense<0.000000e+00> : vector<1x32xf32>
    %103 = tpu.matmul %101, %102, %cst_64 {dimension_numbers = #tpu.dot_dimension_numbers<[1], [0], [0], [1], [0, 0, 1, 1], [], []>} : vector<1x64xf32>, vector<64x32xf32>, vector<1x32xf32> -> vector<1x32xf32>
    %c0_65 = arith.constant 0 : index
    %c0_66 = arith.constant 0 : index
    %104 = vector.load %arg21[%c0_65, %c0_66] : memref<1x32xf32, #tpu.memory_space<vmem>>, vector<1x32xf32>
    %105 = arith.addf %103, %104 : vector<1x32xf32>
    %106 = arith.addf %95, %105 : vector<1x32xf32>
    %107 = vector.extract_strided_slice %5 {offsets = [2, 0], sizes = [1, 32], strides = [1, 1]} : vector<5x32xf32> to vector<1x32xf32>
    %108 = vector.extract_strided_slice %6 {offsets = [2, 0], sizes = [1, 32], strides = [1, 1]} : vector<5x32xf32> to vector<1x32xf32>
    %cst_67 = arith.constant dense<0.000000e+00> : vector<1xf32>
    %109 = vector.multi_reduction <add>, %106, %cst_67 [1] : vector<1x32xf32> to vector<1xf32>
    %110 = vector.shape_cast %109 : vector<1xf32> to vector<1x1xf32>
    %cst_68 = arith.constant 3.200000e+01 : f32
    %111 = vector.broadcast %cst_68 : f32 to vector<1x1xf32>
    %112 = arith.divf %110, %111 : vector<1x1xf32>
    %113 = vector.broadcast %112 : vector<1x1xf32> to vector<1x32xf32>
    %114 = arith.subf %106, %113 : vector<1x32xf32>
    %115 = arith.mulf %114, %114 : vector<1x32xf32>
    %cst_69 = arith.constant dense<0.000000e+00> : vector<1xf32>
    %116 = vector.multi_reduction <add>, %115, %cst_69 [1] : vector<1x32xf32> to vector<1xf32>
    %117 = vector.shape_cast %116 : vector<1xf32> to vector<1x1xf32>
    %cst_70 = arith.constant 3.200000e+01 : f32
    %118 = vector.broadcast %cst_70 : f32 to vector<1x1xf32>
    %119 = arith.divf %117, %118 : vector<1x1xf32>
    %120 = vector.broadcast %112 : vector<1x1xf32> to vector<1x32xf32>
    %121 = arith.subf %106, %120 : vector<1x32xf32>
    %cst_71 = arith.constant 9.99999974E-6 : f32
    %122 = vector.broadcast %cst_71 : f32 to vector<1x1xf32>
    %123 = arith.addf %119, %122 : vector<1x1xf32>
    %124 = math.rsqrt %123 : vector<1x1xf32>
    %125 = vector.broadcast %124 : vector<1x1xf32> to vector<1x32xf32>
    %126 = arith.mulf %121, %125 : vector<1x32xf32>
    %127 = arith.mulf %126, %107 : vector<1x32xf32>
    %128 = arith.addf %127, %108 : vector<1x32xf32>
    %129 = vector.extract_strided_slice %5 {offsets = [3, 0], sizes = [1, 32], strides = [1, 1]} : vector<5x32xf32> to vector<1x32xf32>
    %130 = vector.extract_strided_slice %6 {offsets = [3, 0], sizes = [1, 32], strides = [1, 1]} : vector<5x32xf32> to vector<1x32xf32>
    %cst_72 = arith.constant dense<0.000000e+00> : vector<1xf32>
    %131 = vector.multi_reduction <add>, %128, %cst_72 [1] : vector<1x32xf32> to vector<1xf32>
    %132 = vector.shape_cast %131 : vector<1xf32> to vector<1x1xf32>
    %cst_73 = arith.constant 3.200000e+01 : f32
    %133 = vector.broadcast %cst_73 : f32 to vector<1x1xf32>
    %134 = arith.divf %132, %133 : vector<1x1xf32>
    %135 = vector.broadcast %134 : vector<1x1xf32> to vector<1x32xf32>
    %136 = arith.subf %128, %135 : vector<1x32xf32>
    %137 = arith.mulf %136, %136 : vector<1x32xf32>
    %cst_74 = arith.constant dense<0.000000e+00> : vector<1xf32>
    %138 = vector.multi_reduction <add>, %137, %cst_74 [1] : vector<1x32xf32> to vector<1xf32>
    %139 = vector.shape_cast %138 : vector<1xf32> to vector<1x1xf32>
    %cst_75 = arith.constant 3.200000e+01 : f32
    %140 = vector.broadcast %cst_75 : f32 to vector<1x1xf32>
    %141 = arith.divf %139, %140 : vector<1x1xf32>
    %142 = vector.broadcast %134 : vector<1x1xf32> to vector<1x32xf32>
    %143 = arith.subf %128, %142 : vector<1x32xf32>
    %cst_76 = arith.constant 9.99999974E-6 : f32
    %144 = vector.broadcast %cst_76 : f32 to vector<1x1xf32>
    %145 = arith.addf %141, %144 : vector<1x1xf32>
    %146 = math.rsqrt %145 : vector<1x1xf32>
    %147 = vector.broadcast %146 : vector<1x1xf32> to vector<1x32xf32>
    %148 = arith.mulf %143, %147 : vector<1x32xf32>
    %149 = arith.mulf %148, %129 : vector<1x32xf32>
    %150 = arith.addf %149, %130 : vector<1x32xf32>
    %151 = vector.extract_strided_slice %5 {offsets = [4, 0], sizes = [1, 32], strides = [1, 1]} : vector<5x32xf32> to vector<1x32xf32>
    %152 = vector.extract_strided_slice %6 {offsets = [4, 0], sizes = [1, 32], strides = [1, 1]} : vector<5x32xf32> to vector<1x32xf32>
    %cst_77 = arith.constant dense<0.000000e+00> : vector<1xf32>
    %153 = vector.multi_reduction <add>, %150, %cst_77 [1] : vector<1x32xf32> to vector<1xf32>
    %154 = vector.shape_cast %153 : vector<1xf32> to vector<1x1xf32>
    %cst_78 = arith.constant 3.200000e+01 : f32
    %155 = vector.broadcast %cst_78 : f32 to vector<1x1xf32>
    %156 = arith.divf %154, %155 : vector<1x1xf32>
    %157 = vector.broadcast %156 : vector<1x1xf32> to vector<1x32xf32>
    %158 = arith.subf %150, %157 : vector<1x32xf32>
    %159 = arith.mulf %158, %158 : vector<1x32xf32>
    %cst_79 = arith.constant dense<0.000000e+00> : vector<1xf32>
    %160 = vector.multi_reduction <add>, %159, %cst_79 [1] : vector<1x32xf32> to vector<1xf32>
    %161 = vector.shape_cast %160 : vector<1xf32> to vector<1x1xf32>
    %cst_80 = arith.constant 3.200000e+01 : f32
    %162 = vector.broadcast %cst_80 : f32 to vector<1x1xf32>
    %163 = arith.divf %161, %162 : vector<1x1xf32>
    %164 = vector.broadcast %156 : vector<1x1xf32> to vector<1x32xf32>
    %165 = arith.subf %150, %164 : vector<1x32xf32>
    %cst_81 = arith.constant 9.99999974E-6 : f32
    %166 = vector.broadcast %cst_81 : f32 to vector<1x1xf32>
    %167 = arith.addf %163, %166 : vector<1x1xf32>
    %168 = math.rsqrt %167 : vector<1x1xf32>
    %169 = vector.broadcast %168 : vector<1x1xf32> to vector<1x32xf32>
    %170 = arith.mulf %165, %169 : vector<1x32xf32>
    %171 = arith.mulf %170, %151 : vector<1x32xf32>
    %172 = arith.addf %171, %152 : vector<1x32xf32>
    %c0_82 = arith.constant 0 : index
    %c0_83 = arith.constant 0 : index
    %173 = vector.load %arg22[%c0_82, %c0_83] : memref<32x10xf32, #tpu.memory_space<vmem>>, vector<32x10xf32>
    %cst_84 = arith.constant dense<0.000000e+00> : vector<1x10xf32>
    %174 = tpu.matmul %172, %173, %cst_84 {dimension_numbers = #tpu.dot_dimension_numbers<[1], [0], [0], [1], [0, 0, 1, 1], [], []>} : vector<1x32xf32>, vector<32x10xf32>, vector<1x10xf32> -> vector<1x10xf32>
    %c0_85 = arith.constant 0 : index
    %c0_86 = arith.constant 0 : index
    %175 = vector.load %arg23[%c0_85, %c0_86] : memref<1x10xf32, #tpu.memory_space<vmem>>, vector<1x10xf32>
    %176 = arith.addf %174, %175 : vector<1x10xf32>
    %c0_87 = arith.constant 0 : index
    %c0_88 = arith.constant 0 : index
    %c0_89 = arith.constant 0 : index
    %177 = vector.load %arg24[%c0_87, %c0_88, %c0_89] : memref<1x1x10xf32, #tpu.memory_space<vmem>>, vector<1x1x10xf32>
    %178 = vector.shape_cast %177 : vector<1x1x10xf32> to vector<1x10xf32>
    %179 = vector.shape_cast %176 : vector<1x10xf32> to vector<1x1x10xf32>
    tpu.vector_store %arg24[%c0_87, %c0_88, %c0_89], %179 {strides = array<i32>} : memref<1x1x10xf32, #tpu.memory_space<vmem>>, vector<1x1x10xf32>,
    return
  }
  func.func @transform_0(%arg0: i32) -> (i32, i32, i32) {
    %c0_i32 = arith.constant 0 : i32
    %c0_i32_0 = arith.constant 0 : i32
    %c0_i32_1 = arith.constant 0 : i32
    return %arg0, %c0_i32, %c0_i32_0 : i32, i32, i32
  }
  func.func @transform_1(%arg0: i32) -> (i32, i32, i32) {
    %c0_i32 = arith.constant 0 : i32
    %c0_i32_0 = arith.constant 0 : i32
    %c0_i32_1 = arith.constant 0 : i32
    %c0_i32_2 = arith.constant 0 : i32
    return %c0_i32, %c0_i32_0, %c0_i32_1 : i32, i32, i32
  }
  func.func @transform_2(%arg0: i32) -> (i32, i32) {
    %c0_i32 = arith.constant 0 : i32
    %c0_i32_0 = arith.constant 0 : i32
    %c0_i32_1 = arith.constant 0 : i32
    return %c0_i32, %c0_i32_0 : i32, i32
  }
  func.func @transform_3(%arg0: i32) -> (i32, i32) {
    %c0_i32 = arith.constant 0 : i32
    %c0_i32_0 = arith.constant 0 : i32
    %c0_i32_1 = arith.constant 0 : i32
    return %c0_i32, %c0_i32_0 : i32, i32
  }
  func.func @transform_4(%arg0: i32) -> (i32, i32) {
    %c0_i32 = arith.constant 0 : i32
    %c0_i32_0 = arith.constant 0 : i32
    %c0_i32_1 = arith.constant 0 : i32
    return %c0_i32, %c0_i32_0 : i32, i32
  }
  func.func @transform_5(%arg0: i32) -> (i32, i32) {
    %c0_i32 = arith.constant 0 : i32
    %c0_i32_0 = arith.constant 0 : i32
    %c0_i32_1 = arith.constant 0 : i32
    return %c0_i32, %c0_i32_0 : i32, i32
  }
  func.func @transform_6(%arg0: i32) -> (i32, i32) {
    %c0_i32 = arith.constant 0 : i32
    %c0_i32_0 = arith.constant 0 : i32
    %c0_i32_1 = arith.constant 0 : i32
    return %c0_i32, %c0_i32_0 : i32, i32
  }
  func.func @transform_7(%arg0: i32) -> (i32, i32) {
    %c0_i32 = arith.constant 0 : i32
    %c0_i32_0 = arith.constant 0 : i32
    %c0_i32_1 = arith.constant 0 : i32
    return %c0_i32, %c0_i32_0 : i32, i32
  }
  func.func @transform_8(%arg0: i32) -> (i32, i32) {
    %c0_i32 = arith.constant 0 : i32
    %c0_i32_0 = arith.constant 0 : i32
    %c0_i32_1 = arith.constant 0 : i32
    return %c0_i32, %c0_i32_0 : i32, i32
  }
  func.func @transform_9(%arg0: i32) -> (i32, i32) {
    %c0_i32 = arith.constant 0 : i32
    %c0_i32_0 = arith.constant 0 : i32
    %c0_i32_1 = arith.constant 0 : i32
    return %c0_i32, %c0_i32_0 : i32, i32
  }
  func.func @transform_10(%arg0: i32) -> (i32, i32) {
    %c0_i32 = arith.constant 0 : i32
    %c0_i32_0 = arith.constant 0 : i32
    %c0_i32_1 = arith.constant 0 : i32
    return %c0_i32, %c0_i32_0 : i32, i32
  }
  func.func @transform_11(%arg0: i32) -> (i32, i32) {
    %c0_i32 = arith.constant 0 : i32
    %c0_i32_0 = arith.constant 0 : i32
    %c0_i32_1 = arith.constant 0 : i32
    return %c0_i32, %c0_i32_0 : i32, i32
  }
  func.func @transform_12(%arg0: i32) -> (i32, i32) {
    %c0_i32 = arith.constant 0 : i32
    %c0_i32_0 = arith.constant 0 : i32
    %c0_i32_1 = arith.constant 0 : i32
    return %c0_i32, %c0_i32_0 : i32, i32
  }
  func.func @transform_13(%arg0: i32) -> (i32, i32) {
    %c0_i32 = arith.constant 0 : i32
    %c0_i32_0 = arith.constant 0 : i32
    %c0_i32_1 = arith.constant 0 : i32
    return %c0_i32, %c0_i32_0 : i32, i32
  }
  func.func @transform_14(%arg0: i32) -> (i32, i32) {
    %c0_i32 = arith.constant 0 : i32
    %c0_i32_0 = arith.constant 0 : i32
    %c0_i32_1 = arith.constant 0 : i32
    return %c0_i32, %c0_i32_0 : i32, i32
  }
  func.func @transform_15(%arg0: i32) -> (i32, i32) {
    %c0_i32 = arith.constant 0 : i32
    %c0_i32_0 = arith.constant 0 : i32
    %c0_i32_1 = arith.constant 0 : i32
    return %c0_i32, %c0_i32_0 : i32, i32
  }
  func.func @transform_16(%arg0: i32) -> (i32, i32) {
    %c0_i32 = arith.constant 0 : i32
    %c0_i32_0 = arith.constant 0 : i32
    %c0_i32_1 = arith.constant 0 : i32
    return %c0_i32, %c0_i32_0 : i32, i32
  }
  func.func @transform_17(%arg0: i32) -> (i32, i32) {
    %c0_i32 = arith.constant 0 : i32
    %c0_i32_0 = arith.constant 0 : i32
    %c0_i32_1 = arith.constant 0 : i32
    return %c0_i32, %c0_i32_0 : i32, i32
  }
  func.func @transform_18(%arg0: i32) -> (i32, i32) {
    %c0_i32 = arith.constant 0 : i32
    %c0_i32_0 = arith.constant 0 : i32
    %c0_i32_1 = arith.constant 0 : i32
    return %c0_i32, %c0_i32_0 : i32, i32
  }
  func.func @transform_19(%arg0: i32) -> (i32, i32) {
    %c0_i32 = arith.constant 0 : i32
    %c0_i32_0 = arith.constant 0 : i32
    %c0_i32_1 = arith.constant 0 : i32
    return %c0_i32, %c0_i32_0 : i32, i32
  }
  func.func @transform_20(%arg0: i32) -> (i32, i32) {
    %c0_i32 = arith.constant 0 : i32
    %c0_i32_0 = arith.constant 0 : i32
    %c0_i32_1 = arith.constant 0 : i32
    return %c0_i32, %c0_i32_0 : i32, i32
  }
  func.func @transform_21(%arg0: i32) -> (i32, i32) {
    %c0_i32 = arith.constant 0 : i32
    %c0_i32_0 = arith.constant 0 : i32
    %c0_i32_1 = arith.constant 0 : i32
    return %c0_i32, %c0_i32_0 : i32, i32
  }
  func.func @transform_22(%arg0: i32) -> (i32, i32) {
    %c0_i32 = arith.constant 0 : i32
    %c0_i32_0 = arith.constant 0 : i32
    %c0_i32_1 = arith.constant 0 : i32
    return %c0_i32, %c0_i32_0 : i32, i32
  }
  func.func @transform_23(%arg0: i32) -> (i32, i32, i32) {
    %c0_i32 = arith.constant 0 : i32
    %c0_i32_0 = arith.constant 0 : i32
    %c0_i32_1 = arith.constant 0 : i32
    return %arg0, %c0_i32, %c0_i32_0 : i32, i32, i32
  }
}

</mosaic_0001>

<llo_original>
// kernel: delicacynet_forward.3
$region0: #{delicacynet_forward.3}
  #allocation0 [shape = 'u32[]', space=smem, size = 0x4, offset = 0x4, fixed_abs, tag = 'smem constant byte address 0x4 - core index']
  #allocation1 [shape = 'u32[144,128]{1,0:T(1,128)}', space=vmem, size = 0x12000, scoped, tag = 'internal scratch']
  %s0 = inlined_call_operand.vmem [shape: f32[2,256,32], index: 0, kind: input, shape index: {}]
  %s1 = inlined_call_operand.vmem [shape: f32[1,256,32], index: 1, kind: input, shape index: {}]
  %s2 = inlined_call_operand.vmem [shape: f32[1,32], index: 2, kind: input, shape index: {}]
  %s3 = inlined_call_operand.vmem [shape: f32[32,32], index: 3, kind: input, shape index: {}]
  %s4 = inlined_call_operand.vmem [shape: f32[1,32], index: 4, kind: input, shape index: {}]
  %s5 = inlined_call_operand.vmem [shape: f32[32,32], index: 5, kind: input, shape index: {}]
  %s6 = inlined_call_operand.vmem [shape: f32[1,32], index: 6, kind: input, shape index: {}]
  %s7 = inlined_call_operand.vmem [shape: f32[32,32], index: 7, kind: input, shape index: {}]
  %s8 = inlined_call_operand.vmem [shape: f32[1,32], index: 8, kind: input, shape index: {}]
  %s9 = inlined_call_operand.vmem [shape: f32[32,32], index: 9, kind: input, shape index: {}]
  %s10 = inlined_call_operand.vmem [shape: f32[1,32], index: 10, kind: input, shape index: {}]
  %s11 = inlined_call_operand.vmem [shape: f32[32,32], index: 11, kind: input, shape index: {}]
  %s12 = inlined_call_operand.vmem [shape: f32[1,32], index: 12, kind: input, shape index: {}]
  %s13 = inlined_call_operand.vmem [shape: f32[32,32], index: 13, kind: input, shape index: {}]
  %s14 = inlined_call_operand.vmem [shape: f32[1,32], index: 14, kind: input, shape index: {}]
  %s15 = inlined_call_operand.vmem [shape: f32[5,32], index: 15, kind: input, shape index: {}]
  %s16 = inlined_call_operand.vmem [shape: f32[5,32], index: 16, kind: input, shape index: {}]
  %s17 = inlined_call_operand.vmem [shape: f32[32,64], index: 17, kind: input, shape index: {}]
  %s18 = inlined_call_operand.vmem [shape: f32[1,64], index: 18, kind: input, shape index: {}]
  %s19 = inlined_call_operand.vmem [shape: f32[64,32], index: 19, kind: input, shape index: {}]
  %s20 = inlined_call_operand.vmem [shape: f32[1,32], index: 20, kind: input, shape index: {}]
  %s21 = inlined_call_operand.vmem [shape: f32[32,10], index: 21, kind: input, shape index: {}]
  %s22 = inlined_call_operand.vmem [shape: f32[1,10], index: 22, kind: input, shape index: {}]
  %s23 = inlined_call_operand.vmem [shape: f32[2,1,10], index: 23, kind: output, shape index: {}]
  %s24 = sld [smem:[#allocation0]]
  $region125: #{delicacynet_forward.3} parent=0
    _
  %s26 = ssub.s32 1, %s24
  %s27 = scalar_select 0, %s26, %s24
  loop: start=0, step=1, limit=4
  $region2: #{delicacynet_forward.3} parent=0 // loop_pre_header
    _
  $region3: #{delicacynet_forward.3} parent=0 // loop_header
    %s29 = sphi 0, %s33
    %p30 = scmp.ge.s32.totalorder %s29, 4
    %s39 = sphi 0, %s41
    %s42 = sphi 0, %s39
    %s43 = sphi 0, %s42
    %s59 = sphi 0, %s43
    %s63 = sphi 0, %s63
    %s65 = sphi 0, %s63
    %s66 = sphi 0, %s65
    %s80 = sphi 0, %s66
    %s84 = sphi 0, %s84
    %s86 = sphi 0, %s84
    %s87 = sphi 0, %s86
    %s101 = sphi 0, %s87
    %s105 = sphi 0, %s105
    %s107 = sphi 0, %s105
    %s108 = sphi 0, %s107
    %s122 = sphi 0, %s108
    %s126 = sphi 0, %s126
    %s128 = sphi 0, %s126
    %s129 = sphi 0, %s128
    %s143 = sphi 0, %s129
    %s147 = sphi 0, %s147
    %s149 = sphi 0, %s147
    %s150 = sphi 0, %s149
    %s164 = sphi 0, %s150
    %s168 = sphi 0, %s168
    %s170 = sphi 0, %s168
    %s171 = sphi 0, %s170
    %s185 = sphi 0, %s171
    %s189 = sphi 0, %s189
    %s191 = sphi 0, %s189
    %s192 = sphi 0, %s191
    %s206 = sphi 0, %s192
    %s210 = sphi 0, %s210
    %s212 = sphi 0, %s210
    %s213 = sphi 0, %s212
    %s227 = sphi 0, %s213
    %s231 = sphi 0, %s231
    %s233 = sphi 0, %s231
    %s234 = sphi 0, %s233
    %s248 = sphi 0, %s234
    %s252 = sphi 0, %s252
    %s254 = sphi 0, %s252
    %s255 = sphi 0, %s254
    %s269 = sphi 0, %s255
    %s273 = sphi 0, %s273
    %s275 = sphi 0, %s273
    %s276 = sphi 0, %s275
    %s290 = sphi 0, %s276
    %s294 = sphi 0, %s294
    %s296 = sphi 0, %s294
    %s297 = sphi 0, %s296
    %s311 = sphi 0, %s297
    %s315 = sphi 0, %s315
    %s317 = sphi 0, %s315
    %s318 = sphi 0, %s317
    %s332 = sphi 0, %s318
    %s336 = sphi 0, %s336
    %s338 = sphi 0, %s336
    %s339 = sphi 0, %s338
    %s353 = sphi 0, %s339
    %s357 = sphi 0, %s357
    %s359 = sphi 0, %s357
    %s360 = sphi 0, %s359
    %s374 = sphi 0, %s360
    %s378 = sphi 0, %s378
    %s380 = sphi 0, %s378
    %s381 = sphi 0, %s380
    %s395 = sphi 0, %s381
    %s399 = sphi 0, %s399
    %s401 = sphi 0, %s399
    %s402 = sphi 0, %s401
    %s416 = sphi 0, %s402
    %s420 = sphi 0, %s420
    %s422 = sphi 0, %s420
    %s423 = sphi 0, %s422
    %s437 = sphi 0, %s423
    %s441 = sphi 0, %s441
    %s443 = sphi 0, %s441
    %s444 = sphi 0, %s443
    %s458 = sphi 0, %s444
    %s462 = sphi 0, %s462
    %s464 = sphi 0, %s462
    %s465 = sphi 0, %s464
    %s479 = sphi 0, %s465
    %s483 = sphi 0, %s483
    %s485 = sphi 0, %s483
    %s486 = sphi 0, %s485
    %s500 = sphi 0, %s486
    %s504 = sphi 0, %s504
    %s506 = sphi 0, %s504
    %s507 = sphi 0, %s506
    %s521 = sphi 0, %s507
    %s527 = sphi 0, %s529
    %s530 = sphi 0, %s527
    %s531 = sphi 0, %s530
    %s547 = sphi 0, %s531
  $region4: #{delicacynet_forward.3} parent=0 // loop_header_branch
    %32 = sbr.rel (%p30) target = $region8
  $region5: #{delicacynet_forward.3} parent=0 // loop_body
    %s34 = ssub.s32 %s29, 1
    %s35 = ssub.s32 %s29, 2
    %s36 = sadd.s32 %s29, 1
    %s37 = ssub.s32 %s29, %s36
    %p38 = scmp.eq.s32.totalorder %s37, 0
    %s40 = sadd.s32 %s39, 1
    %s41 = scalar_select %p38, %s39, %s40
    %p44 = pneg %p38
    %p45 = scmp.eq.s32.totalorder %s29, 1
    %p46 = por %p44, %p45
    %p47 = scmp.ne.s32.totalorder %s39, %s42
    %p48 = scmp.eq.s32.totalorder %s29, 0
    %p49 = por %p47, %p48
    %p50 = scmp.ne.s32.totalorder %s39, %s42
    %p51 = scmp.eq.s32.totalorder %s34, 1
    %p52 = por %p50, %p51
    %p53 = scmp.ne.s32.totalorder %s42, %s43
    %p54 = scmp.eq.s32.totalorder %s34, 0
    %p55 = por %p53, %p54
    %p56 = scmp.ne.s32.totalorder %s42, %s43
    %p57 = scmp.eq.s32.totalorder %s35, 1
    %p58 = por %p56, %p57
    %p60 = scmp.ne.s32.totalorder %s43, %s59
    %p61 = scmp.eq.s32.totalorder %s35, 0
    %p62 = por %p60, %p61
    %s64 = sadd.s32 %s63, 1
    %p67 = scmp.eq.s32.totalorder %s29, 1
    %p68 = scmp.ne.s32.totalorder %s63, %s65
    %p69 = scmp.eq.s32.totalorder %s29, 0
    %p70 = por %p68, %p69
    %p71 = scmp.ne.s32.totalorder %s63, %s65
    %p72 = scmp.eq.s32.totalorder %s34, 1
    %p73 = por %p71, %p72
    %p74 = scmp.ne.s32.totalorder %s65, %s66
    %p75 = scmp.eq.s32.totalorder %s34, 0
    %p76 = por %p74, %p75
    %p77 = scmp.ne.s32.totalorder %s65, %s66
    %p78 = scmp.eq.s32.totalorder %s35, 1
    %p79 = por %p77, %p78
    %p81 = scmp.ne.s32.totalorder %s66, %s80
    %p82 = scmp.eq.s32.totalorder %s35, 0
    %p83 = por %p81, %p82
    %s85 = sadd.s32 %s84, 1
    %p88 = scmp.eq.s32.totalorder %s29, 1
    %p89 = scmp.ne.s32.totalorder %s84, %s86
    %p90 = scmp.eq.s32.totalorder %s29, 0
    %p91 = por %p89, %p90
    %p92 = scmp.ne.s32.totalorder %s84, %s86
    %p93 = scmp.eq.s32.totalorder %s34, 1
    %p94 = por %p92, %p93
    %p95 = scmp.ne.s32.totalorder %s86, %s87
    %p96 = scmp.eq.s32.totalorder %s34, 0
    %p97 = por %p95, %p96
    %p98 = scmp.ne.s32.totalorder %s86, %s87
    %p99 = scmp.eq.s32.totalorder %s35, 1
    %p100 = por %p98, %p99
    %p102 = scmp.ne.s32.totalorder %s87, %s101
    %p103 = scmp.eq.s32.totalorder %s35, 0
    %p104 = por %p102, %p103
    %s106 = sadd.s32 %s105, 1
    %p109 = scmp.eq.s32.totalorder %s29, 1
    %p110 = scmp.ne.s32.totalorder %s105, %s107
    %p111 = scmp.eq.s32.totalorder %s29, 0
    %p112 = por %p110, %p111
    %p113 = scmp.ne.s32.totalorder %s105, %s107
    %p114 = scmp.eq.s32.totalorder %s34, 1
    %p115 = por %p113, %p114
    %p116 = scmp.ne.s32.totalorder %s107, %s108
    %p117 = scmp.eq.s32.totalorder %s34, 0
    %p118 = por %p116, %p117
    %p119 = scmp.ne.s32.totalorder %s107, %s108
    %p120 = scmp.eq.s32.totalorder %s35, 1
    %p121 = por %p119, %p120
    %p123 = scmp.ne.s32.totalorder %s108, %s122
    %p124 = scmp.eq.s32.totalorder %s35, 0
    %p125 = por %p123, %p124
    %s127 = sadd.s32 %s126, 1
    %p130 = scmp.eq.s32.totalorder %s29, 1
    %p131 = scmp.ne.s32.totalorder %s126, %s128
    %p132 = scmp.eq.s32.totalorder %s29, 0
    %p133 = por %p131, %p132
    %p134 = scmp.ne.s32.totalorder %s126, %s128
    %p135 = scmp.eq.s32.totalorder %s34, 1
    %p136 = por %p134, %p135
    %p137 = scmp.ne.s32.totalorder %s128, %s129
    %p138 = scmp.eq.s32.totalorder %s34, 0
    %p139 = por %p137, %p138
    %p140 = scmp.ne.s32.totalorder %s128, %s129
    %p141 = scmp.eq.s32.totalorder %s35, 1
    %p142 = por %p140, %p141
    %p144 = scmp.ne.s32.totalorder %s129, %s143
    %p145 = scmp.eq.s32.totalorder %s35, 0
    %p146 = por %p144, %p145
    %s148 = sadd.s32 %s147, 1
    %p151 = scmp.eq.s32.totalorder %s29, 1
    %p152 = scmp.ne.s32.totalorder %s147, %s149
    %p153 = scmp.eq.s32.totalorder %s29, 0
    %p154 = por %p152, %p153
    %p155 = scmp.ne.s32.totalorder %s147, %s149
    %p156 = scmp.eq.s32.totalorder %s34, 1
    %p157 = por %p155, %p156
    %p158 = scmp.ne.s32.totalorder %s149, %s150
    %p159 = scmp.eq.s32.totalorder %s34, 0
    %p160 = por %p158, %p159
    %p161 = scmp.ne.s32.totalorder %s149, %s150
    %p162 = scmp.eq.s32.totalorder %s35, 1
    %p163 = por %p161, %p162
    %p165 = scmp.ne.s32.totalorder %s150, %s164
    %p166 = scmp.eq.s32.totalorder %s35, 0
    %p167 = por %p165, %p166
    %s169 = sadd.s32 %s168, 1
    %p172 = scmp.eq.s32.totalorder %s29, 1
    %p173 = scmp.ne.s32.totalorder %s168, %s170
    %p174 = scmp.eq.s32.totalorder %s29, 0
    %p175 = por %p173, %p174
    %p176 = scmp.ne.s32.totalorder %s168, %s170
    %p177 = scmp.eq.s32.totalorder %s34, 1
    %p178 = por %p176, %p177
    %p179 = scmp.ne.s32.totalorder %s170, %s171
    %p180 = scmp.eq.s32.totalorder %s34, 0
    %p181 = por %p179, %p180
    %p182 = scmp.ne.s32.totalorder %s170, %s171
    %p183 = scmp.eq.s32.totalorder %s35, 1
    %p184 = por %p182, %p183
    %p186 = scmp.ne.s32.totalorder %s171, %s185
    %p187 = scmp.eq.s32.totalorder %s35, 0
    %p188 = por %p186, %p187
    %s190 = sadd.s32 %s189, 1
    %p193 = scmp.eq.s32.totalorder %s29, 1
    %p194 = scmp.ne.s32.totalorder %s189, %s191
    %p195 = scmp.eq.s32.totalorder %s29, 0
    %p196 = por %p194, %p195
    %p197 = scmp.ne.s32.totalorder %s189, %s191
    %p198 = scmp.eq.s32.totalorder %s34, 1
    %p199 = por %p197, %p198
    %p200 = scmp.ne.s32.totalorder %s191, %s192
    %p201 = scmp.eq.s32.totalorder %s34, 0
    %p202 = por %p200, %p201
    %p203 = scmp.ne.s32.totalorder %s191, %s192
    %p204 = scmp.eq.s32.totalorder %s35, 1
    %p205 = por %p203, %p204
    %p207 = scmp.ne.s32.totalorder %s192, %s206
    %p208 = scmp.eq.s32.totalorder %s35, 0
    %p209 = por %p207, %p208
    %s211 = sadd.s32 %s210, 1
    %p214 = scmp.eq.s32.totalorder %s29, 1
    %p215 = scmp.ne.s32.totalorder %s210, %s212
    %p216 = scmp.eq.s32.totalorder %s29, 0
    %p217 = por %p215, %p216
    %p218 = scmp.ne.s32.totalorder %s210, %s212
    %p219 = scmp.eq.s32.totalorder %s34, 1
    %p220 = por %p218, %p219
    %p221 = scmp.ne.s32.totalorder %s212, %s213
    %p222 = scmp.eq.s32.totalorder %s34, 0
    %p223 = por %p221, %p222
    %p224 = scmp.ne.s32.totalorder %s212, %s213
    %p225 = scmp.eq.s32.totalorder %s35, 1
    %p226 = por %p224, %p225
    %p228 = scmp.ne.s32.totalorder %s213, %s227
    %p229 = scmp.eq.s32.totalorder %s35, 0
    %p230 = por %p228, %p229
    %s232 = sadd.s32 %s231, 1
    %p235 = scmp.eq.s32.totalorder %s29, 1
    %p236 = scmp.ne.s32.totalorder %s231, %s233
    %p237 = scmp.eq.s32.totalorder %s29, 0
    %p238 = por %p236, %p237
    %p239 = scmp.ne.s32.totalorder %s231, %s233
    %p240 = scmp.eq.s32.totalorder %s34, 1
    %p241 = por %p239, %p240
    %p242 = scmp.ne.s32.totalorder %s233, %s234
    %p243 = scmp.eq.s32.totalorder %s34, 0
    %p244 = por %p242, %p243
    %p245 = scmp.ne.s32.totalorder %s233, %s234
    %p246 = scmp.eq.s32.totalorder %s35, 1
    %p247 = por %p245, %p246
    %p249 = scmp.ne.s32.totalorder %s234, %s248
    %p250 = scmp.eq.s32.totalorder %s35, 0
    %p251 = por %p249, %p250
    %s253 = sadd.s32 %s252, 1
    %p256 = scmp.eq.s32.totalorder %s29, 1
    %p257 = scmp.ne.s32.totalorder %s252, %s254
    %p258 = scmp.eq.s32.totalorder %s29, 0
    %p259 = por %p257, %p258
    %p260 = scmp.ne.s32.totalorder %s252, %s254
    %p261 = scmp.eq.s32.totalorder %s34, 1
    %p262 = por %p260, %p261
    %p263 = scmp.ne.s32.totalorder %s254, %s255
    %p264 = scmp.eq.s32.totalorder %s34, 0
    %p265 = por %p263, %p264
    %p266 = scmp.ne.s32.totalorder %s254, %s255
    %p267 = scmp.eq.s32.totalorder %s35, 1
    %p268 = por %p266, %p267
    %p270 = scmp.ne.s32.totalorder %s255, %s269
    %p271 = scmp.eq.s32.totalorder %s35, 0
    %p272 = por %p270, %p271
    %s274 = sadd.s32 %s273, 1
    %p277 = scmp.eq.s32.totalorder %s29, 1
    %p278 = scmp.ne.s32.totalorder %s273, %s275
    %p279 = scmp.eq.s32.totalorder %s29, 0
    %p280 = por %p278, %p279
    %p281 = scmp.ne.s32.totalorder %s273, %s275
    %p282 = scmp.eq.s32.totalorder %s34, 1
    %p283 = por %p281, %p282
    %p284 = scmp.ne.s32.totalorder %s275, %s276
    %p285 = scmp.eq.s32.totalorder %s34, 0
    %p286 = por %p284, %p285
    %p287 = scmp.ne.s32.totalorder %s275, %s276
    %p288 = scmp.eq.s32.totalorder %s35, 1
    %p289 = por %p287, %p288
    %p291 = scmp.ne.s32.totalorder %s276, %s290
    %p292 = scmp.eq.s32.totalorder %s35, 0
    %p293 = por %p291, %p292
    %s295 = sadd.s32 %s294, 1
    %p298 = scmp.eq.s32.totalorder %s29, 1
    %p299 = scmp.ne.s32.totalorder %s294, %s296
    %p300 = scmp.eq.s32.totalorder %s29, 0
    %p301 = por %p299, %p300
    %p302 = scmp.ne.s32.totalorder %s294, %s296
    %p303 = scmp.eq.s32.totalorder %s34, 1
    %p304 = por %p302, %p303
    %p305 = scmp.ne.s32.totalorder %s296, %s297
    %p306 = scmp.eq.s32.totalorder %s34, 0
    %p307 = por %p305, %p306
    %p308 = scmp.ne.s32.totalorder %s296, %s297
    %p309 = scmp.eq.s32.totalorder %s35, 1
    %p310 = por %p308, %p309
    %p312 = scmp.ne.s32.totalorder %s297, %s311
    %p313 = scmp.eq.s32.totalorder %s35, 0
    %p314 = por %p312, %p313
    %s316 = sadd.s32 %s315, 1
    %p319 = scmp.eq.s32.totalorder %s29, 1
    %p320 = scmp.ne.s32.totalorder %s315, %s317
    %p321 = scmp.eq.s32.totalorder %s29, 0
    %p322 = por %p320, %p321
    %p323 = scmp.ne.s32.totalorder %s315, %s317
    %p324 = scmp.eq.s32.totalorder %s34, 1
    %p325 = por %p323, %p324
    %p326 = scmp.ne.s32.totalorder %s317, %s318
    %p327 = scmp.eq.s32.totalorder %s34, 0
    %p328 = por %p326, %p327
    %p329 = scmp.ne.s32.totalorder %s317, %s318
    %p330 = scmp.eq.s32.totalorder %s35, 1
    %p331 = por %p329, %p330
    %p333 = scmp.ne.s32.totalorder %s318, %s332
    %p334 = scmp.eq.s32.totalorder %s35, 0
    %p335 = por %p333, %p334
    %s337 = sadd.s32 %s336, 1
    %p340 = scmp.eq.s32.totalorder %s29, 1
    %p341 = scmp.ne.s32.totalorder %s336, %s338
    %p342 = scmp.eq.s32.totalorder %s29, 0
    %p343 = por %p341, %p342
    %p344 = scmp.ne.s32.totalorder %s336, %s338
    %p345 = scmp.eq.s32.totalorder %s34, 1
    %p346 = por %p344, %p345
    %p347 = scmp.ne.s32.totalorder %s338, %s339
    %p348 = scmp.eq.s32.totalorder %s34, 0
    %p349 = por %p347, %p348
    %p350 = scmp.ne.s32.totalorder %s338, %s339
    %p351 = scmp.eq.s32.totalorder %s35, 1
    %p352 = por %p350, %p351
    %p354 = scmp.ne.s32.totalorder %s339, %s353
    %p355 = scmp.eq.s32.totalorder %s35, 0
    %p356 = por %p354, %p355
    %s358 = sadd.s32 %s357, 1
    %p361 = scmp.eq.s32.totalorder %s29, 1
    %p362 = scmp.ne.s32.totalorder %s357, %s359
    %p363 = scmp.eq.s32.totalorder %s29, 0
    %p364 = por %p362, %p363
    %p365 = scmp.ne.s32.totalorder %s357, %s359
    %p366 = scmp.eq.s32.totalorder %s34, 1
    %p367 = por %p365, %p366
    %p368 = scmp.ne.s32.totalorder %s359, %s360
    %p369 = scmp.eq.s32.totalorder %s34, 0
    %p370 = por %p368, %p369
    %p371 = scmp.ne.s32.totalorder %s359, %s360
    %p372 = scmp.eq.s32.totalorder %s35, 1
    %p373 = por %p371, %p372
    %p375 = scmp.ne.s32.totalorder %s360, %s374
    %p376 = scmp.eq.s32.totalorder %s35, 0
    %p377 = por %p375, %p376
    %s379 = sadd.s32 %s378, 1
    %p382 = scmp.eq.s32.totalorder %s29, 1
    %p383 = scmp.ne.s32.totalorder %s378, %s380
    %p384 = scmp.eq.s32.totalorder %s29, 0
    %p385 = por %p383, %p384
    %p386 = scmp.ne.s32.totalorder %s378, %s380
    %p387 = scmp.eq.s32.totalorder %s34, 1
    %p388 = por %p386, %p387
    %p389 = scmp.ne.s32.totalorder %s380, %s381
    %p390 = scmp.eq.s32.totalorder %s34, 0
    %p391 = por %p389, %p390
    %p392 = scmp.ne.s32.totalorder %s380, %s381
    %p393 = scmp.eq.s32.totalorder %s35, 1
    %p394 = por %p392, %p393
    %p396 = scmp.ne.s32.totalorder %s381, %s395
    %p397 = scmp.eq.s32.totalorder %s35, 0
    %p398 = por %p396, %p397
    %s400 = sadd.s32 %s399, 1
    %p403 = scmp.eq.s32.totalorder %s29, 1
    %p404 = scmp.ne.s32.totalorder %s399, %s401
    %p405 = scmp.eq.s32.totalorder %s29, 0
    %p406 = por %p404, %p405
    %p407 = scmp.ne.s32.totalorder %s399, %s401
    %p408 = scmp.eq.s32.totalorder %s34, 1
    %p409 = por %p407, %p408
    %p410 = scmp.ne.s32.totalorder %s401, %s402
    %p411 = scmp.eq.s32.totalorder %s34, 0
    %p412 = por %p410, %p411
    %p413 = scmp.ne.s32.totalorder %s401, %s402
    %p414 = scmp.eq.s32.totalorder %s35, 1
    %p415 = por %p413, %p414
    %p417 = scmp.ne.s32.totalorder %s402, %s416
    %p418 = scmp.eq.s32.totalorder %s35, 0
    %p419 = por %p417, %p418
    %s421 = sadd.s32 %s420, 1
    %p424 = scmp.eq.s32.totalorder %s29, 1
    %p425 = scmp.ne.s32.totalorder %s420, %s422
    %p426 = scmp.eq.s32.totalorder %s29, 0
    %p427 = por %p425, %p426
    %p428 = scmp.ne.s32.totalorder %s420, %s422
    %p429 = scmp.eq.s32.totalorder %s34, 1
    %p430 = por %p428, %p429
    %p431 = scmp.ne.s32.totalorder %s422, %s423
    %p432 = scmp.eq.s32.totalorder %s34, 0
    %p433 = por %p431, %p432
    %p434 = scmp.ne.s32.totalorder %s422, %s423
    %p435 = scmp.eq.s32.totalorder %s35, 1
    %p436 = por %p434, %p435
    %p438 = scmp.ne.s32.totalorder %s423, %s437
    %p439 = scmp.eq.s32.totalorder %s35, 0
    %p440 = por %p438, %p439
    %s442 = sadd.s32 %s441, 1
    %p445 = scmp.eq.s32.totalorder %s29, 1
    %p446 = scmp.ne.s32.totalorder %s441, %s443
    %p447 = scmp.eq.s32.totalorder %s29, 0
    %p448 = por %p446, %p447
    %p449 = scmp.ne.s32.totalorder %s441, %s443
    %p450 = scmp.eq.s32.totalorder %s34, 1
    %p451 = por %p449, %p450
    %p452 = scmp.ne.s32.totalorder %s443, %s444
    %p453 = scmp.eq.s32.totalorder %s34, 0
    %p454 = por %p452, %p453
    %p455 = scmp.ne.s32.totalorder %s443, %s444
    %p456 = scmp.eq.s32.totalorder %s35, 1
    %p457 = por %p455, %p456
    %p459 = scmp.ne.s32.totalorder %s444, %s458
    %p460 = scmp.eq.s32.totalorder %s35, 0
    %p461 = por %p459, %p460
    %s463 = sadd.s32 %s462, 1
    %p466 = scmp.eq.s32.totalorder %s29, 1
    %p467 = scmp.ne.s32.totalorder %s462, %s464
    %p468 = scmp.eq.s32.totalorder %s29, 0
    %p469 = por %p467, %p468
    %p470 = scmp.ne.s32.totalorder %s462, %s464
    %p471 = scmp.eq.s32.totalorder %s34, 1
    %p472 = por %p470, %p471
    %p473 = scmp.ne.s32.totalorder %s464, %s465
    %p474 = scmp.eq.s32.totalorder %s34, 0
    %p475 = por %p473, %p474
    %p476 = scmp.ne.s32.totalorder %s464, %s465
    %p477 = scmp.eq.s32.totalorder %s35, 1
    %p478 = por %p476, %p477
    %p480 = scmp.ne.s32.totalorder %s465, %s479
    %p481 = scmp.eq.s32.totalorder %s35, 0
    %p482 = por %p480, %p481
    %s484 = sadd.s32 %s483, 1
    %p487 = scmp.eq.s32.totalorder %s29, 1
    %p488 = scmp.ne.s32.totalorder %s483, %s485
    %p489 = scmp.eq.s32.totalorder %s29, 0
    %p490 = por %p488, %p489
    %p491 = scmp.ne.s32.totalorder %s483, %s485
    %p492 = scmp.eq.s32.totalorder %s34, 1
    %p493 = por %p491, %p492
    %p494 = scmp.ne.s32.totalorder %s485, %s486
    %p495 = scmp.eq.s32.totalorder %s34, 0
    %p496 = por %p494, %p495
    %p497 = scmp.ne.s32.totalorder %s485, %s486
    %p498 = scmp.eq.s32.totalorder %s35, 1
    %p499 = por %p497, %p498
    %p501 = scmp.ne.s32.totalorder %s486, %s500
    %p502 = scmp.eq.s32.totalorder %s35, 0
    %p503 = por %p501, %p502
    %s505 = sadd.s32 %s504, 1
    %p508 = scmp.eq.s32.totalorder %s29, 1
    %p509 = scmp.ne.s32.totalorder %s504, %s506
    %p510 = scmp.eq.s32.totalorder %s29, 0
    %p511 = por %p509, %p510
    %p512 = scmp.ne.s32.totalorder %s504, %s506
    %p513 = scmp.eq.s32.totalorder %s34, 1
    %p514 = por %p512, %p513
    %p515 = scmp.ne.s32.totalorder %s506, %s507
    %p516 = scmp.eq.s32.totalorder %s34, 0
    %p517 = por %p515, %p516
    %p518 = scmp.ne.s32.totalorder %s506, %s507
    %p519 = scmp.eq.s32.totalorder %s35, 1
    %p520 = por %p518, %p519
    %p522 = scmp.ne.s32.totalorder %s507, %s521
    %p523 = scmp.eq.s32.totalorder %s35, 0
    %p524 = por %p522, %p523
    %s525 = ssub.s32 %s29, %s36
    %p526 = scmp.eq.s32.totalorder %s525, 0
    %s528 = sadd.s32 %s527, 1
    %s529 = scalar_select %p526, %s527, %s528
    %p532 = pneg %p526
    %p533 = scmp.eq.s32.totalorder %s29, 1
    %p534 = por %p532, %p533
    %p535 = scmp.ne.s32.totalorder %s527, %s530
    %p536 = scmp.eq.s32.totalorder %s29, 0
    %p537 = por %p535, %p536
    %p538 = scmp.ne.s32.totalorder %s527, %s530
    %p539 = scmp.eq.s32.totalorder %s34, 1
    %p540 = por %p538, %p539
    %p541 = scmp.ne.s32.totalorder %s530, %s531
    %p542 = scmp.eq.s32.totalorder %s34, 0
    %p543 = por %p541, %p542
    %p544 = scmp.ne.s32.totalorder %s530, %s531
    %p545 = scmp.eq.s32.totalorder %s35, 1
    %p546 = por %p544, %p545
    %p548 = scmp.ne.s32.totalorder %s531, %s547
    %p549 = scmp.eq.s32.totalorder %s35, 0
    %p550 = por %p548, %p549
    %p551 = scmp.le.s32.totalorder 1, %s29
    %p552 = scmp.lt.s32.totalorder %s29, 3
    %p553 = pnand %p551, %p552
    %p554 = pneg %p553
    // Predicated region
    $region9: #{delicacynet_forward.3} parent=5 // pred_check
      _
    $region10: #{delicacynet_forward.3} parent=5 // pred_check_branch
      %556 = sbr.rel (%p553) target = $region12
    $region11: #{delicacynet_forward.3} parent=5 // pred_region
      %s557 = ssub.s32 %s29, 1
      // Predicated region
      $region13: #{delicacynet_forward.3} parent=11 // pred_check
        %p558 = pneg %p76
      $region14: #{delicacynet_forward.3} parent=11 // pred_check_branch
        %560 = sbr.rel (%p558) target = $region16
      $region15: #{delicacynet_forward.3} parent=11 // pred_region
        _
      $region16: #{delicacynet_forward.3} parent=11 // pred_fallthru
        _
      // Predicated region
      $region17: #{delicacynet_forward.3} parent=11 // pred_check
        %p561 = pneg %p97
      $region18: #{delicacynet_forward.3} parent=11 // pred_check_branch
        %563 = sbr.rel (%p561) target = $region20
      $region19: #{delicacynet_forward.3} parent=11 // pred_region
        _
      $region20: #{delicacynet_forward.3} parent=11 // pred_fallthru
        _
      // Predicated region
      $region21: #{delicacynet_forward.3} parent=11 // pred_check
        %p564 = pneg %p118
      $region22: #{delicacynet_forward.3} parent=11 // pred_check_branch
        %566 = sbr.rel (%p564) target = $region24
      $region23: #{delicacynet_forward.3} parent=11 // pred_region
        _
      $region24: #{delicacynet_forward.3} parent=11 // pred_fallthru
        _
      // Predicated region
      $region25: #{delicacynet_forward.3} parent=11 // pred_check
        %p567 = pneg %p139
      $region26: #{delicacynet_forward.3} parent=11 // pred_check_branch
        %569 = sbr.rel (%p567) target = $region28
      $region27: #{delicacynet_forward.3} parent=11 // pred_region
        _
      $region28: #{delicacynet_forward.3} parent=11 // pred_fallthru
        _
      // Predicated region
      $region29: #{delicacynet_forward.3} parent=11 // pred_check
        %p570 = pneg %p160
      $region30: #{delicacynet_forward.3} parent=11 // pred_check_branch
        %572 = sbr.rel (%p570) target = $region32
      $region31: #{delicacynet_forward.3} parent=11 // pred_region
        _
      $region32: #{delicacynet_forward.3} parent=11 // pred_fallthru
        _
      // Predicated region
      $region33: #{delicacynet_forward.3} parent=11 // pred_check
        %p573 = pneg %p181
      $region34: #{delicacynet_forward.3} parent=11 // pred_check_branch
        %575 = sbr.rel (%p573) target = $region36
      $region35: #{delicacynet_forward.3} parent=11 // pred_region
        _
      $region36: #{delicacynet_forward.3} parent=11 // pred_fallthru
        _
      // Predicated region
      $region37: #{delicacynet_forward.3} parent=11 // pred_check
        %p576 = pneg %p202
      $region38: #{delicacynet_forward.3} parent=11 // pred_check_branch
        %578 = sbr.rel (%p576) target = $region40
      $region39: #{delicacynet_forward.3} parent=11 // pred_region
        _
      $region40: #{delicacynet_forward.3} parent=11 // pred_fallthru
        _
      // Predicated region
      $region41: #{delicacynet_forward.3} parent=11 // pred_check
        %p579 = pneg %p223
      $region42: #{delicacynet_forward.3} parent=11 // pred_check_branch
        %581 = sbr.rel (%p579) target = $region44
      $region43: #{delicacynet_forward.3} parent=11 // pred_region
        _
      $region44: #{delicacynet_forward.3} parent=11 // pred_fallthru
        _
      // Predicated region
      $region45: #{delicacynet_forward.3} parent=11 // pred_check
        %p582 = pneg %p244
      $region46: #{delicacynet_forward.3} parent=11 // pred_check_branch
        %584 = sbr.rel (%p582) target = $region48
      $region47: #{delicacynet_forward.3} parent=11 // pred_region
        _
      $region48: #{delicacynet_forward.3} parent=11 // pred_fallthru
        _
      // Predicated region
      $region49: #{delicacynet_forward.3} parent=11 // pred_check
        %p585 = pneg %p265
      $region50: #{delicacynet_forward.3} parent=11 // pred_check_branch
        %587 = sbr.rel (%p585) target = $region52
      $region51: #{delicacynet_forward.3} parent=11 // pred_region
        _
      $region52: #{delicacynet_forward.3} parent=11 // pred_fallthru
        _
      // Predicated region
      $region53: #{delicacynet_forward.3} parent=11 // pred_check
        %p588 = pneg %p286
      $region54: #{delicacynet_forward.3} parent=11 // pred_check_branch
        %590 = sbr.rel (%p588) target = $region56
      $region55: #{delicacynet_forward.3} parent=11 // pred_region
        _
      $region56: #{delicacynet_forward.3} parent=11 // pred_fallthru
        _
      // Predicated region
      $region57: #{delicacynet_forward.3} parent=11 // pred_check
        %p591 = pneg %p307
      $region58: #{delicacynet_forward.3} parent=11 // pred_check_branch
        %593 = sbr.rel (%p591) target = $region60
      $region59: #{delicacynet_forward.3} parent=11 // pred_region
        _
      $region60: #{delicacynet_forward.3} parent=11 // pred_fallthru
        _
      // Predicated region
      $region61: #{delicacynet_forward.3} parent=11 // pred_check
        %p594 = pneg %p328
      $region62: #{delicacynet_forward.3} parent=11 // pred_check_branch
        %596 = sbr.rel (%p594) target = $region64
      $region63: #{delicacynet_forward.3} parent=11 // pred_region
        _
      $region64: #{delicacynet_forward.3} parent=11 // pred_fallthru
        _
      // Predicated region
      $region65: #{delicacynet_forward.3} parent=11 // pred_check
        %p597 = pneg %p349
      $region66: #{delicacynet_forward.3} parent=11 // pred_check_branch
        %599 = sbr.rel (%p597) target = $region68
      $region67: #{delicacynet_forward.3} parent=11 // pred_region
        _
      $region68: #{delicacynet_forward.3} parent=11 // pred_fallthru
        _
      // Predicated region
      $region69: #{delicacynet_forward.3} parent=11 // pred_check
        %p600 = pneg %p370
      $region70: #{delicacynet_forward.3} parent=11 // pred_check_branch
        %602 = sbr.rel (%p600) target = $region72
      $region71: #{delicacynet_forward.3} parent=11 // pred_region
        _
      $region72: #{delicacynet_forward.3} parent=11 // pred_fallthru
        _
      // Predicated region
      $region73: #{delicacynet_forward.3} parent=11 // pred_check
        %p603 = pneg %p391
      $region74: #{delicacynet_forward.3} parent=11 // pred_check_branch
        %605 = sbr.rel (%p603) target = $region76
      $region75: #{delicacynet_forward.3} parent=11 // pred_region
        _
      $region76: #{delicacynet_forward.3} parent=11 // pred_fallthru
        _
      // Predicated region
      $region77: #{delicacynet_forward.3} parent=11 // pred_check
        %p606 = pneg %p412
      $region78: #{delicacynet_forward.3} parent=11 // pred_check_branch
        %608 = sbr.rel (%p606) target = $region80
      $region79: #{delicacynet_forward.3} parent=11 // pred_region
        _
      $region80: #{delicacynet_forward.3} parent=11 // pred_fallthru
        _
      // Predicated region
      $region81: #{delicacynet_forward.3} parent=11 // pred_check
        %p609 = pneg %p433
      $region82: #{delicacynet_forward.3} parent=11 // pred_check_branch
        %611 = sbr.rel (%p609) target = $region84
      $region83: #{delicacynet_forward.3} parent=11 // pred_region
        _
      $region84: #{delicacynet_forward.3} parent=11 // pred_fallthru
        _
      // Predicated region
      $region85: #{delicacynet_forward.3} parent=11 // pred_check
        %p612 = pneg %p454
      $region86: #{delicacynet_forward.3} parent=11 // pred_check_branch
        %614 = sbr.rel (%p612) target = $region88
      $region87: #{delicacynet_forward.3} parent=11 // pred_region
        _
      $region88: #{delicacynet_forward.3} parent=11 // pred_fallthru
        _
      // Predicated region
      $region89: #{delicacynet_forward.3} parent=11 // pred_check
        %p615 = pneg %p475
      $region90: #{delicacynet_forward.3} parent=11 // pred_check_branch
        %617 = sbr.rel (%p615) target = $region92
      $region91: #{delicacynet_forward.3} parent=11 // pred_region
        _
      $region92: #{delicacynet_forward.3} parent=11 // pred_fallthru
        _
      // Predicated region
      $region93: #{delicacynet_forward.3} parent=11 // pred_check
        %p618 = pneg %p496
      $region94: #{delicacynet_forward.3} parent=11 // pred_check_branch
        %620 = sbr.rel (%p618) target = $region96
      $region95: #{delicacynet_forward.3} parent=11 // pred_region
        _
      $region96: #{delicacynet_forward.3} parent=11 // pred_fallthru
        _
      // Predicated region
      $region97: #{delicacynet_forward.3} parent=11 // pred_check
        %p621 = pneg %p517
      $region98: #{delicacynet_forward.3} parent=11 // pred_check_branch
        %623 = sbr.rel (%p621) target = $region100
      $region99: #{delicacynet_forward.3} parent=11 // pred_region
        _
      $region100: #{delicacynet_forward.3} parent=11 // pred_fallthru
        _
    $region12: #{delicacynet_forward.3} parent=5 // pred_fallthru
      _
    %p624 = scmp.lt.s32.totalorder %s29, 2
    // Predicated region
    $region101: #{delicacynet_forward.3} parent=5 // pred_check
      %p625 = pneg %p624
    $region102: #{delicacynet_forward.3} parent=5 // pred_check_branch
      %627 = sbr.rel (%p625) target = $region104
    $region103: #{delicacynet_forward.3} parent=5 // pred_region
      // Predicated region
      $region105: #{delicacynet_forward.3} parent=103 // pred_check
        %p628 = pneg %p49
      $region106: #{delicacynet_forward.3} parent=103 // pred_check_branch
        %630 = sbr.rel (%p628) target = $region108
      $region107: #{delicacynet_forward.3} parent=103 // pred_region
        %p631 = scmp.lt.s32.totalorder %s29, 1
        %s632 = scalar_select %p631, %s29, 1
        %s633 = smul.addr %s632, 32
        %s634 = smul.addr %s633, 8
        %s635 = scalar_lea.vmem %s0, %s634
      $region108: #{delicacynet_forward.3} parent=103 // pred_fallthru
        _
    $region104: #{delicacynet_forward.3} parent=5 // pred_fallthru
      _
    %p636 = scmp.le.s32.totalorder 1, %s29
    %p637 = scmp.lt.s32.totalorder %s29, 3
    %p638 = pnand %p636, %p637
    %p639 = pneg %p638
    // Predicated region
    $region109: #{delicacynet_forward.3} parent=5 // pred_check
      _
    $region110: #{delicacynet_forward.3} parent=5 // pred_check_branch
      %641 = sbr.rel (%p638) target = $region112
    $region111: #{delicacynet_forward.3} parent=5 // pred_region
      %s642 = ssub.s32 %s29, 1
      %p643 = scmp.lt.s32.totalorder %s34, 1
      %s644 = scalar_select %p643, %s34, 1
      %s645 = smul.addr %s644, 32
      %s646 = smul.addr %s645, 8
      %s647 = scalar_lea.vmem %s0, %s646
      %p648 = pneg %p55
      %p649 = pneg %p52
      %p650 = pneg %p76
      %p651 = pneg %p73
      %p652 = pneg %p97
      %p653 = pneg %p94
      %p654 = pneg %p118
      %p655 = pneg %p115
      %p656 = pneg %p139
      %p657 = pneg %p136
      %p658 = pneg %p160
      %p659 = pneg %p157
      %p660 = pneg %p181
      %p661 = pneg %p178
      %p662 = pneg %p202
      %p663 = pneg %p199
      %p664 = pneg %p223
      %p665 = pneg %p220
      %p666 = pneg %p244
      %p667 = pneg %p241
      %p668 = pneg %p265
      %p669 = pneg %p262
      %p670 = pneg %p286
      %p671 = pneg %p283
      %p672 = pneg %p307
      %p673 = pneg %p304
      %p674 = pneg %p328
      %p675 = pneg %p325
      %p676 = pneg %p349
      %p677 = pneg %p346
      %p678 = pneg %p370
      %p679 = pneg %p367
      %p680 = pneg %p391
      %p681 = pneg %p388
      %p682 = pneg %p412
      %p683 = pneg %p409
      %p684 = pneg %p433
      %p685 = pneg %p430
      %p686 = pneg %p454
      %p687 = pneg %p451
      %p688 = pneg %p475
      %p689 = pneg %p472
      %p690 = pneg %p496
      %p691 = pneg %p493
      %p692 = pneg %p517
      %p693 = pneg %p514
      %p694 = pneg %p543
      %p695 = pneg %p540
      %p696 = scmp.lt.s32.totalorder %s34, 1
      %s697 = scalar_select %p696, %s34, 1
      %s698 = scalar_lea.vmem %s23, %s697
      %p699 = scmp.lt.s32.totalorder %s34, 1
      %s700 = scalar_select %p699, %s34, 1
      %s701 = smul.addr %s700, 32
      %s702 = smul.addr %s701, 8
      %s703 = scalar_lea.vmem %s0, %s702
      %p704 = scmp.lt.s32.totalorder %s34, 1
      %s705 = scalar_select %p704, %s34, 1
      %s706 = scalar_lea.vmem %s23, %s705
      %v707 = vld [vmem:[%s703] sm:$0xff]
      %v708 = vld [vmem:[%s703 + $0x8] sm:$0xff]
      %v709 = vld [vmem:[%s703 + $0x10] sm:$0xff]
      %v710 = vld [vmem:[%s703 + $0x18] sm:$0xff]
      %v711 = vld [vmem:[%s703 + $0x20] sm:$0xff]
      %v712 = vld [vmem:[%s703 + $0x28] sm:$0xff]
      %v713 = vld [vmem:[%s703 + $0x30] sm:$0xff]
      %v714 = vld [vmem:[%s703 + $0x38] sm:$0xff]
      %v715 = vld [vmem:[%s703 + $0x40] sm:$0xff]
      %v716 = vld [vmem:[%s703 + $0x48] sm:$0xff]
      %v717 = vld [vmem:[%s703 + $0x50] sm:$0xff]
      %v718 = vld [vmem:[%s703 + $0x58] sm:$0xff]
      %v719 = vld [vmem:[%s703 + $0x60] sm:$0xff]
      %v720 = vld [vmem:[%s703 + $0x68] sm:$0xff]
      %v721 = vld [vmem:[%s703 + $0x70] sm:$0xff]
      %v722 = vld [vmem:[%s703 + $0x78] sm:$0xff]
      %v723 = vld [vmem:[%s703 + $0x80] sm:$0xff]
      %v724 = vld [vmem:[%s703 + $0x88] sm:$0xff]
      %v725 = vld [vmem:[%s703 + $0x90] sm:$0xff]
      %v726 = vld [vmem:[%s703 + $0x98] sm:$0xff]
      %v727 = vld [vmem:[%s703 + $0xa0] sm:$0xff]
      %v728 = vld [vmem:[%s703 + $0xa8] sm:$0xff]
      %v729 = vld [vmem:[%s703 + $0xb0] sm:$0xff]
      %v730 = vld [vmem:[%s703 + $0xb8] sm:$0xff]
      %v731 = vld [vmem:[%s703 + $0xc0] sm:$0xff]
      %v732 = vld [vmem:[%s703 + $0xc8] sm:$0xff]
      %v733 = vld [vmem:[%s703 + $0xd0] sm:$0xff]
      %v734 = vld [vmem:[%s703 + $0xd8] sm:$0xff]
      %v735 = vld [vmem:[%s703 + $0xe0] sm:$0xff]
      %v736 = vld [vmem:[%s703 + $0xe8] sm:$0xff]
      %v737 = vld [vmem:[%s703 + $0xf0] sm:$0xff]
      %v738 = vld [vmem:[%s703 + $0xf8] sm:$0xff]
      %v739 = vld [vmem:[%s1] sm:$0xff]
      %v740 = vld [vmem:[%s1 + $0x8] sm:$0xff]
      %v741 = vld [vmem:[%s1 + $0x10] sm:$0xff]
      %v742 = vld [vmem:[%s1 + $0x18] sm:$0xff]
      %v743 = vld [vmem:[%s1 + $0x20] sm:$0xff]
      %v744 = vld [vmem:[%s1 + $0x28] sm:$0xff]
      %v745 = vld [vmem:[%s1 + $0x30] sm:$0xff]
      %v746 = vld [vmem:[%s1 + $0x38] sm:$0xff]
      %v747 = vld [vmem:[%s1 + $0x40] sm:$0xff]
      %v748 = vld [vmem:[%s1 + $0x48] sm:$0xff]
      %v749 = vld [vmem:[%s1 + $0x50] sm:$0xff]
      %v750 = vld [vmem:[%s1 + $0x58] sm:$0xff]
      %v751 = vld [vmem:[%s1 + $0x60] sm:$0xff]
      %v752 = vld [vmem:[%s1 + $0x68] sm:$0xff]
      %v753 = vld [vmem:[%s1 + $0x70] sm:$0xff]
      %v754 = vld [vmem:[%s1 + $0x78] sm:$0xff]
      %v755 = vld [vmem:[%s1 + $0x80] sm:$0xff]
      %v756 = vld [vmem:[%s1 + $0x88] sm:$0xff]
      %v757 = vld [vmem:[%s1 + $0x90] sm:$0xff]
      %v758 = vld [vmem:[%s1 + $0x98] sm:$0xff]
      %v759 = vld [vmem:[%s1 + $0xa0] sm:$0xff]
      %v760 = vld [vmem:[%s1 + $0xa8] sm:$0xff]
      %v761 = vld [vmem:[%s1 + $0xb0] sm:$0xff]
      %v762 = vld [vmem:[%s1 + $0xb8] sm:$0xff]
      %v763 = vld [vmem:[%s1 + $0xc0] sm:$0xff]
      %v764 = vld [vmem:[%s1 + $0xc8] sm:$0xff]
      %v765 = vld [vmem:[%s1 + $0xd0] sm:$0xff]
      %v766 = vld [vmem:[%s1 + $0xd8] sm:$0xff]
      %v767 = vld [vmem:[%s1 + $0xe0] sm:$0xff]
      %v768 = vld [vmem:[%s1 + $0xe8] sm:$0xff]
      %v769 = vld [vmem:[%s1 + $0xf0] sm:$0xff]
      %v770 = vld [vmem:[%s1 + $0xf8] sm:$0xff]
      %v771 = vld [vmem:[%s2] sm:$0x1]
      %v772 = vld [vmem:[%s15] sm:$0x1f]
      %v773 = vld [vmem:[%s16] sm:$0x1f]
      %v774 = vld [vmem:[%s3] sm:$0xff]
      %v775 = vld [vmem:[%s3 + $0x8] sm:$0xff]
      %v776 = vld [vmem:[%s3 + $0x10] sm:$0xff]
      %v777 = vld [vmem:[%s3 + $0x18] sm:$0xff]
      %v778 = vld [vmem:[%s4] sm:$0x1]
      %vm779 = vcmask 261120
      %v781 = vsel %vm779, 0.0, 0
      %783 = vmatprep.subr.mxu0 0.0
      %784 = vmatpush1.msra.mxu0 0.0
      %785 = vmatprep.subr.mxu0 0.0
      %786 = vmatpush1.msra.mxu0 0.0
      %787 = vmatprep.subr.mxu0 0.0
      %788 = vmatpush1.msra.mxu0 0.0
      %789 = vmatprep.subr.mxu0 0.0
      %790 = vmatpush1.msra.mxu0 0.0
      %791 = vmatprep.subr.mxu0 0.0
      %792 = vmatpush1.msra.mxu0 0.0
      %793 = vmatprep.subr.mxu0 0.0
      %794 = vmatpush1.msra.mxu0 0.0
      %795 = vmatprep.subr.mxu0 0.0
      %796 = vmatpush1.msra.mxu0 0.0
      %797 = vmatprep.subr.mxu0 0.0
      %798 = vmatpush1.msra.mxu0 0.0
      %799 = vmatprep.subr.mxu0 0.0
      %800 = vmatpush1.msra.mxu0 0.0
      %801 = vmatprep.subr.mxu0 0.0
      %802 = vmatpush1.msra.mxu0 0.0
      %803 = vmatprep.subr.mxu0 0.0
      %804 = vmatpush1.msra.mxu0 0.0
      %805 = vmatprep.subr.mxu0 0.0
      %806 = vmatpush1.msra.mxu0 0.0
      %807 = vmatprep.subr.mxu0 0.0
      %808 = vmatpush1.msra.mxu0 %v777
      %809 = vmatprep.subr.mxu0 0.0
      %810 = vmatpush1.msra.mxu0 %v776
      %811 = vmatprep.subr.mxu0 0.0
      %812 = vmatpush1.msra.mxu0 %v775
      %813 = vmatprep.subr.mxu0 0.0
      %814 = vmatpush1.msra.mxu0 %v774
      %815 = vmatprep.subr.mxu0 0.0
      %816 = vmatpush2.msra.mxu0 0.0
      %817 = vmatprep.subr.mxu0 0.0
      %818 = vmatpush2.msra.mxu0 0.0
      %819 = vmatprep.subr.mxu0 0.0
      %820 = vmatpush2.msra.mxu0 0.0
      %821 = vmatprep.subr.mxu0 0.0
      %822 = vmatpush2.msra.mxu0 0.0
      %823 = vmatprep.subr.mxu0 0.0
      %824 = vmatpush2.msra.mxu0 0.0
      %825 = vmatprep.subr.mxu0 0.0
      %826 = vmatpush2.msra.mxu0 0.0
      %827 = vmatprep.subr.mxu0 0.0
      %828 = vmatpush2.msra.mxu0 0.0
      %829 = vmatprep.subr.mxu0 0.0
      %830 = vmatpush2.msra.mxu0 0.0
      %831 = vmatprep.subr.mxu0 0.0
      %832 = vmatpush2.msra.mxu0 0.0
      %833 = vmatprep.subr.mxu0 0.0
      %834 = vmatpush2.msra.mxu0 0.0
      %835 = vmatprep.subr.mxu0 0.0
      %836 = vmatpush2.msra.mxu0 0.0
      %837 = vmatprep.subr.mxu0 0.0
      %838 = vmatpush2.msra.mxu0 0.0
      %839 = vmatprep.subr.mxu0 0.0
      %840 = vmatpush2.msra.mxu0 0.0
      %841 = vmatprep.subr.mxu0 0.0
      %842 = vmatpush2.msra.mxu0 0.0
      %843 = vmatprep.subr.mxu0 0.0
      %844 = vmatpush2.msra.mxu0 0.0
      %845 = vmatprep.subr.mxu0 0.0
      %846 = vmatpush2.msra.mxu0 0.0
      %847 = vmatprep.mubr.f32.mxu0 0.0
      %848 = vmatmul.mubr.f32.gmra.mxu0 %v781
      %v849 = vpop.f32.mrf.mxu0
      %v850 = vadd.f32 %v778, %v849
      %v851 = vpop.f32.mrf.mxu0
      %852 = vdwg.mxu0
      %v853 = vld [vmem:[%s5] sm:$0xff]
      %v854 = vld [vmem:[%s5 + $0x8] sm:$0xff]
      %v855 = vld [vmem:[%s5 + $0x10] sm:$0xff]
      %v856 = vld [vmem:[%s5 + $0x18] sm:$0xff]
      %v857 = vld [vmem:[%s6] sm:$0x1]
      %v859 = vsel %vm779, %v850, 0
      %861 = vmatprep.subr.mxu0 0.0
      %862 = vmatpush1.msra.mxu0 0.0
      %863 = vmatprep.subr.mxu0 0.0
      %864 = vmatpush1.msra.mxu0 0.0
      %865 = vmatprep.subr.mxu0 0.0
      %866 = vmatpush1.msra.mxu0 0.0
      %867 = vmatprep.subr.mxu0 0.0
      %868 = vmatpush1.msra.mxu0 0.0
      %869 = vmatprep.subr.mxu0 0.0
      %870 = vmatpush1.msra.mxu0 0.0
      %871 = vmatprep.subr.mxu0 0.0
      %872 = vmatpush1.msra.mxu0 0.0
      %873 = vmatprep.subr.mxu0 0.0
      %874 = vmatpush1.msra.mxu0 0.0
      %875 = vmatprep.subr.mxu0 0.0
      %876 = vmatpush1.msra.mxu0 0.0
      %877 = vmatprep.subr.mxu0 0.0
      %878 = vmatpush1.msra.mxu0 0.0
      %879 = vmatprep.subr.mxu0 0.0
      %880 = vmatpush1.msra.mxu0 0.0
      %881 = vmatprep.subr.mxu0 0.0
      %882 = vmatpush1.msra.mxu0 0.0
      %883 = vmatprep.subr.mxu0 0.0
      %884 = vmatpush1.msra.mxu0 0.0
      %885 = vmatprep.subr.mxu0 0.0
      %886 = vmatpush1.msra.mxu0 %v856
      %887 = vmatprep.subr.mxu0 0.0
      %888 = vmatpush1.msra.mxu0 %v855
      %889 = vmatprep.subr.mxu0 0.0
      %890 = vmatpush1.msra.mxu0 %v854
      %891 = vmatprep.subr.mxu0 0.0
      %892 = vmatpush1.msra.mxu0 %v853
      %893 = vmatprep.subr.mxu0 0.0
      %894 = vmatpush2.msra.mxu0 0.0
      %895 = vmatprep.subr.mxu0 0.0
      %896 = vmatpush2.msra.mxu0 0.0
      %897 = vmatprep.subr.mxu0 0.0
      %898 = vmatpush2.msra.mxu0 0.0
      %899 = vmatprep.subr.mxu0 0.0
      %900 = vmatpush2.msra.mxu0 0.0
      %901 = vmatprep.subr.mxu0 0.0
      %902 = vmatpush2.msra.mxu0 0.0
      %903 = vmatprep.subr.mxu0 0.0
      %904 = vmatpush2.msra.mxu0 0.0
      %905 = vmatprep.subr.mxu0 0.0
      %906 = vmatpush2.msra.mxu0 0.0
      %907 = vmatprep.subr.mxu0 0.0
      %908 = vmatpush2.msra.mxu0 0.0
      %909 = vmatprep.subr.mxu0 0.0
      %910 = vmatpush2.msra.mxu0 0.0
      %911 = vmatprep.subr.mxu0 0.0
      %912 = vmatpush2.msra.mxu0 0.0
      %913 = vmatprep.subr.mxu0 0.0
      %914 = vmatpush2.msra.mxu0 0.0
      %915 = vmatprep.subr.mxu0 0.0
      %916 = vmatpush2.msra.mxu0 0.0
      %917 = vmatprep.subr.mxu0 0.0
      %918 = vmatpush2.msra.mxu0 0.0
      %919 = vmatprep.subr.mxu0 0.0
      %920 = vmatpush2.msra.mxu0 0.0
      %921 = vmatprep.subr.mxu0 0.0
      %922 = vmatpush2.msra.mxu0 0.0
      %923 = vmatprep.subr.mxu0 0.0
      %924 = vmatpush2.msra.mxu0 0.0
      %925 = vmatprep.mubr.f32.mxu0 0.0
      %926 = vmatmul.mubr.f32.gmra.mxu0 %v859
      %v927 = vpop.f32.mrf.mxu0
      %v928 = vadd.f32 %v857, %v927
      %v929 = vpop.f32.mrf.mxu0
      %930 = vdwg.mxu0
      %v931 = vadd.f32 %v928, 0.0
      %vm932 = vcmask 253952
      %v933 = vsel %vm932, %v931, 0.0
      %934 = vadd.xlane.f32.xlu0 %v933
      %v935 = vpop.xlane.xlu0 %934
      %v936 = vrcp.pop 32.0
      %v937 = vmul.f32 %v935, %v936
      %v938 = vsub.f32 %v931, %v937
      %v939 = vmul.f32 %v938, %v938
      %v940 = vsel %vm932, %v939, 0.0
      %941 = vadd.xlane.f32.xlu0 %v940
      %v942 = vpop.xlane.xlu0 %941
      %v943 = vmul.f32 %v942, %v936
      %v944 = vadd.f32 %v943, 1e-05
      %v945 = vrsqrt.pop %v944
      %v946 = vmul.f32 %v938, %v945
      %v947 = vmul.f32 %v946, %v772
      %v948 = vadd.f32 %v947, %v773
      %v949 = vadd.f32 %v948, %v771
      %v950 = vld [vmem:[%s7] sm:$0xff]
      %v951 = vld [vmem:[%s7 + $0x8] sm:$0xff]
      %v952 = vld [vmem:[%s7 + $0x10] sm:$0xff]
      %v953 = vld [vmem:[%s7 + $0x18] sm:$0xff]
      %v954 = vld [vmem:[%s8] sm:$0x1]
      %v956 = vsel %vm779, %v949, 0
      %958 = vmatprep.subr.mxu0 0.0
      %959 = vmatpush1.msra.mxu0 0.0
      %960 = vmatprep.subr.mxu0 0.0
      %961 = vmatpush1.msra.mxu0 0.0
      %962 = vmatprep.subr.mxu0 0.0
      %963 = vmatpush1.msra.mxu0 0.0
      %964 = vmatprep.subr.mxu0 0.0
      %965 = vmatpush1.msra.mxu0 0.0
      %966 = vmatprep.subr.mxu0 0.0
      %967 = vmatpush1.msra.mxu0 0.0
      %968 = vmatprep.subr.mxu0 0.0
      %969 = vmatpush1.msra.mxu0 0.0
      %970 = vmatprep.subr.mxu0 0.0
      %971 = vmatpush1.msra.mxu0 0.0
      %972 = vmatprep.subr.mxu0 0.0
      %973 = vmatpush1.msra.mxu0 0.0
      %974 = vmatprep.subr.mxu0 0.0
      %975 = vmatpush1.msra.mxu0 0.0
      %976 = vmatprep.subr.mxu0 0.0
      %977 = vmatpush1.msra.mxu0 0.0
      %978 = vmatprep.subr.mxu0 0.0
      %979 = vmatpush1.msra.mxu0 0.0
      %980 = vmatprep.subr.mxu0 0.0
      %981 = vmatpush1.msra.mxu0 0.0
      %982 = vmatprep.subr.mxu0 0.0
      %983 = vmatpush1.msra.mxu0 %v953
      %984 = vmatprep.subr.mxu0 0.0
      %985 = vmatpush1.msra.mxu0 %v952
      %986 = vmatprep.subr.mxu0 0.0
      %987 = vmatpush1.msra.mxu0 %v951
      %988 = vmatprep.subr.mxu0 0.0
      %989 = vmatpush1.msra.mxu0 %v950
      %990 = vmatprep.subr.mxu0 0.0
      %991 = vmatpush2.msra.mxu0 0.0
      %992 = vmatprep.subr.mxu0 0.0
      %993 = vmatpush2.msra.mxu0 0.0
      %994 = vmatprep.subr.mxu0 0.0
      %995 = vmatpush2.msra.mxu0 0.0
      %996 = vmatprep.subr.mxu0 0.0
      %997 = vmatpush2.msra.mxu0 0.0
      %998 = vmatprep.subr.mxu0 0.0
      %999 = vmatpush2.msra.mxu0 0.0
      %1000 = vmatprep.subr.mxu0 0.0
      %1001 = vmatpush2.msra.mxu0 0.0
      %1002 = vmatprep.subr.mxu0 0.0
      %1003 = vmatpush2.msra.mxu0 0.0
      %1004 = vmatprep.subr.mxu0 0.0
      %1005 = vmatpush2.msra.mxu0 0.0
      %1006 = vmatprep.subr.mxu0 0.0
      %1007 = vmatpush2.msra.mxu0 0.0
      %1008 = vmatprep.subr.mxu0 0.0
      %1009 = vmatpush2.msra.mxu0 0.0
      %1010 = vmatprep.subr.mxu0 0.0
      %1011 = vmatpush2.msra.mxu0 0.0
      %1012 = vmatprep.subr.mxu0 0.0
      %1013 = vmatpush2.msra.mxu0 0.0
      %1014 = vmatprep.subr.mxu0 0.0
      %1015 = vmatpush2.msra.mxu0 0.0
      %1016 = vmatprep.subr.mxu0 0.0
      %1017 = vmatpush2.msra.mxu0 0.0
      %1018 = vmatprep.subr.mxu0 0.0
      %1019 = vmatpush2.msra.mxu0 0.0
      %1020 = vmatprep.subr.mxu0 0.0
      %1021 = vmatpush2.msra.mxu0 0.0
      %1022 = vmatprep.mubr.f32.mxu0 0.0
      %1023 = vmatmul.mubr.f32.gmra.mxu0 %v956
      %v1024 = vpop.f32.mrf.mxu0
      %v1025 = vadd.f32 %v954, %v1024
      %v1026 = vpop.f32.mrf.mxu0
      %1027 = vdwg.mxu0
      %v1028 = vadd.f32 %v707, %v739
      %v1029 = vadd.f32 %v708, %v740
      %v1030 = vadd.f32 %v709, %v741
      %v1031 = vadd.f32 %v710, %v742
      %v1032 = vadd.f32 %v711, %v743
      %v1033 = vadd.f32 %v712, %v744
      %v1034 = vadd.f32 %v713, %v745
      %v1035 = vadd.f32 %v714, %v746
      %v1036 = vadd.f32 %v715, %v747
      %v1037 = vadd.f32 %v716, %v748
      %v1038 = vadd.f32 %v717, %v749
      %v1039 = vadd.f32 %v718, %v750
      %v1040 = vadd.f32 %v719, %v751
      %v1041 = vadd.f32 %v720, %v752
      %v1042 = vadd.f32 %v721, %v753
      %v1043 = vadd.f32 %v722, %v754
      %v1044 = vadd.f32 %v723, %v755
      %v1045 = vadd.f32 %v724, %v756
      %v1046 = vadd.f32 %v725, %v757
      %v1047 = vadd.f32 %v726, %v758
      %v1048 = vadd.f32 %v727, %v759
      %v1049 = vadd.f32 %v728, %v760
      %v1050 = vadd.f32 %v729, %v761
      %v1051 = vadd.f32 %v730, %v762
      %v1052 = vadd.f32 %v731, %v763
      %v1053 = vadd.f32 %v732, %v764
      %v1054 = vadd.f32 %v733, %v765
      %v1055 = vadd.f32 %v734, %v766
      %v1056 = vadd.f32 %v735, %v767
      %v1057 = vadd.f32 %v736, %v768
      %v1058 = vadd.f32 %v737, %v769
      %v1059 = vadd.f32 %v738, %v770
      %v1060 = vld [vmem:[%s9] sm:$0xff]
      %v1061 = vld [vmem:[%s9 + $0x8] sm:$0xff]
      %v1062 = vld [vmem:[%s9 + $0x10] sm:$0xff]
      %v1063 = vld [vmem:[%s9 + $0x18] sm:$0xff]
      %v1064 = vld [vmem:[%s10] sm:$0x1]
      %v1066 = vlaneseq
      %v1067 = vshrl.u32 %v1066, 7
      %v1068 = vsub.s32 0, %v1067
      %v1069 = vrot.slane %v1064, %v1068
      %v1072 = vsel %vm779, %v1028, 0
      %v1075 = vsel %vm779, %v1029, 0
      %v1078 = vsel %vm779, %v1030, 0
      %v1081 = vsel %vm779, %v1031, 0
      %v1084 = vsel %vm779, %v1032, 0
      %v1087 = vsel %vm779, %v1033, 0
      %v1090 = vsel %vm779, %v1034, 0
      %v1093 = vsel %vm779, %v1035, 0
      %v1096 = vsel %vm779, %v1036, 0
      %v1099 = vsel %vm779, %v1037, 0
      %v1102 = vsel %vm779, %v1038, 0
      %v1105 = vsel %vm779, %v1039, 0
      %v1108 = vsel %vm779, %v1040, 0
      %v1111 = vsel %vm779, %v1041, 0
      %v1114 = vsel %vm779, %v1042, 0
      %v1117 = vsel %vm779, %v1043, 0
      %v1120 = vsel %vm779, %v1044, 0
      %v1123 = vsel %vm779, %v1045, 0
      %v1126 = vsel %vm779, %v1046, 0
      %v1129 = vsel %vm779, %v1047, 0
      %v1132 = vsel %vm779, %v1048, 0
      %v1135 = vsel %vm779, %v1049, 0
      %v1138 = vsel %vm779, %v1050, 0
      %v1141 = vsel %vm779, %v1051, 0
      %v1144 = vsel %vm779, %v1052, 0
      %v1147 = vsel %vm779, %v1053, 0
      %v1150 = vsel %vm779, %v1054, 0
      %v1153 = vsel %vm779, %v1055, 0
      %v1156 = vsel %vm779, %v1056, 0
      %v1159 = vsel %vm779, %v1057, 0
      %v1162 = vsel %vm779, %v1058, 0
      %v1165 = vsel %vm779, %v1059, 0
      %1167 = vmatprep.subr.mxu0 0.0
      %1168 = vmatpush1.msra.mxu0 0.0
      %1169 = vmatprep.subr.mxu0 0.0
      %1170 = vmatpush1.msra.mxu0 0.0
      %1171 = vmatprep.subr.mxu0 0.0
      %1172 = vmatpush1.msra.mxu0 0.0
      %1173 = vmatprep.subr.mxu0 0.0
      %1174 = vmatpush1.msra.mxu0 0.0
      %1175 = vmatprep.subr.mxu0 0.0
      %1176 = vmatpush1.msra.mxu0 0.0
      %1177 = vmatprep.subr.mxu0 0.0
      %1178 = vmatpush1.msra.mxu0 0.0
      %1179 = vmatprep.subr.mxu0 0.0
      %1180 = vmatpush1.msra.mxu0 0.0
      %1181 = vmatprep.subr.mxu0 0.0
      %1182 = vmatpush1.msra.mxu0 0.0
      %1183 = vmatprep.subr.mxu0 0.0
      %1184 = vmatpush1.msra.mxu0 0.0
      %1185 = vmatprep.subr.mxu0 0.0
      %1186 = vmatpush1.msra.mxu0 0.0
      %1187 = vmatprep.subr.mxu0 0.0
      %1188 = vmatpush1.msra.mxu0 0.0
      %1189 = vmatprep.subr.mxu0 0.0
      %1190 = vmatpush1.msra.mxu0 0.0
      %1191 = vmatprep.subr.mxu0 0.0
      %1192 = vmatpush1.msra.mxu0 %v1063
      %1193 = vmatprep.subr.mxu0 0.0
      %1194 = vmatpush1.msra.mxu0 %v1062
      %1195 = vmatprep.subr.mxu0 0.0
      %1196 = vmatpush1.msra.mxu0 %v1061
      %1197 = vmatprep.subr.mxu0 0.0
      %1198 = vmatpush1.msra.mxu0 %v1060
      %1199 = vmatprep.subr.mxu0 0.0
      %1200 = vmatpush2.msra.mxu0 0.0
      %1201 = vmatprep.subr.mxu0 0.0
      %1202 = vmatpush2.msra.mxu0 0.0
      %1203 = vmatprep.subr.mxu0 0.0
      %1204 = vmatpush2.msra.mxu0 0.0
      %1205 = vmatprep.subr.mxu0 0.0
      %1206 = vmatpush2.msra.mxu0 0.0
      %1207 = vmatprep.subr.mxu0 0.0
      %1208 = vmatpush2.msra.mxu0 0.0
      %1209 = vmatprep.subr.mxu0 0.0
      %1210 = vmatpush2.msra.mxu0 0.0
      %1211 = vmatprep.subr.mxu0 0.0
      %1212 = vmatpush2.msra.mxu0 0.0
      %1213 = vmatprep.subr.mxu0 0.0
      %1214 = vmatpush2.msra.mxu0 0.0
      %1215 = vmatprep.subr.mxu0 0.0
      %1216 = vmatpush2.msra.mxu0 0.0
      %1217 = vmatprep.subr.mxu0 0.0
      %1218 = vmatpush2.msra.mxu0 0.0
      %1219 = vmatprep.subr.mxu0 0.0
      %1220 = vmatpush2.msra.mxu0 0.0
      %1221 = vmatprep.subr.mxu0 0.0
      %1222 = vmatpush2.msra.mxu0 0.0
      %1223 = vmatprep.subr.mxu0 0.0
      %1224 = vmatpush2.msra.mxu0 0.0
      %1225 = vmatprep.subr.mxu0 0.0
      %1226 = vmatpush2.msra.mxu0 0.0
      %1227 = vmatprep.subr.mxu0 0.0
      %1228 = vmatpush2.msra.mxu0 0.0
      %1229 = vmatprep.subr.mxu0 0.0
      %1230 = vmatpush2.msra.mxu0 0.0
      %1231 = vmatprep.mubr.f32.mxu0 0.0
      %1232 = vmatmul.mubr.f32.gmra.mxu0 %v1072
      %v1233 = vpop.f32.mrf.mxu0
      %v1234 = vadd.f32 %v1069, %v1233
      %v1235 = vpop.f32.mrf.mxu0
      %1236 = vmatprep.mubr.f32.mxu0 0.0
      %1237 = vmatmul.mubr.f32.gmra.mxu0 %v1075
      %v1238 = vpop.f32.mrf.mxu0
      %v1239 = vadd.f32 %v1069, %v1238
      %v1240 = vpop.f32.mrf.mxu0
      %1241 = vmatprep.mubr.f32.mxu0 0.0
      %1242 = vmatmul.mubr.f32.gmra.mxu0 %v1078
      %v1243 = vpop.f32.mrf.mxu0
      %v1244 = vadd.f32 %v1069, %v1243
      %v1245 = vpop.f32.mrf.mxu0
      %1246 = vmatprep.mubr.f32.mxu0 0.0
      %1247 = vmatmul.mubr.f32.gmra.mxu0 %v1081
      %v1248 = vpop.f32.mrf.mxu0
      %v1249 = vadd.f32 %v1069, %v1248
      %v1250 = vpop.f32.mrf.mxu0
      %1251 = vmatprep.mubr.f32.mxu0 0.0
      %1252 = vmatmul.mubr.f32.gmra.mxu0 %v1084
      %v1253 = vpop.f32.mrf.mxu0
      %v1254 = vadd.f32 %v1069, %v1253
      %v1255 = vpop.f32.mrf.mxu0
      %1256 = vmatprep.mubr.f32.mxu0 0.0
      %1257 = vmatmul.mubr.f32.gmra.mxu0 %v1087
      %v1258 = vpop.f32.mrf.mxu0
      %v1259 = vadd.f32 %v1069, %v1258
      %v1260 = vpop.f32.mrf.mxu0
      %1261 = vmatprep.mubr.f32.mxu0 0.0
      %1262 = vmatmul.mubr.f32.gmra.mxu0 %v1090
      %v1263 = vpop.f32.mrf.mxu0
      %v1264 = vadd.f32 %v1069, %v1263
      %v1265 = vpop.f32.mrf.mxu0
      %1266 = vmatprep.mubr.f32.mxu0 0.0
      %1267 = vmatmul.mubr.f32.gmra.mxu0 %v1093
      %v1268 = vpop.f32.mrf.mxu0
      %v1269 = vadd.f32 %v1069, %v1268
      %v1270 = vpop.f32.mrf.mxu0
      %1271 = vmatprep.mubr.f32.mxu0 0.0
      %1272 = vmatmul.mubr.f32.gmra.mxu0 %v1096
      %v1273 = vpop.f32.mrf.mxu0
      %v1274 = vadd.f32 %v1069, %v1273
      %v1275 = vpop.f32.mrf.mxu0
      %1276 = vmatprep.mubr.f32.mxu0 0.0
      %1277 = vmatmul.mubr.f32.gmra.mxu0 %v1099
      %v1278 = vpop.f32.mrf.mxu0
      %v1279 = vadd.f32 %v1069, %v1278
      %v1280 = vpop.f32.mrf.mxu0
      %1281 = vmatprep.mubr.f32.mxu0 0.0
      %1282 = vmatmul.mubr.f32.gmra.mxu0 %v1102
      %v1283 = vpop.f32.mrf.mxu0
      %v1284 = vadd.f32 %v1069, %v1283
      %v1285 = vpop.f32.mrf.mxu0
      %1286 = vmatprep.mubr.f32.mxu0 0.0
      %1287 = vmatmul.mubr.f32.gmra.mxu0 %v1105
      %v1288 = vpop.f32.mrf.mxu0
      %v1289 = vadd.f32 %v1069, %v1288
      %v1290 = vpop.f32.mrf.mxu0
      %1291 = vmatprep.mubr.f32.mxu0 0.0
      %1292 = vmatmul.mubr.f32.gmra.mxu0 %v1108
      %v1293 = vpop.f32.mrf.mxu0
      %v1294 = vadd.f32 %v1069, %v1293
      %v1295 = vpop.f32.mrf.mxu0
      %1296 = vmatprep.mubr.f32.mxu0 0.0
      %1297 = vmatmul.mubr.f32.gmra.mxu0 %v1111
      %v1298 = vpop.f32.mrf.mxu0
      %v1299 = vadd.f32 %v1069, %v1298
      %v1300 = vpop.f32.mrf.mxu0
      %1301 = vmatprep.mubr.f32.mxu0 0.0
      %1302 = vmatmul.mubr.f32.gmra.mxu0 %v1114
      %v1303 = vpop.f32.mrf.mxu0
      %v1304 = vadd.f32 %v1069, %v1303
      %v1305 = vpop.f32.mrf.mxu0
      %1306 = vmatprep.mubr.f32.mxu0 0.0
      %1307 = vmatmul.mubr.f32.gmra.mxu0 %v1117
      %v1308 = vpop.f32.mrf.mxu0
      %v1309 = vadd.f32 %v1069, %v1308
      %v1310 = vpop.f32.mrf.mxu0
      %1311 = vmatprep.mubr.f32.mxu0 0.0
      %1312 = vmatmul.mubr.f32.gmra.mxu0 %v1120
      %v1313 = vpop.f32.mrf.mxu0
      %v1314 = vadd.f32 %v1069, %v1313
      %v1315 = vpop.f32.mrf.mxu0
      %1316 = vmatprep.mubr.f32.mxu0 0.0
      %1317 = vmatmul.mubr.f32.gmra.mxu0 %v1123
      %v1318 = vpop.f32.mrf.mxu0
      %v1319 = vadd.f32 %v1069, %v1318
      %v1320 = vpop.f32.mrf.mxu0
      %1321 = vmatprep.mubr.f32.mxu0 0.0
      %1322 = vmatmul.mubr.f32.gmra.mxu0 %v1126
      %v1323 = vpop.f32.mrf.mxu0
      %v1324 = vadd.f32 %v1069, %v1323
      %v1325 = vpop.f32.mrf.mxu0
      %1326 = vmatprep.mubr.f32.mxu0 0.0
      %1327 = vmatmul.mubr.f32.gmra.mxu0 %v1129
      %v1328 = vpop.f32.mrf.mxu0
      %v1329 = vadd.f32 %v1069, %v1328
      %v1330 = vpop.f32.mrf.mxu0
      %1331 = vmatprep.mubr.f32.mxu0 0.0
      %1332 = vmatmul.mubr.f32.gmra.mxu0 %v1132
      %v1333 = vpop.f32.mrf.mxu0
      %v1334 = vadd.f32 %v1069, %v1333
      %v1335 = vpop.f32.mrf.mxu0
      %1336 = vmatprep.mubr.f32.mxu0 0.0
      %1337 = vmatmul.mubr.f32.gmra.mxu0 %v1135
      %v1338 = vpop.f32.mrf.mxu0
      %v1339 = vadd.f32 %v1069, %v1338
      %v1340 = vpop.f32.mrf.mxu0
      %1341 = vmatprep.mubr.f32.mxu0 0.0
      %1342 = vmatmul.mubr.f32.gmra.mxu0 %v1138
      %v1343 = vpop.f32.mrf.mxu0
      %v1344 = vadd.f32 %v1069, %v1343
      %v1345 = vpop.f32.mrf.mxu0
      %1346 = vmatprep.mubr.f32.mxu0 0.0
      %1347 = vmatmul.mubr.f32.gmra.mxu0 %v1141
      %v1348 = vpop.f32.mrf.mxu0
      %v1349 = vadd.f32 %v1069, %v1348
      %v1350 = vpop.f32.mrf.mxu0
      %1351 = vmatprep.mubr.f32.mxu0 0.0
      %1352 = vmatmul.mubr.f32.gmra.mxu0 %v1144
      %v1353 = vpop.f32.mrf.mxu0
      %v1354 = vadd.f32 %v1069, %v1353
      %v1355 = vpop.f32.mrf.mxu0
      %1356 = vmatprep.mubr.f32.mxu0 0.0
      %1357 = vmatmul.mubr.f32.gmra.mxu0 %v1147
      %v1358 = vpop.f32.mrf.mxu0
      %v1359 = vadd.f32 %v1069, %v1358
      %v1360 = vpop.f32.mrf.mxu0
      %1361 = vmatprep.mubr.f32.mxu0 0.0
      %1362 = vmatmul.mubr.f32.gmra.mxu0 %v1150
      %v1363 = vpop.f32.mrf.mxu0
      %v1364 = vadd.f32 %v1069, %v1363
      %v1365 = vpop.f32.mrf.mxu0
      %1366 = vmatprep.mubr.f32.mxu0 0.0
      %1367 = vmatmul.mubr.f32.gmra.mxu0 %v1153
      %v1368 = vpop.f32.mrf.mxu0
      %v1369 = vadd.f32 %v1069, %v1368
      %v1370 = vpop.f32.mrf.mxu0
      %1371 = vmatprep.mubr.f32.mxu0 0.0
      %1372 = vmatmul.mubr.f32.gmra.mxu0 %v1156
      %v1373 = vpop.f32.mrf.mxu0
      %v1374 = vadd.f32 %v1069, %v1373
      %v1375 = vpop.f32.mrf.mxu0
      %1376 = vmatprep.mubr.f32.mxu0 0.0
      %1377 = vmatmul.mubr.f32.gmra.mxu0 %v1159
      %v1378 = vpop.f32.mrf.mxu0
      %v1379 = vadd.f32 %v1069, %v1378
      %v1380 = vpop.f32.mrf.mxu0
      %1381 = vmatprep.mubr.f32.mxu0 0.0
      %1382 = vmatmul.mubr.f32.gmra.mxu0 %v1162
      %v1383 = vpop.f32.mrf.mxu0
      %v1384 = vadd.f32 %v1069, %v1383
      %v1385 = vpop.f32.mrf.mxu0
      %1386 = vmatprep.mubr.f32.mxu0 0.0
      %1387 = vmatmul.mubr.f32.gmra.mxu0 %v1165
      %v1388 = vpop.f32.mrf.mxu0
      %v1389 = vadd.f32 %v1069, %v1388
      %v1390 = vpop.f32.mrf.mxu0
      %1391 = vdwg.mxu0
      %v1392 = vld [vmem:[%s11] sm:$0xff]
      %v1393 = vld [vmem:[%s11 + $0x8] sm:$0xff]
      %v1394 = vld [vmem:[%s11 + $0x10] sm:$0xff]
      %v1395 = vld [vmem:[%s11 + $0x18] sm:$0xff]
      %v1396 = vld [vmem:[%s12] sm:$0x1]
      %v1398 = vlaneseq
      %v1399 = vshrl.u32 %v1398, 7
      %v1400 = vsub.s32 0, %v1399
      %v1401 = vrot.slane %v1396, %v1400
      %v1404 = vsel %vm779, %v707, 0
      %v1407 = vsel %vm779, %v708, 0
      %v1410 = vsel %vm779, %v709, 0
      %v1413 = vsel %vm779, %v710, 0
      %v1416 = vsel %vm779, %v711, 0
      %v1419 = vsel %vm779, %v712, 0
      %v1422 = vsel %vm779, %v713, 0
      %v1425 = vsel %vm779, %v714, 0
      %v1428 = vsel %vm779, %v715, 0
      %v1431 = vsel %vm779, %v716, 0
      %v1434 = vsel %vm779, %v717, 0
      %v1437 = vsel %vm779, %v718, 0
      %v1440 = vsel %vm779, %v719, 0
      %v1443 = vsel %vm779, %v720, 0
      %v1446 = vsel %vm779, %v721, 0
      %v1449 = vsel %vm779, %v722, 0
      %v1452 = vsel %vm779, %v723, 0
      %v1455 = vsel %vm779, %v724, 0
      %v1458 = vsel %vm779, %v725, 0
      %v1461 = vsel %vm779, %v726, 0
      %v1464 = vsel %vm779, %v727, 0
      %v1467 = vsel %vm779, %v728, 0
      %v1470 = vsel %vm779, %v729, 0
      %v1473 = vsel %vm779, %v730, 0
      %v1476 = vsel %vm779, %v731, 0
      %v1479 = vsel %vm779, %v732, 0
      %v1482 = vsel %vm779, %v733, 0
      %v1485 = vsel %vm779, %v734, 0
      %v1488 = vsel %vm779, %v735, 0
      %v1491 = vsel %vm779, %v736, 0
      %v1494 = vsel %vm779, %v737, 0
      %v1497 = vsel %vm779, %v738, 0
      %1499 = vmatprep.subr.mxu0 0.0
      %1500 = vmatpush1.msra.mxu0 0.0
      %1501 = vmatprep.subr.mxu0 0.0
      %1502 = vmatpush1.msra.mxu0 0.0
      %1503 = vmatprep.subr.mxu0 0.0
      %1504 = vmatpush1.msra.mxu0 0.0
      %1505 = vmatprep.subr.mxu0 0.0
      %1506 = vmatpush1.msra.mxu0 0.0
      %1507 = vmatprep.subr.mxu0 0.0
      %1508 = vmatpush1.msra.mxu0 0.0
      %1509 = vmatprep.subr.mxu0 0.0
      %1510 = vmatpush1.msra.mxu0 0.0
      %1511 = vmatprep.subr.mxu0 0.0
      %1512 = vmatpush1.msra.mxu0 0.0
      %1513 = vmatprep.subr.mxu0 0.0
      %1514 = vmatpush1.msra.mxu0 0.0
      %1515 = vmatprep.subr.mxu0 0.0
      %1516 = vmatpush1.msra.mxu0 0.0
      %1517 = vmatprep.subr.mxu0 0.0
      %1518 = vmatpush1.msra.mxu0 0.0
      %1519 = vmatprep.subr.mxu0 0.0
      %1520 = vmatpush1.msra.mxu0 0.0
      %1521 = vmatprep.subr.mxu0 0.0
      %1522 = vmatpush1.msra.mxu0 0.0
      %1523 = vmatprep.subr.mxu0 0.0
      %1524 = vmatpush1.msra.mxu0 %v1395
      %1525 = vmatprep.subr.mxu0 0.0
      %1526 = vmatpush1.msra.mxu0 %v1394
      %1527 = vmatprep.subr.mxu0 0.0
      %1528 = vmatpush1.msra.mxu0 %v1393
      %1529 = vmatprep.subr.mxu0 0.0
      %1530 = vmatpush1.msra.mxu0 %v1392
      %1531 = vmatprep.subr.mxu0 0.0
      %1532 = vmatpush2.msra.mxu0 0.0
      %1533 = vmatprep.subr.mxu0 0.0
      %1534 = vmatpush2.msra.mxu0 0.0
      %1535 = vmatprep.subr.mxu0 0.0
      %1536 = vmatpush2.msra.mxu0 0.0
      %1537 = vmatprep.subr.mxu0 0.0
      %1538 = vmatpush2.msra.mxu0 0.0
      %1539 = vmatprep.subr.mxu0 0.0
      %1540 = vmatpush2.msra.mxu0 0.0
      %1541 = vmatprep.subr.mxu0 0.0
      %1542 = vmatpush2.msra.mxu0 0.0
      %1543 = vmatprep.subr.mxu0 0.0
      %1544 = vmatpush2.msra.mxu0 0.0
      %1545 = vmatprep.subr.mxu0 0.0
      %1546 = vmatpush2.msra.mxu0 0.0
      %1547 = vmatprep.subr.mxu0 0.0
      %1548 = vmatpush2.msra.mxu0 0.0
      %1549 = vmatprep.subr.mxu0 0.0
      %1550 = vmatpush2.msra.mxu0 0.0
      %1551 = vmatprep.subr.mxu0 0.0
      %1552 = vmatpush2.msra.mxu0 0.0
      %1553 = vmatprep.subr.mxu0 0.0
      %1554 = vmatpush2.msra.mxu0 0.0
      %1555 = vmatprep.subr.mxu0 0.0
      %1556 = vmatpush2.msra.mxu0 0.0
      %1557 = vmatprep.subr.mxu0 0.0
      %1558 = vmatpush2.msra.mxu0 0.0
      %1559 = vmatprep.subr.mxu0 0.0
      %1560 = vmatpush2.msra.mxu0 0.0
      %1561 = vmatprep.subr.mxu0 0.0
      %1562 = vmatpush2.msra.mxu0 0.0
      %1563 = vmatprep.mubr.f32.mxu0 0.0
      %1564 = vmatmul.mubr.f32.gmra.mxu0 %v1404
      %v1565 = vpop.f32.mrf.mxu0
      %v1566 = vadd.f32 %v1401, %v1565
      %v1567 = vpop.f32.mrf.mxu0
      %1568 = vmatprep.mubr.f32.mxu0 0.0
      %1569 = vmatmul.mubr.f32.gmra.mxu0 %v1407
      %v1570 = vpop.f32.mrf.mxu0
      %v1571 = vadd.f32 %v1401, %v1570
      %v1572 = vpop.f32.mrf.mxu0
      %1573 = vmatprep.mubr.f32.mxu0 0.0
      %1574 = vmatmul.mubr.f32.gmra.mxu0 %v1410
      %v1575 = vpop.f32.mrf.mxu0
      %v1576 = vadd.f32 %v1401, %v1575
      %v1577 = vpop.f32.mrf.mxu0
      %1578 = vmatprep.mubr.f32.mxu0 0.0
      %1579 = vmatmul.mubr.f32.gmra.mxu0 %v1413
      %v1580 = vpop.f32.mrf.mxu0
      %v1581 = vadd.f32 %v1401, %v1580
      %v1582 = vpop.f32.mrf.mxu0
      %1583 = vmatprep.mubr.f32.mxu0 0.0
      %1584 = vmatmul.mubr.f32.gmra.mxu0 %v1416
      %v1585 = vpop.f32.mrf.mxu0
      %v1586 = vadd.f32 %v1401, %v1585
      %v1587 = vpop.f32.mrf.mxu0
      %1588 = vmatprep.mubr.f32.mxu0 0.0
      %1589 = vmatmul.mubr.f32.gmra.mxu0 %v1419
      %v1590 = vpop.f32.mrf.mxu0
      %v1591 = vadd.f32 %v1401, %v1590
      %v1592 = vpop.f32.mrf.mxu0
      %1593 = vmatprep.mubr.f32.mxu0 0.0
      %1594 = vmatmul.mubr.f32.gmra.mxu0 %v1422
      %v1595 = vpop.f32.mrf.mxu0
      %v1596 = vadd.f32 %v1401, %v1595
      %v1597 = vpop.f32.mrf.mxu0
      %1598 = vmatprep.mubr.f32.mxu0 0.0
      %1599 = vmatmul.mubr.f32.gmra.mxu0 %v1425
      %v1600 = vpop.f32.mrf.mxu0
      %v1601 = vadd.f32 %v1401, %v1600
      %v1602 = vpop.f32.mrf.mxu0
      %1603 = vmatprep.mubr.f32.mxu0 0.0
      %1604 = vmatmul.mubr.f32.gmra.mxu0 %v1428
      %v1605 = vpop.f32.mrf.mxu0
      %v1606 = vadd.f32 %v1401, %v1605
      %v1607 = vpop.f32.mrf.mxu0
      %1608 = vmatprep.mubr.f32.mxu0 0.0
      %1609 = vmatmul.mubr.f32.gmra.mxu0 %v1431
      %v1610 = vpop.f32.mrf.mxu0
      %v1611 = vadd.f32 %v1401, %v1610
      %v1612 = vpop.f32.mrf.mxu0
      %1613 = vmatprep.mubr.f32.mxu0 0.0
      %1614 = vmatmul.mubr.f32.gmra.mxu0 %v1434
      %v1615 = vpop.f32.mrf.mxu0
      %v1616 = vadd.f32 %v1401, %v1615
      %v1617 = vpop.f32.mrf.mxu0
      %1618 = vmatprep.mubr.f32.mxu0 0.0
      %1619 = vmatmul.mubr.f32.gmra.mxu0 %v1437
      %v1620 = vpop.f32.mrf.mxu0
      %v1621 = vadd.f32 %v1401, %v1620
      %v1622 = vpop.f32.mrf.mxu0
      %1623 = vmatprep.mubr.f32.mxu0 0.0
      %1624 = vmatmul.mubr.f32.gmra.mxu0 %v1440
      %v1625 = vpop.f32.mrf.mxu0
      %v1626 = vadd.f32 %v1401, %v1625
      %v1627 = vpop.f32.mrf.mxu0
      %1628 = vmatprep.mubr.f32.mxu0 0.0
      %1629 = vmatmul.mubr.f32.gmra.mxu0 %v1443
      %v1630 = vpop.f32.mrf.mxu0
      %v1631 = vadd.f32 %v1401, %v1630
      %v1632 = vpop.f32.mrf.mxu0
      %1633 = vmatprep.mubr.f32.mxu0 0.0
      %1634 = vmatmul.mubr.f32.gmra.mxu0 %v1446
      %v1635 = vpop.f32.mrf.mxu0
      %v1636 = vadd.f32 %v1401, %v1635
      %v1637 = vpop.f32.mrf.mxu0
      %1638 = vmatprep.mubr.f32.mxu0 0.0
      %1639 = vmatmul.mubr.f32.gmra.mxu0 %v1449
      %v1640 = vpop.f32.mrf.mxu0
      %v1641 = vadd.f32 %v1401, %v1640
      %v1642 = vpop.f32.mrf.mxu0
      %1643 = vmatprep.mubr.f32.mxu0 0.0
      %1644 = vmatmul.mubr.f32.gmra.mxu0 %v1452
      %v1645 = vpop.f32.mrf.mxu0
      %v1646 = vadd.f32 %v1401, %v1645
      %v1647 = vpop.f32.mrf.mxu0
      %1648 = vmatprep.mubr.f32.mxu0 0.0
      %1649 = vmatmul.mubr.f32.gmra.mxu0 %v1455
      %v1650 = vpop.f32.mrf.mxu0
      %v1651 = vadd.f32 %v1401, %v1650
      %v1652 = vpop.f32.mrf.mxu0
      %1653 = vmatprep.mubr.f32.mxu0 0.0
      %1654 = vmatmul.mubr.f32.gmra.mxu0 %v1458
      %v1655 = vpop.f32.mrf.mxu0
      %v1656 = vadd.f32 %v1401, %v1655
      %v1657 = vpop.f32.mrf.mxu0
      %1658 = vmatprep.mubr.f32.mxu0 0.0
      %1659 = vmatmul.mubr.f32.gmra.mxu0 %v1461
      %v1660 = vpop.f32.mrf.mxu0
      %v1661 = vadd.f32 %v1401, %v1660
      %v1662 = vpop.f32.mrf.mxu0
      %1663 = vmatprep.mubr.f32.mxu0 0.0
      %1664 = vmatmul.mubr.f32.gmra.mxu0 %v1464
      %v1665 = vpop.f32.mrf.mxu0
      %v1666 = vadd.f32 %v1401, %v1665
      %v1667 = vpop.f32.mrf.mxu0
      %1668 = vmatprep.mubr.f32.mxu0 0.0
      %1669 = vmatmul.mubr.f32.gmra.mxu0 %v1467
      %v1670 = vpop.f32.mrf.mxu0
      %v1671 = vadd.f32 %v1401, %v1670
      %v1672 = vpop.f32.mrf.mxu0
      %1673 = vmatprep.mubr.f32.mxu0 0.0
      %1674 = vmatmul.mubr.f32.gmra.mxu0 %v1470
      %v1675 = vpop.f32.mrf.mxu0
      %v1676 = vadd.f32 %v1401, %v1675
      %v1677 = vpop.f32.mrf.mxu0
      %1678 = vmatprep.mubr.f32.mxu0 0.0
      %1679 = vmatmul.mubr.f32.gmra.mxu0 %v1473
      %v1680 = vpop.f32.mrf.mxu0
      %v1681 = vadd.f32 %v1401, %v1680
      %v1682 = vpop.f32.mrf.mxu0
      %1683 = vmatprep.mubr.f32.mxu0 0.0
      %1684 = vmatmul.mubr.f32.gmra.mxu0 %v1476
      %v1685 = vpop.f32.mrf.mxu0
      %v1686 = vadd.f32 %v1401, %v1685
      %v1687 = vpop.f32.mrf.mxu0
      %1688 = vmatprep.mubr.f32.mxu0 0.0
      %1689 = vmatmul.mubr.f32.gmra.mxu0 %v1479
      %v1690 = vpop.f32.mrf.mxu0
      %v1691 = vadd.f32 %v1401, %v1690
      %v1692 = vpop.f32.mrf.mxu0
      %1693 = vmatprep.mubr.f32.mxu0 0.0
      %1694 = vmatmul.mubr.f32.gmra.mxu0 %v1482
      %v1695 = vpop.f32.mrf.mxu0
      %v1696 = vadd.f32 %v1401, %v1695
      %v1697 = vpop.f32.mrf.mxu0
      %1698 = vmatprep.mubr.f32.mxu0 0.0
      %1699 = vmatmul.mubr.f32.gmra.mxu0 %v1485
      %v1700 = vpop.f32.mrf.mxu0
      %v1701 = vadd.f32 %v1401, %v1700
      %v1702 = vpop.f32.mrf.mxu0
      %1703 = vmatprep.mubr.f32.mxu0 0.0
      %1704 = vmatmul.mubr.f32.gmra.mxu0 %v1488
      %v1705 = vpop.f32.mrf.mxu0
      %v1706 = vadd.f32 %v1401, %v1705
      %v1707 = vpop.f32.mrf.mxu0
      %1708 = vmatprep.mubr.f32.mxu0 0.0
      %1709 = vmatmul.mubr.f32.gmra.mxu0 %v1491
      %v1710 = vpop.f32.mrf.mxu0
      %v1711 = vadd.f32 %v1401, %v1710
      %v1712 = vpop.f32.mrf.mxu0
      %1713 = vmatprep.mubr.f32.mxu0 0.0
      %1714 = vmatmul.mubr.f32.gmra.mxu0 %v1494
      %v1715 = vpop.f32.mrf.mxu0
      %v1716 = vadd.f32 %v1401, %v1715
      %v1717 = vpop.f32.mrf.mxu0
      %1718 = vmatprep.mubr.f32.mxu0 0.0
      %1719 = vmatmul.mubr.f32.gmra.mxu0 %v1497
      %v1720 = vpop.f32.mrf.mxu0
      %v1721 = vadd.f32 %v1401, %v1720
      %v1722 = vpop.f32.mrf.mxu0
      %1723 = vdwg.mxu0
      %v1725 = vsel %vm779, %v1025, 0
      %v1728 = vsel %vm779, %v1234, 0
      %v1731 = vsel %vm779, %v1239, 0
      %v1734 = vsel %vm779, %v1244, 0
      %v1737 = vsel %vm779, %v1249, 0
      %v1740 = vsel %vm779, %v1254, 0
      %v1743 = vsel %vm779, %v1259, 0
      %v1746 = vsel %vm779, %v1264, 0
      %v1749 = vsel %vm779, %v1269, 0
      %v1752 = vsel %vm779, %v1274, 0
      %v1755 = vsel %vm779, %v1279, 0
      %v1758 = vsel %vm779, %v1284, 0
      %v1761 = vsel %vm779, %v1289, 0
      %v1764 = vsel %vm779, %v1294, 0
      %v1767 = vsel %vm779, %v1299, 0
      %v1770 = vsel %vm779, %v1304, 0
      %v1773 = vsel %vm779, %v1309, 0
      %v1776 = vsel %vm779, %v1314, 0
      %v1779 = vsel %vm779, %v1319, 0
      %v1782 = vsel %vm779, %v1324, 0
      %v1785 = vsel %vm779, %v1329, 0
      %v1788 = vsel %vm779, %v1334, 0
      %v1791 = vsel %vm779, %v1339, 0
      %v1794 = vsel %vm779, %v1344, 0
      %v1797 = vsel %vm779, %v1349, 0
      %v1800 = vsel %vm779, %v1354, 0
      %v1803 = vsel %vm779, %v1359, 0
      %v1806 = vsel %vm779, %v1364, 0
      %v1809 = vsel %vm779, %v1369, 0
      %v1812 = vsel %vm779, %v1374, 0
      %v1815 = vsel %vm779, %v1379, 0
      %v1818 = vsel %vm779, %v1384, 0
      %v1821 = vsel %vm779, %v1389, 0
      %1823 = vmatprep.subr.mxu0 0.0
      %1824 = vmatpush1.xpose.msra.mxu0 %v1773
      %1825 = vmatprep.subr.mxu0 0.0
      %1826 = vmatpush1.xpose.msra.mxu0 %v1770
      %1827 = vmatprep.subr.mxu0 0.0
      %1828 = vmatpush1.xpose.msra.mxu0 %v1767
      %1829 = vmatprep.subr.mxu0 0.0
      %1830 = vmatpush1.xpose.msra.mxu0 %v1764
      %1831 = vmatprep.subr.mxu0 0.0
      %1832 = vmatpush1.xpose.msra.mxu0 %v1761
      %1833 = vmatprep.subr.mxu0 0.0
      %1834 = vmatpush1.xpose.msra.mxu0 %v1758
      %1835 = vmatprep.subr.mxu0 0.0
      %1836 = vmatpush1.xpose.msra.mxu0 %v1755
      %1837 = vmatprep.subr.mxu0 0.0
      %1838 = vmatpush1.xpose.msra.mxu0 %v1752
      %1839 = vmatprep.subr.mxu0 0.0
      %1840 = vmatpush1.xpose.msra.mxu0 %v1749
      %1841 = vmatprep.subr.mxu0 0.0
      %1842 = vmatpush1.xpose.msra.mxu0 %v1746
      %1843 = vmatprep.subr.mxu0 0.0
      %1844 = vmatpush1.xpose.msra.mxu0 %v1743
      %1845 = vmatprep.subr.mxu0 0.0
      %1846 = vmatpush1.xpose.msra.mxu0 %v1740
      %1847 = vmatprep.subr.mxu0 0.0
      %1848 = vmatpush1.xpose.msra.mxu0 %v1737
      %1849 = vmatprep.subr.mxu0 0.0
      %1850 = vmatpush1.xpose.msra.mxu0 %v1734
      %1851 = vmatprep.subr.mxu0 0.0
      %1852 = vmatpush1.xpose.msra.mxu0 %v1731
      %1853 = vmatprep.subr.mxu0 0.0
      %1854 = vmatpush1.xpose.msra.mxu0 %v1728
      %1855 = vmatprep.subr.mxu0 0.0
      %1856 = vmatpush2.xpose.msra.mxu0 %v1821
      %1857 = vmatprep.subr.mxu0 0.0
      %1858 = vmatpush2.xpose.msra.mxu0 %v1818
      %1859 = vmatprep.subr.mxu0 0.0
      %1860 = vmatpush2.xpose.msra.mxu0 %v1815
      %1861 = vmatprep.subr.mxu0 0.0
      %1862 = vmatpush2.xpose.msra.mxu0 %v1812
      %1863 = vmatprep.subr.mxu0 0.0
      %1864 = vmatpush2.xpose.msra.mxu0 %v1809
      %1865 = vmatprep.subr.mxu0 0.0
      %1866 = vmatpush2.xpose.msra.mxu0 %v1806
      %1867 = vmatprep.subr.mxu0 0.0
      %1868 = vmatpush2.xpose.msra.mxu0 %v1803
      %1869 = vmatprep.subr.mxu0 0.0
      %1870 = vmatpush2.xpose.msra.mxu0 %v1800
      %1871 = vmatprep.subr.mxu0 0.0
      %1872 = vmatpush2.xpose.msra.mxu0 %v1797
      %1873 = vmatprep.subr.mxu0 0.0
      %1874 = vmatpush2.xpose.msra.mxu0 %v1794
      %1875 = vmatprep.subr.mxu0 0.0
      %1876 = vmatpush2.xpose.msra.mxu0 %v1791
      %1877 = vmatprep.subr.mxu0 0.0
      %1878 = vmatpush2.xpose.msra.mxu0 %v1788
      %1879 = vmatprep.subr.mxu0 0.0
      %1880 = vmatpush2.xpose.msra.mxu0 %v1785
      %1881 = vmatprep.subr.mxu0 0.0
      %1882 = vmatpush2.xpose.msra.mxu0 %v1782
      %1883 = vmatprep.subr.mxu0 0.0
      %1884 = vmatpush2.xpose.msra.mxu0 %v1779
      %1885 = vmatprep.subr.mxu0 0.0
      %1886 = vmatpush2.xpose.msra.mxu0 %v1776
      %1887 = vmatprep.mubr.f32.mxu0 0.0
      %1888 = vmatmul.mubr.f32.gmra.mxu0 %v1725
      %v1889 = vpop.f32.mrf.mxu0
      %v1890 = vadd.f32 0.0, %v1889
      %v1891 = vpop.f32.mrf.mxu0
      %v1892 = vadd.f32 0.0, %v1891
      %1893 = vdwg.mxu0
      %v1894 = vmul.f32 %v1890, 0.17677669
      %v1895 = vmul.f32 %v1892, 0.17677669
      %vm1896 = vcmask 1040384
      %v1897 = vsel %vm1896, %v1894, -inf
      %v1898 = vsel %vm1896, %v1895, -inf
      %v1899 = vmax.f32 %v1897, %v1898
      %1900 = vmax.xlane.f32.xlu0 %v1899
      %v1901 = vpop.xlane.xlu0 %1900
      %v1902 = vsub.f32 %v1894, %v1901
      %v1903 = vsub.f32 %v1895, %v1901
      %v1904 = vmul.f32 %v1902, 1.442695
      %v1905 = vpow.pop %v1904
      %v1906 = vmul.f32 %v1903, 1.442695
      %v1907 = vpow.pop %v1906
      %v1908 = vsel %vm1896, %v1905, 0.0
      %v1909 = vsel %vm1896, %v1907, 0.0
      %v1910 = vadd.f32 %v1908, %v1909
      %1911 = vadd.xlane.f32.xlu0 %v1910
      %v1912 = vpop.xlane.xlu0 %1911
      %v1913 = vrcp.pop %v1912
      %v1914 = vmul.f32 %v1905, %v1913
      %v1915 = vmul.f32 %v1907, %v1913
      %1916 = vmatprep.subr.mxu0 0.0
      %1917 = vmatpush1.msra.mxu0 %v1641
      %1918 = vmatprep.subr.mxu0 0.0
      %1919 = vmatpush1.msra.mxu0 %v1636
      %1920 = vmatprep.subr.mxu0 0.0
      %1921 = vmatpush1.msra.mxu0 %v1631
      %1922 = vmatprep.subr.mxu0 0.0
      %1923 = vmatpush1.msra.mxu0 %v1626
      %1924 = vmatprep.subr.mxu0 0.0
      %1925 = vmatpush1.msra.mxu0 %v1621
      %1926 = vmatprep.subr.mxu0 0.0
      %1927 = vmatpush1.msra.mxu0 %v1616
      %1928 = vmatprep.subr.mxu0 0.0
      %1929 = vmatpush1.msra.mxu0 %v1611
      %1930 = vmatprep.subr.mxu0 0.0
      %1931 = vmatpush1.msra.mxu0 %v1606
      %1932 = vmatprep.subr.mxu0 0.0
      %1933 = vmatpush1.msra.mxu0 %v1601
      %1934 = vmatprep.subr.mxu0 0.0
      %1935 = vmatpush1.msra.mxu0 %v1596
      %1936 = vmatprep.subr.mxu0 0.0
      %1937 = vmatpush1.msra.mxu0 %v1591
      %1938 = vmatprep.subr.mxu0 0.0
      %1939 = vmatpush1.msra.mxu0 %v1586
      %1940 = vmatprep.subr.mxu0 0.0
      %1941 = vmatpush1.msra.mxu0 %v1581
      %1942 = vmatprep.subr.mxu0 0.0
      %1943 = vmatpush1.msra.mxu0 %v1576
      %1944 = vmatprep.subr.mxu0 0.0
      %1945 = vmatpush1.msra.mxu0 %v1571
      %1946 = vmatprep.subr.mxu0 0.0
      %1947 = vmatpush1.msra.mxu0 %v1566
      %1948 = vmatprep.subr.mxu0 0.0
      %1949 = vmatpush2.msra.mxu0 %v1721
      %1950 = vmatprep.subr.mxu0 0.0
      %1951 = vmatpush2.msra.mxu0 %v1716
      %1952 = vmatprep.subr.mxu0 0.0
      %1953 = vmatpush2.msra.mxu0 %v1711
      %1954 = vmatprep.subr.mxu0 0.0
      %1955 = vmatpush2.msra.mxu0 %v1706
      %1956 = vmatprep.subr.mxu0 0.0
      %1957 = vmatpush2.msra.mxu0 %v1701
      %1958 = vmatprep.subr.mxu0 0.0
      %1959 = vmatpush2.msra.mxu0 %v1696
      %1960 = vmatprep.subr.mxu0 0.0
      %1961 = vmatpush2.msra.mxu0 %v1691
      %1962 = vmatprep.subr.mxu0 0.0
      %1963 = vmatpush2.msra.mxu0 %v1686
      %1964 = vmatprep.subr.mxu0 0.0
      %1965 = vmatpush2.msra.mxu0 %v1681
      %1966 = vmatprep.subr.mxu0 0.0
      %1967 = vmatpush2.msra.mxu0 %v1676
      %1968 = vmatprep.subr.mxu0 0.0
      %1969 = vmatpush2.msra.mxu0 %v1671
      %1970 = vmatprep.subr.mxu0 0.0
      %1971 = vmatpush2.msra.mxu0 %v1666
      %1972 = vmatprep.subr.mxu0 0.0
      %1973 = vmatpush2.msra.mxu0 %v1661
      %1974 = vmatprep.subr.mxu0 0.0
      %1975 = vmatpush2.msra.mxu0 %v1656
      %1976 = vmatprep.subr.mxu0 0.0
      %1977 = vmatpush2.msra.mxu0 %v1651
      %1978 = vmatprep.subr.mxu0 0.0
      %1979 = vmatpush2.msra.mxu0 %v1646
      %1980 = vmatprep.mubr.f32.mxu0 %v1915
      %1981 = vmatmul.mubr.f32.gmra.mxu0 %v1914
      %v1982 = vpop.f32.mrf.mxu0
      %v1983 = vadd.f32 0.0, %v1982
      %v1984 = vpop.f32.mrf.mxu0
      %1985 = vdwg.mxu0
      %v1986 = vld [vmem:[%s13] sm:$0xff]
      %v1987 = vld [vmem:[%s13 + $0x8] sm:$0xff]
      %v1988 = vld [vmem:[%s13 + $0x10] sm:$0xff]
      %v1989 = vld [vmem:[%s13 + $0x18] sm:$0xff]
      %v1990 = vld [vmem:[%s14] sm:$0x1]
      %v1992 = vsel %vm779, %v1983, 0
      %1994 = vmatprep.subr.mxu0 0.0
      %1995 = vmatpush1.msra.mxu0 0.0
      %1996 = vmatprep.subr.mxu0 0.0
      %1997 = vmatpush1.msra.mxu0 0.0
      %1998 = vmatprep.subr.mxu0 0.0
      %1999 = vmatpush1.msra.mxu0 0.0
      %2000 = vmatprep.subr.mxu0 0.0
      %2001 = vmatpush1.msra.mxu0 0.0
      %2002 = vmatprep.subr.mxu0 0.0
      %2003 = vmatpush1.msra.mxu0 0.0
      %2004 = vmatprep.subr.mxu0 0.0
      %2005 = vmatpush1.msra.mxu0 0.0
      %2006 = vmatprep.subr.mxu0 0.0
      %2007 = vmatpush1.msra.mxu0 0.0
      %2008 = vmatprep.subr.mxu0 0.0
      %2009 = vmatpush1.msra.mxu0 0.0
      %2010 = vmatprep.subr.mxu0 0.0
      %2011 = vmatpush1.msra.mxu0 0.0
      %2012 = vmatprep.subr.mxu0 0.0
      %2013 = vmatpush1.msra.mxu0 0.0
      %2014 = vmatprep.subr.mxu0 0.0
      %2015 = vmatpush1.msra.mxu0 0.0
      %2016 = vmatprep.subr.mxu0 0.0
      %2017 = vmatpush1.msra.mxu0 0.0
      %2018 = vmatprep.subr.mxu0 0.0
      %2019 = vmatpush1.msra.mxu0 %v1989
      %2020 = vmatprep.subr.mxu0 0.0
      %2021 = vmatpush1.msra.mxu0 %v1988
      %2022 = vmatprep.subr.mxu0 0.0
      %2023 = vmatpush1.msra.mxu0 %v1987
      %2024 = vmatprep.subr.mxu0 0.0
      %2025 = vmatpush1.msra.mxu0 %v1986
      %2026 = vmatprep.subr.mxu0 0.0
      %2027 = vmatpush2.msra.mxu0 0.0
      %2028 = vmatprep.subr.mxu0 0.0
      %2029 = vmatpush2.msra.mxu0 0.0
      %2030 = vmatprep.subr.mxu0 0.0
      %2031 = vmatpush2.msra.mxu0 0.0
      %2032 = vmatprep.subr.mxu0 0.0
      %2033 = vmatpush2.msra.mxu0 0.0
      %2034 = vmatprep.subr.mxu0 0.0
      %2035 = vmatpush2.msra.mxu0 0.0
      %2036 = vmatprep.subr.mxu0 0.0
      %2037 = vmatpush2.msra.mxu0 0.0
      %2038 = vmatprep.subr.mxu0 0.0
      %2039 = vmatpush2.msra.mxu0 0.0
      %2040 = vmatprep.subr.mxu0 0.0
      %2041 = vmatpush2.msra.mxu0 0.0
      %2042 = vmatprep.subr.mxu0 0.0
      %2043 = vmatpush2.msra.mxu0 0.0
      %2044 = vmatprep.subr.mxu0 0.0
      %2045 = vmatpush2.msra.mxu0 0.0
      %2046 = vmatprep.subr.mxu0 0.0
      %2047 = vmatpush2.msra.mxu0 0.0
      %2048 = vmatprep.subr.mxu0 0.0
      %2049 = vmatpush2.msra.mxu0 0.0
      %2050 = vmatprep.subr.mxu0 0.0
      %2051 = vmatpush2.msra.mxu0 0.0
      %2052 = vmatprep.subr.mxu0 0.0
      %2053 = vmatpush2.msra.mxu0 0.0
      %2054 = vmatprep.subr.mxu0 0.0
      %2055 = vmatpush2.msra.mxu0 0.0
      %2056 = vmatprep.subr.mxu0 0.0
      %2057 = vmatpush2.msra.mxu0 0.0
      %2058 = vmatprep.mubr.f32.mxu0 0.0
      %2059 = vmatmul.mubr.f32.gmra.mxu0 %v1992
      %v2060 = vpop.f32.mrf.mxu0
      %v2061 = vadd.f32 %v1990, %v2060
      %v2062 = vpop.f32.mrf.mxu0
      %2063 = vdwg.mxu0
      %v2064 = vadd.f32 %v948, %v2061
      %v2065 = vsel %vm932, %v2064, 0.0
      %2066 = vadd.xlane.f32.xlu0 %v2065
      %v2067 = vpop.xlane.xlu0 %2066
      %v2068 = vmul.f32 %v2067, %v936
      %v2069 = vsub.f32 %v2064, %v2068
      %v2070 = vmul.f32 %v2069, %v2069
      %v2071 = vsel %vm932, %v2070, 0.0
      %2072 = vadd.xlane.f32.xlu0 %v2071
      %v2073 = vpop.xlane.xlu0 %2072
      %v2074 = vmul.f32 %v2073, %v936
      %v2075 = vadd.f32 %v2074, 1e-05
      %v2076 = vrsqrt.pop %v2075
      %v2077 = vmul.f32 %v2069, %v2076
      %v2079 = vrot.slane %v772, 1
      %v2081 = vmul.f32 %v2077, %v2079
      %v2083 = vrot.slane %v773, 1
      %v2085 = vadd.f32 %v2081, %v2083
      %v2086 = vld [vmem:[%s17] sm:$0xff]
      %v2087 = vld [vmem:[%s17 + $0x8] sm:$0xff]
      %v2088 = vld [vmem:[%s17 + $0x10] sm:$0xff]
      %v2089 = vld [vmem:[%s17 + $0x18] sm:$0xff]
      %v2090 = vld [vmem:[%s18] sm:$0x1]
      %v2092 = vsel %vm779, %v2085, 0
      %2094 = vmatprep.subr.mxu0 0.0
      %2095 = vmatpush1.msra.mxu0 0.0
      %2096 = vmatprep.subr.mxu0 0.0
      %2097 = vmatpush1.msra.mxu0 0.0
      %2098 = vmatprep.subr.mxu0 0.0
      %2099 = vmatpush1.msra.mxu0 0.0
      %2100 = vmatprep.subr.mxu0 0.0
      %2101 = vmatpush1.msra.mxu0 0.0
      %2102 = vmatprep.subr.mxu0 0.0
      %2103 = vmatpush1.msra.mxu0 0.0
      %2104 = vmatprep.subr.mxu0 0.0
      %2105 = vmatpush1.msra.mxu0 0.0
      %2106 = vmatprep.subr.mxu0 0.0
      %2107 = vmatpush1.msra.mxu0 0.0
      %2108 = vmatprep.subr.mxu0 0.0
      %2109 = vmatpush1.msra.mxu0 0.0
      %2110 = vmatprep.subr.mxu0 0.0
      %2111 = vmatpush1.msra.mxu0 0.0
      %2112 = vmatprep.subr.mxu0 0.0
      %2113 = vmatpush1.msra.mxu0 0.0
      %2114 = vmatprep.subr.mxu0 0.0
      %2115 = vmatpush1.msra.mxu0 0.0
      %2116 = vmatprep.subr.mxu0 0.0
      %2117 = vmatpush1.msra.mxu0 0.0
      %2118 = vmatprep.subr.mxu0 0.0
      %2119 = vmatpush1.msra.mxu0 %v2089
      %2120 = vmatprep.subr.mxu0 0.0
      %2121 = vmatpush1.msra.mxu0 %v2088
      %2122 = vmatprep.subr.mxu0 0.0
      %2123 = vmatpush1.msra.mxu0 %v2087
      %2124 = vmatprep.subr.mxu0 0.0
      %2125 = vmatpush1.msra.mxu0 %v2086
      %2126 = vmatprep.subr.mxu0 0.0
      %2127 = vmatpush2.msra.mxu0 0.0
      %2128 = vmatprep.subr.mxu0 0.0
      %2129 = vmatpush2.msra.mxu0 0.0
      %2130 = vmatprep.subr.mxu0 0.0
      %2131 = vmatpush2.msra.mxu0 0.0
      %2132 = vmatprep.subr.mxu0 0.0
      %2133 = vmatpush2.msra.mxu0 0.0
      %2134 = vmatprep.subr.mxu0 0.0
      %2135 = vmatpush2.msra.mxu0 0.0
      %2136 = vmatprep.subr.mxu0 0.0
      %2137 = vmatpush2.msra.mxu0 0.0
      %2138 = vmatprep.subr.mxu0 0.0
      %2139 = vmatpush2.msra.mxu0 0.0
      %2140 = vmatprep.subr.mxu0 0.0
      %2141 = vmatpush2.msra.mxu0 0.0
      %2142 = vmatprep.subr.mxu0 0.0
      %2143 = vmatpush2.msra.mxu0 0.0
      %2144 = vmatprep.subr.mxu0 0.0
      %2145 = vmatpush2.msra.mxu0 0.0
      %2146 = vmatprep.subr.mxu0 0.0
      %2147 = vmatpush2.msra.mxu0 0.0
      %2148 = vmatprep.subr.mxu0 0.0
      %2149 = vmatpush2.msra.mxu0 0.0
      %2150 = vmatprep.subr.mxu0 0.0
      %2151 = vmatpush2.msra.mxu0 0.0
      %2152 = vmatprep.subr.mxu0 0.0
      %2153 = vmatpush2.msra.mxu0 0.0
      %2154 = vmatprep.subr.mxu0 0.0
      %2155 = vmatpush2.msra.mxu0 0.0
      %2156 = vmatprep.subr.mxu0 0.0
      %2157 = vmatpush2.msra.mxu0 0.0
      %2158 = vmatprep.mubr.f32.mxu0 0.0
      %2159 = vmatmul.mubr.f32.gmra.mxu0 %v2092
      %v2160 = vpop.f32.mrf.mxu0
      %v2161 = vadd.f32 %v2090, %v2160
      %v2162 = vpop.f32.mrf.mxu0
      %2163 = vdwg.mxu0
      %v2164 = vmax.f32 %v2161, 0.0
      %v2165 = vld [vmem:[%s19] sm:$0xff]
      %v2166 = vld [vmem:[%s19 + $0x8] sm:$0xff]
      %v2167 = vld [vmem:[%s19 + $0x10] sm:$0xff]
      %v2168 = vld [vmem:[%s19 + $0x18] sm:$0xff]
      %v2169 = vld [vmem:[%s19 + $0x20] sm:$0xff]
      %v2170 = vld [vmem:[%s19 + $0x28] sm:$0xff]
      %v2171 = vld [vmem:[%s19 + $0x30] sm:$0xff]
      %v2172 = vld [vmem:[%s19 + $0x38] sm:$0xff]
      %v2173 = vld [vmem:[%s20] sm:$0x1]
      %vm2174 = vcmask 523264
      %v2176 = vsel %vm2174, %v2164, 0
      %2178 = vmatprep.subr.mxu0 0.0
      %2179 = vmatpush1.msra.mxu0 0.0
      %2180 = vmatprep.subr.mxu0 0.0
      %2181 = vmatpush1.msra.mxu0 0.0
      %2182 = vmatprep.subr.mxu0 0.0
      %2183 = vmatpush1.msra.mxu0 0.0
      %2184 = vmatprep.subr.mxu0 0.0
      %2185 = vmatpush1.msra.mxu0 0.0
      %2186 = vmatprep.subr.mxu0 0.0
      %2187 = vmatpush1.msra.mxu0 0.0
      %2188 = vmatprep.subr.mxu0 0.0
      %2189 = vmatpush1.msra.mxu0 0.0
      %2190 = vmatprep.subr.mxu0 0.0
      %2191 = vmatpush1.msra.mxu0 0.0
      %2192 = vmatprep.subr.mxu0 0.0
      %2193 = vmatpush1.msra.mxu0 0.0
      %2194 = vmatprep.subr.mxu0 0.0
      %2195 = vmatpush1.msra.mxu0 %v2172
      %2196 = vmatprep.subr.mxu0 0.0
      %2197 = vmatpush1.msra.mxu0 %v2171
      %2198 = vmatprep.subr.mxu0 0.0
      %2199 = vmatpush1.msra.mxu0 %v2170
      %2200 = vmatprep.subr.mxu0 0.0
      %2201 = vmatpush1.msra.mxu0 %v2169
      %2202 = vmatprep.subr.mxu0 0.0
      %2203 = vmatpush1.msra.mxu0 %v2168
      %2204 = vmatprep.subr.mxu0 0.0
      %2205 = vmatpush1.msra.mxu0 %v2167
      %2206 = vmatprep.subr.mxu0 0.0
      %2207 = vmatpush1.msra.mxu0 %v2166
      %2208 = vmatprep.subr.mxu0 0.0
      %2209 = vmatpush1.msra.mxu0 %v2165
      %2210 = vmatprep.subr.mxu0 0.0
      %2211 = vmatpush2.msra.mxu0 0.0
      %2212 = vmatprep.subr.mxu0 0.0
      %2213 = vmatpush2.msra.mxu0 0.0
      %2214 = vmatprep.subr.mxu0 0.0
      %2215 = vmatpush2.msra.mxu0 0.0
      %2216 = vmatprep.subr.mxu0 0.0
      %2217 = vmatpush2.msra.mxu0 0.0
      %2218 = vmatprep.subr.mxu0 0.0
      %2219 = vmatpush2.msra.mxu0 0.0
      %2220 = vmatprep.subr.mxu0 0.0
      %2221 = vmatpush2.msra.mxu0 0.0
      %2222 = vmatprep.subr.mxu0 0.0
      %2223 = vmatpush2.msra.mxu0 0.0
      %2224 = vmatprep.subr.mxu0 0.0
      %2225 = vmatpush2.msra.mxu0 0.0
      %2226 = vmatprep.subr.mxu0 0.0
      %2227 = vmatpush2.msra.mxu0 0.0
      %2228 = vmatprep.subr.mxu0 0.0
      %2229 = vmatpush2.msra.mxu0 0.0
      %2230 = vmatprep.subr.mxu0 0.0
      %2231 = vmatpush2.msra.mxu0 0.0
      %2232 = vmatprep.subr.mxu0 0.0
      %2233 = vmatpush2.msra.mxu0 0.0
      %2234 = vmatprep.subr.mxu0 0.0
      %2235 = vmatpush2.msra.mxu0 0.0
      %2236 = vmatprep.subr.mxu0 0.0
      %2237 = vmatpush2.msra.mxu0 0.0
      %2238 = vmatprep.subr.mxu0 0.0
      %2239 = vmatpush2.msra.mxu0 0.0
      %2240 = vmatprep.subr.mxu0 0.0
      %2241 = vmatpush2.msra.mxu0 0.0
      %2242 = vmatprep.mubr.f32.mxu0 0.0
      %2243 = vmatmul.mubr.f32.gmra.mxu0 %v2176
      %v2244 = vpop.f32.mrf.mxu0
      %v2245 = vadd.f32 %v2173, %v2244
      %v2246 = vpop.f32.mrf.mxu0
      %2247 = vdwg.mxu0
      %v2248 = vadd.f32 %v2085, %v2245
      %v2249 = vsel %vm932, %v2248, 0.0
      %2250 = vadd.xlane.f32.xlu0 %v2249
      %v2251 = vpop.xlane.xlu0 %2250
      %v2252 = vmul.f32 %v2251, %v936
      %v2253 = vsub.f32 %v2248, %v2252
      %v2254 = vmul.f32 %v2253, %v2253
      %v2255 = vsel %vm932, %v2254, 0.0
      %2256 = vadd.xlane.f32.xlu0 %v2255
      %v2257 = vpop.xlane.xlu0 %2256
      %v2258 = vmul.f32 %v2257, %v936
      %v2259 = vadd.f32 %v2258, 1e-05
      %v2260 = vrsqrt.pop %v2259
      %v2261 = vmul.f32 %v2253, %v2260
      %v2262 = vrot.slane %v772, 2
      %v2264 = vmul.f32 %v2261, %v2262
      %v2265 = vrot.slane %v773, 2
      %v2267 = vadd.f32 %v2264, %v2265
      %v2268 = vsel %vm932, %v2267, 0.0
      %2269 = vadd.xlane.f32.xlu0 %v2268
      %v2270 = vpop.xlane.xlu0 %2269
      %v2271 = vmul.f32 %v2270, %v936
      %v2272 = vsub.f32 %v2267, %v2271
      %v2273 = vmul.f32 %v2272, %v2272
      %v2274 = vsel %vm932, %v2273, 0.0
      %2275 = vadd.xlane.f32.xlu0 %v2274
      %v2276 = vpop.xlane.xlu0 %2275
      %v2277 = vmul.f32 %v2276, %v936
      %v2278 = vadd.f32 %v2277, 1e-05
      %v2279 = vrsqrt.pop %v2278
      %v2280 = vmul.f32 %v2272, %v2279
      %v2281 = vrot.slane %v772, 3
      %v2283 = vmul.f32 %v2280, %v2281
      %v2284 = vrot.slane %v773, 3
      %v2286 = vadd.f32 %v2283, %v2284
      %v2287 = vsel %vm932, %v2286, 0.0
      %2288 = vadd.xlane.f32.xlu0 %v2287
      %v2289 = vpop.xlane.xlu0 %2288
      %v2290 = vmul.f32 %v2289, %v936
      %v2291 = vsub.f32 %v2286, %v2290
      %v2292 = vmul.f32 %v2291, %v2291
      %v2293 = vsel %vm932, %v2292, 0.0
      %2294 = vadd.xlane.f32.xlu0 %v2293
      %v2295 = vpop.xlane.xlu0 %2294
      %v2296 = vmul.f32 %v2295, %v936
      %v2297 = vadd.f32 %v2296, 1e-05
      %v2298 = vrsqrt.pop %v2297
      %v2299 = vmul.f32 %v2291, %v2298
      %v2300 = vrot.slane %v772, 4
      %v2302 = vmul.f32 %v2299, %v2300
      %v2303 = vrot.slane %v773, 4
      %v2305 = vadd.f32 %v2302, %v2303
      %v2306 = vld [vmem:[%s21] sm:$0xff]
      %v2307 = vld [vmem:[%s21 + $0x8] sm:$0xff]
      %v2308 = vld [vmem:[%s21 + $0x10] sm:$0xff]
      %v2309 = vld [vmem:[%s21 + $0x18] sm:$0xff]
      %v2310 = vld [vmem:[%s22] sm:$0x1]
      %v2312 = vsel %vm779, %v2305, 0
      %2314 = vmatprep.subr.mxu0 0.0
      %2315 = vmatpush1.msra.mxu0 0.0
      %2316 = vmatprep.subr.mxu0 0.0
      %2317 = vmatpush1.msra.mxu0 0.0
      %2318 = vmatprep.subr.mxu0 0.0
      %2319 = vmatpush1.msra.mxu0 0.0
      %2320 = vmatprep.subr.mxu0 0.0
      %2321 = vmatpush1.msra.mxu0 0.0
      %2322 = vmatprep.subr.mxu0 0.0
      %2323 = vmatpush1.msra.mxu0 0.0
      %2324 = vmatprep.subr.mxu0 0.0
      %2325 = vmatpush1.msra.mxu0 0.0
      %2326 = vmatprep.subr.mxu0 0.0
      %2327 = vmatpush1.msra.mxu0 0.0
      %2328 = vmatprep.subr.mxu0 0.0
      %2329 = vmatpush1.msra.mxu0 0.0
      %2330 = vmatprep.subr.mxu0 0.0
      %2331 = vmatpush1.msra.mxu0 0.0
      %2332 = vmatprep.subr.mxu0 0.0
      %2333 = vmatpush1.msra.mxu0 0.0
      %2334 = vmatprep.subr.mxu0 0.0
      %2335 = vmatpush1.msra.mxu0 0.0
      %2336 = vmatprep.subr.mxu0 0.0
      %2337 = vmatpush1.msra.mxu0 0.0
      %2338 = vmatprep.subr.mxu0 0.0
      %2339 = vmatpush1.msra.mxu0 %v2309
      %2340 = vmatprep.subr.mxu0 0.0
      %2341 = vmatpush1.msra.mxu0 %v2308
      %2342 = vmatprep.subr.mxu0 0.0
      %2343 = vmatpush1.msra.mxu0 %v2307
      %2344 = vmatprep.subr.mxu0 0.0
      %2345 = vmatpush1.msra.mxu0 %v2306
      %2346 = vmatprep.subr.mxu0 0.0
      %2347 = vmatpush2.msra.mxu0 0.0
      %2348 = vmatprep.subr.mxu0 0.0
      %2349 = vmatpush2.msra.mxu0 0.0
      %2350 = vmatprep.subr.mxu0 0.0
      %2351 = vmatpush2.msra.mxu0 0.0
      %2352 = vmatprep.subr.mxu0 0.0
      %2353 = vmatpush2.msra.mxu0 0.0
      %2354 = vmatprep.subr.mxu0 0.0
      %2355 = vmatpush2.msra.mxu0 0.0
      %2356 = vmatprep.subr.mxu0 0.0
      %2357 = vmatpush2.msra.mxu0 0.0
      %2358 = vmatprep.subr.mxu0 0.0
      %2359 = vmatpush2.msra.mxu0 0.0
      %2360 = vmatprep.subr.mxu0 0.0
      %2361 = vmatpush2.msra.mxu0 0.0
      %2362 = vmatprep.subr.mxu0 0.0
      %2363 = vmatpush2.msra.mxu0 0.0
      %2364 = vmatprep.subr.mxu0 0.0
      %2365 = vmatpush2.msra.mxu0 0.0
      %2366 = vmatprep.subr.mxu0 0.0
      %2367 = vmatpush2.msra.mxu0 0.0
      %2368 = vmatprep.subr.mxu0 0.0
      %2369 = vmatpush2.msra.mxu0 0.0
      %2370 = vmatprep.subr.mxu0 0.0
      %2371 = vmatpush2.msra.mxu0 0.0
      %2372 = vmatprep.subr.mxu0 0.0
      %2373 = vmatpush2.msra.mxu0 0.0
      %2374 = vmatprep.subr.mxu0 0.0
      %2375 = vmatpush2.msra.mxu0 0.0
      %2376 = vmatprep.subr.mxu0 0.0
      %2377 = vmatpush2.msra.mxu0 0.0
      %2378 = vmatprep.mubr.f32.mxu0 0.0
      %2379 = vmatmul.mubr.f32.gmra.mxu0 %v2312
      %v2380 = vpop.f32.mrf.mxu0
      %v2381 = vadd.f32 %v2310, %v2380
      %v2382 = vpop.f32.mrf.mxu0
      %2383 = vdwg.mxu0
      %vm2384 = vcmask 73728
      %2385 = vst.msk [vmem:[%s706] sm:$0x1] %vm2384, %v2381
      %p2386 = scmp.lt.s32.totalorder %s34, 1
      %s2387 = scalar_select %p2386, %s34, 1
      %s2388 = scalar_lea.vmem %s23, %s2387
      // Predicated region
      $region113: #{delicacynet_forward.3} parent=111 // pred_check
        %p2389 = pneg %p540
      $region114: #{delicacynet_forward.3} parent=111 // pred_check_branch
        %2391 = sbr.rel (%p2389) target = $region116
      $region115: #{delicacynet_forward.3} parent=111 // pred_region
        _
      $region116: #{delicacynet_forward.3} parent=111 // pred_fallthru
        _
    $region112: #{delicacynet_forward.3} parent=5 // pred_fallthru
      _
    %p2392 = scmp.le.s32.totalorder 2, %s29
    // Predicated region
    $region117: #{delicacynet_forward.3} parent=5 // pred_check
      %p2393 = pneg %p2392
    $region118: #{delicacynet_forward.3} parent=5 // pred_check_branch
      %2395 = sbr.rel (%p2393) target = $region120
    $region119: #{delicacynet_forward.3} parent=5 // pred_region
      %s2396 = ssub.s32 %s29, 2
      // Predicated region
      $region121: #{delicacynet_forward.3} parent=119 // pred_check
        %p2397 = pneg %p546
      $region122: #{delicacynet_forward.3} parent=119 // pred_check_branch
        %2399 = sbr.rel (%p2397) target = $region124
      $region123: #{delicacynet_forward.3} parent=119 // pred_region
        %p2400 = scmp.lt.s32.totalorder %s35, 1
        %s2401 = scalar_select %p2400, %s35, 1
        %s2402 = scalar_lea.vmem %s23, %s2401
      $region124: #{delicacynet_forward.3} parent=119 // pred_fallthru
        _
    $region120: #{delicacynet_forward.3} parent=5 // pred_fallthru
      _
  $region6: #{delicacynet_forward.3} parent=0 // loop_footer
    %s33 = sadd.s32 1, %s29
  $region7: #{delicacynet_forward.3} parent=0 // loop_footer_branch
    %28 = sbr.rel target = $region3
  $region8: #{delicacynet_forward.3} parent=0 // loop_exit
    _

// kernel: delicacynet_forward.2
$region0: #{delicacynet_forward.2}
  #allocation0 [shape = 'u32[]', space=smem, size = 0x4, offset = 0x4, fixed_abs, tag = 'smem constant byte address 0x4 - core index']
  #allocation1 [shape = 'u32[144,128]{1,0:T(1,128)}', space=vmem, size = 0x12000, scoped, tag = 'internal scratch']
  %s0 = inlined_call_operand.vmem [shape: f32[2,256,4], index: 0, kind: input, shape index: {}]
  %s1 = inlined_call_operand.vmem [shape: f32[1,256,32], index: 1, kind: input, shape index: {}]
  %s2 = inlined_call_operand.vmem [shape: f32[4,8], index: 2, kind: input, shape index: {}]
  %s3 = inlined_call_operand.vmem [shape: f32[1,8], index: 3, kind: input, shape index: {}]
  %s4 = inlined_call_operand.vmem [shape: f32[8,32], index: 4, kind: input, shape index: {}]
  %s5 = inlined_call_operand.vmem [shape: f32[1,32], index: 5, kind: input, shape index: {}]
  %s6 = inlined_call_operand.vmem [shape: f32[32,64], index: 6, kind: input, shape index: {}]
  %s7 = inlined_call_operand.vmem [shape: f32[1,64], index: 7, kind: input, shape index: {}]
  %s8 = inlined_call_operand.vmem [shape: f32[32,32], index: 8, kind: input, shape index: {}]
  %s9 = inlined_call_operand.vmem [shape: f32[1,32], index: 9, kind: input, shape index: {}]
  %s10 = inlined_call_operand.vmem [shape: f32[32,32], index: 10, kind: input, shape index: {}]
  %s11 = inlined_call_operand.vmem [shape: f32[1,32], index: 11, kind: input, shape index: {}]
  %s12 = inlined_call_operand.vmem [shape: f32[2,32], index: 12, kind: input, shape index: {}]
  %s13 = inlined_call_operand.vmem [shape: f32[2,32], index: 13, kind: input, shape index: {}]
  %s14 = inlined_call_operand.vmem [shape: f32[32,64], index: 14, kind: input, shape index: {}]
  %s15 = inlined_call_operand.vmem [shape: f32[1,64], index: 15, kind: input, shape index: {}]
  %s16 = inlined_call_operand.vmem [shape: f32[64,32], index: 16, kind: input, shape index: {}]
  %s17 = inlined_call_operand.vmem [shape: f32[1,32], index: 17, kind: input, shape index: {}]
  %s18 = inlined_call_operand.vmem [shape: f32[2,256,32], index: 18, kind: output, shape index: {}]
  %s19 = sld [smem:[#allocation0]]
  $region105: #{delicacynet_forward.2} parent=0
    _
  %s21 = ssub.s32 1, %s19
  %s22 = scalar_select 0, %s21, %s19
  loop: start=0, step=1, limit=4
  $region2: #{delicacynet_forward.2} parent=0 // loop_pre_header
    _
  $region3: #{delicacynet_forward.2} parent=0 // loop_header
    %s24 = sphi 0, %s28
    %p25 = scmp.ge.s32.totalorder %s24, 4
    %s34 = sphi 0, %s36
    %s37 = sphi 0, %s34
    %s38 = sphi 0, %s37
    %s54 = sphi 0, %s38
    %s58 = sphi 0, %s58
    %s60 = sphi 0, %s58
    %s61 = sphi 0, %s60
    %s75 = sphi 0, %s61
    %s79 = sphi 0, %s79
    %s81 = sphi 0, %s79
    %s82 = sphi 0, %s81
    %s96 = sphi 0, %s82
    %s100 = sphi 0, %s100
    %s102 = sphi 0, %s100
    %s103 = sphi 0, %s102
    %s117 = sphi 0, %s103
    %s121 = sphi 0, %s121
    %s123 = sphi 0, %s121
    %s124 = sphi 0, %s123
    %s138 = sphi 0, %s124
    %s142 = sphi 0, %s142
    %s144 = sphi 0, %s142
    %s145 = sphi 0, %s144
    %s159 = sphi 0, %s145
    %s163 = sphi 0, %s163
    %s165 = sphi 0, %s163
    %s166 = sphi 0, %s165
    %s180 = sphi 0, %s166
    %s184 = sphi 0, %s184
    %s186 = sphi 0, %s184
    %s187 = sphi 0, %s186
    %s201 = sphi 0, %s187
    %s205 = sphi 0, %s205
    %s207 = sphi 0, %s205
    %s208 = sphi 0, %s207
    %s222 = sphi 0, %s208
    %s226 = sphi 0, %s226
    %s228 = sphi 0, %s226
    %s229 = sphi 0, %s228
    %s243 = sphi 0, %s229
    %s247 = sphi 0, %s247
    %s249 = sphi 0, %s247
    %s250 = sphi 0, %s249
    %s264 = sphi 0, %s250
    %s268 = sphi 0, %s268
    %s270 = sphi 0, %s268
    %s271 = sphi 0, %s270
    %s285 = sphi 0, %s271
    %s289 = sphi 0, %s289
    %s291 = sphi 0, %s289
    %s292 = sphi 0, %s291
    %s306 = sphi 0, %s292
    %s310 = sphi 0, %s310
    %s312 = sphi 0, %s310
    %s313 = sphi 0, %s312
    %s327 = sphi 0, %s313
    %s331 = sphi 0, %s331
    %s333 = sphi 0, %s331
    %s334 = sphi 0, %s333
    %s348 = sphi 0, %s334
    %s352 = sphi 0, %s352
    %s354 = sphi 0, %s352
    %s355 = sphi 0, %s354
    %s369 = sphi 0, %s355
    %s373 = sphi 0, %s373
    %s375 = sphi 0, %s373
    %s376 = sphi 0, %s375
    %s390 = sphi 0, %s376
    %s394 = sphi 0, %s394
    %s396 = sphi 0, %s394
    %s397 = sphi 0, %s396
    %s411 = sphi 0, %s397
    %s417 = sphi 0, %s419
    %s420 = sphi 0, %s417
    %s421 = sphi 0, %s420
    %s437 = sphi 0, %s421
  $region4: #{delicacynet_forward.2} parent=0 // loop_header_branch
    %27 = sbr.rel (%p25) target = $region8
  $region5: #{delicacynet_forward.2} parent=0 // loop_body
    %s29 = ssub.s32 %s24, 1
    %s30 = ssub.s32 %s24, 2
    %s31 = sadd.s32 %s24, 1
    %s32 = ssub.s32 %s24, %s31
    %p33 = scmp.eq.s32.totalorder %s32, 0
    %s35 = sadd.s32 %s34, 1
    %s36 = scalar_select %p33, %s34, %s35
    %p39 = pneg %p33
    %p40 = scmp.eq.s32.totalorder %s24, 1
    %p41 = por %p39, %p40
    %p42 = scmp.ne.s32.totalorder %s34, %s37
    %p43 = scmp.eq.s32.totalorder %s24, 0
    %p44 = por %p42, %p43
    %p45 = scmp.ne.s32.totalorder %s34, %s37
    %p46 = scmp.eq.s32.totalorder %s29, 1
    %p47 = por %p45, %p46
    %p48 = scmp.ne.s32.totalorder %s37, %s38
    %p49 = scmp.eq.s32.totalorder %s29, 0
    %p50 = por %p48, %p49
    %p51 = scmp.ne.s32.totalorder %s37, %s38
    %p52 = scmp.eq.s32.totalorder %s30, 1
    %p53 = por %p51, %p52
    %p55 = scmp.ne.s32.totalorder %s38, %s54
    %p56 = scmp.eq.s32.totalorder %s30, 0
    %p57 = por %p55, %p56
    %s59 = sadd.s32 %s58, 1
    %p62 = scmp.eq.s32.totalorder %s24, 1
    %p63 = scmp.ne.s32.totalorder %s58, %s60
    %p64 = scmp.eq.s32.totalorder %s24, 0
    %p65 = por %p63, %p64
    %p66 = scmp.ne.s32.totalorder %s58, %s60
    %p67 = scmp.eq.s32.totalorder %s29, 1
    %p68 = por %p66, %p67
    %p69 = scmp.ne.s32.totalorder %s60, %s61
    %p70 = scmp.eq.s32.totalorder %s29, 0
    %p71 = por %p69, %p70
    %p72 = scmp.ne.s32.totalorder %s60, %s61
    %p73 = scmp.eq.s32.totalorder %s30, 1
    %p74 = por %p72, %p73
    %p76 = scmp.ne.s32.totalorder %s61, %s75
    %p77 = scmp.eq.s32.totalorder %s30, 0
    %p78 = por %p76, %p77
    %s80 = sadd.s32 %s79, 1
    %p83 = scmp.eq.s32.totalorder %s24, 1
    %p84 = scmp.ne.s32.totalorder %s79, %s81
    %p85 = scmp.eq.s32.totalorder %s24, 0
    %p86 = por %p84, %p85
    %p87 = scmp.ne.s32.totalorder %s79, %s81
    %p88 = scmp.eq.s32.totalorder %s29, 1
    %p89 = por %p87, %p88
    %p90 = scmp.ne.s32.totalorder %s81, %s82
    %p91 = scmp.eq.s32.totalorder %s29, 0
    %p92 = por %p90, %p91
    %p93 = scmp.ne.s32.totalorder %s81, %s82
    %p94 = scmp.eq.s32.totalorder %s30, 1
    %p95 = por %p93, %p94
    %p97 = scmp.ne.s32.totalorder %s82, %s96
    %p98 = scmp.eq.s32.totalorder %s30, 0
    %p99 = por %p97, %p98
    %s101 = sadd.s32 %s100, 1
    %p104 = scmp.eq.s32.totalorder %s24, 1
    %p105 = scmp.ne.s32.totalorder %s100, %s102
    %p106 = scmp.eq.s32.totalorder %s24, 0
    %p107 = por %p105, %p106
    %p108 = scmp.ne.s32.totalorder %s100, %s102
    %p109 = scmp.eq.s32.totalorder %s29, 1
    %p110 = por %p108, %p109
    %p111 = scmp.ne.s32.totalorder %s102, %s103
    %p112 = scmp.eq.s32.totalorder %s29, 0
    %p113 = por %p111, %p112
    %p114 = scmp.ne.s32.totalorder %s102, %s103
    %p115 = scmp.eq.s32.totalorder %s30, 1
    %p116 = por %p114, %p115
    %p118 = scmp.ne.s32.totalorder %s103, %s117
    %p119 = scmp.eq.s32.totalorder %s30, 0
    %p120 = por %p118, %p119
    %s122 = sadd.s32 %s121, 1
    %p125 = scmp.eq.s32.totalorder %s24, 1
    %p126 = scmp.ne.s32.totalorder %s121, %s123
    %p127 = scmp.eq.s32.totalorder %s24, 0
    %p128 = por %p126, %p127
    %p129 = scmp.ne.s32.totalorder %s121, %s123
    %p130 = scmp.eq.s32.totalorder %s29, 1
    %p131 = por %p129, %p130
    %p132 = scmp.ne.s32.totalorder %s123, %s124
    %p133 = scmp.eq.s32.totalorder %s29, 0
    %p134 = por %p132, %p133
    %p135 = scmp.ne.s32.totalorder %s123, %s124
    %p136 = scmp.eq.s32.totalorder %s30, 1
    %p137 = por %p135, %p136
    %p139 = scmp.ne.s32.totalorder %s124, %s138
    %p140 = scmp.eq.s32.totalorder %s30, 0
    %p141 = por %p139, %p140
    %s143 = sadd.s32 %s142, 1
    %p146 = scmp.eq.s32.totalorder %s24, 1
    %p147 = scmp.ne.s32.totalorder %s142, %s144
    %p148 = scmp.eq.s32.totalorder %s24, 0
    %p149 = por %p147, %p148
    %p150 = scmp.ne.s32.totalorder %s142, %s144
    %p151 = scmp.eq.s32.totalorder %s29, 1
    %p152 = por %p150, %p151
    %p153 = scmp.ne.s32.totalorder %s144, %s145
    %p154 = scmp.eq.s32.totalorder %s29, 0
    %p155 = por %p153, %p154
    %p156 = scmp.ne.s32.totalorder %s144, %s145
    %p157 = scmp.eq.s32.totalorder %s30, 1
    %p158 = por %p156, %p157
    %p160 = scmp.ne.s32.totalorder %s145, %s159
    %p161 = scmp.eq.s32.totalorder %s30, 0
    %p162 = por %p160, %p161
    %s164 = sadd.s32 %s163, 1
    %p167 = scmp.eq.s32.totalorder %s24, 1
    %p168 = scmp.ne.s32.totalorder %s163, %s165
    %p169 = scmp.eq.s32.totalorder %s24, 0
    %p170 = por %p168, %p169
    %p171 = scmp.ne.s32.totalorder %s163, %s165
    %p172 = scmp.eq.s32.totalorder %s29, 1
    %p173 = por %p171, %p172
    %p174 = scmp.ne.s32.totalorder %s165, %s166
    %p175 = scmp.eq.s32.totalorder %s29, 0
    %p176 = por %p174, %p175
    %p177 = scmp.ne.s32.totalorder %s165, %s166
    %p178 = scmp.eq.s32.totalorder %s30, 1
    %p179 = por %p177, %p178
    %p181 = scmp.ne.s32.totalorder %s166, %s180
    %p182 = scmp.eq.s32.totalorder %s30, 0
    %p183 = por %p181, %p182
    %s185 = sadd.s32 %s184, 1
    %p188 = scmp.eq.s32.totalorder %s24, 1
    %p189 = scmp.ne.s32.totalorder %s184, %s186
    %p190 = scmp.eq.s32.totalorder %s24, 0
    %p191 = por %p189, %p190
    %p192 = scmp.ne.s32.totalorder %s184, %s186
    %p193 = scmp.eq.s32.totalorder %s29, 1
    %p194 = por %p192, %p193
    %p195 = scmp.ne.s32.totalorder %s186, %s187
    %p196 = scmp.eq.s32.totalorder %s29, 0
    %p197 = por %p195, %p196
    %p198 = scmp.ne.s32.totalorder %s186, %s187
    %p199 = scmp.eq.s32.totalorder %s30, 1
    %p200 = por %p198, %p199
    %p202 = scmp.ne.s32.totalorder %s187, %s201
    %p203 = scmp.eq.s32.totalorder %s30, 0
    %p204 = por %p202, %p203
    %s206 = sadd.s32 %s205, 1
    %p209 = scmp.eq.s32.totalorder %s24, 1
    %p210 = scmp.ne.s32.totalorder %s205, %s207
    %p211 = scmp.eq.s32.totalorder %s24, 0
    %p212 = por %p210, %p211
    %p213 = scmp.ne.s32.totalorder %s205, %s207
    %p214 = scmp.eq.s32.totalorder %s29, 1
    %p215 = por %p213, %p214
    %p216 = scmp.ne.s32.totalorder %s207, %s208
    %p217 = scmp.eq.s32.totalorder %s29, 0
    %p218 = por %p216, %p217
    %p219 = scmp.ne.s32.totalorder %s207, %s208
    %p220 = scmp.eq.s32.totalorder %s30, 1
    %p221 = por %p219, %p220
    %p223 = scmp.ne.s32.totalorder %s208, %s222
    %p224 = scmp.eq.s32.totalorder %s30, 0
    %p225 = por %p223, %p224
    %s227 = sadd.s32 %s226, 1
    %p230 = scmp.eq.s32.totalorder %s24, 1
    %p231 = scmp.ne.s32.totalorder %s226, %s228
    %p232 = scmp.eq.s32.totalorder %s24, 0
    %p233 = por %p231, %p232
    %p234 = scmp.ne.s32.totalorder %s226, %s228
    %p235 = scmp.eq.s32.totalorder %s29, 1
    %p236 = por %p234, %p235
    %p237 = scmp.ne.s32.totalorder %s228, %s229
    %p238 = scmp.eq.s32.totalorder %s29, 0
    %p239 = por %p237, %p238
    %p240 = scmp.ne.s32.totalorder %s228, %s229
    %p241 = scmp.eq.s32.totalorder %s30, 1
    %p242 = por %p240, %p241
    %p244 = scmp.ne.s32.totalorder %s229, %s243
    %p245 = scmp.eq.s32.totalorder %s30, 0
    %p246 = por %p244, %p245
    %s248 = sadd.s32 %s247, 1
    %p251 = scmp.eq.s32.totalorder %s24, 1
    %p252 = scmp.ne.s32.totalorder %s247, %s249
    %p253 = scmp.eq.s32.totalorder %s24, 0
    %p254 = por %p252, %p253
    %p255 = scmp.ne.s32.totalorder %s247, %s249
    %p256 = scmp.eq.s32.totalorder %s29, 1
    %p257 = por %p255, %p256
    %p258 = scmp.ne.s32.totalorder %s249, %s250
    %p259 = scmp.eq.s32.totalorder %s29, 0
    %p260 = por %p258, %p259
    %p261 = scmp.ne.s32.totalorder %s249, %s250
    %p262 = scmp.eq.s32.totalorder %s30, 1
    %p263 = por %p261, %p262
    %p265 = scmp.ne.s32.totalorder %s250, %s264
    %p266 = scmp.eq.s32.totalorder %s30, 0
    %p267 = por %p265, %p266
    %s269 = sadd.s32 %s268, 1
    %p272 = scmp.eq.s32.totalorder %s24, 1
    %p273 = scmp.ne.s32.totalorder %s268, %s270
    %p274 = scmp.eq.s32.totalorder %s24, 0
    %p275 = por %p273, %p274
    %p276 = scmp.ne.s32.totalorder %s268, %s270
    %p277 = scmp.eq.s32.totalorder %s29, 1
    %p278 = por %p276, %p277
    %p279 = scmp.ne.s32.totalorder %s270, %s271
    %p280 = scmp.eq.s32.totalorder %s29, 0
    %p281 = por %p279, %p280
    %p282 = scmp.ne.s32.totalorder %s270, %s271
    %p283 = scmp.eq.s32.totalorder %s30, 1
    %p284 = por %p282, %p283
    %p286 = scmp.ne.s32.totalorder %s271, %s285
    %p287 = scmp.eq.s32.totalorder %s30, 0
    %p288 = por %p286, %p287
    %s290 = sadd.s32 %s289, 1
    %p293 = scmp.eq.s32.totalorder %s24, 1
    %p294 = scmp.ne.s32.totalorder %s289, %s291
    %p295 = scmp.eq.s32.totalorder %s24, 0
    %p296 = por %p294, %p295
    %p297 = scmp.ne.s32.totalorder %s289, %s291
    %p298 = scmp.eq.s32.totalorder %s29, 1
    %p299 = por %p297, %p298
    %p300 = scmp.ne.s32.totalorder %s291, %s292
    %p301 = scmp.eq.s32.totalorder %s29, 0
    %p302 = por %p300, %p301
    %p303 = scmp.ne.s32.totalorder %s291, %s292
    %p304 = scmp.eq.s32.totalorder %s30, 1
    %p305 = por %p303, %p304
    %p307 = scmp.ne.s32.totalorder %s292, %s306
    %p308 = scmp.eq.s32.totalorder %s30, 0
    %p309 = por %p307, %p308
    %s311 = sadd.s32 %s310, 1
    %p314 = scmp.eq.s32.totalorder %s24, 1
    %p315 = scmp.ne.s32.totalorder %s310, %s312
    %p316 = scmp.eq.s32.totalorder %s24, 0
    %p317 = por %p315, %p316
    %p318 = scmp.ne.s32.totalorder %s310, %s312
    %p319 = scmp.eq.s32.totalorder %s29, 1
    %p320 = por %p318, %p319
    %p321 = scmp.ne.s32.totalorder %s312, %s313
    %p322 = scmp.eq.s32.totalorder %s29, 0
    %p323 = por %p321, %p322
    %p324 = scmp.ne.s32.totalorder %s312, %s313
    %p325 = scmp.eq.s32.totalorder %s30, 1
    %p326 = por %p324, %p325
    %p328 = scmp.ne.s32.totalorder %s313, %s327
    %p329 = scmp.eq.s32.totalorder %s30, 0
    %p330 = por %p328, %p329
    %s332 = sadd.s32 %s331, 1
    %p335 = scmp.eq.s32.totalorder %s24, 1
    %p336 = scmp.ne.s32.totalorder %s331, %s333
    %p337 = scmp.eq.s32.totalorder %s24, 0
    %p338 = por %p336, %p337
    %p339 = scmp.ne.s32.totalorder %s331, %s333
    %p340 = scmp.eq.s32.totalorder %s29, 1
    %p341 = por %p339, %p340
    %p342 = scmp.ne.s32.totalorder %s333, %s334
    %p343 = scmp.eq.s32.totalorder %s29, 0
    %p344 = por %p342, %p343
    %p345 = scmp.ne.s32.totalorder %s333, %s334
    %p346 = scmp.eq.s32.totalorder %s30, 1
    %p347 = por %p345, %p346
    %p349 = scmp.ne.s32.totalorder %s334, %s348
    %p350 = scmp.eq.s32.totalorder %s30, 0
    %p351 = por %p349, %p350
    %s353 = sadd.s32 %s352, 1
    %p356 = scmp.eq.s32.totalorder %s24, 1
    %p357 = scmp.ne.s32.totalorder %s352, %s354
    %p358 = scmp.eq.s32.totalorder %s24, 0
    %p359 = por %p357, %p358
    %p360 = scmp.ne.s32.totalorder %s352, %s354
    %p361 = scmp.eq.s32.totalorder %s29, 1
    %p362 = por %p360, %p361
    %p363 = scmp.ne.s32.totalorder %s354, %s355
    %p364 = scmp.eq.s32.totalorder %s29, 0
    %p365 = por %p363, %p364
    %p366 = scmp.ne.s32.totalorder %s354, %s355
    %p367 = scmp.eq.s32.totalorder %s30, 1
    %p368 = por %p366, %p367
    %p370 = scmp.ne.s32.totalorder %s355, %s369
    %p371 = scmp.eq.s32.totalorder %s30, 0
    %p372 = por %p370, %p371
    %s374 = sadd.s32 %s373, 1
    %p377 = scmp.eq.s32.totalorder %s24, 1
    %p378 = scmp.ne.s32.totalorder %s373, %s375
    %p379 = scmp.eq.s32.totalorder %s24, 0
    %p380 = por %p378, %p379
    %p381 = scmp.ne.s32.totalorder %s373, %s375
    %p382 = scmp.eq.s32.totalorder %s29, 1
    %p383 = por %p381, %p382
    %p384 = scmp.ne.s32.totalorder %s375, %s376
    %p385 = scmp.eq.s32.totalorder %s29, 0
    %p386 = por %p384, %p385
    %p387 = scmp.ne.s32.totalorder %s375, %s376
    %p388 = scmp.eq.s32.totalorder %s30, 1
    %p389 = por %p387, %p388
    %p391 = scmp.ne.s32.totalorder %s376, %s390
    %p392 = scmp.eq.s32.totalorder %s30, 0
    %p393 = por %p391, %p392
    %s395 = sadd.s32 %s394, 1
    %p398 = scmp.eq.s32.totalorder %s24, 1
    %p399 = scmp.ne.s32.totalorder %s394, %s396
    %p400 = scmp.eq.s32.totalorder %s24, 0
    %p401 = por %p399, %p400
    %p402 = scmp.ne.s32.totalorder %s394, %s396
    %p403 = scmp.eq.s32.totalorder %s29, 1
    %p404 = por %p402, %p403
    %p405 = scmp.ne.s32.totalorder %s396, %s397
    %p406 = scmp.eq.s32.totalorder %s29, 0
    %p407 = por %p405, %p406
    %p408 = scmp.ne.s32.totalorder %s396, %s397
    %p409 = scmp.eq.s32.totalorder %s30, 1
    %p410 = por %p408, %p409
    %p412 = scmp.ne.s32.totalorder %s397, %s411
    %p413 = scmp.eq.s32.totalorder %s30, 0
    %p414 = por %p412, %p413
    %s415 = ssub.s32 %s24, %s31
    %p416 = scmp.eq.s32.totalorder %s415, 0
    %s418 = sadd.s32 %s417, 1
    %s419 = scalar_select %p416, %s417, %s418
    %p422 = pneg %p416
    %p423 = scmp.eq.s32.totalorder %s24, 1
    %p424 = por %p422, %p423
    %p425 = scmp.ne.s32.totalorder %s417, %s420
    %p426 = scmp.eq.s32.totalorder %s24, 0
    %p427 = por %p425, %p426
    %p428 = scmp.ne.s32.totalorder %s417, %s420
    %p429 = scmp.eq.s32.totalorder %s29, 1
    %p430 = por %p428, %p429
    %p431 = scmp.ne.s32.totalorder %s420, %s421
    %p432 = scmp.eq.s32.totalorder %s29, 0
    %p433 = por %p431, %p432
    %p434 = scmp.ne.s32.totalorder %s420, %s421
    %p435 = scmp.eq.s32.totalorder %s30, 1
    %p436 = por %p434, %p435
    %p438 = scmp.ne.s32.totalorder %s421, %s437
    %p439 = scmp.eq.s32.totalorder %s30, 0
    %p440 = por %p438, %p439
    %p441 = scmp.le.s32.totalorder 1, %s24
    %p442 = scmp.lt.s32.totalorder %s24, 3
    %p443 = pnand %p441, %p442
    %p444 = pneg %p443
    // Predicated region
    $region9: #{delicacynet_forward.2} parent=5 // pred_check
      _
    $region10: #{delicacynet_forward.2} parent=5 // pred_check_branch
      %446 = sbr.rel (%p443) target = $region12
    $region11: #{delicacynet_forward.2} parent=5 // pred_region
      %s447 = ssub.s32 %s24, 1
      // Predicated region
      $region13: #{delicacynet_forward.2} parent=11 // pred_check
        %p448 = pneg %p71
      $region14: #{delicacynet_forward.2} parent=11 // pred_check_branch
        %450 = sbr.rel (%p448) target = $region16
      $region15: #{delicacynet_forward.2} parent=11 // pred_region
        _
      $region16: #{delicacynet_forward.2} parent=11 // pred_fallthru
        _
      // Predicated region
      $region17: #{delicacynet_forward.2} parent=11 // pred_check
        %p451 = pneg %p92
      $region18: #{delicacynet_forward.2} parent=11 // pred_check_branch
        %453 = sbr.rel (%p451) target = $region20
      $region19: #{delicacynet_forward.2} parent=11 // pred_region
        _
      $region20: #{delicacynet_forward.2} parent=11 // pred_fallthru
        _
      // Predicated region
      $region21: #{delicacynet_forward.2} parent=11 // pred_check
        %p454 = pneg %p113
      $region22: #{delicacynet_forward.2} parent=11 // pred_check_branch
        %456 = sbr.rel (%p454) target = $region24
      $region23: #{delicacynet_forward.2} parent=11 // pred_region
        _
      $region24: #{delicacynet_forward.2} parent=11 // pred_fallthru
        _
      // Predicated region
      $region25: #{delicacynet_forward.2} parent=11 // pred_check
        %p457 = pneg %p134
      $region26: #{delicacynet_forward.2} parent=11 // pred_check_branch
        %459 = sbr.rel (%p457) target = $region28
      $region27: #{delicacynet_forward.2} parent=11 // pred_region
        _
      $region28: #{delicacynet_forward.2} parent=11 // pred_fallthru
        _
      // Predicated region
      $region29: #{delicacynet_forward.2} parent=11 // pred_check
        %p460 = pneg %p155
      $region30: #{delicacynet_forward.2} parent=11 // pred_check_branch
        %462 = sbr.rel (%p460) target = $region32
      $region31: #{delicacynet_forward.2} parent=11 // pred_region
        _
      $region32: #{delicacynet_forward.2} parent=11 // pred_fallthru
        _
      // Predicated region
      $region33: #{delicacynet_forward.2} parent=11 // pred_check
        %p463 = pneg %p176
      $region34: #{delicacynet_forward.2} parent=11 // pred_check_branch
        %465 = sbr.rel (%p463) target = $region36
      $region35: #{delicacynet_forward.2} parent=11 // pred_region
        _
      $region36: #{delicacynet_forward.2} parent=11 // pred_fallthru
        _
      // Predicated region
      $region37: #{delicacynet_forward.2} parent=11 // pred_check
        %p466 = pneg %p197
      $region38: #{delicacynet_forward.2} parent=11 // pred_check_branch
        %468 = sbr.rel (%p466) target = $region40
      $region39: #{delicacynet_forward.2} parent=11 // pred_region
        _
      $region40: #{delicacynet_forward.2} parent=11 // pred_fallthru
        _
      // Predicated region
      $region41: #{delicacynet_forward.2} parent=11 // pred_check
        %p469 = pneg %p218
      $region42: #{delicacynet_forward.2} parent=11 // pred_check_branch
        %471 = sbr.rel (%p469) target = $region44
      $region43: #{delicacynet_forward.2} parent=11 // pred_region
        _
      $region44: #{delicacynet_forward.2} parent=11 // pred_fallthru
        _
      // Predicated region
      $region45: #{delicacynet_forward.2} parent=11 // pred_check
        %p472 = pneg %p239
      $region46: #{delicacynet_forward.2} parent=11 // pred_check_branch
        %474 = sbr.rel (%p472) target = $region48
      $region47: #{delicacynet_forward.2} parent=11 // pred_region
        _
      $region48: #{delicacynet_forward.2} parent=11 // pred_fallthru
        _
      // Predicated region
      $region49: #{delicacynet_forward.2} parent=11 // pred_check
        %p475 = pneg %p260
      $region50: #{delicacynet_forward.2} parent=11 // pred_check_branch
        %477 = sbr.rel (%p475) target = $region52
      $region51: #{delicacynet_forward.2} parent=11 // pred_region
        _
      $region52: #{delicacynet_forward.2} parent=11 // pred_fallthru
        _
      // Predicated region
      $region53: #{delicacynet_forward.2} parent=11 // pred_check
        %p478 = pneg %p281
      $region54: #{delicacynet_forward.2} parent=11 // pred_check_branch
        %480 = sbr.rel (%p478) target = $region56
      $region55: #{delicacynet_forward.2} parent=11 // pred_region
        _
      $region56: #{delicacynet_forward.2} parent=11 // pred_fallthru
        _
      // Predicated region
      $region57: #{delicacynet_forward.2} parent=11 // pred_check
        %p481 = pneg %p302
      $region58: #{delicacynet_forward.2} parent=11 // pred_check_branch
        %483 = sbr.rel (%p481) target = $region60
      $region59: #{delicacynet_forward.2} parent=11 // pred_region
        _
      $region60: #{delicacynet_forward.2} parent=11 // pred_fallthru
        _
      // Predicated region
      $region61: #{delicacynet_forward.2} parent=11 // pred_check
        %p484 = pneg %p323
      $region62: #{delicacynet_forward.2} parent=11 // pred_check_branch
        %486 = sbr.rel (%p484) target = $region64
      $region63: #{delicacynet_forward.2} parent=11 // pred_region
        _
      $region64: #{delicacynet_forward.2} parent=11 // pred_fallthru
        _
      // Predicated region
      $region65: #{delicacynet_forward.2} parent=11 // pred_check
        %p487 = pneg %p344
      $region66: #{delicacynet_forward.2} parent=11 // pred_check_branch
        %489 = sbr.rel (%p487) target = $region68
      $region67: #{delicacynet_forward.2} parent=11 // pred_region
        _
      $region68: #{delicacynet_forward.2} parent=11 // pred_fallthru
        _
      // Predicated region
      $region69: #{delicacynet_forward.2} parent=11 // pred_check
        %p490 = pneg %p365
      $region70: #{delicacynet_forward.2} parent=11 // pred_check_branch
        %492 = sbr.rel (%p490) target = $region72
      $region71: #{delicacynet_forward.2} parent=11 // pred_region
        _
      $region72: #{delicacynet_forward.2} parent=11 // pred_fallthru
        _
      // Predicated region
      $region73: #{delicacynet_forward.2} parent=11 // pred_check
        %p493 = pneg %p386
      $region74: #{delicacynet_forward.2} parent=11 // pred_check_branch
        %495 = sbr.rel (%p493) target = $region76
      $region75: #{delicacynet_forward.2} parent=11 // pred_region
        _
      $region76: #{delicacynet_forward.2} parent=11 // pred_fallthru
        _
      // Predicated region
      $region77: #{delicacynet_forward.2} parent=11 // pred_check
        %p496 = pneg %p407
      $region78: #{delicacynet_forward.2} parent=11 // pred_check_branch
        %498 = sbr.rel (%p496) target = $region80
      $region79: #{delicacynet_forward.2} parent=11 // pred_region
        _
      $region80: #{delicacynet_forward.2} parent=11 // pred_fallthru
        _
    $region12: #{delicacynet_forward.2} parent=5 // pred_fallthru
      _
    %p499 = scmp.lt.s32.totalorder %s24, 2
    // Predicated region
    $region81: #{delicacynet_forward.2} parent=5 // pred_check
      %p500 = pneg %p499
    $region82: #{delicacynet_forward.2} parent=5 // pred_check_branch
      %502 = sbr.rel (%p500) target = $region84
    $region83: #{delicacynet_forward.2} parent=5 // pred_region
      // Predicated region
      $region85: #{delicacynet_forward.2} parent=83 // pred_check
        %p503 = pneg %p44
      $region86: #{delicacynet_forward.2} parent=83 // pred_check_branch
        %505 = sbr.rel (%p503) target = $region88
      $region87: #{delicacynet_forward.2} parent=83 // pred_region
        %p506 = scmp.lt.s32.totalorder %s24, 1
        %s507 = scalar_select %p506, %s24, 1
        %s508 = smul.addr %s507, 32
        %s509 = smul.addr %s508, 8
        %s510 = scalar_lea.vmem %s0, %s509
      $region88: #{delicacynet_forward.2} parent=83 // pred_fallthru
        _
    $region84: #{delicacynet_forward.2} parent=5 // pred_fallthru
      _
    %p511 = scmp.le.s32.totalorder 1, %s24
    %p512 = scmp.lt.s32.totalorder %s24, 3
    %p513 = pnand %p511, %p512
    %p514 = pneg %p513
    // Predicated region
    $region89: #{delicacynet_forward.2} parent=5 // pred_check
      _
    $region90: #{delicacynet_forward.2} parent=5 // pred_check_branch
      %516 = sbr.rel (%p513) target = $region92
    $region91: #{delicacynet_forward.2} parent=5 // pred_region
      %s517 = ssub.s32 %s24, 1
      %p518 = scmp.lt.s32.totalorder %s29, 1
      %s519 = scalar_select %p518, %s29, 1
      %s520 = smul.addr %s519, 32
      %s521 = smul.addr %s520, 8
      %s522 = scalar_lea.vmem %s0, %s521
      %p523 = pneg %p50
      %p524 = pneg %p47
      %p525 = pneg %p71
      %p526 = pneg %p68
      %p527 = pneg %p92
      %p528 = pneg %p89
      %p529 = pneg %p113
      %p530 = pneg %p110
      %p531 = pneg %p134
      %p532 = pneg %p131
      %p533 = pneg %p155
      %p534 = pneg %p152
      %p535 = pneg %p176
      %p536 = pneg %p173
      %p537 = pneg %p197
      %p538 = pneg %p194
      %p539 = pneg %p218
      %p540 = pneg %p215
      %p541 = pneg %p239
      %p542 = pneg %p236
      %p543 = pneg %p260
      %p544 = pneg %p257
      %p545 = pneg %p281
      %p546 = pneg %p278
      %p547 = pneg %p302
      %p548 = pneg %p299
      %p549 = pneg %p323
      %p550 = pneg %p320
      %p551 = pneg %p344
      %p552 = pneg %p341
      %p553 = pneg %p365
      %p554 = pneg %p362
      %p555 = pneg %p386
      %p556 = pneg %p383
      %p557 = pneg %p407
      %p558 = pneg %p404
      %p559 = pneg %p433
      %p560 = pneg %p430
      %p561 = scmp.lt.s32.totalorder %s29, 1
      %s562 = scalar_select %p561, %s29, 1
      %s563 = smul.addr %s562, 32
      %s564 = smul.addr %s563, 8
      %s565 = scalar_lea.vmem %s18, %s564
      %p566 = scmp.lt.s32.totalorder %s29, 1
      %s567 = scalar_select %p566, %s29, 1
      %s568 = smul.addr %s567, 32
      %s569 = smul.addr %s568, 8
      %s570 = scalar_lea.vmem %s0, %s569
      %p571 = scmp.lt.s32.totalorder %s29, 1
      %s572 = scalar_select %p571, %s29, 1
      %s573 = smul.addr %s572, 32
      %s574 = smul.addr %s573, 8
      %s575 = scalar_lea.vmem %s18, %s574
      %v576 = vld [vmem:[%s570] sm:$0xff]
      %v577 = vld [vmem:[%s570 + $0x8] sm:$0xff]
      %v578 = vld [vmem:[%s570 + $0x10] sm:$0xff]
      %v579 = vld [vmem:[%s570 + $0x18] sm:$0xff]
      %v580 = vld [vmem:[%s570 + $0x20] sm:$0xff]
      %v581 = vld [vmem:[%s570 + $0x28] sm:$0xff]
      %v582 = vld [vmem:[%s570 + $0x30] sm:$0xff]
      %v583 = vld [vmem:[%s570 + $0x38] sm:$0xff]
      %v584 = vld [vmem:[%s570 + $0x40] sm:$0xff]
      %v585 = vld [vmem:[%s570 + $0x48] sm:$0xff]
      %v586 = vld [vmem:[%s570 + $0x50] sm:$0xff]
      %v587 = vld [vmem:[%s570 + $0x58] sm:$0xff]
      %v588 = vld [vmem:[%s570 + $0x60] sm:$0xff]
      %v589 = vld [vmem:[%s570 + $0x68] sm:$0xff]
      %v590 = vld [vmem:[%s570 + $0x70] sm:$0xff]
      %v591 = vld [vmem:[%s570 + $0x78] sm:$0xff]
      %v592 = vld [vmem:[%s570 + $0x80] sm:$0xff]
      %v593 = vld [vmem:[%s570 + $0x88] sm:$0xff]
      %v594 = vld [vmem:[%s570 + $0x90] sm:$0xff]
      %v595 = vld [vmem:[%s570 + $0x98] sm:$0xff]
      %v596 = vld [vmem:[%s570 + $0xa0] sm:$0xff]
      %v597 = vld [vmem:[%s570 + $0xa8] sm:$0xff]
      %v598 = vld [vmem:[%s570 + $0xb0] sm:$0xff]
      %v599 = vld [vmem:[%s570 + $0xb8] sm:$0xff]
      %v600 = vld [vmem:[%s570 + $0xc0] sm:$0xff]
      %v601 = vld [vmem:[%s570 + $0xc8] sm:$0xff]
      %v602 = vld [vmem:[%s570 + $0xd0] sm:$0xff]
      %v603 = vld [vmem:[%s570 + $0xd8] sm:$0xff]
      %v604 = vld [vmem:[%s570 + $0xe0] sm:$0xff]
      %v605 = vld [vmem:[%s570 + $0xe8] sm:$0xff]
      %v606 = vld [vmem:[%s570 + $0xf0] sm:$0xff]
      %v607 = vld [vmem:[%s570 + $0xf8] sm:$0xff]
      %v608 = vld [vmem:[%s1] sm:$0xff]
      %v609 = vld [vmem:[%s1 + $0x8] sm:$0xff]
      %v610 = vld [vmem:[%s1 + $0x10] sm:$0xff]
      %v611 = vld [vmem:[%s1 + $0x18] sm:$0xff]
      %v612 = vld [vmem:[%s1 + $0x20] sm:$0xff]
      %v613 = vld [vmem:[%s1 + $0x28] sm:$0xff]
      %v614 = vld [vmem:[%s1 + $0x30] sm:$0xff]
      %v615 = vld [vmem:[%s1 + $0x38] sm:$0xff]
      %v616 = vld [vmem:[%s1 + $0x40] sm:$0xff]
      %v617 = vld [vmem:[%s1 + $0x48] sm:$0xff]
      %v618 = vld [vmem:[%s1 + $0x50] sm:$0xff]
      %v619 = vld [vmem:[%s1 + $0x58] sm:$0xff]
      %v620 = vld [vmem:[%s1 + $0x60] sm:$0xff]
      %v621 = vld [vmem:[%s1 + $0x68] sm:$0xff]
      %v622 = vld [vmem:[%s1 + $0x70] sm:$0xff]
      %v623 = vld [vmem:[%s1 + $0x78] sm:$0xff]
      %v624 = vld [vmem:[%s1 + $0x80] sm:$0xff]
      %v625 = vld [vmem:[%s1 + $0x88] sm:$0xff]
      %v626 = vld [vmem:[%s1 + $0x90] sm:$0xff]
      %v627 = vld [vmem:[%s1 + $0x98] sm:$0xff]
      %v628 = vld [vmem:[%s1 + $0xa0] sm:$0xff]
      %v629 = vld [vmem:[%s1 + $0xa8] sm:$0xff]
      %v630 = vld [vmem:[%s1 + $0xb0] sm:$0xff]
      %v631 = vld [vmem:[%s1 + $0xb8] sm:$0xff]
      %v632 = vld [vmem:[%s1 + $0xc0] sm:$0xff]
      %v633 = vld [vmem:[%s1 + $0xc8] sm:$0xff]
      %v634 = vld [vmem:[%s1 + $0xd0] sm:$0xff]
      %v635 = vld [vmem:[%s1 + $0xd8] sm:$0xff]
      %v636 = vld [vmem:[%s1 + $0xe0] sm:$0xff]
      %v637 = vld [vmem:[%s1 + $0xe8] sm:$0xff]
      %v638 = vld [vmem:[%s1 + $0xf0] sm:$0xff]
      %v639 = vld [vmem:[%s1 + $0xf8] sm:$0xff]
      %v640 = vld [vmem:[%s12] sm:$0x3]
      %v641 = vld [vmem:[%s13] sm:$0x3]
      %v642 = vld [vmem:[%s2] sm:$0xf]
      %v643 = vld [vmem:[%s3] sm:$0x1]
      %v645 = vlaneseq
      %v646 = vshrl.u32 %v645, 7
      %v647 = vsub.s32 0, %v646
      %v648 = vrot.slane %v643, %v647
      %vm650 = vcmask 31744
      %v652 = vsel %vm650, %v576, 0
      %v655 = vsel %vm650, %v577, 0
      %v658 = vsel %vm650, %v578, 0
      %v661 = vsel %vm650, %v579, 0
      %v664 = vsel %vm650, %v580, 0
      %v667 = vsel %vm650, %v581, 0
      %v670 = vsel %vm650, %v582, 0
      %v673 = vsel %vm650, %v583, 0
      %v676 = vsel %vm650, %v584, 0
      %v679 = vsel %vm650, %v585, 0
      %v682 = vsel %vm650, %v586, 0
      %v685 = vsel %vm650, %v587, 0
      %v688 = vsel %vm650, %v588, 0
      %v691 = vsel %vm650, %v589, 0
      %v694 = vsel %vm650, %v590, 0
      %v697 = vsel %vm650, %v591, 0
      %v700 = vsel %vm650, %v592, 0
      %v703 = vsel %vm650, %v593, 0
      %v706 = vsel %vm650, %v594, 0
      %v709 = vsel %vm650, %v595, 0
      %v712 = vsel %vm650, %v596, 0
      %v715 = vsel %vm650, %v597, 0
      %v718 = vsel %vm650, %v598, 0
      %v721 = vsel %vm650, %v599, 0
      %v724 = vsel %vm650, %v600, 0
      %v727 = vsel %vm650, %v601, 0
      %v730 = vsel %vm650, %v602, 0
      %v733 = vsel %vm650, %v603, 0
      %v736 = vsel %vm650, %v604, 0
      %v739 = vsel %vm650, %v605, 0
      %v742 = vsel %vm650, %v606, 0
      %v745 = vsel %vm650, %v607, 0
      %vm747 = vcmask 1043456
      %v749 = vsel %vm747, %v642, 0
      %751 = vmatprep.subr.mxu0 0.0
      %752 = vmatpush1.msra.mxu0 0.0
      %753 = vmatprep.subr.mxu0 0.0
      %754 = vmatpush1.msra.mxu0 0.0
      %755 = vmatprep.subr.mxu0 0.0
      %756 = vmatpush1.msra.mxu0 0.0
      %757 = vmatprep.subr.mxu0 0.0
      %758 = vmatpush1.msra.mxu0 0.0
      %759 = vmatprep.subr.mxu0 0.0
      %760 = vmatpush1.msra.mxu0 0.0
      %761 = vmatprep.subr.mxu0 0.0
      %762 = vmatpush1.msra.mxu0 0.0
      %763 = vmatprep.subr.mxu0 0.0
      %764 = vmatpush1.msra.mxu0 0.0
      %765 = vmatprep.subr.mxu0 0.0
      %766 = vmatpush1.msra.mxu0 0.0
      %767 = vmatprep.subr.mxu0 0.0
      %768 = vmatpush1.msra.mxu0 0.0
      %769 = vmatprep.subr.mxu0 0.0
      %770 = vmatpush1.msra.mxu0 0.0
      %771 = vmatprep.subr.mxu0 0.0
      %772 = vmatpush1.msra.mxu0 0.0
      %773 = vmatprep.subr.mxu0 0.0
      %774 = vmatpush1.msra.mxu0 0.0
      %775 = vmatprep.subr.mxu0 0.0
      %776 = vmatpush1.msra.mxu0 0.0
      %777 = vmatprep.subr.mxu0 0.0
      %778 = vmatpush1.msra.mxu0 0.0
      %779 = vmatprep.subr.mxu0 0.0
      %780 = vmatpush1.msra.mxu0 0.0
      %781 = vmatprep.subr.mxu0 0.0
      %782 = vmatpush1.msra.mxu0 %v749
      %783 = vmatprep.subr.mxu0 0.0
      %784 = vmatpush2.msra.mxu0 0.0
      %785 = vmatprep.subr.mxu0 0.0
      %786 = vmatpush2.msra.mxu0 0.0
      %787 = vmatprep.subr.mxu0 0.0
      %788 = vmatpush2.msra.mxu0 0.0
      %789 = vmatprep.subr.mxu0 0.0
      %790 = vmatpush2.msra.mxu0 0.0
      %791 = vmatprep.subr.mxu0 0.0
      %792 = vmatpush2.msra.mxu0 0.0
      %793 = vmatprep.subr.mxu0 0.0
      %794 = vmatpush2.msra.mxu0 0.0
      %795 = vmatprep.subr.mxu0 0.0
      %796 = vmatpush2.msra.mxu0 0.0
      %797 = vmatprep.subr.mxu0 0.0
      %798 = vmatpush2.msra.mxu0 0.0
      %799 = vmatprep.subr.mxu0 0.0
      %800 = vmatpush2.msra.mxu0 0.0
      %801 = vmatprep.subr.mxu0 0.0
      %802 = vmatpush2.msra.mxu0 0.0
      %803 = vmatprep.subr.mxu0 0.0
      %804 = vmatpush2.msra.mxu0 0.0
      %805 = vmatprep.subr.mxu0 0.0
      %806 = vmatpush2.msra.mxu0 0.0
      %807 = vmatprep.subr.mxu0 0.0
      %808 = vmatpush2.msra.mxu0 0.0
      %809 = vmatprep.subr.mxu0 0.0
      %810 = vmatpush2.msra.mxu0 0.0
      %811 = vmatprep.subr.mxu0 0.0
      %812 = vmatpush2.msra.mxu0 0.0
      %813 = vmatprep.subr.mxu0 0.0
      %814 = vmatpush2.msra.mxu0 0.0
      %815 = vmatprep.mubr.f32.mxu0 0.0
      %816 = vmatmul.mubr.f32.gmra.mxu0 %v652
      %v817 = vpop.f32.mrf.mxu0
      %v818 = vadd.f32 %v648, %v817
      %v819 = vpop.f32.mrf.mxu0
      %820 = vmatprep.mubr.f32.mxu0 0.0
      %821 = vmatmul.mubr.f32.gmra.mxu0 %v655
      %v822 = vpop.f32.mrf.mxu0
      %v823 = vadd.f32 %v648, %v822
      %v824 = vpop.f32.mrf.mxu0
      %825 = vmatprep.mubr.f32.mxu0 0.0
      %826 = vmatmul.mubr.f32.gmra.mxu0 %v658
      %v827 = vpop.f32.mrf.mxu0
      %v828 = vadd.f32 %v648, %v827
      %v829 = vpop.f32.mrf.mxu0
      %830 = vmatprep.mubr.f32.mxu0 0.0
      %831 = vmatmul.mubr.f32.gmra.mxu0 %v661
      %v832 = vpop.f32.mrf.mxu0
      %v833 = vadd.f32 %v648, %v832
      %v834 = vpop.f32.mrf.mxu0
      %835 = vmatprep.mubr.f32.mxu0 0.0
      %836 = vmatmul.mubr.f32.gmra.mxu0 %v664
      %v837 = vpop.f32.mrf.mxu0
      %v838 = vadd.f32 %v648, %v837
      %v839 = vpop.f32.mrf.mxu0
      %840 = vmatprep.mubr.f32.mxu0 0.0
      %841 = vmatmul.mubr.f32.gmra.mxu0 %v667
      %v842 = vpop.f32.mrf.mxu0
      %v843 = vadd.f32 %v648, %v842
      %v844 = vpop.f32.mrf.mxu0
      %845 = vmatprep.mubr.f32.mxu0 0.0
      %846 = vmatmul.mubr.f32.gmra.mxu0 %v670
      %v847 = vpop.f32.mrf.mxu0
      %v848 = vadd.f32 %v648, %v847
      %v849 = vpop.f32.mrf.mxu0
      %850 = vmatprep.mubr.f32.mxu0 0.0
      %851 = vmatmul.mubr.f32.gmra.mxu0 %v673
      %v852 = vpop.f32.mrf.mxu0
      %v853 = vadd.f32 %v648, %v852
      %v854 = vpop.f32.mrf.mxu0
      %855 = vmatprep.mubr.f32.mxu0 0.0
      %856 = vmatmul.mubr.f32.gmra.mxu0 %v676
      %v857 = vpop.f32.mrf.mxu0
      %v858 = vadd.f32 %v648, %v857
      %v859 = vpop.f32.mrf.mxu0
      %860 = vmatprep.mubr.f32.mxu0 0.0
      %861 = vmatmul.mubr.f32.gmra.mxu0 %v679
      %v862 = vpop.f32.mrf.mxu0
      %v863 = vadd.f32 %v648, %v862
      %v864 = vpop.f32.mrf.mxu0
      %865 = vmatprep.mubr.f32.mxu0 0.0
      %866 = vmatmul.mubr.f32.gmra.mxu0 %v682
      %v867 = vpop.f32.mrf.mxu0
      %v868 = vadd.f32 %v648, %v867
      %v869 = vpop.f32.mrf.mxu0
      %870 = vmatprep.mubr.f32.mxu0 0.0
      %871 = vmatmul.mubr.f32.gmra.mxu0 %v685
      %v872 = vpop.f32.mrf.mxu0
      %v873 = vadd.f32 %v648, %v872
      %v874 = vpop.f32.mrf.mxu0
      %875 = vmatprep.mubr.f32.mxu0 0.0
      %876 = vmatmul.mubr.f32.gmra.mxu0 %v688
      %v877 = vpop.f32.mrf.mxu0
      %v878 = vadd.f32 %v648, %v877
      %v879 = vpop.f32.mrf.mxu0
      %880 = vmatprep.mubr.f32.mxu0 0.0
      %881 = vmatmul.mubr.f32.gmra.mxu0 %v691
      %v882 = vpop.f32.mrf.mxu0
      %v883 = vadd.f32 %v648, %v882
      %v884 = vpop.f32.mrf.mxu0
      %885 = vmatprep.mubr.f32.mxu0 0.0
      %886 = vmatmul.mubr.f32.gmra.mxu0 %v694
      %v887 = vpop.f32.mrf.mxu0
      %v888 = vadd.f32 %v648, %v887
      %v889 = vpop.f32.mrf.mxu0
      %890 = vmatprep.mubr.f32.mxu0 0.0
      %891 = vmatmul.mubr.f32.gmra.mxu0 %v697
      %v892 = vpop.f32.mrf.mxu0
      %v893 = vadd.f32 %v648, %v892
      %v894 = vpop.f32.mrf.mxu0
      %895 = vmatprep.mubr.f32.mxu0 0.0
      %896 = vmatmul.mubr.f32.gmra.mxu0 %v700
      %v897 = vpop.f32.mrf.mxu0
      %v898 = vadd.f32 %v648, %v897
      %v899 = vpop.f32.mrf.mxu0
      %900 = vmatprep.mubr.f32.mxu0 0.0
      %901 = vmatmul.mubr.f32.gmra.mxu0 %v703
      %v902 = vpop.f32.mrf.mxu0
      %v903 = vadd.f32 %v648, %v902
      %v904 = vpop.f32.mrf.mxu0
      %905 = vmatprep.mubr.f32.mxu0 0.0
      %906 = vmatmul.mubr.f32.gmra.mxu0 %v706
      %v907 = vpop.f32.mrf.mxu0
      %v908 = vadd.f32 %v648, %v907
      %v909 = vpop.f32.mrf.mxu0
      %910 = vmatprep.mubr.f32.mxu0 0.0
      %911 = vmatmul.mubr.f32.gmra.mxu0 %v709
      %v912 = vpop.f32.mrf.mxu0
      %v913 = vadd.f32 %v648, %v912
      %v914 = vpop.f32.mrf.mxu0
      %915 = vmatprep.mubr.f32.mxu0 0.0
      %916 = vmatmul.mubr.f32.gmra.mxu0 %v712
      %v917 = vpop.f32.mrf.mxu0
      %v918 = vadd.f32 %v648, %v917
      %v919 = vpop.f32.mrf.mxu0
      %920 = vmatprep.mubr.f32.mxu0 0.0
      %921 = vmatmul.mubr.f32.gmra.mxu0 %v715
      %v922 = vpop.f32.mrf.mxu0
      %v923 = vadd.f32 %v648, %v922
      %v924 = vpop.f32.mrf.mxu0
      %925 = vmatprep.mubr.f32.mxu0 0.0
      %926 = vmatmul.mubr.f32.gmra.mxu0 %v718
      %v927 = vpop.f32.mrf.mxu0
      %v928 = vadd.f32 %v648, %v927
      %v929 = vpop.f32.mrf.mxu0
      %930 = vmatprep.mubr.f32.mxu0 0.0
      %931 = vmatmul.mubr.f32.gmra.mxu0 %v721
      %v932 = vpop.f32.mrf.mxu0
      %v933 = vadd.f32 %v648, %v932
      %v934 = vpop.f32.mrf.mxu0
      %935 = vmatprep.mubr.f32.mxu0 0.0
      %936 = vmatmul.mubr.f32.gmra.mxu0 %v724
      %v937 = vpop.f32.mrf.mxu0
      %v938 = vadd.f32 %v648, %v937
      %v939 = vpop.f32.mrf.mxu0
      %940 = vmatprep.mubr.f32.mxu0 0.0
      %941 = vmatmul.mubr.f32.gmra.mxu0 %v727
      %v942 = vpop.f32.mrf.mxu0
      %v943 = vadd.f32 %v648, %v942
      %v944 = vpop.f32.mrf.mxu0
      %945 = vmatprep.mubr.f32.mxu0 0.0
      %946 = vmatmul.mubr.f32.gmra.mxu0 %v730
      %v947 = vpop.f32.mrf.mxu0
      %v948 = vadd.f32 %v648, %v947
      %v949 = vpop.f32.mrf.mxu0
      %950 = vmatprep.mubr.f32.mxu0 0.0
      %951 = vmatmul.mubr.f32.gmra.mxu0 %v733
      %v952 = vpop.f32.mrf.mxu0
      %v953 = vadd.f32 %v648, %v952
      %v954 = vpop.f32.mrf.mxu0
      %955 = vmatprep.mubr.f32.mxu0 0.0
      %956 = vmatmul.mubr.f32.gmra.mxu0 %v736
      %v957 = vpop.f32.mrf.mxu0
      %v958 = vadd.f32 %v648, %v957
      %v959 = vpop.f32.mrf.mxu0
      %960 = vmatprep.mubr.f32.mxu0 0.0
      %961 = vmatmul.mubr.f32.gmra.mxu0 %v739
      %v962 = vpop.f32.mrf.mxu0
      %v963 = vadd.f32 %v648, %v962
      %v964 = vpop.f32.mrf.mxu0
      %965 = vmatprep.mubr.f32.mxu0 0.0
      %966 = vmatmul.mubr.f32.gmra.mxu0 %v742
      %v967 = vpop.f32.mrf.mxu0
      %v968 = vadd.f32 %v648, %v967
      %v969 = vpop.f32.mrf.mxu0
      %970 = vmatprep.mubr.f32.mxu0 0.0
      %971 = vmatmul.mubr.f32.gmra.mxu0 %v745
      %v972 = vpop.f32.mrf.mxu0
      %v973 = vadd.f32 %v648, %v972
      %v974 = vpop.f32.mrf.mxu0
      %975 = vdwg.mxu0
      %v976 = vmax.f32 %v818, 0.0
      %v977 = vmax.f32 %v823, 0.0
      %v978 = vmax.f32 %v828, 0.0
      %v979 = vmax.f32 %v833, 0.0
      %v980 = vmax.f32 %v838, 0.0
      %v981 = vmax.f32 %v843, 0.0
      %v982 = vmax.f32 %v848, 0.0
      %v983 = vmax.f32 %v853, 0.0
      %v984 = vmax.f32 %v858, 0.0
      %v985 = vmax.f32 %v863, 0.0
      %v986 = vmax.f32 %v868, 0.0
      %v987 = vmax.f32 %v873, 0.0
      %v988 = vmax.f32 %v878, 0.0
      %v989 = vmax.f32 %v883, 0.0
      %v990 = vmax.f32 %v888, 0.0
      %v991 = vmax.f32 %v893, 0.0
      %v992 = vmax.f32 %v898, 0.0
      %v993 = vmax.f32 %v903, 0.0
      %v994 = vmax.f32 %v908, 0.0
      %v995 = vmax.f32 %v913, 0.0
      %v996 = vmax.f32 %v918, 0.0
      %v997 = vmax.f32 %v923, 0.0
      %v998 = vmax.f32 %v928, 0.0
      %v999 = vmax.f32 %v933, 0.0
      %v1000 = vmax.f32 %v938, 0.0
      %v1001 = vmax.f32 %v943, 0.0
      %v1002 = vmax.f32 %v948, 0.0
      %v1003 = vmax.f32 %v953, 0.0
      %v1004 = vmax.f32 %v958, 0.0
      %v1005 = vmax.f32 %v963, 0.0
      %v1006 = vmax.f32 %v968, 0.0
      %v1007 = vmax.f32 %v973, 0.0
      %v1008 = vld [vmem:[%s4] sm:$0xff]
      %v1009 = vld [vmem:[%s5] sm:$0x1]
      %v1011 = vlaneseq
      %v1012 = vshrl.u32 %v1011, 7
      %v1013 = vsub.s32 0, %v1012
      %v1014 = vrot.slane %v1009, %v1013
      %vm1016 = vcmask 64512
      %v1018 = vsel %vm1016, %v976, 0
      %v1021 = vsel %vm1016, %v977, 0
      %v1024 = vsel %vm1016, %v978, 0
      %v1027 = vsel %vm1016, %v979, 0
      %v1030 = vsel %vm1016, %v980, 0
      %v1033 = vsel %vm1016, %v981, 0
      %v1036 = vsel %vm1016, %v982, 0
      %v1039 = vsel %vm1016, %v983, 0
      %v1042 = vsel %vm1016, %v984, 0
      %v1045 = vsel %vm1016, %v985, 0
      %v1048 = vsel %vm1016, %v986, 0
      %v1051 = vsel %vm1016, %v987, 0
      %v1054 = vsel %vm1016, %v988, 0
      %v1057 = vsel %vm1016, %v989, 0
      %v1060 = vsel %vm1016, %v990, 0
      %v1063 = vsel %vm1016, %v991, 0
      %v1066 = vsel %vm1016, %v992, 0
      %v1069 = vsel %vm1016, %v993, 0
      %v1072 = vsel %vm1016, %v994, 0
      %v1075 = vsel %vm1016, %v995, 0
      %v1078 = vsel %vm1016, %v996, 0
      %v1081 = vsel %vm1016, %v997, 0
      %v1084 = vsel %vm1016, %v998, 0
      %v1087 = vsel %vm1016, %v999, 0
      %v1090 = vsel %vm1016, %v1000, 0
      %v1093 = vsel %vm1016, %v1001, 0
      %v1096 = vsel %vm1016, %v1002, 0
      %v1099 = vsel %vm1016, %v1003, 0
      %v1102 = vsel %vm1016, %v1004, 0
      %v1105 = vsel %vm1016, %v1005, 0
      %v1108 = vsel %vm1016, %v1006, 0
      %v1111 = vsel %vm1016, %v1007, 0
      %1113 = vmatprep.subr.mxu0 0.0
      %1114 = vmatpush1.msra.mxu0 0.0
      %1115 = vmatprep.subr.mxu0 0.0
      %1116 = vmatpush1.msra.mxu0 0.0
      %1117 = vmatprep.subr.mxu0 0.0
      %1118 = vmatpush1.msra.mxu0 0.0
      %1119 = vmatprep.subr.mxu0 0.0
      %1120 = vmatpush1.msra.mxu0 0.0
      %1121 = vmatprep.subr.mxu0 0.0
      %1122 = vmatpush1.msra.mxu0 0.0
      %1123 = vmatprep.subr.mxu0 0.0
      %1124 = vmatpush1.msra.mxu0 0.0
      %1125 = vmatprep.subr.mxu0 0.0
      %1126 = vmatpush1.msra.mxu0 0.0
      %1127 = vmatprep.subr.mxu0 0.0
      %1128 = vmatpush1.msra.mxu0 0.0
      %1129 = vmatprep.subr.mxu0 0.0
      %1130 = vmatpush1.msra.mxu0 0.0
      %1131 = vmatprep.subr.mxu0 0.0
      %1132 = vmatpush1.msra.mxu0 0.0
      %1133 = vmatprep.subr.mxu0 0.0
      %1134 = vmatpush1.msra.mxu0 0.0
      %1135 = vmatprep.subr.mxu0 0.0
      %1136 = vmatpush1.msra.mxu0 0.0
      %1137 = vmatprep.subr.mxu0 0.0
      %1138 = vmatpush1.msra.mxu0 0.0
      %1139 = vmatprep.subr.mxu0 0.0
      %1140 = vmatpush1.msra.mxu0 0.0
      %1141 = vmatprep.subr.mxu0 0.0
      %1142 = vmatpush1.msra.mxu0 0.0
      %1143 = vmatprep.subr.mxu0 0.0
      %1144 = vmatpush1.msra.mxu0 %v1008
      %1145 = vmatprep.subr.mxu0 0.0
      %1146 = vmatpush2.msra.mxu0 0.0
      %1147 = vmatprep.subr.mxu0 0.0
      %1148 = vmatpush2.msra.mxu0 0.0
      %1149 = vmatprep.subr.mxu0 0.0
      %1150 = vmatpush2.msra.mxu0 0.0
      %1151 = vmatprep.subr.mxu0 0.0
      %1152 = vmatpush2.msra.mxu0 0.0
      %1153 = vmatprep.subr.mxu0 0.0
      %1154 = vmatpush2.msra.mxu0 0.0
      %1155 = vmatprep.subr.mxu0 0.0
      %1156 = vmatpush2.msra.mxu0 0.0
      %1157 = vmatprep.subr.mxu0 0.0
      %1158 = vmatpush2.msra.mxu0 0.0
      %1159 = vmatprep.subr.mxu0 0.0
      %1160 = vmatpush2.msra.mxu0 0.0
      %1161 = vmatprep.subr.mxu0 0.0
      %1162 = vmatpush2.msra.mxu0 0.0
      %1163 = vmatprep.subr.mxu0 0.0
      %1164 = vmatpush2.msra.mxu0 0.0
      %1165 = vmatprep.subr.mxu0 0.0
      %1166 = vmatpush2.msra.mxu0 0.0
      %1167 = vmatprep.subr.mxu0 0.0
      %1168 = vmatpush2.msra.mxu0 0.0
      %1169 = vmatprep.subr.mxu0 0.0
      %1170 = vmatpush2.msra.mxu0 0.0
      %1171 = vmatprep.subr.mxu0 0.0
      %1172 = vmatpush2.msra.mxu0 0.0
      %1173 = vmatprep.subr.mxu0 0.0
      %1174 = vmatpush2.msra.mxu0 0.0
      %1175 = vmatprep.subr.mxu0 0.0
      %1176 = vmatpush2.msra.mxu0 0.0
      %1177 = vmatprep.mubr.f32.mxu0 0.0
      %1178 = vmatmul.mubr.f32.gmra.mxu0 %v1018
      %v1179 = vpop.f32.mrf.mxu0
      %v1180 = vadd.f32 %v1014, %v1179
      %v1181 = vpop.f32.mrf.mxu0
      %1182 = vmatprep.mubr.f32.mxu0 0.0
      %1183 = vmatmul.mubr.f32.gmra.mxu0 %v1021
      %v1184 = vpop.f32.mrf.mxu0
      %v1185 = vadd.f32 %v1014, %v1184
      %v1186 = vpop.f32.mrf.mxu0
      %1187 = vmatprep.mubr.f32.mxu0 0.0
      %1188 = vmatmul.mubr.f32.gmra.mxu0 %v1024
      %v1189 = vpop.f32.mrf.mxu0
      %v1190 = vadd.f32 %v1014, %v1189
      %v1191 = vpop.f32.mrf.mxu0
      %1192 = vmatprep.mubr.f32.mxu0 0.0
      %1193 = vmatmul.mubr.f32.gmra.mxu0 %v1027
      %v1194 = vpop.f32.mrf.mxu0
      %v1195 = vadd.f32 %v1014, %v1194
      %v1196 = vpop.f32.mrf.mxu0
      %1197 = vmatprep.mubr.f32.mxu0 0.0
      %1198 = vmatmul.mubr.f32.gmra.mxu0 %v1030
      %v1199 = vpop.f32.mrf.mxu0
      %v1200 = vadd.f32 %v1014, %v1199
      %v1201 = vpop.f32.mrf.mxu0
      %1202 = vmatprep.mubr.f32.mxu0 0.0
      %1203 = vmatmul.mubr.f32.gmra.mxu0 %v1033
      %v1204 = vpop.f32.mrf.mxu0
      %v1205 = vadd.f32 %v1014, %v1204
      %v1206 = vpop.f32.mrf.mxu0
      %1207 = vmatprep.mubr.f32.mxu0 0.0
      %1208 = vmatmul.mubr.f32.gmra.mxu0 %v1036
      %v1209 = vpop.f32.mrf.mxu0
      %v1210 = vadd.f32 %v1014, %v1209
      %v1211 = vpop.f32.mrf.mxu0
      %1212 = vmatprep.mubr.f32.mxu0 0.0
      %1213 = vmatmul.mubr.f32.gmra.mxu0 %v1039
      %v1214 = vpop.f32.mrf.mxu0
      %v1215 = vadd.f32 %v1014, %v1214
      %v1216 = vpop.f32.mrf.mxu0
      %1217 = vmatprep.mubr.f32.mxu0 0.0
      %1218 = vmatmul.mubr.f32.gmra.mxu0 %v1042
      %v1219 = vpop.f32.mrf.mxu0
      %v1220 = vadd.f32 %v1014, %v1219
      %v1221 = vpop.f32.mrf.mxu0
      %1222 = vmatprep.mubr.f32.mxu0 0.0
      %1223 = vmatmul.mubr.f32.gmra.mxu0 %v1045
      %v1224 = vpop.f32.mrf.mxu0
      %v1225 = vadd.f32 %v1014, %v1224
      %v1226 = vpop.f32.mrf.mxu0
      %1227 = vmatprep.mubr.f32.mxu0 0.0
      %1228 = vmatmul.mubr.f32.gmra.mxu0 %v1048
      %v1229 = vpop.f32.mrf.mxu0
      %v1230 = vadd.f32 %v1014, %v1229
      %v1231 = vpop.f32.mrf.mxu0
      %1232 = vmatprep.mubr.f32.mxu0 0.0
      %1233 = vmatmul.mubr.f32.gmra.mxu0 %v1051
      %v1234 = vpop.f32.mrf.mxu0
      %v1235 = vadd.f32 %v1014, %v1234
      %v1236 = vpop.f32.mrf.mxu0
      %1237 = vmatprep.mubr.f32.mxu0 0.0
      %1238 = vmatmul.mubr.f32.gmra.mxu0 %v1054
      %v1239 = vpop.f32.mrf.mxu0
      %v1240 = vadd.f32 %v1014, %v1239
      %v1241 = vpop.f32.mrf.mxu0
      %1242 = vmatprep.mubr.f32.mxu0 0.0
      %1243 = vmatmul.mubr.f32.gmra.mxu0 %v1057
      %v1244 = vpop.f32.mrf.mxu0
      %v1245 = vadd.f32 %v1014, %v1244
      %v1246 = vpop.f32.mrf.mxu0
      %1247 = vmatprep.mubr.f32.mxu0 0.0
      %1248 = vmatmul.mubr.f32.gmra.mxu0 %v1060
      %v1249 = vpop.f32.mrf.mxu0
      %v1250 = vadd.f32 %v1014, %v1249
      %v1251 = vpop.f32.mrf.mxu0
      %1252 = vmatprep.mubr.f32.mxu0 0.0
      %1253 = vmatmul.mubr.f32.gmra.mxu0 %v1063
      %v1254 = vpop.f32.mrf.mxu0
      %v1255 = vadd.f32 %v1014, %v1254
      %v1256 = vpop.f32.mrf.mxu0
      %1257 = vmatprep.mubr.f32.mxu0 0.0
      %1258 = vmatmul.mubr.f32.gmra.mxu0 %v1066
      %v1259 = vpop.f32.mrf.mxu0
      %v1260 = vadd.f32 %v1014, %v1259
      %v1261 = vpop.f32.mrf.mxu0
      %1262 = vmatprep.mubr.f32.mxu0 0.0
      %1263 = vmatmul.mubr.f32.gmra.mxu0 %v1069
      %v1264 = vpop.f32.mrf.mxu0
      %v1265 = vadd.f32 %v1014, %v1264
      %v1266 = vpop.f32.mrf.mxu0
      %1267 = vmatprep.mubr.f32.mxu0 0.0
      %1268 = vmatmul.mubr.f32.gmra.mxu0 %v1072
      %v1269 = vpop.f32.mrf.mxu0
      %v1270 = vadd.f32 %v1014, %v1269
      %v1271 = vpop.f32.mrf.mxu0
      %1272 = vmatprep.mubr.f32.mxu0 0.0
      %1273 = vmatmul.mubr.f32.gmra.mxu0 %v1075
      %v1274 = vpop.f32.mrf.mxu0
      %v1275 = vadd.f32 %v1014, %v1274
      %v1276 = vpop.f32.mrf.mxu0
      %1277 = vmatprep.mubr.f32.mxu0 0.0
      %1278 = vmatmul.mubr.f32.gmra.mxu0 %v1078
      %v1279 = vpop.f32.mrf.mxu0
      %v1280 = vadd.f32 %v1014, %v1279
      %v1281 = vpop.f32.mrf.mxu0
      %1282 = vmatprep.mubr.f32.mxu0 0.0
      %1283 = vmatmul.mubr.f32.gmra.mxu0 %v1081
      %v1284 = vpop.f32.mrf.mxu0
      %v1285 = vadd.f32 %v1014, %v1284
      %v1286 = vpop.f32.mrf.mxu0
      %1287 = vmatprep.mubr.f32.mxu0 0.0
      %1288 = vmatmul.mubr.f32.gmra.mxu0 %v1084
      %v1289 = vpop.f32.mrf.mxu0
      %v1290 = vadd.f32 %v1014, %v1289
      %v1291 = vpop.f32.mrf.mxu0
      %1292 = vmatprep.mubr.f32.mxu0 0.0
      %1293 = vmatmul.mubr.f32.gmra.mxu0 %v1087
      %v1294 = vpop.f32.mrf.mxu0
      %v1295 = vadd.f32 %v1014, %v1294
      %v1296 = vpop.f32.mrf.mxu0
      %1297 = vmatprep.mubr.f32.mxu0 0.0
      %1298 = vmatmul.mubr.f32.gmra.mxu0 %v1090
      %v1299 = vpop.f32.mrf.mxu0
      %v1300 = vadd.f32 %v1014, %v1299
      %v1301 = vpop.f32.mrf.mxu0
      %1302 = vmatprep.mubr.f32.mxu0 0.0
      %1303 = vmatmul.mubr.f32.gmra.mxu0 %v1093
      %v1304 = vpop.f32.mrf.mxu0
      %v1305 = vadd.f32 %v1014, %v1304
      %v1306 = vpop.f32.mrf.mxu0
      %1307 = vmatprep.mubr.f32.mxu0 0.0
      %1308 = vmatmul.mubr.f32.gmra.mxu0 %v1096
      %v1309 = vpop.f32.mrf.mxu0
      %v1310 = vadd.f32 %v1014, %v1309
      %v1311 = vpop.f32.mrf.mxu0
      %1312 = vmatprep.mubr.f32.mxu0 0.0
      %1313 = vmatmul.mubr.f32.gmra.mxu0 %v1099
      %v1314 = vpop.f32.mrf.mxu0
      %v1315 = vadd.f32 %v1014, %v1314
      %v1316 = vpop.f32.mrf.mxu0
      %1317 = vmatprep.mubr.f32.mxu0 0.0
      %1318 = vmatmul.mubr.f32.gmra.mxu0 %v1102
      %v1319 = vpop.f32.mrf.mxu0
      %v1320 = vadd.f32 %v1014, %v1319
      %v1321 = vpop.f32.mrf.mxu0
      %1322 = vmatprep.mubr.f32.mxu0 0.0
      %1323 = vmatmul.mubr.f32.gmra.mxu0 %v1105
      %v1324 = vpop.f32.mrf.mxu0
      %v1325 = vadd.f32 %v1014, %v1324
      %v1326 = vpop.f32.mrf.mxu0
      %1327 = vmatprep.mubr.f32.mxu0 0.0
      %1328 = vmatmul.mubr.f32.gmra.mxu0 %v1108
      %v1329 = vpop.f32.mrf.mxu0
      %v1330 = vadd.f32 %v1014, %v1329
      %v1331 = vpop.f32.mrf.mxu0
      %1332 = vmatprep.mubr.f32.mxu0 0.0
      %1333 = vmatmul.mubr.f32.gmra.mxu0 %v1111
      %v1334 = vpop.f32.mrf.mxu0
      %v1335 = vadd.f32 %v1014, %v1334
      %v1336 = vpop.f32.mrf.mxu0
      %1337 = vdwg.mxu0
      %v1338 = vadd.f32 %v1180, %v608
      %v1339 = vadd.f32 %v1185, %v609
      %v1340 = vadd.f32 %v1190, %v610
      %v1341 = vadd.f32 %v1195, %v611
      %v1342 = vadd.f32 %v1200, %v612
      %v1343 = vadd.f32 %v1205, %v613
      %v1344 = vadd.f32 %v1210, %v614
      %v1345 = vadd.f32 %v1215, %v615
      %v1346 = vadd.f32 %v1220, %v616
      %v1347 = vadd.f32 %v1225, %v617
      %v1348 = vadd.f32 %v1230, %v618
      %v1349 = vadd.f32 %v1235, %v619
      %v1350 = vadd.f32 %v1240, %v620
      %v1351 = vadd.f32 %v1245, %v621
      %v1352 = vadd.f32 %v1250, %v622
      %v1353 = vadd.f32 %v1255, %v623
      %v1354 = vadd.f32 %v1260, %v624
      %v1355 = vadd.f32 %v1265, %v625
      %v1356 = vadd.f32 %v1270, %v626
      %v1357 = vadd.f32 %v1275, %v627
      %v1358 = vadd.f32 %v1280, %v628
      %v1359 = vadd.f32 %v1285, %v629
      %v1360 = vadd.f32 %v1290, %v630
      %v1361 = vadd.f32 %v1295, %v631
      %v1362 = vadd.f32 %v1300, %v632
      %v1363 = vadd.f32 %v1305, %v633
      %v1364 = vadd.f32 %v1310, %v634
      %v1365 = vadd.f32 %v1315, %v635
      %v1366 = vadd.f32 %v1320, %v636
      %v1367 = vadd.f32 %v1325, %v637
      %v1368 = vadd.f32 %v1330, %v638
      %v1369 = vadd.f32 %v1335, %v639
      %v1370 = vld [vmem:[%s6] sm:$0xff]
      %v1371 = vld [vmem:[%s6 + $0x8] sm:$0xff]
      %v1372 = vld [vmem:[%s6 + $0x10] sm:$0xff]
      %v1373 = vld [vmem:[%s6 + $0x18] sm:$0xff]
      %v1374 = vld [vmem:[%s7] sm:$0x1]
      %v1376 = vlaneseq
      %v1377 = vshrl.u32 %v1376, 7
      %v1378 = vsub.s32 0, %v1377
      %v1379 = vrot.slane %v1374, %v1378
      %vm1381 = vcmask 261120
      %v1383 = vsel %vm1381, %v1338, 0
      %v1386 = vsel %vm1381, %v1339, 0
      %v1389 = vsel %vm1381, %v1340, 0
      %v1392 = vsel %vm1381, %v1341, 0
      %v1395 = vsel %vm1381, %v1342, 0
      %v1398 = vsel %vm1381, %v1343, 0
      %v1401 = vsel %vm1381, %v1344, 0
      %v1404 = vsel %vm1381, %v1345, 0
      %v1407 = vsel %vm1381, %v1346, 0
      %v1410 = vsel %vm1381, %v1347, 0
      %v1413 = vsel %vm1381, %v1348, 0
      %v1416 = vsel %vm1381, %v1349, 0
      %v1419 = vsel %vm1381, %v1350, 0
      %v1422 = vsel %vm1381, %v1351, 0
      %v1425 = vsel %vm1381, %v1352, 0
      %v1428 = vsel %vm1381, %v1353, 0
      %v1431 = vsel %vm1381, %v1354, 0
      %v1434 = vsel %vm1381, %v1355, 0
      %v1437 = vsel %vm1381, %v1356, 0
      %v1440 = vsel %vm1381, %v1357, 0
      %v1443 = vsel %vm1381, %v1358, 0
      %v1446 = vsel %vm1381, %v1359, 0
      %v1449 = vsel %vm1381, %v1360, 0
      %v1452 = vsel %vm1381, %v1361, 0
      %v1455 = vsel %vm1381, %v1362, 0
      %v1458 = vsel %vm1381, %v1363, 0
      %v1461 = vsel %vm1381, %v1364, 0
      %v1464 = vsel %vm1381, %v1365, 0
      %v1467 = vsel %vm1381, %v1366, 0
      %v1470 = vsel %vm1381, %v1367, 0
      %v1473 = vsel %vm1381, %v1368, 0
      %v1476 = vsel %vm1381, %v1369, 0
      %1478 = vmatprep.subr.mxu0 0.0
      %1479 = vmatpush1.msra.mxu0 0.0
      %1480 = vmatprep.subr.mxu0 0.0
      %1481 = vmatpush1.msra.mxu0 0.0
      %1482 = vmatprep.subr.mxu0 0.0
      %1483 = vmatpush1.msra.mxu0 0.0
      %1484 = vmatprep.subr.mxu0 0.0
      %1485 = vmatpush1.msra.mxu0 0.0
      %1486 = vmatprep.subr.mxu0 0.0
      %1487 = vmatpush1.msra.mxu0 0.0
      %1488 = vmatprep.subr.mxu0 0.0
      %1489 = vmatpush1.msra.mxu0 0.0
      %1490 = vmatprep.subr.mxu0 0.0
      %1491 = vmatpush1.msra.mxu0 0.0
      %1492 = vmatprep.subr.mxu0 0.0
      %1493 = vmatpush1.msra.mxu0 0.0
      %1494 = vmatprep.subr.mxu0 0.0
      %1495 = vmatpush1.msra.mxu0 0.0
      %1496 = vmatprep.subr.mxu0 0.0
      %1497 = vmatpush1.msra.mxu0 0.0
      %1498 = vmatprep.subr.mxu0 0.0
      %1499 = vmatpush1.msra.mxu0 0.0
      %1500 = vmatprep.subr.mxu0 0.0
      %1501 = vmatpush1.msra.mxu0 0.0
      %1502 = vmatprep.subr.mxu0 0.0
      %1503 = vmatpush1.msra.mxu0 %v1373
      %1504 = vmatprep.subr.mxu0 0.0
      %1505 = vmatpush1.msra.mxu0 %v1372
      %1506 = vmatprep.subr.mxu0 0.0
      %1507 = vmatpush1.msra.mxu0 %v1371
      %1508 = vmatprep.subr.mxu0 0.0
      %1509 = vmatpush1.msra.mxu0 %v1370
      %1510 = vmatprep.subr.mxu0 0.0
      %1511 = vmatpush2.msra.mxu0 0.0
      %1512 = vmatprep.subr.mxu0 0.0
      %1513 = vmatpush2.msra.mxu0 0.0
      %1514 = vmatprep.subr.mxu0 0.0
      %1515 = vmatpush2.msra.mxu0 0.0
      %1516 = vmatprep.subr.mxu0 0.0
      %1517 = vmatpush2.msra.mxu0 0.0
      %1518 = vmatprep.subr.mxu0 0.0
      %1519 = vmatpush2.msra.mxu0 0.0
      %1520 = vmatprep.subr.mxu0 0.0
      %1521 = vmatpush2.msra.mxu0 0.0
      %1522 = vmatprep.subr.mxu0 0.0
      %1523 = vmatpush2.msra.mxu0 0.0
      %1524 = vmatprep.subr.mxu0 0.0
      %1525 = vmatpush2.msra.mxu0 0.0
      %1526 = vmatprep.subr.mxu0 0.0
      %1527 = vmatpush2.msra.mxu0 0.0
      %1528 = vmatprep.subr.mxu0 0.0
      %1529 = vmatpush2.msra.mxu0 0.0
      %1530 = vmatprep.subr.mxu0 0.0
      %1531 = vmatpush2.msra.mxu0 0.0
      %1532 = vmatprep.subr.mxu0 0.0
      %1533 = vmatpush2.msra.mxu0 0.0
      %1534 = vmatprep.subr.mxu0 0.0
      %1535 = vmatpush2.msra.mxu0 0.0
      %1536 = vmatprep.subr.mxu0 0.0
      %1537 = vmatpush2.msra.mxu0 0.0
      %1538 = vmatprep.subr.mxu0 0.0
      %1539 = vmatpush2.msra.mxu0 0.0
      %1540 = vmatprep.subr.mxu0 0.0
      %1541 = vmatpush2.msra.mxu0 0.0
      %1542 = vmatprep.mubr.f32.mxu0 0.0
      %1543 = vmatmul.mubr.f32.gmra.mxu0 %v1383
      %v1544 = vpop.f32.mrf.mxu0
      %v1545 = vadd.f32 %v1379, %v1544
      %v1546 = vpop.f32.mrf.mxu0
      %1547 = vmatprep.mubr.f32.mxu0 0.0
      %1548 = vmatmul.mubr.f32.gmra.mxu0 %v1386
      %v1549 = vpop.f32.mrf.mxu0
      %v1550 = vadd.f32 %v1379, %v1549
      %v1551 = vpop.f32.mrf.mxu0
      %1552 = vmatprep.mubr.f32.mxu0 0.0
      %1553 = vmatmul.mubr.f32.gmra.mxu0 %v1389
      %v1554 = vpop.f32.mrf.mxu0
      %v1555 = vadd.f32 %v1379, %v1554
      %v1556 = vpop.f32.mrf.mxu0
      %1557 = vmatprep.mubr.f32.mxu0 0.0
      %1558 = vmatmul.mubr.f32.gmra.mxu0 %v1392
      %v1559 = vpop.f32.mrf.mxu0
      %v1560 = vadd.f32 %v1379, %v1559
      %v1561 = vpop.f32.mrf.mxu0
      %1562 = vmatprep.mubr.f32.mxu0 0.0
      %1563 = vmatmul.mubr.f32.gmra.mxu0 %v1395
      %v1564 = vpop.f32.mrf.mxu0
      %v1565 = vadd.f32 %v1379, %v1564
      %v1566 = vpop.f32.mrf.mxu0
      %1567 = vmatprep.mubr.f32.mxu0 0.0
      %1568 = vmatmul.mubr.f32.gmra.mxu0 %v1398
      %v1569 = vpop.f32.mrf.mxu0
      %v1570 = vadd.f32 %v1379, %v1569
      %v1571 = vpop.f32.mrf.mxu0
      %1572 = vmatprep.mubr.f32.mxu0 0.0
      %1573 = vmatmul.mubr.f32.gmra.mxu0 %v1401
      %v1574 = vpop.f32.mrf.mxu0
      %v1575 = vadd.f32 %v1379, %v1574
      %v1576 = vpop.f32.mrf.mxu0
      %1577 = vmatprep.mubr.f32.mxu0 0.0
      %1578 = vmatmul.mubr.f32.gmra.mxu0 %v1404
      %v1579 = vpop.f32.mrf.mxu0
      %v1580 = vadd.f32 %v1379, %v1579
      %v1581 = vpop.f32.mrf.mxu0
      %1582 = vmatprep.mubr.f32.mxu0 0.0
      %1583 = vmatmul.mubr.f32.gmra.mxu0 %v1407
      %v1584 = vpop.f32.mrf.mxu0
      %v1585 = vadd.f32 %v1379, %v1584
      %v1586 = vpop.f32.mrf.mxu0
      %1587 = vmatprep.mubr.f32.mxu0 0.0
      %1588 = vmatmul.mubr.f32.gmra.mxu0 %v1410
      %v1589 = vpop.f32.mrf.mxu0
      %v1590 = vadd.f32 %v1379, %v1589
      %v1591 = vpop.f32.mrf.mxu0
      %1592 = vmatprep.mubr.f32.mxu0 0.0
      %1593 = vmatmul.mubr.f32.gmra.mxu0 %v1413
      %v1594 = vpop.f32.mrf.mxu0
      %v1595 = vadd.f32 %v1379, %v1594
      %v1596 = vpop.f32.mrf.mxu0
      %1597 = vmatprep.mubr.f32.mxu0 0.0
      %1598 = vmatmul.mubr.f32.gmra.mxu0 %v1416
      %v1599 = vpop.f32.mrf.mxu0
      %v1600 = vadd.f32 %v1379, %v1599
      %v1601 = vpop.f32.mrf.mxu0
      %1602 = vmatprep.mubr.f32.mxu0 0.0
      %1603 = vmatmul.mubr.f32.gmra.mxu0 %v1419
      %v1604 = vpop.f32.mrf.mxu0
      %v1605 = vadd.f32 %v1379, %v1604
      %v1606 = vpop.f32.mrf.mxu0
      %1607 = vmatprep.mubr.f32.mxu0 0.0
      %1608 = vmatmul.mubr.f32.gmra.mxu0 %v1422
      %v1609 = vpop.f32.mrf.mxu0
      %v1610 = vadd.f32 %v1379, %v1609
      %v1611 = vpop.f32.mrf.mxu0
      %1612 = vmatprep.mubr.f32.mxu0 0.0
      %1613 = vmatmul.mubr.f32.gmra.mxu0 %v1425
      %v1614 = vpop.f32.mrf.mxu0
      %v1615 = vadd.f32 %v1379, %v1614
      %v1616 = vpop.f32.mrf.mxu0
      %1617 = vmatprep.mubr.f32.mxu0 0.0
      %1618 = vmatmul.mubr.f32.gmra.mxu0 %v1428
      %v1619 = vpop.f32.mrf.mxu0
      %v1620 = vadd.f32 %v1379, %v1619
      %v1621 = vpop.f32.mrf.mxu0
      %1622 = vmatprep.mubr.f32.mxu0 0.0
      %1623 = vmatmul.mubr.f32.gmra.mxu0 %v1431
      %v1624 = vpop.f32.mrf.mxu0
      %v1625 = vadd.f32 %v1379, %v1624
      %v1626 = vpop.f32.mrf.mxu0
      %1627 = vmatprep.mubr.f32.mxu0 0.0
      %1628 = vmatmul.mubr.f32.gmra.mxu0 %v1434
      %v1629 = vpop.f32.mrf.mxu0
      %v1630 = vadd.f32 %v1379, %v1629
      %v1631 = vpop.f32.mrf.mxu0
      %1632 = vmatprep.mubr.f32.mxu0 0.0
      %1633 = vmatmul.mubr.f32.gmra.mxu0 %v1437
      %v1634 = vpop.f32.mrf.mxu0
      %v1635 = vadd.f32 %v1379, %v1634
      %v1636 = vpop.f32.mrf.mxu0
      %1637 = vmatprep.mubr.f32.mxu0 0.0
      %1638 = vmatmul.mubr.f32.gmra.mxu0 %v1440
      %v1639 = vpop.f32.mrf.mxu0
      %v1640 = vadd.f32 %v1379, %v1639
      %v1641 = vpop.f32.mrf.mxu0
      %1642 = vmatprep.mubr.f32.mxu0 0.0
      %1643 = vmatmul.mubr.f32.gmra.mxu0 %v1443
      %v1644 = vpop.f32.mrf.mxu0
      %v1645 = vadd.f32 %v1379, %v1644
      %v1646 = vpop.f32.mrf.mxu0
      %1647 = vmatprep.mubr.f32.mxu0 0.0
      %1648 = vmatmul.mubr.f32.gmra.mxu0 %v1446
      %v1649 = vpop.f32.mrf.mxu0
      %v1650 = vadd.f32 %v1379, %v1649
      %v1651 = vpop.f32.mrf.mxu0
      %1652 = vmatprep.mubr.f32.mxu0 0.0
      %1653 = vmatmul.mubr.f32.gmra.mxu0 %v1449
      %v1654 = vpop.f32.mrf.mxu0
      %v1655 = vadd.f32 %v1379, %v1654
      %v1656 = vpop.f32.mrf.mxu0
      %1657 = vmatprep.mubr.f32.mxu0 0.0
      %1658 = vmatmul.mubr.f32.gmra.mxu0 %v1452
      %v1659 = vpop.f32.mrf.mxu0
      %v1660 = vadd.f32 %v1379, %v1659
      %v1661 = vpop.f32.mrf.mxu0
      %1662 = vmatprep.mubr.f32.mxu0 0.0
      %1663 = vmatmul.mubr.f32.gmra.mxu0 %v1455
      %v1664 = vpop.f32.mrf.mxu0
      %v1665 = vadd.f32 %v1379, %v1664
      %v1666 = vpop.f32.mrf.mxu0
      %1667 = vmatprep.mubr.f32.mxu0 0.0
      %1668 = vmatmul.mubr.f32.gmra.mxu0 %v1458
      %v1669 = vpop.f32.mrf.mxu0
      %v1670 = vadd.f32 %v1379, %v1669
      %v1671 = vpop.f32.mrf.mxu0
      %1672 = vmatprep.mubr.f32.mxu0 0.0
      %1673 = vmatmul.mubr.f32.gmra.mxu0 %v1461
      %v1674 = vpop.f32.mrf.mxu0
      %v1675 = vadd.f32 %v1379, %v1674
      %v1676 = vpop.f32.mrf.mxu0
      %1677 = vmatprep.mubr.f32.mxu0 0.0
      %1678 = vmatmul.mubr.f32.gmra.mxu0 %v1464
      %v1679 = vpop.f32.mrf.mxu0
      %v1680 = vadd.f32 %v1379, %v1679
      %v1681 = vpop.f32.mrf.mxu0
      %1682 = vmatprep.mubr.f32.mxu0 0.0
      %1683 = vmatmul.mubr.f32.gmra.mxu0 %v1467
      %v1684 = vpop.f32.mrf.mxu0
      %v1685 = vadd.f32 %v1379, %v1684
      %v1686 = vpop.f32.mrf.mxu0
      %1687 = vmatprep.mubr.f32.mxu0 0.0
      %1688 = vmatmul.mubr.f32.gmra.mxu0 %v1470
      %v1689 = vpop.f32.mrf.mxu0
      %v1690 = vadd.f32 %v1379, %v1689
      %v1691 = vpop.f32.mrf.mxu0
      %1692 = vmatprep.mubr.f32.mxu0 0.0
      %1693 = vmatmul.mubr.f32.gmra.mxu0 %v1473
      %v1694 = vpop.f32.mrf.mxu0
      %v1695 = vadd.f32 %v1379, %v1694
      %v1696 = vpop.f32.mrf.mxu0
      %1697 = vmatprep.mubr.f32.mxu0 0.0
      %1698 = vmatmul.mubr.f32.gmra.mxu0 %v1476
      %v1699 = vpop.f32.mrf.mxu0
      %v1700 = vadd.f32 %v1379, %v1699
      %v1701 = vpop.f32.mrf.mxu0
      %1702 = vdwg.mxu0
      %v1703 = vld [vmem:[%s8] sm:$0xff]
      %v1704 = vld [vmem:[%s8 + $0x8] sm:$0xff]
      %v1705 = vld [vmem:[%s8 + $0x10] sm:$0xff]
      %v1706 = vld [vmem:[%s8 + $0x18] sm:$0xff]
      %v1707 = vld [vmem:[%s9] sm:$0x1]
      %v1709 = vlaneseq
      %v1710 = vshrl.u32 %v1709, 7
      %v1711 = vsub.s32 0, %v1710
      %v1712 = vrot.slane %v1707, %v1711
      %v1715 = vsel %vm1381, %v1180, 0
      %v1718 = vsel %vm1381, %v1185, 0
      %v1721 = vsel %vm1381, %v1190, 0
      %v1724 = vsel %vm1381, %v1195, 0
      %v1727 = vsel %vm1381, %v1200, 0
      %v1730 = vsel %vm1381, %v1205, 0
      %v1733 = vsel %vm1381, %v1210, 0
      %v1736 = vsel %vm1381, %v1215, 0
      %v1739 = vsel %vm1381, %v1220, 0
      %v1742 = vsel %vm1381, %v1225, 0
      %v1745 = vsel %vm1381, %v1230, 0
      %v1748 = vsel %vm1381, %v1235, 0
      %v1751 = vsel %vm1381, %v1240, 0
      %v1754 = vsel %vm1381, %v1245, 0
      %v1757 = vsel %vm1381, %v1250, 0
      %v1760 = vsel %vm1381, %v1255, 0
      %v1763 = vsel %vm1381, %v1260, 0
      %v1766 = vsel %vm1381, %v1265, 0
      %v1769 = vsel %vm1381, %v1270, 0
      %v1772 = vsel %vm1381, %v1275, 0
      %v1775 = vsel %vm1381, %v1280, 0
      %v1778 = vsel %vm1381, %v1285, 0
      %v1781 = vsel %vm1381, %v1290, 0
      %v1784 = vsel %vm1381, %v1295, 0
      %v1787 = vsel %vm1381, %v1300, 0
      %v1790 = vsel %vm1381, %v1305, 0
      %v1793 = vsel %vm1381, %v1310, 0
      %v1796 = vsel %vm1381, %v1315, 0
      %v1799 = vsel %vm1381, %v1320, 0
      %v1802 = vsel %vm1381, %v1325, 0
      %v1805 = vsel %vm1381, %v1330, 0
      %v1808 = vsel %vm1381, %v1335, 0
      %1810 = vmatprep.subr.mxu0 0.0
      %1811 = vmatpush1.msra.mxu0 0.0
      %1812 = vmatprep.subr.mxu0 0.0
      %1813 = vmatpush1.msra.mxu0 0.0
      %1814 = vmatprep.subr.mxu0 0.0
      %1815 = vmatpush1.msra.mxu0 0.0
      %1816 = vmatprep.subr.mxu0 0.0
      %1817 = vmatpush1.msra.mxu0 0.0
      %1818 = vmatprep.subr.mxu0 0.0
      %1819 = vmatpush1.msra.mxu0 0.0
      %1820 = vmatprep.subr.mxu0 0.0
      %1821 = vmatpush1.msra.mxu0 0.0
      %1822 = vmatprep.subr.mxu0 0.0
      %1823 = vmatpush1.msra.mxu0 0.0
      %1824 = vmatprep.subr.mxu0 0.0
      %1825 = vmatpush1.msra.mxu0 0.0
      %1826 = vmatprep.subr.mxu0 0.0
      %1827 = vmatpush1.msra.mxu0 0.0
      %1828 = vmatprep.subr.mxu0 0.0
      %1829 = vmatpush1.msra.mxu0 0.0
      %1830 = vmatprep.subr.mxu0 0.0
      %1831 = vmatpush1.msra.mxu0 0.0
      %1832 = vmatprep.subr.mxu0 0.0
      %1833 = vmatpush1.msra.mxu0 0.0
      %1834 = vmatprep.subr.mxu0 0.0
      %1835 = vmatpush1.msra.mxu0 %v1706
      %1836 = vmatprep.subr.mxu0 0.0
      %1837 = vmatpush1.msra.mxu0 %v1705
      %1838 = vmatprep.subr.mxu0 0.0
      %1839 = vmatpush1.msra.mxu0 %v1704
      %1840 = vmatprep.subr.mxu0 0.0
      %1841 = vmatpush1.msra.mxu0 %v1703
      %1842 = vmatprep.subr.mxu0 0.0
      %1843 = vmatpush2.msra.mxu0 0.0
      %1844 = vmatprep.subr.mxu0 0.0
      %1845 = vmatpush2.msra.mxu0 0.0
      %1846 = vmatprep.subr.mxu0 0.0
      %1847 = vmatpush2.msra.mxu0 0.0
      %1848 = vmatprep.subr.mxu0 0.0
      %1849 = vmatpush2.msra.mxu0 0.0
      %1850 = vmatprep.subr.mxu0 0.0
      %1851 = vmatpush2.msra.mxu0 0.0
      %1852 = vmatprep.subr.mxu0 0.0
      %1853 = vmatpush2.msra.mxu0 0.0
      %1854 = vmatprep.subr.mxu0 0.0
      %1855 = vmatpush2.msra.mxu0 0.0
      %1856 = vmatprep.subr.mxu0 0.0
      %1857 = vmatpush2.msra.mxu0 0.0
      %1858 = vmatprep.subr.mxu0 0.0
      %1859 = vmatpush2.msra.mxu0 0.0
      %1860 = vmatprep.subr.mxu0 0.0
      %1861 = vmatpush2.msra.mxu0 0.0
      %1862 = vmatprep.subr.mxu0 0.0
      %1863 = vmatpush2.msra.mxu0 0.0
      %1864 = vmatprep.subr.mxu0 0.0
      %1865 = vmatpush2.msra.mxu0 0.0
      %1866 = vmatprep.subr.mxu0 0.0
      %1867 = vmatpush2.msra.mxu0 0.0
      %1868 = vmatprep.subr.mxu0 0.0
      %1869 = vmatpush2.msra.mxu0 0.0
      %1870 = vmatprep.subr.mxu0 0.0
      %1871 = vmatpush2.msra.mxu0 0.0
      %1872 = vmatprep.subr.mxu0 0.0
      %1873 = vmatpush2.msra.mxu0 0.0
      %1874 = vmatprep.mubr.f32.mxu0 0.0
      %1875 = vmatmul.mubr.f32.gmra.mxu0 %v1715
      %v1876 = vpop.f32.mrf.mxu0
      %v1877 = vadd.f32 %v1712, %v1876
      %v1878 = vpop.f32.mrf.mxu0
      %1879 = vmatprep.mubr.f32.mxu0 0.0
      %1880 = vmatmul.mubr.f32.gmra.mxu0 %v1718
      %v1881 = vpop.f32.mrf.mxu0
      %v1882 = vadd.f32 %v1712, %v1881
      %v1883 = vpop.f32.mrf.mxu0
      %1884 = vmatprep.mubr.f32.mxu0 0.0
      %1885 = vmatmul.mubr.f32.gmra.mxu0 %v1721
      %v1886 = vpop.f32.mrf.mxu0
      %v1887 = vadd.f32 %v1712, %v1886
      %v1888 = vpop.f32.mrf.mxu0
      %1889 = vmatprep.mubr.f32.mxu0 0.0
      %1890 = vmatmul.mubr.f32.gmra.mxu0 %v1724
      %v1891 = vpop.f32.mrf.mxu0
      %v1892 = vadd.f32 %v1712, %v1891
      %v1893 = vpop.f32.mrf.mxu0
      %1894 = vmatprep.mubr.f32.mxu0 0.0
      %1895 = vmatmul.mubr.f32.gmra.mxu0 %v1727
      %v1896 = vpop.f32.mrf.mxu0
      %v1897 = vadd.f32 %v1712, %v1896
      %v1898 = vpop.f32.mrf.mxu0
      %1899 = vmatprep.mubr.f32.mxu0 0.0
      %1900 = vmatmul.mubr.f32.gmra.mxu0 %v1730
      %v1901 = vpop.f32.mrf.mxu0
      %v1902 = vadd.f32 %v1712, %v1901
      %v1903 = vpop.f32.mrf.mxu0
      %1904 = vmatprep.mubr.f32.mxu0 0.0
      %1905 = vmatmul.mubr.f32.gmra.mxu0 %v1733
      %v1906 = vpop.f32.mrf.mxu0
      %v1907 = vadd.f32 %v1712, %v1906
      %v1908 = vpop.f32.mrf.mxu0
      %1909 = vmatprep.mubr.f32.mxu0 0.0
      %1910 = vmatmul.mubr.f32.gmra.mxu0 %v1736
      %v1911 = vpop.f32.mrf.mxu0
      %v1912 = vadd.f32 %v1712, %v1911
      %v1913 = vpop.f32.mrf.mxu0
      %1914 = vmatprep.mubr.f32.mxu0 0.0
      %1915 = vmatmul.mubr.f32.gmra.mxu0 %v1739
      %v1916 = vpop.f32.mrf.mxu0
      %v1917 = vadd.f32 %v1712, %v1916
      %v1918 = vpop.f32.mrf.mxu0
      %1919 = vmatprep.mubr.f32.mxu0 0.0
      %1920 = vmatmul.mubr.f32.gmra.mxu0 %v1742
      %v1921 = vpop.f32.mrf.mxu0
      %v1922 = vadd.f32 %v1712, %v1921
      %v1923 = vpop.f32.mrf.mxu0
      %1924 = vmatprep.mubr.f32.mxu0 0.0
      %1925 = vmatmul.mubr.f32.gmra.mxu0 %v1745
      %v1926 = vpop.f32.mrf.mxu0
      %v1927 = vadd.f32 %v1712, %v1926
      %v1928 = vpop.f32.mrf.mxu0
      %1929 = vmatprep.mubr.f32.mxu0 0.0
      %1930 = vmatmul.mubr.f32.gmra.mxu0 %v1748
      %v1931 = vpop.f32.mrf.mxu0
      %v1932 = vadd.f32 %v1712, %v1931
      %v1933 = vpop.f32.mrf.mxu0
      %1934 = vmatprep.mubr.f32.mxu0 0.0
      %1935 = vmatmul.mubr.f32.gmra.mxu0 %v1751
      %v1936 = vpop.f32.mrf.mxu0
      %v1937 = vadd.f32 %v1712, %v1936
      %v1938 = vpop.f32.mrf.mxu0
      %1939 = vmatprep.mubr.f32.mxu0 0.0
      %1940 = vmatmul.mubr.f32.gmra.mxu0 %v1754
      %v1941 = vpop.f32.mrf.mxu0
      %v1942 = vadd.f32 %v1712, %v1941
      %v1943 = vpop.f32.mrf.mxu0
      %1944 = vmatprep.mubr.f32.mxu0 0.0
      %1945 = vmatmul.mubr.f32.gmra.mxu0 %v1757
      %v1946 = vpop.f32.mrf.mxu0
      %v1947 = vadd.f32 %v1712, %v1946
      %v1948 = vpop.f32.mrf.mxu0
      %1949 = vmatprep.mubr.f32.mxu0 0.0
      %1950 = vmatmul.mubr.f32.gmra.mxu0 %v1760
      %v1951 = vpop.f32.mrf.mxu0
      %v1952 = vadd.f32 %v1712, %v1951
      %v1953 = vpop.f32.mrf.mxu0
      %1954 = vmatprep.mubr.f32.mxu0 0.0
      %1955 = vmatmul.mubr.f32.gmra.mxu0 %v1763
      %v1956 = vpop.f32.mrf.mxu0
      %v1957 = vadd.f32 %v1712, %v1956
      %v1958 = vpop.f32.mrf.mxu0
      %1959 = vmatprep.mubr.f32.mxu0 0.0
      %1960 = vmatmul.mubr.f32.gmra.mxu0 %v1766
      %v1961 = vpop.f32.mrf.mxu0
      %v1962 = vadd.f32 %v1712, %v1961
      %v1963 = vpop.f32.mrf.mxu0
      %1964 = vmatprep.mubr.f32.mxu0 0.0
      %1965 = vmatmul.mubr.f32.gmra.mxu0 %v1769
      %v1966 = vpop.f32.mrf.mxu0
      %v1967 = vadd.f32 %v1712, %v1966
      %v1968 = vpop.f32.mrf.mxu0
      %1969 = vmatprep.mubr.f32.mxu0 0.0
      %1970 = vmatmul.mubr.f32.gmra.mxu0 %v1772
      %v1971 = vpop.f32.mrf.mxu0
      %v1972 = vadd.f32 %v1712, %v1971
      %v1973 = vpop.f32.mrf.mxu0
      %1974 = vmatprep.mubr.f32.mxu0 0.0
      %1975 = vmatmul.mubr.f32.gmra.mxu0 %v1775
      %v1976 = vpop.f32.mrf.mxu0
      %v1977 = vadd.f32 %v1712, %v1976
      %v1978 = vpop.f32.mrf.mxu0
      %1979 = vmatprep.mubr.f32.mxu0 0.0
      %1980 = vmatmul.mubr.f32.gmra.mxu0 %v1778
      %v1981 = vpop.f32.mrf.mxu0
      %v1982 = vadd.f32 %v1712, %v1981
      %v1983 = vpop.f32.mrf.mxu0
      %1984 = vmatprep.mubr.f32.mxu0 0.0
      %1985 = vmatmul.mubr.f32.gmra.mxu0 %v1781
      %v1986 = vpop.f32.mrf.mxu0
      %v1987 = vadd.f32 %v1712, %v1986
      %v1988 = vpop.f32.mrf.mxu0
      %1989 = vmatprep.mubr.f32.mxu0 0.0
      %1990 = vmatmul.mubr.f32.gmra.mxu0 %v1784
      %v1991 = vpop.f32.mrf.mxu0
      %v1992 = vadd.f32 %v1712, %v1991
      %v1993 = vpop.f32.mrf.mxu0
      %1994 = vmatprep.mubr.f32.mxu0 0.0
      %1995 = vmatmul.mubr.f32.gmra.mxu0 %v1787
      %v1996 = vpop.f32.mrf.mxu0
      %v1997 = vadd.f32 %v1712, %v1996
      %v1998 = vpop.f32.mrf.mxu0
      %1999 = vmatprep.mubr.f32.mxu0 0.0
      %2000 = vmatmul.mubr.f32.gmra.mxu0 %v1790
      %v2001 = vpop.f32.mrf.mxu0
      %v2002 = vadd.f32 %v1712, %v2001
      %v2003 = vpop.f32.mrf.mxu0
      %2004 = vmatprep.mubr.f32.mxu0 0.0
      %2005 = vmatmul.mubr.f32.gmra.mxu0 %v1793
      %v2006 = vpop.f32.mrf.mxu0
      %v2007 = vadd.f32 %v1712, %v2006
      %v2008 = vpop.f32.mrf.mxu0
      %2009 = vmatprep.mubr.f32.mxu0 0.0
      %2010 = vmatmul.mubr.f32.gmra.mxu0 %v1796
      %v2011 = vpop.f32.mrf.mxu0
      %v2012 = vadd.f32 %v1712, %v2011
      %v2013 = vpop.f32.mrf.mxu0
      %2014 = vmatprep.mubr.f32.mxu0 0.0
      %2015 = vmatmul.mubr.f32.gmra.mxu0 %v1799
      %v2016 = vpop.f32.mrf.mxu0
      %v2017 = vadd.f32 %v1712, %v2016
      %v2018 = vpop.f32.mrf.mxu0
      %2019 = vmatprep.mubr.f32.mxu0 0.0
      %2020 = vmatmul.mubr.f32.gmra.mxu0 %v1802
      %v2021 = vpop.f32.mrf.mxu0
      %v2022 = vadd.f32 %v1712, %v2021
      %v2023 = vpop.f32.mrf.mxu0
      %2024 = vmatprep.mubr.f32.mxu0 0.0
      %2025 = vmatmul.mubr.f32.gmra.mxu0 %v1805
      %v2026 = vpop.f32.mrf.mxu0
      %v2027 = vadd.f32 %v1712, %v2026
      %v2028 = vpop.f32.mrf.mxu0
      %2029 = vmatprep.mubr.f32.mxu0 0.0
      %2030 = vmatmul.mubr.f32.gmra.mxu0 %v1808
      %v2031 = vpop.f32.mrf.mxu0
      %v2032 = vadd.f32 %v1712, %v2031
      %v2033 = vpop.f32.mrf.mxu0
      %2034 = vdwg.mxu0
      %2067 = vrot.lane.b32.xlu0 %v1545, 96
      %v2068 = vpop.permute.xlu0 %2067
      %2069 = vrot.lane.b32.xlu0 %v1550, 96
      %v2070 = vpop.permute.xlu0 %2069
      %2071 = vrot.lane.b32.xlu0 %v1555, 96
      %v2072 = vpop.permute.xlu0 %2071
      %2073 = vrot.lane.b32.xlu0 %v1560, 96
      %v2074 = vpop.permute.xlu0 %2073
      %2075 = vrot.lane.b32.xlu0 %v1565, 96
      %v2076 = vpop.permute.xlu0 %2075
      %2077 = vrot.lane.b32.xlu0 %v1570, 96
      %v2078 = vpop.permute.xlu0 %2077
      %2079 = vrot.lane.b32.xlu0 %v1575, 96
      %v2080 = vpop.permute.xlu0 %2079
      %2081 = vrot.lane.b32.xlu0 %v1580, 96
      %v2082 = vpop.permute.xlu0 %2081
      %2083 = vrot.lane.b32.xlu0 %v1585, 96
      %v2084 = vpop.permute.xlu0 %2083
      %2085 = vrot.lane.b32.xlu0 %v1590, 96
      %v2086 = vpop.permute.xlu0 %2085
      %2087 = vrot.lane.b32.xlu0 %v1595, 96
      %v2088 = vpop.permute.xlu0 %2087
      %2089 = vrot.lane.b32.xlu0 %v1600, 96
      %v2090 = vpop.permute.xlu0 %2089
      %2091 = vrot.lane.b32.xlu0 %v1605, 96
      %v2092 = vpop.permute.xlu0 %2091
      %2093 = vrot.lane.b32.xlu0 %v1610, 96
      %v2094 = vpop.permute.xlu0 %2093
      %2095 = vrot.lane.b32.xlu0 %v1615, 96
      %v2096 = vpop.permute.xlu0 %2095
      %2097 = vrot.lane.b32.xlu0 %v1620, 96
      %v2098 = vpop.permute.xlu0 %2097
      %2099 = vrot.lane.b32.xlu0 %v1625, 96
      %v2100 = vpop.permute.xlu0 %2099
      %2101 = vrot.lane.b32.xlu0 %v1630, 96
      %v2102 = vpop.permute.xlu0 %2101
      %2103 = vrot.lane.b32.xlu0 %v1635, 96
      %v2104 = vpop.permute.xlu0 %2103
      %2105 = vrot.lane.b32.xlu0 %v1640, 96
      %v2106 = vpop.permute.xlu0 %2105
      %2107 = vrot.lane.b32.xlu0 %v1645, 96
      %v2108 = vpop.permute.xlu0 %2107
      %2109 = vrot.lane.b32.xlu0 %v1650, 96
      %v2110 = vpop.permute.xlu0 %2109
      %2111 = vrot.lane.b32.xlu0 %v1655, 96
      %v2112 = vpop.permute.xlu0 %2111
      %2113 = vrot.lane.b32.xlu0 %v1660, 96
      %v2114 = vpop.permute.xlu0 %2113
      %2115 = vrot.lane.b32.xlu0 %v1665, 96
      %v2116 = vpop.permute.xlu0 %2115
      %2117 = vrot.lane.b32.xlu0 %v1670, 96
      %v2118 = vpop.permute.xlu0 %2117
      %2119 = vrot.lane.b32.xlu0 %v1675, 96
      %v2120 = vpop.permute.xlu0 %2119
      %2121 = vrot.lane.b32.xlu0 %v1680, 96
      %v2122 = vpop.permute.xlu0 %2121
      %2123 = vrot.lane.b32.xlu0 %v1685, 96
      %v2124 = vpop.permute.xlu0 %2123
      %2125 = vrot.lane.b32.xlu0 %v1690, 96
      %v2126 = vpop.permute.xlu0 %2125
      %2127 = vrot.lane.b32.xlu0 %v1695, 96
      %v2128 = vpop.permute.xlu0 %2127
      %2129 = vrot.lane.b32.xlu0 %v1700, 96
      %v2130 = vpop.permute.xlu0 %2129
      %v2131 = vsel %vm1381, %v1545, 0
      %v2133 = vsel %vm1381, %v1550, 0
      %v2135 = vsel %vm1381, %v1555, 0
      %v2137 = vsel %vm1381, %v1560, 0
      %v2139 = vsel %vm1381, %v1565, 0
      %v2141 = vsel %vm1381, %v1570, 0
      %v2143 = vsel %vm1381, %v1575, 0
      %v2145 = vsel %vm1381, %v1580, 0
      %v2147 = vsel %vm1381, %v1585, 0
      %v2149 = vsel %vm1381, %v1590, 0
      %v2151 = vsel %vm1381, %v1595, 0
      %v2153 = vsel %vm1381, %v1600, 0
      %v2155 = vsel %vm1381, %v1605, 0
      %v2157 = vsel %vm1381, %v1610, 0
      %v2159 = vsel %vm1381, %v1615, 0
      %v2161 = vsel %vm1381, %v1620, 0
      %v2163 = vsel %vm1381, %v1625, 0
      %v2165 = vsel %vm1381, %v1630, 0
      %v2167 = vsel %vm1381, %v1635, 0
      %v2169 = vsel %vm1381, %v1640, 0
      %v2171 = vsel %vm1381, %v1645, 0
      %v2173 = vsel %vm1381, %v1650, 0
      %v2175 = vsel %vm1381, %v1655, 0
      %v2177 = vsel %vm1381, %v1660, 0
      %v2179 = vsel %vm1381, %v1665, 0
      %v2181 = vsel %vm1381, %v1670, 0
      %v2183 = vsel %vm1381, %v1675, 0
      %v2185 = vsel %vm1381, %v1680, 0
      %v2187 = vsel %vm1381, %v1685, 0
      %v2189 = vsel %vm1381, %v1690, 0
      %v2191 = vsel %vm1381, %v1695, 0
      %v2193 = vsel %vm1381, %v1700, 0
      %v2195 = vsel %vm1381, %v2068, 0
      %v2197 = vsel %vm1381, %v2070, 0
      %v2199 = vsel %vm1381, %v2072, 0
      %v2201 = vsel %vm1381, %v2074, 0
      %v2203 = vsel %vm1381, %v2076, 0
      %v2205 = vsel %vm1381, %v2078, 0
      %v2207 = vsel %vm1381, %v2080, 0
      %v2209 = vsel %vm1381, %v2082, 0
      %v2211 = vsel %vm1381, %v2084, 0
      %v2213 = vsel %vm1381, %v2086, 0
      %v2215 = vsel %vm1381, %v2088, 0
      %v2217 = vsel %vm1381, %v2090, 0
      %v2219 = vsel %vm1381, %v2092, 0
      %v2221 = vsel %vm1381, %v2094, 0
      %v2223 = vsel %vm1381, %v2096, 0
      %v2225 = vsel %vm1381, %v2098, 0
      %v2227 = vsel %vm1381, %v2100, 0
      %v2229 = vsel %vm1381, %v2102, 0
      %v2231 = vsel %vm1381, %v2104, 0
      %v2233 = vsel %vm1381, %v2106, 0
      %v2235 = vsel %vm1381, %v2108, 0
      %v2237 = vsel %vm1381, %v2110, 0
      %v2239 = vsel %vm1381, %v2112, 0
      %v2241 = vsel %vm1381, %v2114, 0
      %v2243 = vsel %vm1381, %v2116, 0
      %v2245 = vsel %vm1381, %v2118, 0
      %v2247 = vsel %vm1381, %v2120, 0
      %v2249 = vsel %vm1381, %v2122, 0
      %v2251 = vsel %vm1381, %v2124, 0
      %v2253 = vsel %vm1381, %v2126, 0
      %v2255 = vsel %vm1381, %v2128, 0
      %v2257 = vsel %vm1381, %v2130, 0
      %2259 = vmatprep.subr.mxu0 0.0
      %2260 = vmatpush1.xpose.msra.mxu0 %v2225
      %2261 = vmatprep.subr.mxu0 0.0
      %2262 = vmatpush1.xpose.msra.mxu0 %v2223
      %2263 = vmatprep.subr.mxu0 0.0
      %2264 = vmatpush1.xpose.msra.mxu0 %v2221
      %2265 = vmatprep.subr.mxu0 0.0
      %2266 = vmatpush1.xpose.msra.mxu0 %v2219
      %2267 = vmatprep.subr.mxu0 0.0
      %2268 = vmatpush1.xpose.msra.mxu0 %v2217
      %2269 = vmatprep.subr.mxu0 0.0
      %2270 = vmatpush1.xpose.msra.mxu0 %v2215
      %2271 = vmatprep.subr.mxu0 0.0
      %2272 = vmatpush1.xpose.msra.mxu0 %v2213
      %2273 = vmatprep.subr.mxu0 0.0
      %2274 = vmatpush1.xpose.msra.mxu0 %v2211
      %2275 = vmatprep.subr.mxu0 0.0
      %2276 = vmatpush1.xpose.msra.mxu0 %v2209
      %2277 = vmatprep.subr.mxu0 0.0
      %2278 = vmatpush1.xpose.msra.mxu0 %v2207
      %2279 = vmatprep.subr.mxu0 0.0
      %2280 = vmatpush1.xpose.msra.mxu0 %v2205
      %2281 = vmatprep.subr.mxu0 0.0
      %2282 = vmatpush1.xpose.msra.mxu0 %v2203
      %2283 = vmatprep.subr.mxu0 0.0
      %2284 = vmatpush1.xpose.msra.mxu0 %v2201
      %2285 = vmatprep.subr.mxu0 0.0
      %2286 = vmatpush1.xpose.msra.mxu0 %v2199
      %2287 = vmatprep.subr.mxu0 0.0
      %2288 = vmatpush1.xpose.msra.mxu0 %v2197
      %2289 = vmatprep.subr.mxu0 0.0
      %2290 = vmatpush1.xpose.msra.mxu0 %v2195
      %2291 = vmatprep.subr.mxu0 0.0
      %2292 = vmatpush2.xpose.msra.mxu0 %v2257
      %2293 = vmatprep.subr.mxu0 0.0
      %2294 = vmatpush2.xpose.msra.mxu0 %v2255
      %2295 = vmatprep.subr.mxu0 0.0
      %2296 = vmatpush2.xpose.msra.mxu0 %v2253
      %2297 = vmatprep.subr.mxu0 0.0
      %2298 = vmatpush2.xpose.msra.mxu0 %v2251
      %2299 = vmatprep.subr.mxu0 0.0
      %2300 = vmatpush2.xpose.msra.mxu0 %v2249
      %2301 = vmatprep.subr.mxu0 0.0
      %2302 = vmatpush2.xpose.msra.mxu0 %v2247
      %2303 = vmatprep.subr.mxu0 0.0
      %2304 = vmatpush2.xpose.msra.mxu0 %v2245
      %2305 = vmatprep.subr.mxu0 0.0
      %2306 = vmatpush2.xpose.msra.mxu0 %v2243
      %2307 = vmatprep.subr.mxu0 0.0
      %2308 = vmatpush2.xpose.msra.mxu0 %v2241
      %2309 = vmatprep.subr.mxu0 0.0
      %2310 = vmatpush2.xpose.msra.mxu0 %v2239
      %2311 = vmatprep.subr.mxu0 0.0
      %2312 = vmatpush2.xpose.msra.mxu0 %v2237
      %2313 = vmatprep.subr.mxu0 0.0
      %2314 = vmatpush2.xpose.msra.mxu0 %v2235
      %2315 = vmatprep.subr.mxu0 0.0
      %2316 = vmatpush2.xpose.msra.mxu0 %v2233
      %2317 = vmatprep.subr.mxu0 0.0
      %2318 = vmatpush2.xpose.msra.mxu0 %v2231
      %2319 = vmatprep.subr.mxu0 0.0
      %2320 = vmatpush2.xpose.msra.mxu0 %v2229
      %2321 = vmatprep.subr.mxu0 0.0
      %2322 = vmatpush2.xpose.msra.mxu0 %v2227
      %2323 = vmatprep.mubr.f32.mxu0 0.0
      %2324 = vmatmul.mubr.f32.gmra.mxu0 %v2131
      %v2325 = vpop.f32.mrf.mxu0
      %v2326 = vadd.f32 0.0, %v2325
      %v2327 = vpop.f32.mrf.mxu0
      %v2328 = vadd.f32 0.0, %v2327
      %2329 = vmatprep.mubr.f32.mxu0 0.0
      %2330 = vmatmul.mubr.f32.gmra.mxu0 %v2133
      %v2331 = vpop.f32.mrf.mxu0
      %v2332 = vadd.f32 0.0, %v2331
      %v2333 = vpop.f32.mrf.mxu0
      %v2334 = vadd.f32 0.0, %v2333
      %2335 = vmatprep.mubr.f32.mxu0 0.0
      %2336 = vmatmul.mubr.f32.gmra.mxu0 %v2135
      %v2337 = vpop.f32.mrf.mxu0
      %v2338 = vadd.f32 0.0, %v2337
      %v2339 = vpop.f32.mrf.mxu0
      %v2340 = vadd.f32 0.0, %v2339
      %2341 = vmatprep.mubr.f32.mxu0 0.0
      %2342 = vmatmul.mubr.f32.gmra.mxu0 %v2137
      %v2343 = vpop.f32.mrf.mxu0
      %v2344 = vadd.f32 0.0, %v2343
      %v2345 = vpop.f32.mrf.mxu0
      %v2346 = vadd.f32 0.0, %v2345
      %2347 = vmatprep.mubr.f32.mxu0 0.0
      %2348 = vmatmul.mubr.f32.gmra.mxu0 %v2139
      %v2349 = vpop.f32.mrf.mxu0
      %v2350 = vadd.f32 0.0, %v2349
      %v2351 = vpop.f32.mrf.mxu0
      %v2352 = vadd.f32 0.0, %v2351
      %2353 = vmatprep.mubr.f32.mxu0 0.0
      %2354 = vmatmul.mubr.f32.gmra.mxu0 %v2141
      %v2355 = vpop.f32.mrf.mxu0
      %v2356 = vadd.f32 0.0, %v2355
      %v2357 = vpop.f32.mrf.mxu0
      %v2358 = vadd.f32 0.0, %v2357
      %2359 = vmatprep.mubr.f32.mxu0 0.0
      %2360 = vmatmul.mubr.f32.gmra.mxu0 %v2143
      %v2361 = vpop.f32.mrf.mxu0
      %v2362 = vadd.f32 0.0, %v2361
      %v2363 = vpop.f32.mrf.mxu0
      %v2364 = vadd.f32 0.0, %v2363
      %2365 = vmatprep.mubr.f32.mxu0 0.0
      %2366 = vmatmul.mubr.f32.gmra.mxu0 %v2145
      %v2367 = vpop.f32.mrf.mxu0
      %v2368 = vadd.f32 0.0, %v2367
      %v2369 = vpop.f32.mrf.mxu0
      %v2370 = vadd.f32 0.0, %v2369
      %2371 = vmatprep.mubr.f32.mxu0 0.0
      %2372 = vmatmul.mubr.f32.gmra.mxu0 %v2147
      %v2373 = vpop.f32.mrf.mxu0
      %v2374 = vadd.f32 0.0, %v2373
      %v2375 = vpop.f32.mrf.mxu0
      %v2376 = vadd.f32 0.0, %v2375
      %2377 = vmatprep.mubr.f32.mxu0 0.0
      %2378 = vmatmul.mubr.f32.gmra.mxu0 %v2149
      %v2379 = vpop.f32.mrf.mxu0
      %v2380 = vadd.f32 0.0, %v2379
      %v2381 = vpop.f32.mrf.mxu0
      %v2382 = vadd.f32 0.0, %v2381
      %2383 = vmatprep.mubr.f32.mxu0 0.0
      %2384 = vmatmul.mubr.f32.gmra.mxu0 %v2151
      %v2385 = vpop.f32.mrf.mxu0
      %v2386 = vadd.f32 0.0, %v2385
      %v2387 = vpop.f32.mrf.mxu0
      %v2388 = vadd.f32 0.0, %v2387
      %2389 = vmatprep.mubr.f32.mxu0 0.0
      %2390 = vmatmul.mubr.f32.gmra.mxu0 %v2153
      %v2391 = vpop.f32.mrf.mxu0
      %v2392 = vadd.f32 0.0, %v2391
      %v2393 = vpop.f32.mrf.mxu0
      %v2394 = vadd.f32 0.0, %v2393
      %2395 = vmatprep.mubr.f32.mxu0 0.0
      %2396 = vmatmul.mubr.f32.gmra.mxu0 %v2155
      %v2397 = vpop.f32.mrf.mxu0
      %v2398 = vadd.f32 0.0, %v2397
      %v2399 = vpop.f32.mrf.mxu0
      %v2400 = vadd.f32 0.0, %v2399
      %2401 = vmatprep.mubr.f32.mxu0 0.0
      %2402 = vmatmul.mubr.f32.gmra.mxu0 %v2157
      %v2403 = vpop.f32.mrf.mxu0
      %v2404 = vadd.f32 0.0, %v2403
      %v2405 = vpop.f32.mrf.mxu0
      %v2406 = vadd.f32 0.0, %v2405
      %2407 = vmatprep.mubr.f32.mxu0 0.0
      %2408 = vmatmul.mubr.f32.gmra.mxu0 %v2159
      %v2409 = vpop.f32.mrf.mxu0
      %v2410 = vadd.f32 0.0, %v2409
      %v2411 = vpop.f32.mrf.mxu0
      %v2412 = vadd.f32 0.0, %v2411
      %2413 = vmatprep.mubr.f32.mxu0 0.0
      %2414 = vmatmul.mubr.f32.gmra.mxu0 %v2161
      %v2415 = vpop.f32.mrf.mxu0
      %v2416 = vadd.f32 0.0, %v2415
      %v2417 = vpop.f32.mrf.mxu0
      %v2418 = vadd.f32 0.0, %v2417
      %2419 = vmatprep.mubr.f32.mxu0 0.0
      %2420 = vmatmul.mubr.f32.gmra.mxu0 %v2163
      %v2421 = vpop.f32.mrf.mxu0
      %v2422 = vadd.f32 0.0, %v2421
      %v2423 = vpop.f32.mrf.mxu0
      %v2424 = vadd.f32 0.0, %v2423
      %2425 = vmatprep.mubr.f32.mxu0 0.0
      %2426 = vmatmul.mubr.f32.gmra.mxu0 %v2165
      %v2427 = vpop.f32.mrf.mxu0
      %v2428 = vadd.f32 0.0, %v2427
      %v2429 = vpop.f32.mrf.mxu0
      %v2430 = vadd.f32 0.0, %v2429
      %2431 = vmatprep.mubr.f32.mxu0 0.0
      %2432 = vmatmul.mubr.f32.gmra.mxu0 %v2167
      %v2433 = vpop.f32.mrf.mxu0
      %v2434 = vadd.f32 0.0, %v2433
      %v2435 = vpop.f32.mrf.mxu0
      %v2436 = vadd.f32 0.0, %v2435
      %2437 = vmatprep.mubr.f32.mxu0 0.0
      %2438 = vmatmul.mubr.f32.gmra.mxu0 %v2169
      %v2439 = vpop.f32.mrf.mxu0
      %v2440 = vadd.f32 0.0, %v2439
      %v2441 = vpop.f32.mrf.mxu0
      %v2442 = vadd.f32 0.0, %v2441
      %2443 = vmatprep.mubr.f32.mxu0 0.0
      %2444 = vmatmul.mubr.f32.gmra.mxu0 %v2171
      %v2445 = vpop.f32.mrf.mxu0
      %v2446 = vadd.f32 0.0, %v2445
      %v2447 = vpop.f32.mrf.mxu0
      %v2448 = vadd.f32 0.0, %v2447
      %2449 = vmatprep.mubr.f32.mxu0 0.0
      %2450 = vmatmul.mubr.f32.gmra.mxu0 %v2173
      %v2451 = vpop.f32.mrf.mxu0
      %v2452 = vadd.f32 0.0, %v2451
      %v2453 = vpop.f32.mrf.mxu0
      %v2454 = vadd.f32 0.0, %v2453
      %2455 = vmatprep.mubr.f32.mxu0 0.0
      %2456 = vmatmul.mubr.f32.gmra.mxu0 %v2175
      %v2457 = vpop.f32.mrf.mxu0
      %v2458 = vadd.f32 0.0, %v2457
      %v2459 = vpop.f32.mrf.mxu0
      %v2460 = vadd.f32 0.0, %v2459
      %2461 = vmatprep.mubr.f32.mxu0 0.0
      %2462 = vmatmul.mubr.f32.gmra.mxu0 %v2177
      %v2463 = vpop.f32.mrf.mxu0
      %v2464 = vadd.f32 0.0, %v2463
      %v2465 = vpop.f32.mrf.mxu0
      %v2466 = vadd.f32 0.0, %v2465
      %2467 = vmatprep.mubr.f32.mxu0 0.0
      %2468 = vmatmul.mubr.f32.gmra.mxu0 %v2179
      %v2469 = vpop.f32.mrf.mxu0
      %v2470 = vadd.f32 0.0, %v2469
      %v2471 = vpop.f32.mrf.mxu0
      %v2472 = vadd.f32 0.0, %v2471
      %2473 = vmatprep.mubr.f32.mxu0 0.0
      %2474 = vmatmul.mubr.f32.gmra.mxu0 %v2181
      %v2475 = vpop.f32.mrf.mxu0
      %v2476 = vadd.f32 0.0, %v2475
      %v2477 = vpop.f32.mrf.mxu0
      %v2478 = vadd.f32 0.0, %v2477
      %2479 = vmatprep.mubr.f32.mxu0 0.0
      %2480 = vmatmul.mubr.f32.gmra.mxu0 %v2183
      %v2481 = vpop.f32.mrf.mxu0
      %v2482 = vadd.f32 0.0, %v2481
      %v2483 = vpop.f32.mrf.mxu0
      %v2484 = vadd.f32 0.0, %v2483
      %2485 = vmatprep.mubr.f32.mxu0 0.0
      %2486 = vmatmul.mubr.f32.gmra.mxu0 %v2185
      %v2487 = vpop.f32.mrf.mxu0
      %v2488 = vadd.f32 0.0, %v2487
      %v2489 = vpop.f32.mrf.mxu0
      %v2490 = vadd.f32 0.0, %v2489
      %2491 = vmatprep.mubr.f32.mxu0 0.0
      %2492 = vmatmul.mubr.f32.gmra.mxu0 %v2187
      %v2493 = vpop.f32.mrf.mxu0
      %v2494 = vadd.f32 0.0, %v2493
      %v2495 = vpop.f32.mrf.mxu0
      %v2496 = vadd.f32 0.0, %v2495
      %2497 = vmatprep.mubr.f32.mxu0 0.0
      %2498 = vmatmul.mubr.f32.gmra.mxu0 %v2189
      %v2499 = vpop.f32.mrf.mxu0
      %v2500 = vadd.f32 0.0, %v2499
      %v2501 = vpop.f32.mrf.mxu0
      %v2502 = vadd.f32 0.0, %v2501
      %2503 = vmatprep.mubr.f32.mxu0 0.0
      %2504 = vmatmul.mubr.f32.gmra.mxu0 %v2191
      %v2505 = vpop.f32.mrf.mxu0
      %v2506 = vadd.f32 0.0, %v2505
      %v2507 = vpop.f32.mrf.mxu0
      %v2508 = vadd.f32 0.0, %v2507
      %2509 = vmatprep.mubr.f32.mxu0 0.0
      %2510 = vmatmul.mubr.f32.gmra.mxu0 %v2193
      %v2511 = vpop.f32.mrf.mxu0
      %v2512 = vadd.f32 0.0, %v2511
      %v2513 = vpop.f32.mrf.mxu0
      %v2514 = vadd.f32 0.0, %v2513
      %2515 = vdwg.mxu0
      %v2516 = vmul.f32 %v2326, 0.17677669
      %v2517 = vmul.f32 %v2328, 0.17677669
      %v2518 = vmul.f32 %v2332, 0.17677669
      %v2519 = vmul.f32 %v2334, 0.17677669
      %v2520 = vmul.f32 %v2338, 0.17677669
      %v2521 = vmul.f32 %v2340, 0.17677669
      %v2522 = vmul.f32 %v2344, 0.17677669
      %v2523 = vmul.f32 %v2346, 0.17677669
      %v2524 = vmul.f32 %v2350, 0.17677669
      %v2525 = vmul.f32 %v2352, 0.17677669
      %v2526 = vmul.f32 %v2356, 0.17677669
      %v2527 = vmul.f32 %v2358, 0.17677669
      %v2528 = vmul.f32 %v2362, 0.17677669
      %v2529 = vmul.f32 %v2364, 0.17677669
      %v2530 = vmul.f32 %v2368, 0.17677669
      %v2531 = vmul.f32 %v2370, 0.17677669
      %v2532 = vmul.f32 %v2374, 0.17677669
      %v2533 = vmul.f32 %v2376, 0.17677669
      %v2534 = vmul.f32 %v2380, 0.17677669
      %v2535 = vmul.f32 %v2382, 0.17677669
      %v2536 = vmul.f32 %v2386, 0.17677669
      %v2537 = vmul.f32 %v2388, 0.17677669
      %v2538 = vmul.f32 %v2392, 0.17677669
      %v2539 = vmul.f32 %v2394, 0.17677669
      %v2540 = vmul.f32 %v2398, 0.17677669
      %v2541 = vmul.f32 %v2400, 0.17677669
      %v2542 = vmul.f32 %v2404, 0.17677669
      %v2543 = vmul.f32 %v2406, 0.17677669
      %v2544 = vmul.f32 %v2410, 0.17677669
      %v2545 = vmul.f32 %v2412, 0.17677669
      %v2546 = vmul.f32 %v2416, 0.17677669
      %v2547 = vmul.f32 %v2418, 0.17677669
      %v2548 = vmul.f32 %v2422, 0.17677669
      %v2549 = vmul.f32 %v2424, 0.17677669
      %v2550 = vmul.f32 %v2428, 0.17677669
      %v2551 = vmul.f32 %v2430, 0.17677669
      %v2552 = vmul.f32 %v2434, 0.17677669
      %v2553 = vmul.f32 %v2436, 0.17677669
      %v2554 = vmul.f32 %v2440, 0.17677669
      %v2555 = vmul.f32 %v2442, 0.17677669
      %v2556 = vmul.f32 %v2446, 0.17677669
      %v2557 = vmul.f32 %v2448, 0.17677669
      %v2558 = vmul.f32 %v2452, 0.17677669
      %v2559 = vmul.f32 %v2454, 0.17677669
      %v2560 = vmul.f32 %v2458, 0.17677669
      %v2561 = vmul.f32 %v2460, 0.17677669
      %v2562 = vmul.f32 %v2464, 0.17677669
      %v2563 = vmul.f32 %v2466, 0.17677669
      %v2564 = vmul.f32 %v2470, 0.17677669
      %v2565 = vmul.f32 %v2472, 0.17677669
      %v2566 = vmul.f32 %v2476, 0.17677669
      %v2567 = vmul.f32 %v2478, 0.17677669
      %v2568 = vmul.f32 %v2482, 0.17677669
      %v2569 = vmul.f32 %v2484, 0.17677669
      %v2570 = vmul.f32 %v2488, 0.17677669
      %v2571 = vmul.f32 %v2490, 0.17677669
      %v2572 = vmul.f32 %v2494, 0.17677669
      %v2573 = vmul.f32 %v2496, 0.17677669
      %v2574 = vmul.f32 %v2500, 0.17677669
      %v2575 = vmul.f32 %v2502, 0.17677669
      %v2576 = vmul.f32 %v2506, 0.17677669
      %v2577 = vmul.f32 %v2508, 0.17677669
      %v2578 = vmul.f32 %v2512, 0.17677669
      %v2579 = vmul.f32 %v2514, 0.17677669
      %v2580 = vmax.f32 %v2516, %v2517
      %2581 = vmax.xlane.f32.xlu0 %v2580
      %v2582 = vpop.xlane.xlu0 %2581
      %v2583 = vmax.f32 %v2518, %v2519
      %2584 = vmax.xlane.f32.xlu0 %v2583
      %v2585 = vpop.xlane.xlu0 %2584
      %v2586 = vmax.f32 %v2520, %v2521
      %2587 = vmax.xlane.f32.xlu0 %v2586
      %v2588 = vpop.xlane.xlu0 %2587
      %v2589 = vmax.f32 %v2522, %v2523
      %2590 = vmax.xlane.f32.xlu0 %v2589
      %v2591 = vpop.xlane.xlu0 %2590
      %v2592 = vmax.f32 %v2524, %v2525
      %2593 = vmax.xlane.f32.xlu0 %v2592
      %v2594 = vpop.xlane.xlu0 %2593
      %v2595 = vmax.f32 %v2526, %v2527
      %2596 = vmax.xlane.f32.xlu0 %v2595
      %v2597 = vpop.xlane.xlu0 %2596
      %v2598 = vmax.f32 %v2528, %v2529
      %2599 = vmax.xlane.f32.xlu0 %v2598
      %v2600 = vpop.xlane.xlu0 %2599
      %v2601 = vmax.f32 %v2530, %v2531
      %2602 = vmax.xlane.f32.xlu0 %v2601
      %v2603 = vpop.xlane.xlu0 %2602
      %v2604 = vmax.f32 %v2532, %v2533
      %2605 = vmax.xlane.f32.xlu0 %v2604
      %v2606 = vpop.xlane.xlu0 %2605
      %v2607 = vmax.f32 %v2534, %v2535
      %2608 = vmax.xlane.f32.xlu0 %v2607
      %v2609 = vpop.xlane.xlu0 %2608
      %v2610 = vmax.f32 %v2536, %v2537
      %2611 = vmax.xlane.f32.xlu0 %v2610
      %v2612 = vpop.xlane.xlu0 %2611
      %v2613 = vmax.f32 %v2538, %v2539
      %2614 = vmax.xlane.f32.xlu0 %v2613
      %v2615 = vpop.xlane.xlu0 %2614
      %v2616 = vmax.f32 %v2540, %v2541
      %2617 = vmax.xlane.f32.xlu0 %v2616
      %v2618 = vpop.xlane.xlu0 %2617
      %v2619 = vmax.f32 %v2542, %v2543
      %2620 = vmax.xlane.f32.xlu0 %v2619
      %v2621 = vpop.xlane.xlu0 %2620
      %v2622 = vmax.f32 %v2544, %v2545
      %2623 = vmax.xlane.f32.xlu0 %v2622
      %v2624 = vpop.xlane.xlu0 %2623
      %v2625 = vmax.f32 %v2546, %v2547
      %2626 = vmax.xlane.f32.xlu0 %v2625
      %v2627 = vpop.xlane.xlu0 %2626
      %v2628 = vmax.f32 %v2548, %v2549
      %2629 = vmax.xlane.f32.xlu0 %v2628
      %v2630 = vpop.xlane.xlu0 %2629
      %v2631 = vmax.f32 %v2550, %v2551
      %2632 = vmax.xlane.f32.xlu0 %v2631
      %v2633 = vpop.xlane.xlu0 %2632
      %v2634 = vmax.f32 %v2552, %v2553
      %2635 = vmax.xlane.f32.xlu0 %v2634
      %v2636 = vpop.xlane.xlu0 %2635
      %v2637 = vmax.f32 %v2554, %v2555
      %2638 = vmax.xlane.f32.xlu0 %v2637
      %v2639 = vpop.xlane.xlu0 %2638
      %v2640 = vmax.f32 %v2556, %v2557
      %2641 = vmax.xlane.f32.xlu0 %v2640
      %v2642 = vpop.xlane.xlu0 %2641
      %v2643 = vmax.f32 %v2558, %v2559
      %2644 = vmax.xlane.f32.xlu0 %v2643
      %v2645 = vpop.xlane.xlu0 %2644
      %v2646 = vmax.f32 %v2560, %v2561
      %2647 = vmax.xlane.f32.xlu0 %v2646
      %v2648 = vpop.xlane.xlu0 %2647
      %v2649 = vmax.f32 %v2562, %v2563
      %2650 = vmax.xlane.f32.xlu0 %v2649
      %v2651 = vpop.xlane.xlu0 %2650
      %v2652 = vmax.f32 %v2564, %v2565
      %2653 = vmax.xlane.f32.xlu0 %v2652
      %v2654 = vpop.xlane.xlu0 %2653
      %v2655 = vmax.f32 %v2566, %v2567
      %2656 = vmax.xlane.f32.xlu0 %v2655
      %v2657 = vpop.xlane.xlu0 %2656
      %v2658 = vmax.f32 %v2568, %v2569
      %2659 = vmax.xlane.f32.xlu0 %v2658
      %v2660 = vpop.xlane.xlu0 %2659
      %v2661 = vmax.f32 %v2570, %v2571
      %2662 = vmax.xlane.f32.xlu0 %v2661
      %v2663 = vpop.xlane.xlu0 %2662
      %v2664 = vmax.f32 %v2572, %v2573
      %2665 = vmax.xlane.f32.xlu0 %v2664
      %v2666 = vpop.xlane.xlu0 %2665
      %v2667 = vmax.f32 %v2574, %v2575
      %2668 = vmax.xlane.f32.xlu0 %v2667
      %v2669 = vpop.xlane.xlu0 %2668
      %v2670 = vmax.f32 %v2576, %v2577
      %2671 = vmax.xlane.f32.xlu0 %v2670
      %v2672 = vpop.xlane.xlu0 %2671
      %v2673 = vmax.f32 %v2578, %v2579
      %2674 = vmax.xlane.f32.xlu0 %v2673
      %v2675 = vpop.xlane.xlu0 %2674
      %v2676 = vsub.f32 %v2516, %v2582
      %v2677 = vsub.f32 %v2517, %v2582
      %v2678 = vsub.f32 %v2518, %v2585
      %v2679 = vsub.f32 %v2519, %v2585
      %v2680 = vsub.f32 %v2520, %v2588
      %v2681 = vsub.f32 %v2521, %v2588
      %v2682 = vsub.f32 %v2522, %v2591
      %v2683 = vsub.f32 %v2523, %v2591
      %v2684 = vsub.f32 %v2524, %v2594
      %v2685 = vsub.f32 %v2525, %v2594
      %v2686 = vsub.f32 %v2526, %v2597
      %v2687 = vsub.f32 %v2527, %v2597
      %v2688 = vsub.f32 %v2528, %v2600
      %v2689 = vsub.f32 %v2529, %v2600
      %v2690 = vsub.f32 %v2530, %v2603
      %v2691 = vsub.f32 %v2531, %v2603
      %v2692 = vsub.f32 %v2532, %v2606
      %v2693 = vsub.f32 %v2533, %v2606
      %v2694 = vsub.f32 %v2534, %v2609
      %v2695 = vsub.f32 %v2535, %v2609
      %v2696 = vsub.f32 %v2536, %v2612
      %v2697 = vsub.f32 %v2537, %v2612
      %v2698 = vsub.f32 %v2538, %v2615
      %v2699 = vsub.f32 %v2539, %v2615
      %v2700 = vsub.f32 %v2540, %v2618
      %v2701 = vsub.f32 %v2541, %v2618
      %v2702 = vsub.f32 %v2542, %v2621
      %v2703 = vsub.f32 %v2543, %v2621
      %v2704 = vsub.f32 %v2544, %v2624
      %v2705 = vsub.f32 %v2545, %v2624
      %v2706 = vsub.f32 %v2546, %v2627
      %v2707 = vsub.f32 %v2547, %v2627
      %v2708 = vsub.f32 %v2548, %v2630
      %v2709 = vsub.f32 %v2549, %v2630
      %v2710 = vsub.f32 %v2550, %v2633
      %v2711 = vsub.f32 %v2551, %v2633
      %v2712 = vsub.f32 %v2552, %v2636
      %v2713 = vsub.f32 %v2553, %v2636
      %v2714 = vsub.f32 %v2554, %v2639
      %v2715 = vsub.f32 %v2555, %v2639
      %v2716 = vsub.f32 %v2556, %v2642
      %v2717 = vsub.f32 %v2557, %v2642
      %v2718 = vsub.f32 %v2558, %v2645
      %v2719 = vsub.f32 %v2559, %v2645
      %v2720 = vsub.f32 %v2560, %v2648
      %v2721 = vsub.f32 %v2561, %v2648
      %v2722 = vsub.f32 %v2562, %v2651
      %v2723 = vsub.f32 %v2563, %v2651
      %v2724 = vsub.f32 %v2564, %v2654
      %v2725 = vsub.f32 %v2565, %v2654
      %v2726 = vsub.f32 %v2566, %v2657
      %v2727 = vsub.f32 %v2567, %v2657
      %v2728 = vsub.f32 %v2568, %v2660
      %v2729 = vsub.f32 %v2569, %v2660
      %v2730 = vsub.f32 %v2570, %v2663
      %v2731 = vsub.f32 %v2571, %v2663
      %v2732 = vsub.f32 %v2572, %v2666
      %v2733 = vsub.f32 %v2573, %v2666
      %v2734 = vsub.f32 %v2574, %v2669
      %v2735 = vsub.f32 %v2575, %v2669
      %v2736 = vsub.f32 %v2576, %v2672
      %v2737 = vsub.f32 %v2577, %v2672
      %v2738 = vsub.f32 %v2578, %v2675
      %v2739 = vsub.f32 %v2579, %v2675
      %v2740 = vmul.f32 %v2676, 1.442695
      %v2741 = vpow.pop %v2740
      %v2742 = vmul.f32 %v2677, 1.442695
      %v2743 = vpow.pop %v2742
      %v2744 = vmul.f32 %v2678, 1.442695
      %v2745 = vpow.pop %v2744
      %v2746 = vmul.f32 %v2679, 1.442695
      %v2747 = vpow.pop %v2746
      %v2748 = vmul.f32 %v2680, 1.442695
      %v2749 = vpow.pop %v2748
      %v2750 = vmul.f32 %v2681, 1.442695
      %v2751 = vpow.pop %v2750
      %v2752 = vmul.f32 %v2682, 1.442695
      %v2753 = vpow.pop %v2752
      %v2754 = vmul.f32 %v2683, 1.442695
      %v2755 = vpow.pop %v2754
      %v2756 = vmul.f32 %v2684, 1.442695
      %v2757 = vpow.pop %v2756
      %v2758 = vmul.f32 %v2685, 1.442695
      %v2759 = vpow.pop %v2758
      %v2760 = vmul.f32 %v2686, 1.442695
      %v2761 = vpow.pop %v2760
      %v2762 = vmul.f32 %v2687, 1.442695
      %v2763 = vpow.pop %v2762
      %v2764 = vmul.f32 %v2688, 1.442695
      %v2765 = vpow.pop %v2764
      %v2766 = vmul.f32 %v2689, 1.442695
      %v2767 = vpow.pop %v2766
      %v2768 = vmul.f32 %v2690, 1.442695
      %v2769 = vpow.pop %v2768
      %v2770 = vmul.f32 %v2691, 1.442695
      %v2771 = vpow.pop %v2770
      %v2772 = vmul.f32 %v2692, 1.442695
      %v2773 = vpow.pop %v2772
      %v2774 = vmul.f32 %v2693, 1.442695
      %v2775 = vpow.pop %v2774
      %v2776 = vmul.f32 %v2694, 1.442695
      %v2777 = vpow.pop %v2776
      %v2778 = vmul.f32 %v2695, 1.442695
      %v2779 = vpow.pop %v2778
      %v2780 = vmul.f32 %v2696, 1.442695
      %v2781 = vpow.pop %v2780
      %v2782 = vmul.f32 %v2697, 1.442695
      %v2783 = vpow.pop %v2782
      %v2784 = vmul.f32 %v2698, 1.442695
      %v2785 = vpow.pop %v2784
      %v2786 = vmul.f32 %v2699, 1.442695
      %v2787 = vpow.pop %v2786
      %v2788 = vmul.f32 %v2700, 1.442695
      %v2789 = vpow.pop %v2788
      %v2790 = vmul.f32 %v2701, 1.442695
      %v2791 = vpow.pop %v2790
      %v2792 = vmul.f32 %v2702, 1.442695
      %v2793 = vpow.pop %v2792
      %v2794 = vmul.f32 %v2703, 1.442695
      %v2795 = vpow.pop %v2794
      %v2796 = vmul.f32 %v2704, 1.442695
      %v2797 = vpow.pop %v2796
      %v2798 = vmul.f32 %v2705, 1.442695
      %v2799 = vpow.pop %v2798
      %v2800 = vmul.f32 %v2706, 1.442695
      %v2801 = vpow.pop %v2800
      %v2802 = vmul.f32 %v2707, 1.442695
      %v2803 = vpow.pop %v2802
      %v2804 = vmul.f32 %v2708, 1.442695
      %v2805 = vpow.pop %v2804
      %v2806 = vmul.f32 %v2709, 1.442695
      %v2807 = vpow.pop %v2806
      %v2808 = vmul.f32 %v2710, 1.442695
      %v2809 = vpow.pop %v2808
      %v2810 = vmul.f32 %v2711, 1.442695
      %v2811 = vpow.pop %v2810
      %v2812 = vmul.f32 %v2712, 1.442695
      %v2813 = vpow.pop %v2812
      %v2814 = vmul.f32 %v2713, 1.442695
      %v2815 = vpow.pop %v2814
      %v2816 = vmul.f32 %v2714, 1.442695
      %v2817 = vpow.pop %v2816
      %v2818 = vmul.f32 %v2715, 1.442695
      %v2819 = vpow.pop %v2818
      %v2820 = vmul.f32 %v2716, 1.442695
      %v2821 = vpow.pop %v2820
      %v2822 = vmul.f32 %v2717, 1.442695
      %v2823 = vpow.pop %v2822
      %v2824 = vmul.f32 %v2718, 1.442695
      %v2825 = vpow.pop %v2824
      %v2826 = vmul.f32 %v2719, 1.442695
      %v2827 = vpow.pop %v2826
      %v2828 = vmul.f32 %v2720, 1.442695
      %v2829 = vpow.pop %v2828
      %v2830 = vmul.f32 %v2721, 1.442695
      %v2831 = vpow.pop %v2830
      %v2832 = vmul.f32 %v2722, 1.442695
      %v2833 = vpow.pop %v2832
      %v2834 = vmul.f32 %v2723, 1.442695
      %v2835 = vpow.pop %v2834
      %v2836 = vmul.f32 %v2724, 1.442695
      %v2837 = vpow.pop %v2836
      %v2838 = vmul.f32 %v2725, 1.442695
      %v2839 = vpow.pop %v2838
      %v2840 = vmul.f32 %v2726, 1.442695
      %v2841 = vpow.pop %v2840
      %v2842 = vmul.f32 %v2727, 1.442695
      %v2843 = vpow.pop %v2842
      %v2844 = vmul.f32 %v2728, 1.442695
      %v2845 = vpow.pop %v2844
      %v2846 = vmul.f32 %v2729, 1.442695
      %v2847 = vpow.pop %v2846
      %v2848 = vmul.f32 %v2730, 1.442695
      %v2849 = vpow.pop %v2848
      %v2850 = vmul.f32 %v2731, 1.442695
      %v2851 = vpow.pop %v2850
      %v2852 = vmul.f32 %v2732, 1.442695
      %v2853 = vpow.pop %v2852
      %v2854 = vmul.f32 %v2733, 1.442695
      %v2855 = vpow.pop %v2854
      %v2856 = vmul.f32 %v2734, 1.442695
      %v2857 = vpow.pop %v2856
      %v2858 = vmul.f32 %v2735, 1.442695
      %v2859 = vpow.pop %v2858
      %v2860 = vmul.f32 %v2736, 1.442695
      %v2861 = vpow.pop %v2860
      %v2862 = vmul.f32 %v2737, 1.442695
      %v2863 = vpow.pop %v2862
      %v2864 = vmul.f32 %v2738, 1.442695
      %v2865 = vpow.pop %v2864
      %v2866 = vmul.f32 %v2739, 1.442695
      %v2867 = vpow.pop %v2866
      %v2868 = vadd.f32 %v2741, %v2743
      %2869 = vadd.xlane.f32.xlu0 %v2868
      %v2870 = vpop.xlane.xlu0 %2869
      %v2871 = vadd.f32 %v2745, %v2747
      %2872 = vadd.xlane.f32.xlu0 %v2871
      %v2873 = vpop.xlane.xlu0 %2872
      %v2874 = vadd.f32 %v2749, %v2751
      %2875 = vadd.xlane.f32.xlu0 %v2874
      %v2876 = vpop.xlane.xlu0 %2875
      %v2877 = vadd.f32 %v2753, %v2755
      %2878 = vadd.xlane.f32.xlu0 %v2877
      %v2879 = vpop.xlane.xlu0 %2878
      %v2880 = vadd.f32 %v2757, %v2759
      %2881 = vadd.xlane.f32.xlu0 %v2880
      %v2882 = vpop.xlane.xlu0 %2881
      %v2883 = vadd.f32 %v2761, %v2763
      %2884 = vadd.xlane.f32.xlu0 %v2883
      %v2885 = vpop.xlane.xlu0 %2884
      %v2886 = vadd.f32 %v2765, %v2767
      %2887 = vadd.xlane.f32.xlu0 %v2886
      %v2888 = vpop.xlane.xlu0 %2887
      %v2889 = vadd.f32 %v2769, %v2771
      %2890 = vadd.xlane.f32.xlu0 %v2889
      %v2891 = vpop.xlane.xlu0 %2890
      %v2892 = vadd.f32 %v2773, %v2775
      %2893 = vadd.xlane.f32.xlu0 %v2892
      %v2894 = vpop.xlane.xlu0 %2893
      %v2895 = vadd.f32 %v2777, %v2779
      %2896 = vadd.xlane.f32.xlu0 %v2895
      %v2897 = vpop.xlane.xlu0 %2896
      %v2898 = vadd.f32 %v2781, %v2783
      %2899 = vadd.xlane.f32.xlu0 %v2898
      %v2900 = vpop.xlane.xlu0 %2899
      %v2901 = vadd.f32 %v2785, %v2787
      %2902 = vadd.xlane.f32.xlu0 %v2901
      %v2903 = vpop.xlane.xlu0 %2902
      %v2904 = vadd.f32 %v2789, %v2791
      %2905 = vadd.xlane.f32.xlu0 %v2904
      %v2906 = vpop.xlane.xlu0 %2905
      %v2907 = vadd.f32 %v2793, %v2795
      %2908 = vadd.xlane.f32.xlu0 %v2907
      %v2909 = vpop.xlane.xlu0 %2908
      %v2910 = vadd.f32 %v2797, %v2799
      %2911 = vadd.xlane.f32.xlu0 %v2910
      %v2912 = vpop.xlane.xlu0 %2911
      %v2913 = vadd.f32 %v2801, %v2803
      %2914 = vadd.xlane.f32.xlu0 %v2913
      %v2915 = vpop.xlane.xlu0 %2914
      %v2916 = vadd.f32 %v2805, %v2807
      %2917 = vadd.xlane.f32.xlu0 %v2916
      %v2918 = vpop.xlane.xlu0 %2917
      %v2919 = vadd.f32 %v2809, %v2811
      %2920 = vadd.xlane.f32.xlu0 %v2919
      %v2921 = vpop.xlane.xlu0 %2920
      %v2922 = vadd.f32 %v2813, %v2815
      %2923 = vadd.xlane.f32.xlu0 %v2922
      %v2924 = vpop.xlane.xlu0 %2923
      %v2925 = vadd.f32 %v2817, %v2819
      %2926 = vadd.xlane.f32.xlu0 %v2925
      %v2927 = vpop.xlane.xlu0 %2926
      %v2928 = vadd.f32 %v2821, %v2823
      %2929 = vadd.xlane.f32.xlu0 %v2928
      %v2930 = vpop.xlane.xlu0 %2929
      %v2931 = vadd.f32 %v2825, %v2827
      %2932 = vadd.xlane.f32.xlu0 %v2931
      %v2933 = vpop.xlane.xlu0 %2932
      %v2934 = vadd.f32 %v2829, %v2831
      %2935 = vadd.xlane.f32.xlu0 %v2934
      %v2936 = vpop.xlane.xlu0 %2935
      %v2937 = vadd.f32 %v2833, %v2835
      %2938 = vadd.xlane.f32.xlu0 %v2937
      %v2939 = vpop.xlane.xlu0 %2938
      %v2940 = vadd.f32 %v2837, %v2839
      %2941 = vadd.xlane.f32.xlu0 %v2940
      %v2942 = vpop.xlane.xlu0 %2941
      %v2943 = vadd.f32 %v2841, %v2843
      %2944 = vadd.xlane.f32.xlu0 %v2943
      %v2945 = vpop.xlane.xlu0 %2944
      %v2946 = vadd.f32 %v2845, %v2847
      %2947 = vadd.xlane.f32.xlu0 %v2946
      %v2948 = vpop.xlane.xlu0 %2947
      %v2949 = vadd.f32 %v2849, %v2851
      %2950 = vadd.xlane.f32.xlu0 %v2949
      %v2951 = vpop.xlane.xlu0 %2950
      %v2952 = vadd.f32 %v2853, %v2855
      %2953 = vadd.xlane.f32.xlu0 %v2952
      %v2954 = vpop.xlane.xlu0 %2953
      %v2955 = vadd.f32 %v2857, %v2859
      %2956 = vadd.xlane.f32.xlu0 %v2955
      %v2957 = vpop.xlane.xlu0 %2956
      %v2958 = vadd.f32 %v2861, %v2863
      %2959 = vadd.xlane.f32.xlu0 %v2958
      %v2960 = vpop.xlane.xlu0 %2959
      %v2961 = vadd.f32 %v2865, %v2867
      %2962 = vadd.xlane.f32.xlu0 %v2961
      %v2963 = vpop.xlane.xlu0 %2962
      %v2964 = vrcp.pop %v2870
      %v2965 = vrcp.pop %v2873
      %v2966 = vrcp.pop %v2876
      %v2967 = vrcp.pop %v2879
      %v2968 = vrcp.pop %v2882
      %v2969 = vrcp.pop %v2885
      %v2970 = vrcp.pop %v2888
      %v2971 = vrcp.pop %v2891
      %v2972 = vrcp.pop %v2894
      %v2973 = vrcp.pop %v2897
      %v2974 = vrcp.pop %v2900
      %v2975 = vrcp.pop %v2903
      %v2976 = vrcp.pop %v2906
      %v2977 = vrcp.pop %v2909
      %v2978 = vrcp.pop %v2912
      %v2979 = vrcp.pop %v2915
      %v2980 = vrcp.pop %v2918
      %v2981 = vrcp.pop %v2921
      %v2982 = vrcp.pop %v2924
      %v2983 = vrcp.pop %v2927
      %v2984 = vrcp.pop %v2930
      %v2985 = vrcp.pop %v2933
      %v2986 = vrcp.pop %v2936
      %v2987 = vrcp.pop %v2939
      %v2988 = vrcp.pop %v2942
      %v2989 = vrcp.pop %v2945
      %v2990 = vrcp.pop %v2948
      %v2991 = vrcp.pop %v2951
      %v2992 = vrcp.pop %v2954
      %v2993 = vrcp.pop %v2957
      %v2994 = vrcp.pop %v2960
      %v2995 = vrcp.pop %v2963
      %v2996 = vmul.f32 %v2741, %v2964
      %v2997 = vmul.f32 %v2743, %v2964
      %v2998 = vmul.f32 %v2745, %v2965
      %v2999 = vmul.f32 %v2747, %v2965
      %v3000 = vmul.f32 %v2749, %v2966
      %v3001 = vmul.f32 %v2751, %v2966
      %v3002 = vmul.f32 %v2753, %v2967
      %v3003 = vmul.f32 %v2755, %v2967
      %v3004 = vmul.f32 %v2757, %v2968
      %v3005 = vmul.f32 %v2759, %v2968
      %v3006 = vmul.f32 %v2761, %v2969
      %v3007 = vmul.f32 %v2763, %v2969
      %v3008 = vmul.f32 %v2765, %v2970
      %v3009 = vmul.f32 %v2767, %v2970
      %v3010 = vmul.f32 %v2769, %v2971
      %v3011 = vmul.f32 %v2771, %v2971
      %v3012 = vmul.f32 %v2773, %v2972
      %v3013 = vmul.f32 %v2775, %v2972
      %v3014 = vmul.f32 %v2777, %v2973
      %v3015 = vmul.f32 %v2779, %v2973
      %v3016 = vmul.f32 %v2781, %v2974
      %v3017 = vmul.f32 %v2783, %v2974
      %v3018 = vmul.f32 %v2785, %v2975
      %v3019 = vmul.f32 %v2787, %v2975
      %v3020 = vmul.f32 %v2789, %v2976
      %v3021 = vmul.f32 %v2791, %v2976
      %v3022 = vmul.f32 %v2793, %v2977
      %v3023 = vmul.f32 %v2795, %v2977
      %v3024 = vmul.f32 %v2797, %v2978
      %v3025 = vmul.f32 %v2799, %v2978
      %v3026 = vmul.f32 %v2801, %v2979
      %v3027 = vmul.f32 %v2803, %v2979
      %v3028 = vmul.f32 %v2805, %v2980
      %v3029 = vmul.f32 %v2807, %v2980
      %v3030 = vmul.f32 %v2809, %v2981
      %v3031 = vmul.f32 %v2811, %v2981
      %v3032 = vmul.f32 %v2813, %v2982
      %v3033 = vmul.f32 %v2815, %v2982
      %v3034 = vmul.f32 %v2817, %v2983
      %v3035 = vmul.f32 %v2819, %v2983
      %v3036 = vmul.f32 %v2821, %v2984
      %v3037 = vmul.f32 %v2823, %v2984
      %v3038 = vmul.f32 %v2825, %v2985
      %v3039 = vmul.f32 %v2827, %v2985
      %v3040 = vmul.f32 %v2829, %v2986
      %v3041 = vmul.f32 %v2831, %v2986
      %v3042 = vmul.f32 %v2833, %v2987
      %v3043 = vmul.f32 %v2835, %v2987
      %v3044 = vmul.f32 %v2837, %v2988
      %v3045 = vmul.f32 %v2839, %v2988
      %v3046 = vmul.f32 %v2841, %v2989
      %v3047 = vmul.f32 %v2843, %v2989
      %v3048 = vmul.f32 %v2845, %v2990
      %v3049 = vmul.f32 %v2847, %v2990
      %v3050 = vmul.f32 %v2849, %v2991
      %v3051 = vmul.f32 %v2851, %v2991
      %v3052 = vmul.f32 %v2853, %v2992
      %v3053 = vmul.f32 %v2855, %v2992
      %v3054 = vmul.f32 %v2857, %v2993
      %v3055 = vmul.f32 %v2859, %v2993
      %v3056 = vmul.f32 %v2861, %v2994
      %v3057 = vmul.f32 %v2863, %v2994
      %v3058 = vmul.f32 %v2865, %v2995
      %v3059 = vmul.f32 %v2867, %v2995
      %3060 = vmatprep.subr.mxu0 0.0
      %3061 = vmatpush1.msra.mxu0 %v1952
      %3062 = vmatprep.subr.mxu0 0.0
      %3063 = vmatpush1.msra.mxu0 %v1947
      %3064 = vmatprep.subr.mxu0 0.0
      %3065 = vmatpush1.msra.mxu0 %v1942
      %3066 = vmatprep.subr.mxu0 0.0
      %3067 = vmatpush1.msra.mxu0 %v1937
      %3068 = vmatprep.subr.mxu0 0.0
      %3069 = vmatpush1.msra.mxu0 %v1932
      %3070 = vmatprep.subr.mxu0 0.0
      %3071 = vmatpush1.msra.mxu0 %v1927
      %3072 = vmatprep.subr.mxu0 0.0
      %3073 = vmatpush1.msra.mxu0 %v1922
      %3074 = vmatprep.subr.mxu0 0.0
      %3075 = vmatpush1.msra.mxu0 %v1917
      %3076 = vmatprep.subr.mxu0 0.0
      %3077 = vmatpush1.msra.mxu0 %v1912
      %3078 = vmatprep.subr.mxu0 0.0
      %3079 = vmatpush1.msra.mxu0 %v1907
      %3080 = vmatprep.subr.mxu0 0.0
      %3081 = vmatpush1.msra.mxu0 %v1902
      %3082 = vmatprep.subr.mxu0 0.0
      %3083 = vmatpush1.msra.mxu0 %v1897
      %3084 = vmatprep.subr.mxu0 0.0
      %3085 = vmatpush1.msra.mxu0 %v1892
      %3086 = vmatprep.subr.mxu0 0.0
      %3087 = vmatpush1.msra.mxu0 %v1887
      %3088 = vmatprep.subr.mxu0 0.0
      %3089 = vmatpush1.msra.mxu0 %v1882
      %3090 = vmatprep.subr.mxu0 0.0
      %3091 = vmatpush1.msra.mxu0 %v1877
      %3092 = vmatprep.subr.mxu0 0.0
      %3093 = vmatpush2.msra.mxu0 %v2032
      %3094 = vmatprep.subr.mxu0 0.0
      %3095 = vmatpush2.msra.mxu0 %v2027
      %3096 = vmatprep.subr.mxu0 0.0
      %3097 = vmatpush2.msra.mxu0 %v2022
      %3098 = vmatprep.subr.mxu0 0.0
      %3099 = vmatpush2.msra.mxu0 %v2017
      %3100 = vmatprep.subr.mxu0 0.0
      %3101 = vmatpush2.msra.mxu0 %v2012
      %3102 = vmatprep.subr.mxu0 0.0
      %3103 = vmatpush2.msra.mxu0 %v2007
      %3104 = vmatprep.subr.mxu0 0.0
      %3105 = vmatpush2.msra.mxu0 %v2002
      %3106 = vmatprep.subr.mxu0 0.0
      %3107 = vmatpush2.msra.mxu0 %v1997
      %3108 = vmatprep.subr.mxu0 0.0
      %3109 = vmatpush2.msra.mxu0 %v1992
      %3110 = vmatprep.subr.mxu0 0.0
      %3111 = vmatpush2.msra.mxu0 %v1987
      %3112 = vmatprep.subr.mxu0 0.0
      %3113 = vmatpush2.msra.mxu0 %v1982
      %3114 = vmatprep.subr.mxu0 0.0
      %3115 = vmatpush2.msra.mxu0 %v1977
      %3116 = vmatprep.subr.mxu0 0.0
      %3117 = vmatpush2.msra.mxu0 %v1972
      %3118 = vmatprep.subr.mxu0 0.0
      %3119 = vmatpush2.msra.mxu0 %v1967
      %3120 = vmatprep.subr.mxu0 0.0
      %3121 = vmatpush2.msra.mxu0 %v1962
      %3122 = vmatprep.subr.mxu0 0.0
      %3123 = vmatpush2.msra.mxu0 %v1957
      %3124 = vmatprep.mubr.f32.mxu0 %v2997
      %3125 = vmatmul.mubr.f32.gmra.mxu0 %v2996
      %v3126 = vpop.f32.mrf.mxu0
      %v3127 = vadd.f32 0.0, %v3126
      %v3128 = vpop.f32.mrf.mxu0
      %3129 = vmatprep.mubr.f32.mxu0 %v2999
      %3130 = vmatmul.mubr.f32.gmra.mxu0 %v2998
      %v3131 = vpop.f32.mrf.mxu0
      %v3132 = vadd.f32 0.0, %v3131
      %v3133 = vpop.f32.mrf.mxu0
      %3134 = vmatprep.mubr.f32.mxu0 %v3001
      %3135 = vmatmul.mubr.f32.gmra.mxu0 %v3000
      %v3136 = vpop.f32.mrf.mxu0
      %v3137 = vadd.f32 0.0, %v3136
      %v3138 = vpop.f32.mrf.mxu0
      %3139 = vmatprep.mubr.f32.mxu0 %v3003
      %3140 = vmatmul.mubr.f32.gmra.mxu0 %v3002
      %v3141 = vpop.f32.mrf.mxu0
      %v3142 = vadd.f32 0.0, %v3141
      %v3143 = vpop.f32.mrf.mxu0
      %3144 = vmatprep.mubr.f32.mxu0 %v3005
      %3145 = vmatmul.mubr.f32.gmra.mxu0 %v3004
      %v3146 = vpop.f32.mrf.mxu0
      %v3147 = vadd.f32 0.0, %v3146
      %v3148 = vpop.f32.mrf.mxu0
      %3149 = vmatprep.mubr.f32.mxu0 %v3007
      %3150 = vmatmul.mubr.f32.gmra.mxu0 %v3006
      %v3151 = vpop.f32.mrf.mxu0
      %v3152 = vadd.f32 0.0, %v3151
      %v3153 = vpop.f32.mrf.mxu0
      %3154 = vmatprep.mubr.f32.mxu0 %v3009
      %3155 = vmatmul.mubr.f32.gmra.mxu0 %v3008
      %v3156 = vpop.f32.mrf.mxu0
      %v3157 = vadd.f32 0.0, %v3156
      %v3158 = vpop.f32.mrf.mxu0
      %3159 = vmatprep.mubr.f32.mxu0 %v3011
      %3160 = vmatmul.mubr.f32.gmra.mxu0 %v3010
      %v3161 = vpop.f32.mrf.mxu0
      %v3162 = vadd.f32 0.0, %v3161
      %v3163 = vpop.f32.mrf.mxu0
      %3164 = vmatprep.mubr.f32.mxu0 %v3013
      %3165 = vmatmul.mubr.f32.gmra.mxu0 %v3012
      %v3166 = vpop.f32.mrf.mxu0
      %v3167 = vadd.f32 0.0, %v3166
      %v3168 = vpop.f32.mrf.mxu0
      %3169 = vmatprep.mubr.f32.mxu0 %v3015
      %3170 = vmatmul.mubr.f32.gmra.mxu0 %v3014
      %v3171 = vpop.f32.mrf.mxu0
      %v3172 = vadd.f32 0.0, %v3171
      %v3173 = vpop.f32.mrf.mxu0
      %3174 = vmatprep.mubr.f32.mxu0 %v3017
      %3175 = vmatmul.mubr.f32.gmra.mxu0 %v3016
      %v3176 = vpop.f32.mrf.mxu0
      %v3177 = vadd.f32 0.0, %v3176
      %v3178 = vpop.f32.mrf.mxu0
      %3179 = vmatprep.mubr.f32.mxu0 %v3019
      %3180 = vmatmul.mubr.f32.gmra.mxu0 %v3018
      %v3181 = vpop.f32.mrf.mxu0
      %v3182 = vadd.f32 0.0, %v3181
      %v3183 = vpop.f32.mrf.mxu0
      %3184 = vmatprep.mubr.f32.mxu0 %v3021
      %3185 = vmatmul.mubr.f32.gmra.mxu0 %v3020
      %v3186 = vpop.f32.mrf.mxu0
      %v3187 = vadd.f32 0.0, %v3186
      %v3188 = vpop.f32.mrf.mxu0
      %3189 = vmatprep.mubr.f32.mxu0 %v3023
      %3190 = vmatmul.mubr.f32.gmra.mxu0 %v3022
      %v3191 = vpop.f32.mrf.mxu0
      %v3192 = vadd.f32 0.0, %v3191
      %v3193 = vpop.f32.mrf.mxu0
      %3194 = vmatprep.mubr.f32.mxu0 %v3025
      %3195 = vmatmul.mubr.f32.gmra.mxu0 %v3024
      %v3196 = vpop.f32.mrf.mxu0
      %v3197 = vadd.f32 0.0, %v3196
      %v3198 = vpop.f32.mrf.mxu0
      %3199 = vmatprep.mubr.f32.mxu0 %v3027
      %3200 = vmatmul.mubr.f32.gmra.mxu0 %v3026
      %v3201 = vpop.f32.mrf.mxu0
      %v3202 = vadd.f32 0.0, %v3201
      %v3203 = vpop.f32.mrf.mxu0
      %3204 = vmatprep.mubr.f32.mxu0 %v3029
      %3205 = vmatmul.mubr.f32.gmra.mxu0 %v3028
      %v3206 = vpop.f32.mrf.mxu0
      %v3207 = vadd.f32 0.0, %v3206
      %v3208 = vpop.f32.mrf.mxu0
      %3209 = vmatprep.mubr.f32.mxu0 %v3031
      %3210 = vmatmul.mubr.f32.gmra.mxu0 %v3030
      %v3211 = vpop.f32.mrf.mxu0
      %v3212 = vadd.f32 0.0, %v3211
      %v3213 = vpop.f32.mrf.mxu0
      %3214 = vmatprep.mubr.f32.mxu0 %v3033
      %3215 = vmatmul.mubr.f32.gmra.mxu0 %v3032
      %v3216 = vpop.f32.mrf.mxu0
      %v3217 = vadd.f32 0.0, %v3216
      %v3218 = vpop.f32.mrf.mxu0
      %3219 = vmatprep.mubr.f32.mxu0 %v3035
      %3220 = vmatmul.mubr.f32.gmra.mxu0 %v3034
      %v3221 = vpop.f32.mrf.mxu0
      %v3222 = vadd.f32 0.0, %v3221
      %v3223 = vpop.f32.mrf.mxu0
      %3224 = vmatprep.mubr.f32.mxu0 %v3037
      %3225 = vmatmul.mubr.f32.gmra.mxu0 %v3036
      %v3226 = vpop.f32.mrf.mxu0
      %v3227 = vadd.f32 0.0, %v3226
      %v3228 = vpop.f32.mrf.mxu0
      %3229 = vmatprep.mubr.f32.mxu0 %v3039
      %3230 = vmatmul.mubr.f32.gmra.mxu0 %v3038
      %v3231 = vpop.f32.mrf.mxu0
      %v3232 = vadd.f32 0.0, %v3231
      %v3233 = vpop.f32.mrf.mxu0
      %3234 = vmatprep.mubr.f32.mxu0 %v3041
      %3235 = vmatmul.mubr.f32.gmra.mxu0 %v3040
      %v3236 = vpop.f32.mrf.mxu0
      %v3237 = vadd.f32 0.0, %v3236
      %v3238 = vpop.f32.mrf.mxu0
      %3239 = vmatprep.mubr.f32.mxu0 %v3043
      %3240 = vmatmul.mubr.f32.gmra.mxu0 %v3042
      %v3241 = vpop.f32.mrf.mxu0
      %v3242 = vadd.f32 0.0, %v3241
      %v3243 = vpop.f32.mrf.mxu0
      %3244 = vmatprep.mubr.f32.mxu0 %v3045
      %3245 = vmatmul.mubr.f32.gmra.mxu0 %v3044
      %v3246 = vpop.f32.mrf.mxu0
      %v3247 = vadd.f32 0.0, %v3246
      %v3248 = vpop.f32.mrf.mxu0
      %3249 = vmatprep.mubr.f32.mxu0 %v3047
      %3250 = vmatmul.mubr.f32.gmra.mxu0 %v3046
      %v3251 = vpop.f32.mrf.mxu0
      %v3252 = vadd.f32 0.0, %v3251
      %v3253 = vpop.f32.mrf.mxu0
      %3254 = vmatprep.mubr.f32.mxu0 %v3049
      %3255 = vmatmul.mubr.f32.gmra.mxu0 %v3048
      %v3256 = vpop.f32.mrf.mxu0
      %v3257 = vadd.f32 0.0, %v3256
      %v3258 = vpop.f32.mrf.mxu0
      %3259 = vmatprep.mubr.f32.mxu0 %v3051
      %3260 = vmatmul.mubr.f32.gmra.mxu0 %v3050
      %v3261 = vpop.f32.mrf.mxu0
      %v3262 = vadd.f32 0.0, %v3261
      %v3263 = vpop.f32.mrf.mxu0
      %3264 = vmatprep.mubr.f32.mxu0 %v3053
      %3265 = vmatmul.mubr.f32.gmra.mxu0 %v3052
      %v3266 = vpop.f32.mrf.mxu0
      %v3267 = vadd.f32 0.0, %v3266
      %v3268 = vpop.f32.mrf.mxu0
      %3269 = vmatprep.mubr.f32.mxu0 %v3055
      %3270 = vmatmul.mubr.f32.gmra.mxu0 %v3054
      %v3271 = vpop.f32.mrf.mxu0
      %v3272 = vadd.f32 0.0, %v3271
      %v3273 = vpop.f32.mrf.mxu0
      %3274 = vmatprep.mubr.f32.mxu0 %v3057
      %3275 = vmatmul.mubr.f32.gmra.mxu0 %v3056
      %v3276 = vpop.f32.mrf.mxu0
      %v3277 = vadd.f32 0.0, %v3276
      %v3278 = vpop.f32.mrf.mxu0
      %3279 = vmatprep.mubr.f32.mxu0 %v3059
      %3280 = vmatmul.mubr.f32.gmra.mxu0 %v3058
      %v3281 = vpop.f32.mrf.mxu0
      %v3282 = vadd.f32 0.0, %v3281
      %v3283 = vpop.f32.mrf.mxu0
      %3284 = vdwg.mxu0
      %v3285 = vld [vmem:[%s10] sm:$0xff]
      %v3286 = vld [vmem:[%s10 + $0x8] sm:$0xff]
      %v3287 = vld [vmem:[%s10 + $0x10] sm:$0xff]
      %v3288 = vld [vmem:[%s10 + $0x18] sm:$0xff]
      %v3289 = vld [vmem:[%s11] sm:$0x1]
      %v3291 = vlaneseq
      %v3292 = vshrl.u32 %v3291, 7
      %v3293 = vsub.s32 0, %v3292
      %v3294 = vrot.slane %v3289, %v3293
      %v3297 = vsel %vm1381, %v3127, 0
      %v3300 = vsel %vm1381, %v3132, 0
      %v3303 = vsel %vm1381, %v3137, 0
      %v3306 = vsel %vm1381, %v3142, 0
      %v3309 = vsel %vm1381, %v3147, 0
      %v3312 = vsel %vm1381, %v3152, 0
      %v3315 = vsel %vm1381, %v3157, 0
      %v3318 = vsel %vm1381, %v3162, 0
      %v3321 = vsel %vm1381, %v3167, 0
      %v3324 = vsel %vm1381, %v3172, 0
      %v3327 = vsel %vm1381, %v3177, 0
      %v3330 = vsel %vm1381, %v3182, 0
      %v3333 = vsel %vm1381, %v3187, 0
      %v3336 = vsel %vm1381, %v3192, 0
      %v3339 = vsel %vm1381, %v3197, 0
      %v3342 = vsel %vm1381, %v3202, 0
      %v3345 = vsel %vm1381, %v3207, 0
      %v3348 = vsel %vm1381, %v3212, 0
      %v3351 = vsel %vm1381, %v3217, 0
      %v3354 = vsel %vm1381, %v3222, 0
      %v3357 = vsel %vm1381, %v3227, 0
      %v3360 = vsel %vm1381, %v3232, 0
      %v3363 = vsel %vm1381, %v3237, 0
      %v3366 = vsel %vm1381, %v3242, 0
      %v3369 = vsel %vm1381, %v3247, 0
      %v3372 = vsel %vm1381, %v3252, 0
      %v3375 = vsel %vm1381, %v3257, 0
      %v3378 = vsel %vm1381, %v3262, 0
      %v3381 = vsel %vm1381, %v3267, 0
      %v3384 = vsel %vm1381, %v3272, 0
      %v3387 = vsel %vm1381, %v3277, 0
      %v3390 = vsel %vm1381, %v3282, 0
      %3392 = vmatprep.subr.mxu0 0.0
      %3393 = vmatpush1.msra.mxu0 0.0
      %3394 = vmatprep.subr.mxu0 0.0
      %3395 = vmatpush1.msra.mxu0 0.0
      %3396 = vmatprep.subr.mxu0 0.0
      %3397 = vmatpush1.msra.mxu0 0.0
      %3398 = vmatprep.subr.mxu0 0.0
      %3399 = vmatpush1.msra.mxu0 0.0
      %3400 = vmatprep.subr.mxu0 0.0
      %3401 = vmatpush1.msra.mxu0 0.0
      %3402 = vmatprep.subr.mxu0 0.0
      %3403 = vmatpush1.msra.mxu0 0.0
      %3404 = vmatprep.subr.mxu0 0.0
      %3405 = vmatpush1.msra.mxu0 0.0
      %3406 = vmatprep.subr.mxu0 0.0
      %3407 = vmatpush1.msra.mxu0 0.0
      %3408 = vmatprep.subr.mxu0 0.0
      %3409 = vmatpush1.msra.mxu0 0.0
      %3410 = vmatprep.subr.mxu0 0.0
      %3411 = vmatpush1.msra.mxu0 0.0
      %3412 = vmatprep.subr.mxu0 0.0
      %3413 = vmatpush1.msra.mxu0 0.0
      %3414 = vmatprep.subr.mxu0 0.0
      %3415 = vmatpush1.msra.mxu0 0.0
      %3416 = vmatprep.subr.mxu0 0.0
      %3417 = vmatpush1.msra.mxu0 %v3288
      %3418 = vmatprep.subr.mxu0 0.0
      %3419 = vmatpush1.msra.mxu0 %v3287
      %3420 = vmatprep.subr.mxu0 0.0
      %3421 = vmatpush1.msra.mxu0 %v3286
      %3422 = vmatprep.subr.mxu0 0.0
      %3423 = vmatpush1.msra.mxu0 %v3285
      %3424 = vmatprep.subr.mxu0 0.0
      %3425 = vmatpush2.msra.mxu0 0.0
      %3426 = vmatprep.subr.mxu0 0.0
      %3427 = vmatpush2.msra.mxu0 0.0
      %3428 = vmatprep.subr.mxu0 0.0
      %3429 = vmatpush2.msra.mxu0 0.0
      %3430 = vmatprep.subr.mxu0 0.0
      %3431 = vmatpush2.msra.mxu0 0.0
      %3432 = vmatprep.subr.mxu0 0.0
      %3433 = vmatpush2.msra.mxu0 0.0
      %3434 = vmatprep.subr.mxu0 0.0
      %3435 = vmatpush2.msra.mxu0 0.0
      %3436 = vmatprep.subr.mxu0 0.0
      %3437 = vmatpush2.msra.mxu0 0.0
      %3438 = vmatprep.subr.mxu0 0.0
      %3439 = vmatpush2.msra.mxu0 0.0
      %3440 = vmatprep.subr.mxu0 0.0
      %3441 = vmatpush2.msra.mxu0 0.0
      %3442 = vmatprep.subr.mxu0 0.0
      %3443 = vmatpush2.msra.mxu0 0.0
      %3444 = vmatprep.subr.mxu0 0.0
      %3445 = vmatpush2.msra.mxu0 0.0
      %3446 = vmatprep.subr.mxu0 0.0
      %3447 = vmatpush2.msra.mxu0 0.0
      %3448 = vmatprep.subr.mxu0 0.0
      %3449 = vmatpush2.msra.mxu0 0.0
      %3450 = vmatprep.subr.mxu0 0.0
      %3451 = vmatpush2.msra.mxu0 0.0
      %3452 = vmatprep.subr.mxu0 0.0
      %3453 = vmatpush2.msra.mxu0 0.0
      %3454 = vmatprep.subr.mxu0 0.0
      %3455 = vmatpush2.msra.mxu0 0.0
      %3456 = vmatprep.mubr.f32.mxu0 0.0
      %3457 = vmatmul.mubr.f32.gmra.mxu0 %v3297
      %v3458 = vpop.f32.mrf.mxu0
      %v3459 = vadd.f32 %v3294, %v3458
      %v3460 = vpop.f32.mrf.mxu0
      %3461 = vmatprep.mubr.f32.mxu0 0.0
      %3462 = vmatmul.mubr.f32.gmra.mxu0 %v3300
      %v3463 = vpop.f32.mrf.mxu0
      %v3464 = vadd.f32 %v3294, %v3463
      %v3465 = vpop.f32.mrf.mxu0
      %3466 = vmatprep.mubr.f32.mxu0 0.0
      %3467 = vmatmul.mubr.f32.gmra.mxu0 %v3303
      %v3468 = vpop.f32.mrf.mxu0
      %v3469 = vadd.f32 %v3294, %v3468
      %v3470 = vpop.f32.mrf.mxu0
      %3471 = vmatprep.mubr.f32.mxu0 0.0
      %3472 = vmatmul.mubr.f32.gmra.mxu0 %v3306
      %v3473 = vpop.f32.mrf.mxu0
      %v3474 = vadd.f32 %v3294, %v3473
      %v3475 = vpop.f32.mrf.mxu0
      %3476 = vmatprep.mubr.f32.mxu0 0.0
      %3477 = vmatmul.mubr.f32.gmra.mxu0 %v3309
      %v3478 = vpop.f32.mrf.mxu0
      %v3479 = vadd.f32 %v3294, %v3478
      %v3480 = vpop.f32.mrf.mxu0
      %3481 = vmatprep.mubr.f32.mxu0 0.0
      %3482 = vmatmul.mubr.f32.gmra.mxu0 %v3312
      %v3483 = vpop.f32.mrf.mxu0
      %v3484 = vadd.f32 %v3294, %v3483
      %v3485 = vpop.f32.mrf.mxu0
      %3486 = vmatprep.mubr.f32.mxu0 0.0
      %3487 = vmatmul.mubr.f32.gmra.mxu0 %v3315
      %v3488 = vpop.f32.mrf.mxu0
      %v3489 = vadd.f32 %v3294, %v3488
      %v3490 = vpop.f32.mrf.mxu0
      %3491 = vmatprep.mubr.f32.mxu0 0.0
      %3492 = vmatmul.mubr.f32.gmra.mxu0 %v3318
      %v3493 = vpop.f32.mrf.mxu0
      %v3494 = vadd.f32 %v3294, %v3493
      %v3495 = vpop.f32.mrf.mxu0
      %3496 = vmatprep.mubr.f32.mxu0 0.0
      %3497 = vmatmul.mubr.f32.gmra.mxu0 %v3321
      %v3498 = vpop.f32.mrf.mxu0
      %v3499 = vadd.f32 %v3294, %v3498
      %v3500 = vpop.f32.mrf.mxu0
      %3501 = vmatprep.mubr.f32.mxu0 0.0
      %3502 = vmatmul.mubr.f32.gmra.mxu0 %v3324
      %v3503 = vpop.f32.mrf.mxu0
      %v3504 = vadd.f32 %v3294, %v3503
      %v3505 = vpop.f32.mrf.mxu0
      %3506 = vmatprep.mubr.f32.mxu0 0.0
      %3507 = vmatmul.mubr.f32.gmra.mxu0 %v3327
      %v3508 = vpop.f32.mrf.mxu0
      %v3509 = vadd.f32 %v3294, %v3508
      %v3510 = vpop.f32.mrf.mxu0
      %3511 = vmatprep.mubr.f32.mxu0 0.0
      %3512 = vmatmul.mubr.f32.gmra.mxu0 %v3330
      %v3513 = vpop.f32.mrf.mxu0
      %v3514 = vadd.f32 %v3294, %v3513
      %v3515 = vpop.f32.mrf.mxu0
      %3516 = vmatprep.mubr.f32.mxu0 0.0
      %3517 = vmatmul.mubr.f32.gmra.mxu0 %v3333
      %v3518 = vpop.f32.mrf.mxu0
      %v3519 = vadd.f32 %v3294, %v3518
      %v3520 = vpop.f32.mrf.mxu0
      %3521 = vmatprep.mubr.f32.mxu0 0.0
      %3522 = vmatmul.mubr.f32.gmra.mxu0 %v3336
      %v3523 = vpop.f32.mrf.mxu0
      %v3524 = vadd.f32 %v3294, %v3523
      %v3525 = vpop.f32.mrf.mxu0
      %3526 = vmatprep.mubr.f32.mxu0 0.0
      %3527 = vmatmul.mubr.f32.gmra.mxu0 %v3339
      %v3528 = vpop.f32.mrf.mxu0
      %v3529 = vadd.f32 %v3294, %v3528
      %v3530 = vpop.f32.mrf.mxu0
      %3531 = vmatprep.mubr.f32.mxu0 0.0
      %3532 = vmatmul.mubr.f32.gmra.mxu0 %v3342
      %v3533 = vpop.f32.mrf.mxu0
      %v3534 = vadd.f32 %v3294, %v3533
      %v3535 = vpop.f32.mrf.mxu0
      %3536 = vmatprep.mubr.f32.mxu0 0.0
      %3537 = vmatmul.mubr.f32.gmra.mxu0 %v3345
      %v3538 = vpop.f32.mrf.mxu0
      %v3539 = vadd.f32 %v3294, %v3538
      %v3540 = vpop.f32.mrf.mxu0
      %3541 = vmatprep.mubr.f32.mxu0 0.0
      %3542 = vmatmul.mubr.f32.gmra.mxu0 %v3348
      %v3543 = vpop.f32.mrf.mxu0
      %v3544 = vadd.f32 %v3294, %v3543
      %v3545 = vpop.f32.mrf.mxu0
      %3546 = vmatprep.mubr.f32.mxu0 0.0
      %3547 = vmatmul.mubr.f32.gmra.mxu0 %v3351
      %v3548 = vpop.f32.mrf.mxu0
      %v3549 = vadd.f32 %v3294, %v3548
      %v3550 = vpop.f32.mrf.mxu0
      %3551 = vmatprep.mubr.f32.mxu0 0.0
      %3552 = vmatmul.mubr.f32.gmra.mxu0 %v3354
      %v3553 = vpop.f32.mrf.mxu0
      %v3554 = vadd.f32 %v3294, %v3553
      %v3555 = vpop.f32.mrf.mxu0
      %3556 = vmatprep.mubr.f32.mxu0 0.0
      %3557 = vmatmul.mubr.f32.gmra.mxu0 %v3357
      %v3558 = vpop.f32.mrf.mxu0
      %v3559 = vadd.f32 %v3294, %v3558
      %v3560 = vpop.f32.mrf.mxu0
      %3561 = vmatprep.mubr.f32.mxu0 0.0
      %3562 = vmatmul.mubr.f32.gmra.mxu0 %v3360
      %v3563 = vpop.f32.mrf.mxu0
      %v3564 = vadd.f32 %v3294, %v3563
      %v3565 = vpop.f32.mrf.mxu0
      %3566 = vmatprep.mubr.f32.mxu0 0.0
      %3567 = vmatmul.mubr.f32.gmra.mxu0 %v3363
      %v3568 = vpop.f32.mrf.mxu0
      %v3569 = vadd.f32 %v3294, %v3568
      %v3570 = vpop.f32.mrf.mxu0
      %3571 = vmatprep.mubr.f32.mxu0 0.0
      %3572 = vmatmul.mubr.f32.gmra.mxu0 %v3366
      %v3573 = vpop.f32.mrf.mxu0
      %v3574 = vadd.f32 %v3294, %v3573
      %v3575 = vpop.f32.mrf.mxu0
      %3576 = vmatprep.mubr.f32.mxu0 0.0
      %3577 = vmatmul.mubr.f32.gmra.mxu0 %v3369
      %v3578 = vpop.f32.mrf.mxu0
      %v3579 = vadd.f32 %v3294, %v3578
      %v3580 = vpop.f32.mrf.mxu0
      %3581 = vmatprep.mubr.f32.mxu0 0.0
      %3582 = vmatmul.mubr.f32.gmra.mxu0 %v3372
      %v3583 = vpop.f32.mrf.mxu0
      %v3584 = vadd.f32 %v3294, %v3583
      %v3585 = vpop.f32.mrf.mxu0
      %3586 = vmatprep.mubr.f32.mxu0 0.0
      %3587 = vmatmul.mubr.f32.gmra.mxu0 %v3375
      %v3588 = vpop.f32.mrf.mxu0
      %v3589 = vadd.f32 %v3294, %v3588
      %v3590 = vpop.f32.mrf.mxu0
      %3591 = vmatprep.mubr.f32.mxu0 0.0
      %3592 = vmatmul.mubr.f32.gmra.mxu0 %v3378
      %v3593 = vpop.f32.mrf.mxu0
      %v3594 = vadd.f32 %v3294, %v3593
      %v3595 = vpop.f32.mrf.mxu0
      %3596 = vmatprep.mubr.f32.mxu0 0.0
      %3597 = vmatmul.mubr.f32.gmra.mxu0 %v3381
      %v3598 = vpop.f32.mrf.mxu0
      %v3599 = vadd.f32 %v3294, %v3598
      %v3600 = vpop.f32.mrf.mxu0
      %3601 = vmatprep.mubr.f32.mxu0 0.0
      %3602 = vmatmul.mubr.f32.gmra.mxu0 %v3384
      %v3603 = vpop.f32.mrf.mxu0
      %v3604 = vadd.f32 %v3294, %v3603
      %v3605 = vpop.f32.mrf.mxu0
      %3606 = vmatprep.mubr.f32.mxu0 0.0
      %3607 = vmatmul.mubr.f32.gmra.mxu0 %v3387
      %v3608 = vpop.f32.mrf.mxu0
      %v3609 = vadd.f32 %v3294, %v3608
      %v3610 = vpop.f32.mrf.mxu0
      %3611 = vmatprep.mubr.f32.mxu0 0.0
      %3612 = vmatmul.mubr.f32.gmra.mxu0 %v3390
      %v3613 = vpop.f32.mrf.mxu0
      %v3614 = vadd.f32 %v3294, %v3613
      %v3615 = vpop.f32.mrf.mxu0
      %3616 = vdwg.mxu0
      %v3617 = vadd.f32 %v1180, %v3459
      %v3618 = vadd.f32 %v1185, %v3464
      %v3619 = vadd.f32 %v1190, %v3469
      %v3620 = vadd.f32 %v1195, %v3474
      %v3621 = vadd.f32 %v1200, %v3479
      %v3622 = vadd.f32 %v1205, %v3484
      %v3623 = vadd.f32 %v1210, %v3489
      %v3624 = vadd.f32 %v1215, %v3494
      %v3625 = vadd.f32 %v1220, %v3499
      %v3626 = vadd.f32 %v1225, %v3504
      %v3627 = vadd.f32 %v1230, %v3509
      %v3628 = vadd.f32 %v1235, %v3514
      %v3629 = vadd.f32 %v1240, %v3519
      %v3630 = vadd.f32 %v1245, %v3524
      %v3631 = vadd.f32 %v1250, %v3529
      %v3632 = vadd.f32 %v1255, %v3534
      %v3633 = vadd.f32 %v1260, %v3539
      %v3634 = vadd.f32 %v1265, %v3544
      %v3635 = vadd.f32 %v1270, %v3549
      %v3636 = vadd.f32 %v1275, %v3554
      %v3637 = vadd.f32 %v1280, %v3559
      %v3638 = vadd.f32 %v1285, %v3564
      %v3639 = vadd.f32 %v1290, %v3569
      %v3640 = vadd.f32 %v1295, %v3574
      %v3641 = vadd.f32 %v1300, %v3579
      %v3642 = vadd.f32 %v1305, %v3584
      %v3643 = vadd.f32 %v1310, %v3589
      %v3644 = vadd.f32 %v1315, %v3594
      %v3645 = vadd.f32 %v1320, %v3599
      %v3646 = vadd.f32 %v1325, %v3604
      %v3647 = vadd.f32 %v1330, %v3609
      %v3648 = vadd.f32 %v1335, %v3614
      %v3649 = vsel %vm1381, %v3617, 0.0
      %3650 = vadd.xlane.f32.xlu0 %v3649
      %v3651 = vpop.xlane.xlu0 %3650
      %v3652 = vsel %vm1381, %v3618, 0.0
      %3653 = vadd.xlane.f32.xlu0 %v3652
      %v3654 = vpop.xlane.xlu0 %3653
      %v3655 = vsel %vm1381, %v3619, 0.0
      %3656 = vadd.xlane.f32.xlu0 %v3655
      %v3657 = vpop.xlane.xlu0 %3656
      %v3658 = vsel %vm1381, %v3620, 0.0
      %3659 = vadd.xlane.f32.xlu0 %v3658
      %v3660 = vpop.xlane.xlu0 %3659
      %v3661 = vsel %vm1381, %v3621, 0.0
      %3662 = vadd.xlane.f32.xlu0 %v3661
      %v3663 = vpop.xlane.xlu0 %3662
      %v3664 = vsel %vm1381, %v3622, 0.0
      %3665 = vadd.xlane.f32.xlu0 %v3664
      %v3666 = vpop.xlane.xlu0 %3665
      %v3667 = vsel %vm1381, %v3623, 0.0
      %3668 = vadd.xlane.f32.xlu0 %v3667
      %v3669 = vpop.xlane.xlu0 %3668
      %v3670 = vsel %vm1381, %v3624, 0.0
      %3671 = vadd.xlane.f32.xlu0 %v3670
      %v3672 = vpop.xlane.xlu0 %3671
      %v3673 = vsel %vm1381, %v3625, 0.0
      %3674 = vadd.xlane.f32.xlu0 %v3673
      %v3675 = vpop.xlane.xlu0 %3674
      %v3676 = vsel %vm1381, %v3626, 0.0
      %3677 = vadd.xlane.f32.xlu0 %v3676
      %v3678 = vpop.xlane.xlu0 %3677
      %v3679 = vsel %vm1381, %v3627, 0.0
      %3680 = vadd.xlane.f32.xlu0 %v3679
      %v3681 = vpop.xlane.xlu0 %3680
      %v3682 = vsel %vm1381, %v3628, 0.0
      %3683 = vadd.xlane.f32.xlu0 %v3682
      %v3684 = vpop.xlane.xlu0 %3683
      %v3685 = vsel %vm1381, %v3629, 0.0
      %3686 = vadd.xlane.f32.xlu0 %v3685
      %v3687 = vpop.xlane.xlu0 %3686
      %v3688 = vsel %vm1381, %v3630, 0.0
      %3689 = vadd.xlane.f32.xlu0 %v3688
      %v3690 = vpop.xlane.xlu0 %3689
      %v3691 = vsel %vm1381, %v3631, 0.0
      %3692 = vadd.xlane.f32.xlu0 %v3691
      %v3693 = vpop.xlane.xlu0 %3692
      %v3694 = vsel %vm1381, %v3632, 0.0
      %3695 = vadd.xlane.f32.xlu0 %v3694
      %v3696 = vpop.xlane.xlu0 %3695
      %v3697 = vsel %vm1381, %v3633, 0.0
      %3698 = vadd.xlane.f32.xlu0 %v3697
      %v3699 = vpop.xlane.xlu0 %3698
      %v3700 = vsel %vm1381, %v3634, 0.0
      %3701 = vadd.xlane.f32.xlu0 %v3700
      %v3702 = vpop.xlane.xlu0 %3701
      %v3703 = vsel %vm1381, %v3635, 0.0
      %3704 = vadd.xlane.f32.xlu0 %v3703
      %v3705 = vpop.xlane.xlu0 %3704
      %v3706 = vsel %vm1381, %v3636, 0.0
      %3707 = vadd.xlane.f32.xlu0 %v3706
      %v3708 = vpop.xlane.xlu0 %3707
      %v3709 = vsel %vm1381, %v3637, 0.0
      %3710 = vadd.xlane.f32.xlu0 %v3709
      %v3711 = vpop.xlane.xlu0 %3710
      %v3712 = vsel %vm1381, %v3638, 0.0
      %3713 = vadd.xlane.f32.xlu0 %v3712
      %v3714 = vpop.xlane.xlu0 %3713
      %v3715 = vsel %vm1381, %v3639, 0.0
      %3716 = vadd.xlane.f32.xlu0 %v3715
      %v3717 = vpop.xlane.xlu0 %3716
      %v3718 = vsel %vm1381, %v3640, 0.0
      %3719 = vadd.xlane.f32.xlu0 %v3718
      %v3720 = vpop.xlane.xlu0 %3719
      %v3721 = vsel %vm1381, %v3641, 0.0
      %3722 = vadd.xlane.f32.xlu0 %v3721
      %v3723 = vpop.xlane.xlu0 %3722
      %v3724 = vsel %vm1381, %v3642, 0.0
      %3725 = vadd.xlane.f32.xlu0 %v3724
      %v3726 = vpop.xlane.xlu0 %3725
      %v3727 = vsel %vm1381, %v3643, 0.0
      %3728 = vadd.xlane.f32.xlu0 %v3727
      %v3729 = vpop.xlane.xlu0 %3728
      %v3730 = vsel %vm1381, %v3644, 0.0
      %3731 = vadd.xlane.f32.xlu0 %v3730
      %v3732 = vpop.xlane.xlu0 %3731
      %v3733 = vsel %vm1381, %v3645, 0.0
      %3734 = vadd.xlane.f32.xlu0 %v3733
      %v3735 = vpop.xlane.xlu0 %3734
      %v3736 = vsel %vm1381, %v3646, 0.0
      %3737 = vadd.xlane.f32.xlu0 %v3736
      %v3738 = vpop.xlane.xlu0 %3737
      %v3739 = vsel %vm1381, %v3647, 0.0
      %3740 = vadd.xlane.f32.xlu0 %v3739
      %v3741 = vpop.xlane.xlu0 %3740
      %v3742 = vsel %vm1381, %v3648, 0.0
      %3743 = vadd.xlane.f32.xlu0 %v3742
      %v3744 = vpop.xlane.xlu0 %3743
      %v3745 = vrcp.pop 32.0
      %v3746 = vmul.f32 %v3651, %v3745
      %v3747 = vmul.f32 %v3654, %v3745
      %v3748 = vmul.f32 %v3657, %v3745
      %v3749 = vmul.f32 %v3660, %v3745
      %v3750 = vmul.f32 %v3663, %v3745
      %v3751 = vmul.f32 %v3666, %v3745
      %v3752 = vmul.f32 %v3669, %v3745
      %v3753 = vmul.f32 %v3672, %v3745
      %v3754 = vmul.f32 %v3675, %v3745
      %v3755 = vmul.f32 %v3678, %v3745
      %v3756 = vmul.f32 %v3681, %v3745
      %v3757 = vmul.f32 %v3684, %v3745
      %v3758 = vmul.f32 %v3687, %v3745
      %v3759 = vmul.f32 %v3690, %v3745
      %v3760 = vmul.f32 %v3693, %v3745
      %v3761 = vmul.f32 %v3696, %v3745
      %v3762 = vmul.f32 %v3699, %v3745
      %v3763 = vmul.f32 %v3702, %v3745
      %v3764 = vmul.f32 %v3705, %v3745
      %v3765 = vmul.f32 %v3708, %v3745
      %v3766 = vmul.f32 %v3711, %v3745
      %v3767 = vmul.f32 %v3714, %v3745
      %v3768 = vmul.f32 %v3717, %v3745
      %v3769 = vmul.f32 %v3720, %v3745
      %v3770 = vmul.f32 %v3723, %v3745
      %v3771 = vmul.f32 %v3726, %v3745
      %v3772 = vmul.f32 %v3729, %v3745
      %v3773 = vmul.f32 %v3732, %v3745
      %v3774 = vmul.f32 %v3735, %v3745
      %v3775 = vmul.f32 %v3738, %v3745
      %v3776 = vmul.f32 %v3741, %v3745
      %v3777 = vmul.f32 %v3744, %v3745
      %v3778 = vsub.f32 %v3617, %v3746
      %v3779 = vsub.f32 %v3618, %v3747
      %v3780 = vsub.f32 %v3619, %v3748
      %v3781 = vsub.f32 %v3620, %v3749
      %v3782 = vsub.f32 %v3621, %v3750
      %v3783 = vsub.f32 %v3622, %v3751
      %v3784 = vsub.f32 %v3623, %v3752
      %v3785 = vsub.f32 %v3624, %v3753
      %v3786 = vsub.f32 %v3625, %v3754
      %v3787 = vsub.f32 %v3626, %v3755
      %v3788 = vsub.f32 %v3627, %v3756
      %v3789 = vsub.f32 %v3628, %v3757
      %v3790 = vsub.f32 %v3629, %v3758
      %v3791 = vsub.f32 %v3630, %v3759
      %v3792 = vsub.f32 %v3631, %v3760
      %v3793 = vsub.f32 %v3632, %v3761
      %v3794 = vsub.f32 %v3633, %v3762
      %v3795 = vsub.f32 %v3634, %v3763
      %v3796 = vsub.f32 %v3635, %v3764
      %v3797 = vsub.f32 %v3636, %v3765
      %v3798 = vsub.f32 %v3637, %v3766
      %v3799 = vsub.f32 %v3638, %v3767
      %v3800 = vsub.f32 %v3639, %v3768
      %v3801 = vsub.f32 %v3640, %v3769
      %v3802 = vsub.f32 %v3641, %v3770
      %v3803 = vsub.f32 %v3642, %v3771
      %v3804 = vsub.f32 %v3643, %v3772
      %v3805 = vsub.f32 %v3644, %v3773
      %v3806 = vsub.f32 %v3645, %v3774
      %v3807 = vsub.f32 %v3646, %v3775
      %v3808 = vsub.f32 %v3647, %v3776
      %v3809 = vsub.f32 %v3648, %v3777
      %v3810 = vmul.f32 %v3778, %v3778
      %v3811 = vmul.f32 %v3779, %v3779
      %v3812 = vmul.f32 %v3780, %v3780
      %v3813 = vmul.f32 %v3781, %v3781
      %v3814 = vmul.f32 %v3782, %v3782
      %v3815 = vmul.f32 %v3783, %v3783
      %v3816 = vmul.f32 %v3784, %v3784
      %v3817 = vmul.f32 %v3785, %v3785
      %v3818 = vmul.f32 %v3786, %v3786
      %v3819 = vmul.f32 %v3787, %v3787
      %v3820 = vmul.f32 %v3788, %v3788
      %v3821 = vmul.f32 %v3789, %v3789
      %v3822 = vmul.f32 %v3790, %v3790
      %v3823 = vmul.f32 %v3791, %v3791
      %v3824 = vmul.f32 %v3792, %v3792
      %v3825 = vmul.f32 %v3793, %v3793
      %v3826 = vmul.f32 %v3794, %v3794
      %v3827 = vmul.f32 %v3795, %v3795
      %v3828 = vmul.f32 %v3796, %v3796
      %v3829 = vmul.f32 %v3797, %v3797
      %v3830 = vmul.f32 %v3798, %v3798
      %v3831 = vmul.f32 %v3799, %v3799
      %v3832 = vmul.f32 %v3800, %v3800
      %v3833 = vmul.f32 %v3801, %v3801
      %v3834 = vmul.f32 %v3802, %v3802
      %v3835 = vmul.f32 %v3803, %v3803
      %v3836 = vmul.f32 %v3804, %v3804
      %v3837 = vmul.f32 %v3805, %v3805
      %v3838 = vmul.f32 %v3806, %v3806
      %v3839 = vmul.f32 %v3807, %v3807
      %v3840 = vmul.f32 %v3808, %v3808
      %v3841 = vmul.f32 %v3809, %v3809
      %v3842 = vsel %vm1381, %v3810, 0.0
      %3843 = vadd.xlane.f32.xlu0 %v3842
      %v3844 = vpop.xlane.xlu0 %3843
      %v3845 = vsel %vm1381, %v3811, 0.0
      %3846 = vadd.xlane.f32.xlu0 %v3845
      %v3847 = vpop.xlane.xlu0 %3846
      %v3848 = vsel %vm1381, %v3812, 0.0
      %3849 = vadd.xlane.f32.xlu0 %v3848
      %v3850 = vpop.xlane.xlu0 %3849
      %v3851 = vsel %vm1381, %v3813, 0.0
      %3852 = vadd.xlane.f32.xlu0 %v3851
      %v3853 = vpop.xlane.xlu0 %3852
      %v3854 = vsel %vm1381, %v3814, 0.0
      %3855 = vadd.xlane.f32.xlu0 %v3854
      %v3856 = vpop.xlane.xlu0 %3855
      %v3857 = vsel %vm1381, %v3815, 0.0
      %3858 = vadd.xlane.f32.xlu0 %v3857
      %v3859 = vpop.xlane.xlu0 %3858
      %v3860 = vsel %vm1381, %v3816, 0.0
      %3861 = vadd.xlane.f32.xlu0 %v3860
      %v3862 = vpop.xlane.xlu0 %3861
      %v3863 = vsel %vm1381, %v3817, 0.0
      %3864 = vadd.xlane.f32.xlu0 %v3863
      %v3865 = vpop.xlane.xlu0 %3864
      %v3866 = vsel %vm1381, %v3818, 0.0
      %3867 = vadd.xlane.f32.xlu0 %v3866
      %v3868 = vpop.xlane.xlu0 %3867
      %v3869 = vsel %vm1381, %v3819, 0.0
      %3870 = vadd.xlane.f32.xlu0 %v3869
      %v3871 = vpop.xlane.xlu0 %3870
      %v3872 = vsel %vm1381, %v3820, 0.0
      %3873 = vadd.xlane.f32.xlu0 %v3872
      %v3874 = vpop.xlane.xlu0 %3873
      %v3875 = vsel %vm1381, %v3821, 0.0
      %3876 = vadd.xlane.f32.xlu0 %v3875
      %v3877 = vpop.xlane.xlu0 %3876
      %v3878 = vsel %vm1381, %v3822, 0.0
      %3879 = vadd.xlane.f32.xlu0 %v3878
      %v3880 = vpop.xlane.xlu0 %3879
      %v3881 = vsel %vm1381, %v3823, 0.0
      %3882 = vadd.xlane.f32.xlu0 %v3881
      %v3883 = vpop.xlane.xlu0 %3882
      %v3884 = vsel %vm1381, %v3824, 0.0
      %3885 = vadd.xlane.f32.xlu0 %v3884
      %v3886 = vpop.xlane.xlu0 %3885
      %v3887 = vsel %vm1381, %v3825, 0.0
      %3888 = vadd.xlane.f32.xlu0 %v3887
      %v3889 = vpop.xlane.xlu0 %3888
      %v3890 = vsel %vm1381, %v3826, 0.0
      %3891 = vadd.xlane.f32.xlu0 %v3890
      %v3892 = vpop.xlane.xlu0 %3891
      %v3893 = vsel %vm1381, %v3827, 0.0
      %3894 = vadd.xlane.f32.xlu0 %v3893
      %v3895 = vpop.xlane.xlu0 %3894
      %v3896 = vsel %vm1381, %v3828, 0.0
      %3897 = vadd.xlane.f32.xlu0 %v3896
      %v3898 = vpop.xlane.xlu0 %3897
      %v3899 = vsel %vm1381, %v3829, 0.0
      %3900 = vadd.xlane.f32.xlu0 %v3899
      %v3901 = vpop.xlane.xlu0 %3900
      %v3902 = vsel %vm1381, %v3830, 0.0
      %3903 = vadd.xlane.f32.xlu0 %v3902
      %v3904 = vpop.xlane.xlu0 %3903
      %v3905 = vsel %vm1381, %v3831, 0.0
      %3906 = vadd.xlane.f32.xlu0 %v3905
      %v3907 = vpop.xlane.xlu0 %3906
      %v3908 = vsel %vm1381, %v3832, 0.0
      %3909 = vadd.xlane.f32.xlu0 %v3908
      %v3910 = vpop.xlane.xlu0 %3909
      %v3911 = vsel %vm1381, %v3833, 0.0
      %3912 = vadd.xlane.f32.xlu0 %v3911
      %v3913 = vpop.xlane.xlu0 %3912
      %v3914 = vsel %vm1381, %v3834, 0.0
      %3915 = vadd.xlane.f32.xlu0 %v3914
      %v3916 = vpop.xlane.xlu0 %3915
      %v3917 = vsel %vm1381, %v3835, 0.0
      %3918 = vadd.xlane.f32.xlu0 %v3917
      %v3919 = vpop.xlane.xlu0 %3918
      %v3920 = vsel %vm1381, %v3836, 0.0
      %3921 = vadd.xlane.f32.xlu0 %v3920
      %v3922 = vpop.xlane.xlu0 %3921
      %v3923 = vsel %vm1381, %v3837, 0.0
      %3924 = vadd.xlane.f32.xlu0 %v3923
      %v3925 = vpop.xlane.xlu0 %3924
      %v3926 = vsel %vm1381, %v3838, 0.0
      %3927 = vadd.xlane.f32.xlu0 %v3926
      %v3928 = vpop.xlane.xlu0 %3927
      %v3929 = vsel %vm1381, %v3839, 0.0
      %3930 = vadd.xlane.f32.xlu0 %v3929
      %v3931 = vpop.xlane.xlu0 %3930
      %v3932 = vsel %vm1381, %v3840, 0.0
      %3933 = vadd.xlane.f32.xlu0 %v3932
      %v3934 = vpop.xlane.xlu0 %3933
      %v3935 = vsel %vm1381, %v3841, 0.0
      %3936 = vadd.xlane.f32.xlu0 %v3935
      %v3937 = vpop.xlane.xlu0 %3936
      %v3938 = vmul.f32 %v3844, %v3745
      %v3939 = vmul.f32 %v3847, %v3745
      %v3940 = vmul.f32 %v3850, %v3745
      %v3941 = vmul.f32 %v3853, %v3745
      %v3942 = vmul.f32 %v3856, %v3745
      %v3943 = vmul.f32 %v3859, %v3745
      %v3944 = vmul.f32 %v3862, %v3745
      %v3945 = vmul.f32 %v3865, %v3745
      %v3946 = vmul.f32 %v3868, %v3745
      %v3947 = vmul.f32 %v3871, %v3745
      %v3948 = vmul.f32 %v3874, %v3745
      %v3949 = vmul.f32 %v3877, %v3745
      %v3950 = vmul.f32 %v3880, %v3745
      %v3951 = vmul.f32 %v3883, %v3745
      %v3952 = vmul.f32 %v3886, %v3745
      %v3953 = vmul.f32 %v3889, %v3745
      %v3954 = vmul.f32 %v3892, %v3745
      %v3955 = vmul.f32 %v3895, %v3745
      %v3956 = vmul.f32 %v3898, %v3745
      %v3957 = vmul.f32 %v3901, %v3745
      %v3958 = vmul.f32 %v3904, %v3745
      %v3959 = vmul.f32 %v3907, %v3745
      %v3960 = vmul.f32 %v3910, %v3745
      %v3961 = vmul.f32 %v3913, %v3745
      %v3962 = vmul.f32 %v3916, %v3745
      %v3963 = vmul.f32 %v3919, %v3745
      %v3964 = vmul.f32 %v3922, %v3745
      %v3965 = vmul.f32 %v3925, %v3745
      %v3966 = vmul.f32 %v3928, %v3745
      %v3967 = vmul.f32 %v3931, %v3745
      %v3968 = vmul.f32 %v3934, %v3745
      %v3969 = vmul.f32 %v3937, %v3745
      %v3970 = vadd.f32 %v3938, 1e-05
      %v3971 = vadd.f32 %v3939, 1e-05
      %v3972 = vadd.f32 %v3940, 1e-05
      %v3973 = vadd.f32 %v3941, 1e-05
      %v3974 = vadd.f32 %v3942, 1e-05
      %v3975 = vadd.f32 %v3943, 1e-05
      %v3976 = vadd.f32 %v3944, 1e-05
      %v3977 = vadd.f32 %v3945, 1e-05
      %v3978 = vadd.f32 %v3946, 1e-05
      %v3979 = vadd.f32 %v3947, 1e-05
      %v3980 = vadd.f32 %v3948, 1e-05
      %v3981 = vadd.f32 %v3949, 1e-05
      %v3982 = vadd.f32 %v3950, 1e-05
      %v3983 = vadd.f32 %v3951, 1e-05
      %v3984 = vadd.f32 %v3952, 1e-05
      %v3985 = vadd.f32 %v3953, 1e-05
      %v3986 = vadd.f32 %v3954, 1e-05
      %v3987 = vadd.f32 %v3955, 1e-05
      %v3988 = vadd.f32 %v3956, 1e-05
      %v3989 = vadd.f32 %v3957, 1e-05
      %v3990 = vadd.f32 %v3958, 1e-05
      %v3991 = vadd.f32 %v3959, 1e-05
      %v3992 = vadd.f32 %v3960, 1e-05
      %v3993 = vadd.f32 %v3961, 1e-05
      %v3994 = vadd.f32 %v3962, 1e-05
      %v3995 = vadd.f32 %v3963, 1e-05
      %v3996 = vadd.f32 %v3964, 1e-05
      %v3997 = vadd.f32 %v3965, 1e-05
      %v3998 = vadd.f32 %v3966, 1e-05
      %v3999 = vadd.f32 %v3967, 1e-05
      %v4000 = vadd.f32 %v3968, 1e-05
      %v4001 = vadd.f32 %v3969, 1e-05
      %v4002 = vrsqrt.pop %v3970
      %v4003 = vrsqrt.pop %v3971
      %v4004 = vrsqrt.pop %v3972
      %v4005 = vrsqrt.pop %v3973
      %v4006 = vrsqrt.pop %v3974
      %v4007 = vrsqrt.pop %v3975
      %v4008 = vrsqrt.pop %v3976
      %v4009 = vrsqrt.pop %v3977
      %v4010 = vrsqrt.pop %v3978
      %v4011 = vrsqrt.pop %v3979
      %v4012 = vrsqrt.pop %v3980
      %v4013 = vrsqrt.pop %v3981
      %v4014 = vrsqrt.pop %v3982
      %v4015 = vrsqrt.pop %v3983
      %v4016 = vrsqrt.pop %v3984
      %v4017 = vrsqrt.pop %v3985
      %v4018 = vrsqrt.pop %v3986
      %v4019 = vrsqrt.pop %v3987
      %v4020 = vrsqrt.pop %v3988
      %v4021 = vrsqrt.pop %v3989
      %v4022 = vrsqrt.pop %v3990
      %v4023 = vrsqrt.pop %v3991
      %v4024 = vrsqrt.pop %v3992
      %v4025 = vrsqrt.pop %v3993
      %v4026 = vrsqrt.pop %v3994
      %v4027 = vrsqrt.pop %v3995
      %v4028 = vrsqrt.pop %v3996
      %v4029 = vrsqrt.pop %v3997
      %v4030 = vrsqrt.pop %v3998
      %v4031 = vrsqrt.pop %v3999
      %v4032 = vrsqrt.pop %v4000
      %v4033 = vrsqrt.pop %v4001
      %v4034 = vmul.f32 %v3778, %v4002
      %v4035 = vmul.f32 %v3779, %v4003
      %v4036 = vmul.f32 %v3780, %v4004
      %v4037 = vmul.f32 %v3781, %v4005
      %v4038 = vmul.f32 %v3782, %v4006
      %v4039 = vmul.f32 %v3783, %v4007
      %v4040 = vmul.f32 %v3784, %v4008
      %v4041 = vmul.f32 %v3785, %v4009
      %v4042 = vmul.f32 %v3786, %v4010
      %v4043 = vmul.f32 %v3787, %v4011
      %v4044 = vmul.f32 %v3788, %v4012
      %v4045 = vmul.f32 %v3789, %v4013
      %v4046 = vmul.f32 %v3790, %v4014
      %v4047 = vmul.f32 %v3791, %v4015
      %v4048 = vmul.f32 %v3792, %v4016
      %v4049 = vmul.f32 %v3793, %v4017
      %v4050 = vmul.f32 %v3794, %v4018
      %v4051 = vmul.f32 %v3795, %v4019
      %v4052 = vmul.f32 %v3796, %v4020
      %v4053 = vmul.f32 %v3797, %v4021
      %v4054 = vmul.f32 %v3798, %v4022
      %v4055 = vmul.f32 %v3799, %v4023
      %v4056 = vmul.f32 %v3800, %v4024
      %v4057 = vmul.f32 %v3801, %v4025
      %v4058 = vmul.f32 %v3802, %v4026
      %v4059 = vmul.f32 %v3803, %v4027
      %v4060 = vmul.f32 %v3804, %v4028
      %v4061 = vmul.f32 %v3805, %v4029
      %v4062 = vmul.f32 %v3806, %v4030
      %v4063 = vmul.f32 %v3807, %v4031
      %v4064 = vmul.f32 %v3808, %v4032
      %v4065 = vmul.f32 %v3809, %v4033
      %v4066 = vlaneseq
      %v4067 = vshrl.u32 %v4066, 7
      %v4068 = vsub.s32 0, %v4067
      %v4069 = vrot.slane %v640, %v4068
      %v4070 = vmul.f32 %v4034, %v4069
      %v4071 = vmul.f32 %v4035, %v4069
      %v4072 = vmul.f32 %v4036, %v4069
      %v4073 = vmul.f32 %v4037, %v4069
      %v4074 = vmul.f32 %v4038, %v4069
      %v4075 = vmul.f32 %v4039, %v4069
      %v4076 = vmul.f32 %v4040, %v4069
      %v4077 = vmul.f32 %v4041, %v4069
      %v4078 = vmul.f32 %v4042, %v4069
      %v4079 = vmul.f32 %v4043, %v4069
      %v4080 = vmul.f32 %v4044, %v4069
      %v4081 = vmul.f32 %v4045, %v4069
      %v4082 = vmul.f32 %v4046, %v4069
      %v4083 = vmul.f32 %v4047, %v4069
      %v4084 = vmul.f32 %v4048, %v4069
      %v4085 = vmul.f32 %v4049, %v4069
      %v4086 = vmul.f32 %v4050, %v4069
      %v4087 = vmul.f32 %v4051, %v4069
      %v4088 = vmul.f32 %v4052, %v4069
      %v4089 = vmul.f32 %v4053, %v4069
      %v4090 = vmul.f32 %v4054, %v4069
      %v4091 = vmul.f32 %v4055, %v4069
      %v4092 = vmul.f32 %v4056, %v4069
      %v4093 = vmul.f32 %v4057, %v4069
      %v4094 = vmul.f32 %v4058, %v4069
      %v4095 = vmul.f32 %v4059, %v4069
      %v4096 = vmul.f32 %v4060, %v4069
      %v4097 = vmul.f32 %v4061, %v4069
      %v4098 = vmul.f32 %v4062, %v4069
      %v4099 = vmul.f32 %v4063, %v4069
      %v4100 = vmul.f32 %v4064, %v4069
      %v4101 = vmul.f32 %v4065, %v4069
      %v4102 = vlaneseq
      %v4103 = vshrl.u32 %v4102, 7
      %v4104 = vsub.s32 0, %v4103
      %v4105 = vrot.slane %v641, %v4104
      %v4106 = vadd.f32 %v4070, %v4105
      %v4107 = vadd.f32 %v4071, %v4105
      %v4108 = vadd.f32 %v4072, %v4105
      %v4109 = vadd.f32 %v4073, %v4105
      %v4110 = vadd.f32 %v4074, %v4105
      %v4111 = vadd.f32 %v4075, %v4105
      %v4112 = vadd.f32 %v4076, %v4105
      %v4113 = vadd.f32 %v4077, %v4105
      %v4114 = vadd.f32 %v4078, %v4105
      %v4115 = vadd.f32 %v4079, %v4105
      %v4116 = vadd.f32 %v4080, %v4105
      %v4117 = vadd.f32 %v4081, %v4105
      %v4118 = vadd.f32 %v4082, %v4105
      %v4119 = vadd.f32 %v4083, %v4105
      %v4120 = vadd.f32 %v4084, %v4105
      %v4121 = vadd.f32 %v4085, %v4105
      %v4122 = vadd.f32 %v4086, %v4105
      %v4123 = vadd.f32 %v4087, %v4105
      %v4124 = vadd.f32 %v4088, %v4105
      %v4125 = vadd.f32 %v4089, %v4105
      %v4126 = vadd.f32 %v4090, %v4105
      %v4127 = vadd.f32 %v4091, %v4105
      %v4128 = vadd.f32 %v4092, %v4105
      %v4129 = vadd.f32 %v4093, %v4105
      %v4130 = vadd.f32 %v4094, %v4105
      %v4131 = vadd.f32 %v4095, %v4105
      %v4132 = vadd.f32 %v4096, %v4105
      %v4133 = vadd.f32 %v4097, %v4105
      %v4134 = vadd.f32 %v4098, %v4105
      %v4135 = vadd.f32 %v4099, %v4105
      %v4136 = vadd.f32 %v4100, %v4105
      %v4137 = vadd.f32 %v4101, %v4105
      %v4138 = vld [vmem:[%s14] sm:$0xff]
      %v4139 = vld [vmem:[%s14 + $0x8] sm:$0xff]
      %v4140 = vld [vmem:[%s14 + $0x10] sm:$0xff]
      %v4141 = vld [vmem:[%s14 + $0x18] sm:$0xff]
      %v4142 = vld [vmem:[%s15] sm:$0x1]
      %v4144 = vlaneseq
      %v4145 = vshrl.u32 %v4144, 7
      %v4146 = vsub.s32 0, %v4145
      %v4147 = vrot.slane %v4142, %v4146
      %v4150 = vsel %vm1381, %v4106, 0
      %v4153 = vsel %vm1381, %v4107, 0
      %v4156 = vsel %vm1381, %v4108, 0
      %v4159 = vsel %vm1381, %v4109, 0
      %v4162 = vsel %vm1381, %v4110, 0
      %v4165 = vsel %vm1381, %v4111, 0
      %v4168 = vsel %vm1381, %v4112, 0
      %v4171 = vsel %vm1381, %v4113, 0
      %v4174 = vsel %vm1381, %v4114, 0
      %v4177 = vsel %vm1381, %v4115, 0
      %v4180 = vsel %vm1381, %v4116, 0
      %v4183 = vsel %vm1381, %v4117, 0
      %v4186 = vsel %vm1381, %v4118, 0
      %v4189 = vsel %vm1381, %v4119, 0
      %v4192 = vsel %vm1381, %v4120, 0
      %v4195 = vsel %vm1381, %v4121, 0
      %v4198 = vsel %vm1381, %v4122, 0
      %v4201 = vsel %vm1381, %v4123, 0
      %v4204 = vsel %vm1381, %v4124, 0
      %v4207 = vsel %vm1381, %v4125, 0
      %v4210 = vsel %vm1381, %v4126, 0
      %v4213 = vsel %vm1381, %v4127, 0
      %v4216 = vsel %vm1381, %v4128, 0
      %v4219 = vsel %vm1381, %v4129, 0
      %v4222 = vsel %vm1381, %v4130, 0
      %v4225 = vsel %vm1381, %v4131, 0
      %v4228 = vsel %vm1381, %v4132, 0
      %v4231 = vsel %vm1381, %v4133, 0
      %v4234 = vsel %vm1381, %v4134, 0
      %v4237 = vsel %vm1381, %v4135, 0
      %v4240 = vsel %vm1381, %v4136, 0
      %v4243 = vsel %vm1381, %v4137, 0
      %4245 = vmatprep.subr.mxu0 0.0
      %4246 = vmatpush1.msra.mxu0 0.0
      %4247 = vmatprep.subr.mxu0 0.0
      %4248 = vmatpush1.msra.mxu0 0.0
      %4249 = vmatprep.subr.mxu0 0.0
      %4250 = vmatpush1.msra.mxu0 0.0
      %4251 = vmatprep.subr.mxu0 0.0
      %4252 = vmatpush1.msra.mxu0 0.0
      %4253 = vmatprep.subr.mxu0 0.0
      %4254 = vmatpush1.msra.mxu0 0.0
      %4255 = vmatprep.subr.mxu0 0.0
      %4256 = vmatpush1.msra.mxu0 0.0
      %4257 = vmatprep.subr.mxu0 0.0
      %4258 = vmatpush1.msra.mxu0 0.0
      %4259 = vmatprep.subr.mxu0 0.0
      %4260 = vmatpush1.msra.mxu0 0.0
      %4261 = vmatprep.subr.mxu0 0.0
      %4262 = vmatpush1.msra.mxu0 0.0
      %4263 = vmatprep.subr.mxu0 0.0
      %4264 = vmatpush1.msra.mxu0 0.0
      %4265 = vmatprep.subr.mxu0 0.0
      %4266 = vmatpush1.msra.mxu0 0.0
      %4267 = vmatprep.subr.mxu0 0.0
      %4268 = vmatpush1.msra.mxu0 0.0
      %4269 = vmatprep.subr.mxu0 0.0
      %4270 = vmatpush1.msra.mxu0 %v4141
      %4271 = vmatprep.subr.mxu0 0.0
      %4272 = vmatpush1.msra.mxu0 %v4140
      %4273 = vmatprep.subr.mxu0 0.0
      %4274 = vmatpush1.msra.mxu0 %v4139
      %4275 = vmatprep.subr.mxu0 0.0
      %4276 = vmatpush1.msra.mxu0 %v4138
      %4277 = vmatprep.subr.mxu0 0.0
      %4278 = vmatpush2.msra.mxu0 0.0
      %4279 = vmatprep.subr.mxu0 0.0
      %4280 = vmatpush2.msra.mxu0 0.0
      %4281 = vmatprep.subr.mxu0 0.0
      %4282 = vmatpush2.msra.mxu0 0.0
      %4283 = vmatprep.subr.mxu0 0.0
      %4284 = vmatpush2.msra.mxu0 0.0
      %4285 = vmatprep.subr.mxu0 0.0
      %4286 = vmatpush2.msra.mxu0 0.0
      %4287 = vmatprep.subr.mxu0 0.0
      %4288 = vmatpush2.msra.mxu0 0.0
      %4289 = vmatprep.subr.mxu0 0.0
      %4290 = vmatpush2.msra.mxu0 0.0
      %4291 = vmatprep.subr.mxu0 0.0
      %4292 = vmatpush2.msra.mxu0 0.0
      %4293 = vmatprep.subr.mxu0 0.0
      %4294 = vmatpush2.msra.mxu0 0.0
      %4295 = vmatprep.subr.mxu0 0.0
      %4296 = vmatpush2.msra.mxu0 0.0
      %4297 = vmatprep.subr.mxu0 0.0
      %4298 = vmatpush2.msra.mxu0 0.0
      %4299 = vmatprep.subr.mxu0 0.0
      %4300 = vmatpush2.msra.mxu0 0.0
      %4301 = vmatprep.subr.mxu0 0.0
      %4302 = vmatpush2.msra.mxu0 0.0
      %4303 = vmatprep.subr.mxu0 0.0
      %4304 = vmatpush2.msra.mxu0 0.0
      %4305 = vmatprep.subr.mxu0 0.0
      %4306 = vmatpush2.msra.mxu0 0.0
      %4307 = vmatprep.subr.mxu0 0.0
      %4308 = vmatpush2.msra.mxu0 0.0
      %4309 = vmatprep.mubr.f32.mxu0 0.0
      %4310 = vmatmul.mubr.f32.gmra.mxu0 %v4150
      %v4311 = vpop.f32.mrf.mxu0
      %v4312 = vadd.f32 %v4147, %v4311
      %v4313 = vpop.f32.mrf.mxu0
      %4314 = vmatprep.mubr.f32.mxu0 0.0
      %4315 = vmatmul.mubr.f32.gmra.mxu0 %v4153
      %v4316 = vpop.f32.mrf.mxu0
      %v4317 = vadd.f32 %v4147, %v4316
      %v4318 = vpop.f32.mrf.mxu0
      %4319 = vmatprep.mubr.f32.mxu0 0.0
      %4320 = vmatmul.mubr.f32.gmra.mxu0 %v4156
      %v4321 = vpop.f32.mrf.mxu0
      %v4322 = vadd.f32 %v4147, %v4321
      %v4323 = vpop.f32.mrf.mxu0
      %4324 = vmatprep.mubr.f32.mxu0 0.0
      %4325 = vmatmul.mubr.f32.gmra.mxu0 %v4159
      %v4326 = vpop.f32.mrf.mxu0
      %v4327 = vadd.f32 %v4147, %v4326
      %v4328 = vpop.f32.mrf.mxu0
      %4329 = vmatprep.mubr.f32.mxu0 0.0
      %4330 = vmatmul.mubr.f32.gmra.mxu0 %v4162
      %v4331 = vpop.f32.mrf.mxu0
      %v4332 = vadd.f32 %v4147, %v4331
      %v4333 = vpop.f32.mrf.mxu0
      %4334 = vmatprep.mubr.f32.mxu0 0.0
      %4335 = vmatmul.mubr.f32.gmra.mxu0 %v4165
      %v4336 = vpop.f32.mrf.mxu0
      %v4337 = vadd.f32 %v4147, %v4336
      %v4338 = vpop.f32.mrf.mxu0
      %4339 = vmatprep.mubr.f32.mxu0 0.0
      %4340 = vmatmul.mubr.f32.gmra.mxu0 %v4168
      %v4341 = vpop.f32.mrf.mxu0
      %v4342 = vadd.f32 %v4147, %v4341
      %v4343 = vpop.f32.mrf.mxu0
      %4344 = vmatprep.mubr.f32.mxu0 0.0
      %4345 = vmatmul.mubr.f32.gmra.mxu0 %v4171
      %v4346 = vpop.f32.mrf.mxu0
      %v4347 = vadd.f32 %v4147, %v4346
      %v4348 = vpop.f32.mrf.mxu0
      %4349 = vmatprep.mubr.f32.mxu0 0.0
      %4350 = vmatmul.mubr.f32.gmra.mxu0 %v4174
      %v4351 = vpop.f32.mrf.mxu0
      %v4352 = vadd.f32 %v4147, %v4351
      %v4353 = vpop.f32.mrf.mxu0
      %4354 = vmatprep.mubr.f32.mxu0 0.0
      %4355 = vmatmul.mubr.f32.gmra.mxu0 %v4177
      %v4356 = vpop.f32.mrf.mxu0
      %v4357 = vadd.f32 %v4147, %v4356
      %v4358 = vpop.f32.mrf.mxu0
      %4359 = vmatprep.mubr.f32.mxu0 0.0
      %4360 = vmatmul.mubr.f32.gmra.mxu0 %v4180
      %v4361 = vpop.f32.mrf.mxu0
      %v4362 = vadd.f32 %v4147, %v4361
      %v4363 = vpop.f32.mrf.mxu0
      %4364 = vmatprep.mubr.f32.mxu0 0.0
      %4365 = vmatmul.mubr.f32.gmra.mxu0 %v4183
      %v4366 = vpop.f32.mrf.mxu0
      %v4367 = vadd.f32 %v4147, %v4366
      %v4368 = vpop.f32.mrf.mxu0
      %4369 = vmatprep.mubr.f32.mxu0 0.0
      %4370 = vmatmul.mubr.f32.gmra.mxu0 %v4186
      %v4371 = vpop.f32.mrf.mxu0
      %v4372 = vadd.f32 %v4147, %v4371
      %v4373 = vpop.f32.mrf.mxu0
      %4374 = vmatprep.mubr.f32.mxu0 0.0
      %4375 = vmatmul.mubr.f32.gmra.mxu0 %v4189
      %v4376 = vpop.f32.mrf.mxu0
      %v4377 = vadd.f32 %v4147, %v4376
      %v4378 = vpop.f32.mrf.mxu0
      %4379 = vmatprep.mubr.f32.mxu0 0.0
      %4380 = vmatmul.mubr.f32.gmra.mxu0 %v4192
      %v4381 = vpop.f32.mrf.mxu0
      %v4382 = vadd.f32 %v4147, %v4381
      %v4383 = vpop.f32.mrf.mxu0
      %4384 = vmatprep.mubr.f32.mxu0 0.0
      %4385 = vmatmul.mubr.f32.gmra.mxu0 %v4195
      %v4386 = vpop.f32.mrf.mxu0
      %v4387 = vadd.f32 %v4147, %v4386
      %v4388 = vpop.f32.mrf.mxu0
      %4389 = vmatprep.mubr.f32.mxu0 0.0
      %4390 = vmatmul.mubr.f32.gmra.mxu0 %v4198
      %v4391 = vpop.f32.mrf.mxu0
      %v4392 = vadd.f32 %v4147, %v4391
      %v4393 = vpop.f32.mrf.mxu0
      %4394 = vmatprep.mubr.f32.mxu0 0.0
      %4395 = vmatmul.mubr.f32.gmra.mxu0 %v4201
      %v4396 = vpop.f32.mrf.mxu0
      %v4397 = vadd.f32 %v4147, %v4396
      %v4398 = vpop.f32.mrf.mxu0
      %4399 = vmatprep.mubr.f32.mxu0 0.0
      %4400 = vmatmul.mubr.f32.gmra.mxu0 %v4204
      %v4401 = vpop.f32.mrf.mxu0
      %v4402 = vadd.f32 %v4147, %v4401
      %v4403 = vpop.f32.mrf.mxu0
      %4404 = vmatprep.mubr.f32.mxu0 0.0
      %4405 = vmatmul.mubr.f32.gmra.mxu0 %v4207
      %v4406 = vpop.f32.mrf.mxu0
      %v4407 = vadd.f32 %v4147, %v4406
      %v4408 = vpop.f32.mrf.mxu0
      %4409 = vmatprep.mubr.f32.mxu0 0.0
      %4410 = vmatmul.mubr.f32.gmra.mxu0 %v4210
      %v4411 = vpop.f32.mrf.mxu0
      %v4412 = vadd.f32 %v4147, %v4411
      %v4413 = vpop.f32.mrf.mxu0
      %4414 = vmatprep.mubr.f32.mxu0 0.0
      %4415 = vmatmul.mubr.f32.gmra.mxu0 %v4213
      %v4416 = vpop.f32.mrf.mxu0
      %v4417 = vadd.f32 %v4147, %v4416
      %v4418 = vpop.f32.mrf.mxu0
      %4419 = vmatprep.mubr.f32.mxu0 0.0
      %4420 = vmatmul.mubr.f32.gmra.mxu0 %v4216
      %v4421 = vpop.f32.mrf.mxu0
      %v4422 = vadd.f32 %v4147, %v4421
      %v4423 = vpop.f32.mrf.mxu0
      %4424 = vmatprep.mubr.f32.mxu0 0.0
      %4425 = vmatmul.mubr.f32.gmra.mxu0 %v4219
      %v4426 = vpop.f32.mrf.mxu0
      %v4427 = vadd.f32 %v4147, %v4426
      %v4428 = vpop.f32.mrf.mxu0
      %4429 = vmatprep.mubr.f32.mxu0 0.0
      %4430 = vmatmul.mubr.f32.gmra.mxu0 %v4222
      %v4431 = vpop.f32.mrf.mxu0
      %v4432 = vadd.f32 %v4147, %v4431
      %v4433 = vpop.f32.mrf.mxu0
      %4434 = vmatprep.mubr.f32.mxu0 0.0
      %4435 = vmatmul.mubr.f32.gmra.mxu0 %v4225
      %v4436 = vpop.f32.mrf.mxu0
      %v4437 = vadd.f32 %v4147, %v4436
      %v4438 = vpop.f32.mrf.mxu0
      %4439 = vmatprep.mubr.f32.mxu0 0.0
      %4440 = vmatmul.mubr.f32.gmra.mxu0 %v4228
      %v4441 = vpop.f32.mrf.mxu0
      %v4442 = vadd.f32 %v4147, %v4441
      %v4443 = vpop.f32.mrf.mxu0
      %4444 = vmatprep.mubr.f32.mxu0 0.0
      %4445 = vmatmul.mubr.f32.gmra.mxu0 %v4231
      %v4446 = vpop.f32.mrf.mxu0
      %v4447 = vadd.f32 %v4147, %v4446
      %v4448 = vpop.f32.mrf.mxu0
      %4449 = vmatprep.mubr.f32.mxu0 0.0
      %4450 = vmatmul.mubr.f32.gmra.mxu0 %v4234
      %v4451 = vpop.f32.mrf.mxu0
      %v4452 = vadd.f32 %v4147, %v4451
      %v4453 = vpop.f32.mrf.mxu0
      %4454 = vmatprep.mubr.f32.mxu0 0.0
      %4455 = vmatmul.mubr.f32.gmra.mxu0 %v4237
      %v4456 = vpop.f32.mrf.mxu0
      %v4457 = vadd.f32 %v4147, %v4456
      %v4458 = vpop.f32.mrf.mxu0
      %4459 = vmatprep.mubr.f32.mxu0 0.0
      %4460 = vmatmul.mubr.f32.gmra.mxu0 %v4240
      %v4461 = vpop.f32.mrf.mxu0
      %v4462 = vadd.f32 %v4147, %v4461
      %v4463 = vpop.f32.mrf.mxu0
      %4464 = vmatprep.mubr.f32.mxu0 0.0
      %4465 = vmatmul.mubr.f32.gmra.mxu0 %v4243
      %v4466 = vpop.f32.mrf.mxu0
      %v4467 = vadd.f32 %v4147, %v4466
      %v4468 = vpop.f32.mrf.mxu0
      %4469 = vdwg.mxu0
      %v4470 = vmax.f32 %v4312, 0.0
      %v4471 = vmax.f32 %v4317, 0.0
      %v4472 = vmax.f32 %v4322, 0.0
      %v4473 = vmax.f32 %v4327, 0.0
      %v4474 = vmax.f32 %v4332, 0.0
      %v4475 = vmax.f32 %v4337, 0.0
      %v4476 = vmax.f32 %v4342, 0.0
      %v4477 = vmax.f32 %v4347, 0.0
      %v4478 = vmax.f32 %v4352, 0.0
      %v4479 = vmax.f32 %v4357, 0.0
      %v4480 = vmax.f32 %v4362, 0.0
      %v4481 = vmax.f32 %v4367, 0.0
      %v4482 = vmax.f32 %v4372, 0.0
      %v4483 = vmax.f32 %v4377, 0.0
      %v4484 = vmax.f32 %v4382, 0.0
      %v4485 = vmax.f32 %v4387, 0.0
      %v4486 = vmax.f32 %v4392, 0.0
      %v4487 = vmax.f32 %v4397, 0.0
      %v4488 = vmax.f32 %v4402, 0.0
      %v4489 = vmax.f32 %v4407, 0.0
      %v4490 = vmax.f32 %v4412, 0.0
      %v4491 = vmax.f32 %v4417, 0.0
      %v4492 = vmax.f32 %v4422, 0.0
      %v4493 = vmax.f32 %v4427, 0.0
      %v4494 = vmax.f32 %v4432, 0.0
      %v4495 = vmax.f32 %v4437, 0.0
      %v4496 = vmax.f32 %v4442, 0.0
      %v4497 = vmax.f32 %v4447, 0.0
      %v4498 = vmax.f32 %v4452, 0.0
      %v4499 = vmax.f32 %v4457, 0.0
      %v4500 = vmax.f32 %v4462, 0.0
      %v4501 = vmax.f32 %v4467, 0.0
      %v4502 = vld [vmem:[%s16] sm:$0xff]
      %v4503 = vld [vmem:[%s16 + $0x8] sm:$0xff]
      %v4504 = vld [vmem:[%s16 + $0x10] sm:$0xff]
      %v4505 = vld [vmem:[%s16 + $0x18] sm:$0xff]
      %v4506 = vld [vmem:[%s16 + $0x20] sm:$0xff]
      %v4507 = vld [vmem:[%s16 + $0x28] sm:$0xff]
      %v4508 = vld [vmem:[%s16 + $0x30] sm:$0xff]
      %v4509 = vld [vmem:[%s16 + $0x38] sm:$0xff]
      %v4510 = vld [vmem:[%s17] sm:$0x1]
      %v4512 = vlaneseq
      %v4513 = vshrl.u32 %v4512, 7
      %v4514 = vsub.s32 0, %v4513
      %v4515 = vrot.slane %v4510, %v4514
      %vm4517 = vcmask 523264
      %v4519 = vsel %vm4517, %v4470, 0
      %v4522 = vsel %vm4517, %v4471, 0
      %v4525 = vsel %vm4517, %v4472, 0
      %v4528 = vsel %vm4517, %v4473, 0
      %v4531 = vsel %vm4517, %v4474, 0
      %v4534 = vsel %vm4517, %v4475, 0
      %v4537 = vsel %vm4517, %v4476, 0
      %v4540 = vsel %vm4517, %v4477, 0
      %v4543 = vsel %vm4517, %v4478, 0
      %v4546 = vsel %vm4517, %v4479, 0
      %v4549 = vsel %vm4517, %v4480, 0
      %v4552 = vsel %vm4517, %v4481, 0
      %v4555 = vsel %vm4517, %v4482, 0
      %v4558 = vsel %vm4517, %v4483, 0
      %v4561 = vsel %vm4517, %v4484, 0
      %v4564 = vsel %vm4517, %v4485, 0
      %v4567 = vsel %vm4517, %v4486, 0
      %v4570 = vsel %vm4517, %v4487, 0
      %v4573 = vsel %vm4517, %v4488, 0
      %v4576 = vsel %vm4517, %v4489, 0
      %v4579 = vsel %vm4517, %v4490, 0
      %v4582 = vsel %vm4517, %v4491, 0
      %v4585 = vsel %vm4517, %v4492, 0
      %v4588 = vsel %vm4517, %v4493, 0
      %v4591 = vsel %vm4517, %v4494, 0
      %v4594 = vsel %vm4517, %v4495, 0
      %v4597 = vsel %vm4517, %v4496, 0
      %v4600 = vsel %vm4517, %v4497, 0
      %v4603 = vsel %vm4517, %v4498, 0
      %v4606 = vsel %vm4517, %v4499, 0
      %v4609 = vsel %vm4517, %v4500, 0
      %v4612 = vsel %vm4517, %v4501, 0
      %4614 = vmatprep.subr.mxu0 0.0
      %4615 = vmatpush1.msra.mxu0 0.0
      %4616 = vmatprep.subr.mxu0 0.0
      %4617 = vmatpush1.msra.mxu0 0.0
      %4618 = vmatprep.subr.mxu0 0.0
      %4619 = vmatpush1.msra.mxu0 0.0
      %4620 = vmatprep.subr.mxu0 0.0
      %4621 = vmatpush1.msra.mxu0 0.0
      %4622 = vmatprep.subr.mxu0 0.0
      %4623 = vmatpush1.msra.mxu0 0.0
      %4624 = vmatprep.subr.mxu0 0.0
      %4625 = vmatpush1.msra.mxu0 0.0
      %4626 = vmatprep.subr.mxu0 0.0
      %4627 = vmatpush1.msra.mxu0 0.0
      %4628 = vmatprep.subr.mxu0 0.0
      %4629 = vmatpush1.msra.mxu0 0.0
      %4630 = vmatprep.subr.mxu0 0.0
      %4631 = vmatpush1.msra.mxu0 %v4509
      %4632 = vmatprep.subr.mxu0 0.0
      %4633 = vmatpush1.msra.mxu0 %v4508
      %4634 = vmatprep.subr.mxu0 0.0
      %4635 = vmatpush1.msra.mxu0 %v4507
      %4636 = vmatprep.subr.mxu0 0.0
      %4637 = vmatpush1.msra.mxu0 %v4506
      %4638 = vmatprep.subr.mxu0 0.0
      %4639 = vmatpush1.msra.mxu0 %v4505
      %4640 = vmatprep.subr.mxu0 0.0
      %4641 = vmatpush1.msra.mxu0 %v4504
      %4642 = vmatprep.subr.mxu0 0.0
      %4643 = vmatpush1.msra.mxu0 %v4503
      %4644 = vmatprep.subr.mxu0 0.0
      %4645 = vmatpush1.msra.mxu0 %v4502
      %4646 = vmatprep.subr.mxu0 0.0
      %4647 = vmatpush2.msra.mxu0 0.0
      %4648 = vmatprep.subr.mxu0 0.0
      %4649 = vmatpush2.msra.mxu0 0.0
      %4650 = vmatprep.subr.mxu0 0.0
      %4651 = vmatpush2.msra.mxu0 0.0
      %4652 = vmatprep.subr.mxu0 0.0
      %4653 = vmatpush2.msra.mxu0 0.0
      %4654 = vmatprep.subr.mxu0 0.0
      %4655 = vmatpush2.msra.mxu0 0.0
      %4656 = vmatprep.subr.mxu0 0.0
      %4657 = vmatpush2.msra.mxu0 0.0
      %4658 = vmatprep.subr.mxu0 0.0
      %4659 = vmatpush2.msra.mxu0 0.0
      %4660 = vmatprep.subr.mxu0 0.0
      %4661 = vmatpush2.msra.mxu0 0.0
      %4662 = vmatprep.subr.mxu0 0.0
      %4663 = vmatpush2.msra.mxu0 0.0
      %4664 = vmatprep.subr.mxu0 0.0
      %4665 = vmatpush2.msra.mxu0 0.0
      %4666 = vmatprep.subr.mxu0 0.0
      %4667 = vmatpush2.msra.mxu0 0.0
      %4668 = vmatprep.subr.mxu0 0.0
      %4669 = vmatpush2.msra.mxu0 0.0
      %4670 = vmatprep.subr.mxu0 0.0
      %4671 = vmatpush2.msra.mxu0 0.0
      %4672 = vmatprep.subr.mxu0 0.0
      %4673 = vmatpush2.msra.mxu0 0.0
      %4674 = vmatprep.subr.mxu0 0.0
      %4675 = vmatpush2.msra.mxu0 0.0
      %4676 = vmatprep.subr.mxu0 0.0
      %4677 = vmatpush2.msra.mxu0 0.0
      %4678 = vmatprep.mubr.f32.mxu0 0.0
      %4679 = vmatmul.mubr.f32.gmra.mxu0 %v4519
      %v4680 = vpop.f32.mrf.mxu0
      %v4681 = vadd.f32 %v4515, %v4680
      %v4682 = vpop.f32.mrf.mxu0
      %4683 = vmatprep.mubr.f32.mxu0 0.0
      %4684 = vmatmul.mubr.f32.gmra.mxu0 %v4522
      %v4685 = vpop.f32.mrf.mxu0
      %v4686 = vadd.f32 %v4515, %v4685
      %v4687 = vpop.f32.mrf.mxu0
      %4688 = vmatprep.mubr.f32.mxu0 0.0
      %4689 = vmatmul.mubr.f32.gmra.mxu0 %v4525
      %v4690 = vpop.f32.mrf.mxu0
      %v4691 = vadd.f32 %v4515, %v4690
      %v4692 = vpop.f32.mrf.mxu0
      %4693 = vmatprep.mubr.f32.mxu0 0.0
      %4694 = vmatmul.mubr.f32.gmra.mxu0 %v4528
      %v4695 = vpop.f32.mrf.mxu0
      %v4696 = vadd.f32 %v4515, %v4695
      %v4697 = vpop.f32.mrf.mxu0
      %4698 = vmatprep.mubr.f32.mxu0 0.0
      %4699 = vmatmul.mubr.f32.gmra.mxu0 %v4531
      %v4700 = vpop.f32.mrf.mxu0
      %v4701 = vadd.f32 %v4515, %v4700
      %v4702 = vpop.f32.mrf.mxu0
      %4703 = vmatprep.mubr.f32.mxu0 0.0
      %4704 = vmatmul.mubr.f32.gmra.mxu0 %v4534
      %v4705 = vpop.f32.mrf.mxu0
      %v4706 = vadd.f32 %v4515, %v4705
      %v4707 = vpop.f32.mrf.mxu0
      %4708 = vmatprep.mubr.f32.mxu0 0.0
      %4709 = vmatmul.mubr.f32.gmra.mxu0 %v4537
      %v4710 = vpop.f32.mrf.mxu0
      %v4711 = vadd.f32 %v4515, %v4710
      %v4712 = vpop.f32.mrf.mxu0
      %4713 = vmatprep.mubr.f32.mxu0 0.0
      %4714 = vmatmul.mubr.f32.gmra.mxu0 %v4540
      %v4715 = vpop.f32.mrf.mxu0
      %v4716 = vadd.f32 %v4515, %v4715
      %v4717 = vpop.f32.mrf.mxu0
      %4718 = vmatprep.mubr.f32.mxu0 0.0
      %4719 = vmatmul.mubr.f32.gmra.mxu0 %v4543
      %v4720 = vpop.f32.mrf.mxu0
      %v4721 = vadd.f32 %v4515, %v4720
      %v4722 = vpop.f32.mrf.mxu0
      %4723 = vmatprep.mubr.f32.mxu0 0.0
      %4724 = vmatmul.mubr.f32.gmra.mxu0 %v4546
      %v4725 = vpop.f32.mrf.mxu0
      %v4726 = vadd.f32 %v4515, %v4725
      %v4727 = vpop.f32.mrf.mxu0
      %4728 = vmatprep.mubr.f32.mxu0 0.0
      %4729 = vmatmul.mubr.f32.gmra.mxu0 %v4549
      %v4730 = vpop.f32.mrf.mxu0
      %v4731 = vadd.f32 %v4515, %v4730
      %v4732 = vpop.f32.mrf.mxu0
      %4733 = vmatprep.mubr.f32.mxu0 0.0
      %4734 = vmatmul.mubr.f32.gmra.mxu0 %v4552
      %v4735 = vpop.f32.mrf.mxu0
      %v4736 = vadd.f32 %v4515, %v4735
      %v4737 = vpop.f32.mrf.mxu0
      %4738 = vmatprep.mubr.f32.mxu0 0.0
      %4739 = vmatmul.mubr.f32.gmra.mxu0 %v4555
      %v4740 = vpop.f32.mrf.mxu0
      %v4741 = vadd.f32 %v4515, %v4740
      %v4742 = vpop.f32.mrf.mxu0
      %4743 = vmatprep.mubr.f32.mxu0 0.0
      %4744 = vmatmul.mubr.f32.gmra.mxu0 %v4558
      %v4745 = vpop.f32.mrf.mxu0
      %v4746 = vadd.f32 %v4515, %v4745
      %v4747 = vpop.f32.mrf.mxu0
      %4748 = vmatprep.mubr.f32.mxu0 0.0
      %4749 = vmatmul.mubr.f32.gmra.mxu0 %v4561
      %v4750 = vpop.f32.mrf.mxu0
      %v4751 = vadd.f32 %v4515, %v4750
      %v4752 = vpop.f32.mrf.mxu0
      %4753 = vmatprep.mubr.f32.mxu0 0.0
      %4754 = vmatmul.mubr.f32.gmra.mxu0 %v4564
      %v4755 = vpop.f32.mrf.mxu0
      %v4756 = vadd.f32 %v4515, %v4755
      %v4757 = vpop.f32.mrf.mxu0
      %4758 = vmatprep.mubr.f32.mxu0 0.0
      %4759 = vmatmul.mubr.f32.gmra.mxu0 %v4567
      %v4760 = vpop.f32.mrf.mxu0
      %v4761 = vadd.f32 %v4515, %v4760
      %v4762 = vpop.f32.mrf.mxu0
      %4763 = vmatprep.mubr.f32.mxu0 0.0
      %4764 = vmatmul.mubr.f32.gmra.mxu0 %v4570
      %v4765 = vpop.f32.mrf.mxu0
      %v4766 = vadd.f32 %v4515, %v4765
      %v4767 = vpop.f32.mrf.mxu0
      %4768 = vmatprep.mubr.f32.mxu0 0.0
      %4769 = vmatmul.mubr.f32.gmra.mxu0 %v4573
      %v4770 = vpop.f32.mrf.mxu0
      %v4771 = vadd.f32 %v4515, %v4770
      %v4772 = vpop.f32.mrf.mxu0
      %4773 = vmatprep.mubr.f32.mxu0 0.0
      %4774 = vmatmul.mubr.f32.gmra.mxu0 %v4576
      %v4775 = vpop.f32.mrf.mxu0
      %v4776 = vadd.f32 %v4515, %v4775
      %v4777 = vpop.f32.mrf.mxu0
      %4778 = vmatprep.mubr.f32.mxu0 0.0
      %4779 = vmatmul.mubr.f32.gmra.mxu0 %v4579
      %v4780 = vpop.f32.mrf.mxu0
      %v4781 = vadd.f32 %v4515, %v4780
      %v4782 = vpop.f32.mrf.mxu0
      %4783 = vmatprep.mubr.f32.mxu0 0.0
      %4784 = vmatmul.mubr.f32.gmra.mxu0 %v4582
      %v4785 = vpop.f32.mrf.mxu0
      %v4786 = vadd.f32 %v4515, %v4785
      %v4787 = vpop.f32.mrf.mxu0
      %4788 = vmatprep.mubr.f32.mxu0 0.0
      %4789 = vmatmul.mubr.f32.gmra.mxu0 %v4585
      %v4790 = vpop.f32.mrf.mxu0
      %v4791 = vadd.f32 %v4515, %v4790
      %v4792 = vpop.f32.mrf.mxu0
      %4793 = vmatprep.mubr.f32.mxu0 0.0
      %4794 = vmatmul.mubr.f32.gmra.mxu0 %v4588
      %v4795 = vpop.f32.mrf.mxu0
      %v4796 = vadd.f32 %v4515, %v4795
      %v4797 = vpop.f32.mrf.mxu0
      %4798 = vmatprep.mubr.f32.mxu0 0.0
      %4799 = vmatmul.mubr.f32.gmra.mxu0 %v4591
      %v4800 = vpop.f32.mrf.mxu0
      %v4801 = vadd.f32 %v4515, %v4800
      %v4802 = vpop.f32.mrf.mxu0
      %4803 = vmatprep.mubr.f32.mxu0 0.0
      %4804 = vmatmul.mubr.f32.gmra.mxu0 %v4594
      %v4805 = vpop.f32.mrf.mxu0
      %v4806 = vadd.f32 %v4515, %v4805
      %v4807 = vpop.f32.mrf.mxu0
      %4808 = vmatprep.mubr.f32.mxu0 0.0
      %4809 = vmatmul.mubr.f32.gmra.mxu0 %v4597
      %v4810 = vpop.f32.mrf.mxu0
      %v4811 = vadd.f32 %v4515, %v4810
      %v4812 = vpop.f32.mrf.mxu0
      %4813 = vmatprep.mubr.f32.mxu0 0.0
      %4814 = vmatmul.mubr.f32.gmra.mxu0 %v4600
      %v4815 = vpop.f32.mrf.mxu0
      %v4816 = vadd.f32 %v4515, %v4815
      %v4817 = vpop.f32.mrf.mxu0
      %4818 = vmatprep.mubr.f32.mxu0 0.0
      %4819 = vmatmul.mubr.f32.gmra.mxu0 %v4603
      %v4820 = vpop.f32.mrf.mxu0
      %v4821 = vadd.f32 %v4515, %v4820
      %v4822 = vpop.f32.mrf.mxu0
      %4823 = vmatprep.mubr.f32.mxu0 0.0
      %4824 = vmatmul.mubr.f32.gmra.mxu0 %v4606
      %v4825 = vpop.f32.mrf.mxu0
      %v4826 = vadd.f32 %v4515, %v4825
      %v4827 = vpop.f32.mrf.mxu0
      %4828 = vmatprep.mubr.f32.mxu0 0.0
      %4829 = vmatmul.mubr.f32.gmra.mxu0 %v4609
      %v4830 = vpop.f32.mrf.mxu0
      %v4831 = vadd.f32 %v4515, %v4830
      %v4832 = vpop.f32.mrf.mxu0
      %4833 = vmatprep.mubr.f32.mxu0 0.0
      %4834 = vmatmul.mubr.f32.gmra.mxu0 %v4612
      %v4835 = vpop.f32.mrf.mxu0
      %v4836 = vadd.f32 %v4515, %v4835
      %v4837 = vpop.f32.mrf.mxu0
      %4838 = vdwg.mxu0
      %v4839 = vadd.f32 %v4106, %v4681
      %v4840 = vadd.f32 %v4107, %v4686
      %v4841 = vadd.f32 %v4108, %v4691
      %v4842 = vadd.f32 %v4109, %v4696
      %v4843 = vadd.f32 %v4110, %v4701
      %v4844 = vadd.f32 %v4111, %v4706
      %v4845 = vadd.f32 %v4112, %v4711
      %v4846 = vadd.f32 %v4113, %v4716
      %v4847 = vadd.f32 %v4114, %v4721
      %v4848 = vadd.f32 %v4115, %v4726
      %v4849 = vadd.f32 %v4116, %v4731
      %v4850 = vadd.f32 %v4117, %v4736
      %v4851 = vadd.f32 %v4118, %v4741
      %v4852 = vadd.f32 %v4119, %v4746
      %v4853 = vadd.f32 %v4120, %v4751
      %v4854 = vadd.f32 %v4121, %v4756
      %v4855 = vadd.f32 %v4122, %v4761
      %v4856 = vadd.f32 %v4123, %v4766
      %v4857 = vadd.f32 %v4124, %v4771
      %v4858 = vadd.f32 %v4125, %v4776
      %v4859 = vadd.f32 %v4126, %v4781
      %v4860 = vadd.f32 %v4127, %v4786
      %v4861 = vadd.f32 %v4128, %v4791
      %v4862 = vadd.f32 %v4129, %v4796
      %v4863 = vadd.f32 %v4130, %v4801
      %v4864 = vadd.f32 %v4131, %v4806
      %v4865 = vadd.f32 %v4132, %v4811
      %v4866 = vadd.f32 %v4133, %v4816
      %v4867 = vadd.f32 %v4134, %v4821
      %v4868 = vadd.f32 %v4135, %v4826
      %v4869 = vadd.f32 %v4136, %v4831
      %v4870 = vadd.f32 %v4137, %v4836
      %v4871 = vsel %vm1381, %v4839, 0.0
      %4872 = vadd.xlane.f32.xlu0 %v4871
      %v4873 = vpop.xlane.xlu0 %4872
      %v4874 = vsel %vm1381, %v4840, 0.0
      %4875 = vadd.xlane.f32.xlu0 %v4874
      %v4876 = vpop.xlane.xlu0 %4875
      %v4877 = vsel %vm1381, %v4841, 0.0
      %4878 = vadd.xlane.f32.xlu0 %v4877
      %v4879 = vpop.xlane.xlu0 %4878
      %v4880 = vsel %vm1381, %v4842, 0.0
      %4881 = vadd.xlane.f32.xlu0 %v4880
      %v4882 = vpop.xlane.xlu0 %4881
      %v4883 = vsel %vm1381, %v4843, 0.0
      %4884 = vadd.xlane.f32.xlu0 %v4883
      %v4885 = vpop.xlane.xlu0 %4884
      %v4886 = vsel %vm1381, %v4844, 0.0
      %4887 = vadd.xlane.f32.xlu0 %v4886
      %v4888 = vpop.xlane.xlu0 %4887
      %v4889 = vsel %vm1381, %v4845, 0.0
      %4890 = vadd.xlane.f32.xlu0 %v4889
      %v4891 = vpop.xlane.xlu0 %4890
      %v4892 = vsel %vm1381, %v4846, 0.0
      %4893 = vadd.xlane.f32.xlu0 %v4892
      %v4894 = vpop.xlane.xlu0 %4893
      %v4895 = vsel %vm1381, %v4847, 0.0
      %4896 = vadd.xlane.f32.xlu0 %v4895
      %v4897 = vpop.xlane.xlu0 %4896
      %v4898 = vsel %vm1381, %v4848, 0.0
      %4899 = vadd.xlane.f32.xlu0 %v4898
      %v4900 = vpop.xlane.xlu0 %4899
      %v4901 = vsel %vm1381, %v4849, 0.0
      %4902 = vadd.xlane.f32.xlu0 %v4901
      %v4903 = vpop.xlane.xlu0 %4902
      %v4904 = vsel %vm1381, %v4850, 0.0
      %4905 = vadd.xlane.f32.xlu0 %v4904
      %v4906 = vpop.xlane.xlu0 %4905
      %v4907 = vsel %vm1381, %v4851, 0.0
      %4908 = vadd.xlane.f32.xlu0 %v4907
      %v4909 = vpop.xlane.xlu0 %4908
      %v4910 = vsel %vm1381, %v4852, 0.0
      %4911 = vadd.xlane.f32.xlu0 %v4910
      %v4912 = vpop.xlane.xlu0 %4911
      %v4913 = vsel %vm1381, %v4853, 0.0
      %4914 = vadd.xlane.f32.xlu0 %v4913
      %v4915 = vpop.xlane.xlu0 %4914
      %v4916 = vsel %vm1381, %v4854, 0.0
      %4917 = vadd.xlane.f32.xlu0 %v4916
      %v4918 = vpop.xlane.xlu0 %4917
      %v4919 = vsel %vm1381, %v4855, 0.0
      %4920 = vadd.xlane.f32.xlu0 %v4919
      %v4921 = vpop.xlane.xlu0 %4920
      %v4922 = vsel %vm1381, %v4856, 0.0
      %4923 = vadd.xlane.f32.xlu0 %v4922
      %v4924 = vpop.xlane.xlu0 %4923
      %v4925 = vsel %vm1381, %v4857, 0.0
      %4926 = vadd.xlane.f32.xlu0 %v4925
      %v4927 = vpop.xlane.xlu0 %4926
      %v4928 = vsel %vm1381, %v4858, 0.0
      %4929 = vadd.xlane.f32.xlu0 %v4928
      %v4930 = vpop.xlane.xlu0 %4929
      %v4931 = vsel %vm1381, %v4859, 0.0
      %4932 = vadd.xlane.f32.xlu0 %v4931
      %v4933 = vpop.xlane.xlu0 %4932
      %v4934 = vsel %vm1381, %v4860, 0.0
      %4935 = vadd.xlane.f32.xlu0 %v4934
      %v4936 = vpop.xlane.xlu0 %4935
      %v4937 = vsel %vm1381, %v4861, 0.0
      %4938 = vadd.xlane.f32.xlu0 %v4937
      %v4939 = vpop.xlane.xlu0 %4938
      %v4940 = vsel %vm1381, %v4862, 0.0
      %4941 = vadd.xlane.f32.xlu0 %v4940
      %v4942 = vpop.xlane.xlu0 %4941
      %v4943 = vsel %vm1381, %v4863, 0.0
      %4944 = vadd.xlane.f32.xlu0 %v4943
      %v4945 = vpop.xlane.xlu0 %4944
      %v4946 = vsel %vm1381, %v4864, 0.0
      %4947 = vadd.xlane.f32.xlu0 %v4946
      %v4948 = vpop.xlane.xlu0 %4947
      %v4949 = vsel %vm1381, %v4865, 0.0
      %4950 = vadd.xlane.f32.xlu0 %v4949
      %v4951 = vpop.xlane.xlu0 %4950
      %v4952 = vsel %vm1381, %v4866, 0.0
      %4953 = vadd.xlane.f32.xlu0 %v4952
      %v4954 = vpop.xlane.xlu0 %4953
      %v4955 = vsel %vm1381, %v4867, 0.0
      %4956 = vadd.xlane.f32.xlu0 %v4955
      %v4957 = vpop.xlane.xlu0 %4956
      %v4958 = vsel %vm1381, %v4868, 0.0
      %4959 = vadd.xlane.f32.xlu0 %v4958
      %v4960 = vpop.xlane.xlu0 %4959
      %v4961 = vsel %vm1381, %v4869, 0.0
      %4962 = vadd.xlane.f32.xlu0 %v4961
      %v4963 = vpop.xlane.xlu0 %4962
      %v4964 = vsel %vm1381, %v4870, 0.0
      %4965 = vadd.xlane.f32.xlu0 %v4964
      %v4966 = vpop.xlane.xlu0 %4965
      %v4967 = vmul.f32 %v4873, %v3745
      %v4968 = vmul.f32 %v4876, %v3745
      %v4969 = vmul.f32 %v4879, %v3745
      %v4970 = vmul.f32 %v4882, %v3745
      %v4971 = vmul.f32 %v4885, %v3745
      %v4972 = vmul.f32 %v4888, %v3745
      %v4973 = vmul.f32 %v4891, %v3745
      %v4974 = vmul.f32 %v4894, %v3745
      %v4975 = vmul.f32 %v4897, %v3745
      %v4976 = vmul.f32 %v4900, %v3745
      %v4977 = vmul.f32 %v4903, %v3745
      %v4978 = vmul.f32 %v4906, %v3745
      %v4979 = vmul.f32 %v4909, %v3745
      %v4980 = vmul.f32 %v4912, %v3745
      %v4981 = vmul.f32 %v4915, %v3745
      %v4982 = vmul.f32 %v4918, %v3745
      %v4983 = vmul.f32 %v4921, %v3745
      %v4984 = vmul.f32 %v4924, %v3745
      %v4985 = vmul.f32 %v4927, %v3745
      %v4986 = vmul.f32 %v4930, %v3745
      %v4987 = vmul.f32 %v4933, %v3745
      %v4988 = vmul.f32 %v4936, %v3745
      %v4989 = vmul.f32 %v4939, %v3745
      %v4990 = vmul.f32 %v4942, %v3745
      %v4991 = vmul.f32 %v4945, %v3745
      %v4992 = vmul.f32 %v4948, %v3745
      %v4993 = vmul.f32 %v4951, %v3745
      %v4994 = vmul.f32 %v4954, %v3745
      %v4995 = vmul.f32 %v4957, %v3745
      %v4996 = vmul.f32 %v4960, %v3745
      %v4997 = vmul.f32 %v4963, %v3745
      %v4998 = vmul.f32 %v4966, %v3745
      %v4999 = vsub.f32 %v4839, %v4967
      %v5000 = vsub.f32 %v4840, %v4968
      %v5001 = vsub.f32 %v4841, %v4969
      %v5002 = vsub.f32 %v4842, %v4970
      %v5003 = vsub.f32 %v4843, %v4971
      %v5004 = vsub.f32 %v4844, %v4972
      %v5005 = vsub.f32 %v4845, %v4973
      %v5006 = vsub.f32 %v4846, %v4974
      %v5007 = vsub.f32 %v4847, %v4975
      %v5008 = vsub.f32 %v4848, %v4976
      %v5009 = vsub.f32 %v4849, %v4977
      %v5010 = vsub.f32 %v4850, %v4978
      %v5011 = vsub.f32 %v4851, %v4979
      %v5012 = vsub.f32 %v4852, %v4980
      %v5013 = vsub.f32 %v4853, %v4981
      %v5014 = vsub.f32 %v4854, %v4982
      %v5015 = vsub.f32 %v4855, %v4983
      %v5016 = vsub.f32 %v4856, %v4984
      %v5017 = vsub.f32 %v4857, %v4985
      %v5018 = vsub.f32 %v4858, %v4986
      %v5019 = vsub.f32 %v4859, %v4987
      %v5020 = vsub.f32 %v4860, %v4988
      %v5021 = vsub.f32 %v4861, %v4989
      %v5022 = vsub.f32 %v4862, %v4990
      %v5023 = vsub.f32 %v4863, %v4991
      %v5024 = vsub.f32 %v4864, %v4992
      %v5025 = vsub.f32 %v4865, %v4993
      %v5026 = vsub.f32 %v4866, %v4994
      %v5027 = vsub.f32 %v4867, %v4995
      %v5028 = vsub.f32 %v4868, %v4996
      %v5029 = vsub.f32 %v4869, %v4997
      %v5030 = vsub.f32 %v4870, %v4998
      %v5031 = vmul.f32 %v4999, %v4999
      %v5032 = vmul.f32 %v5000, %v5000
      %v5033 = vmul.f32 %v5001, %v5001
      %v5034 = vmul.f32 %v5002, %v5002
      %v5035 = vmul.f32 %v5003, %v5003
      %v5036 = vmul.f32 %v5004, %v5004
      %v5037 = vmul.f32 %v5005, %v5005
      %v5038 = vmul.f32 %v5006, %v5006
      %v5039 = vmul.f32 %v5007, %v5007
      %v5040 = vmul.f32 %v5008, %v5008
      %v5041 = vmul.f32 %v5009, %v5009
      %v5042 = vmul.f32 %v5010, %v5010
      %v5043 = vmul.f32 %v5011, %v5011
      %v5044 = vmul.f32 %v5012, %v5012
      %v5045 = vmul.f32 %v5013, %v5013
      %v5046 = vmul.f32 %v5014, %v5014
      %v5047 = vmul.f32 %v5015, %v5015
      %v5048 = vmul.f32 %v5016, %v5016
      %v5049 = vmul.f32 %v5017, %v5017
      %v5050 = vmul.f32 %v5018, %v5018
      %v5051 = vmul.f32 %v5019, %v5019
      %v5052 = vmul.f32 %v5020, %v5020
      %v5053 = vmul.f32 %v5021, %v5021
      %v5054 = vmul.f32 %v5022, %v5022
      %v5055 = vmul.f32 %v5023, %v5023
      %v5056 = vmul.f32 %v5024, %v5024
      %v5057 = vmul.f32 %v5025, %v5025
      %v5058 = vmul.f32 %v5026, %v5026
      %v5059 = vmul.f32 %v5027, %v5027
      %v5060 = vmul.f32 %v5028, %v5028
      %v5061 = vmul.f32 %v5029, %v5029
      %v5062 = vmul.f32 %v5030, %v5030
      %v5063 = vsel %vm1381, %v5031, 0.0
      %5064 = vadd.xlane.f32.xlu0 %v5063
      %v5065 = vpop.xlane.xlu0 %5064
      %v5066 = vsel %vm1381, %v5032, 0.0
      %5067 = vadd.xlane.f32.xlu0 %v5066
      %v5068 = vpop.xlane.xlu0 %5067
      %v5069 = vsel %vm1381, %v5033, 0.0
      %5070 = vadd.xlane.f32.xlu0 %v5069
      %v5071 = vpop.xlane.xlu0 %5070
      %v5072 = vsel %vm1381, %v5034, 0.0
      %5073 = vadd.xlane.f32.xlu0 %v5072
      %v5074 = vpop.xlane.xlu0 %5073
      %v5075 = vsel %vm1381, %v5035, 0.0
      %5076 = vadd.xlane.f32.xlu0 %v5075
      %v5077 = vpop.xlane.xlu0 %5076
      %v5078 = vsel %vm1381, %v5036, 0.0
      %5079 = vadd.xlane.f32.xlu0 %v5078
      %v5080 = vpop.xlane.xlu0 %5079
      %v5081 = vsel %vm1381, %v5037, 0.0
      %5082 = vadd.xlane.f32.xlu0 %v5081
      %v5083 = vpop.xlane.xlu0 %5082
      %v5084 = vsel %vm1381, %v5038, 0.0
      %5085 = vadd.xlane.f32.xlu0 %v5084
      %v5086 = vpop.xlane.xlu0 %5085
      %v5087 = vsel %vm1381, %v5039, 0.0
      %5088 = vadd.xlane.f32.xlu0 %v5087
      %v5089 = vpop.xlane.xlu0 %5088
      %v5090 = vsel %vm1381, %v5040, 0.0
      %5091 = vadd.xlane.f32.xlu0 %v5090
      %v5092 = vpop.xlane.xlu0 %5091
      %v5093 = vsel %vm1381, %v5041, 0.0
      %5094 = vadd.xlane.f32.xlu0 %v5093
      %v5095 = vpop.xlane.xlu0 %5094
      %v5096 = vsel %vm1381, %v5042, 0.0
      %5097 = vadd.xlane.f32.xlu0 %v5096
      %v5098 = vpop.xlane.xlu0 %5097
      %v5099 = vsel %vm1381, %v5043, 0.0
      %5100 = vadd.xlane.f32.xlu0 %v5099
      %v5101 = vpop.xlane.xlu0 %5100
      %v5102 = vsel %vm1381, %v5044, 0.0
      %5103 = vadd.xlane.f32.xlu0 %v5102
      %v5104 = vpop.xlane.xlu0 %5103
      %v5105 = vsel %vm1381, %v5045, 0.0
      %5106 = vadd.xlane.f32.xlu0 %v5105
      %v5107 = vpop.xlane.xlu0 %5106
      %v5108 = vsel %vm1381, %v5046, 0.0
      %5109 = vadd.xlane.f32.xlu0 %v5108
      %v5110 = vpop.xlane.xlu0 %5109
      %v5111 = vsel %vm1381, %v5047, 0.0
      %5112 = vadd.xlane.f32.xlu0 %v5111
      %v5113 = vpop.xlane.xlu0 %5112
      %v5114 = vsel %vm1381, %v5048, 0.0
      %5115 = vadd.xlane.f32.xlu0 %v5114
      %v5116 = vpop.xlane.xlu0 %5115
      %v5117 = vsel %vm1381, %v5049, 0.0
      %5118 = vadd.xlane.f32.xlu0 %v5117
      %v5119 = vpop.xlane.xlu0 %5118
      %v5120 = vsel %vm1381, %v5050, 0.0
      %5121 = vadd.xlane.f32.xlu0 %v5120
      %v5122 = vpop.xlane.xlu0 %5121
      %v5123 = vsel %vm1381, %v5051, 0.0
      %5124 = vadd.xlane.f32.xlu0 %v5123
      %v5125 = vpop.xlane.xlu0 %5124
      %v5126 = vsel %vm1381, %v5052, 0.0
      %5127 = vadd.xlane.f32.xlu0 %v5126
      %v5128 = vpop.xlane.xlu0 %5127
      %v5129 = vsel %vm1381, %v5053, 0.0
      %5130 = vadd.xlane.f32.xlu0 %v5129
      %v5131 = vpop.xlane.xlu0 %5130
      %v5132 = vsel %vm1381, %v5054, 0.0
      %5133 = vadd.xlane.f32.xlu0 %v5132
      %v5134 = vpop.xlane.xlu0 %5133
      %v5135 = vsel %vm1381, %v5055, 0.0
      %5136 = vadd.xlane.f32.xlu0 %v5135
      %v5137 = vpop.xlane.xlu0 %5136
      %v5138 = vsel %vm1381, %v5056, 0.0
      %5139 = vadd.xlane.f32.xlu0 %v5138
      %v5140 = vpop.xlane.xlu0 %5139
      %v5141 = vsel %vm1381, %v5057, 0.0
      %5142 = vadd.xlane.f32.xlu0 %v5141
      %v5143 = vpop.xlane.xlu0 %5142
      %v5144 = vsel %vm1381, %v5058, 0.0
      %5145 = vadd.xlane.f32.xlu0 %v5144
      %v5146 = vpop.xlane.xlu0 %5145
      %v5147 = vsel %vm1381, %v5059, 0.0
      %5148 = vadd.xlane.f32.xlu0 %v5147
      %v5149 = vpop.xlane.xlu0 %5148
      %v5150 = vsel %vm1381, %v5060, 0.0
      %5151 = vadd.xlane.f32.xlu0 %v5150
      %v5152 = vpop.xlane.xlu0 %5151
      %v5153 = vsel %vm1381, %v5061, 0.0
      %5154 = vadd.xlane.f32.xlu0 %v5153
      %v5155 = vpop.xlane.xlu0 %5154
      %v5156 = vsel %vm1381, %v5062, 0.0
      %5157 = vadd.xlane.f32.xlu0 %v5156
      %v5158 = vpop.xlane.xlu0 %5157
      %v5159 = vmul.f32 %v5065, %v3745
      %v5160 = vmul.f32 %v5068, %v3745
      %v5161 = vmul.f32 %v5071, %v3745
      %v5162 = vmul.f32 %v5074, %v3745
      %v5163 = vmul.f32 %v5077, %v3745
      %v5164 = vmul.f32 %v5080, %v3745
      %v5165 = vmul.f32 %v5083, %v3745
      %v5166 = vmul.f32 %v5086, %v3745
      %v5167 = vmul.f32 %v5089, %v3745
      %v5168 = vmul.f32 %v5092, %v3745
      %v5169 = vmul.f32 %v5095, %v3745
      %v5170 = vmul.f32 %v5098, %v3745
      %v5171 = vmul.f32 %v5101, %v3745
      %v5172 = vmul.f32 %v5104, %v3745
      %v5173 = vmul.f32 %v5107, %v3745
      %v5174 = vmul.f32 %v5110, %v3745
      %v5175 = vmul.f32 %v5113, %v3745
      %v5176 = vmul.f32 %v5116, %v3745
      %v5177 = vmul.f32 %v5119, %v3745
      %v5178 = vmul.f32 %v5122, %v3745
      %v5179 = vmul.f32 %v5125, %v3745
      %v5180 = vmul.f32 %v5128, %v3745
      %v5181 = vmul.f32 %v5131, %v3745
      %v5182 = vmul.f32 %v5134, %v3745
      %v5183 = vmul.f32 %v5137, %v3745
      %v5184 = vmul.f32 %v5140, %v3745
      %v5185 = vmul.f32 %v5143, %v3745
      %v5186 = vmul.f32 %v5146, %v3745
      %v5187 = vmul.f32 %v5149, %v3745
      %v5188 = vmul.f32 %v5152, %v3745
      %v5189 = vmul.f32 %v5155, %v3745
      %v5190 = vmul.f32 %v5158, %v3745
      %v5191 = vadd.f32 %v5159, 1e-05
      %v5192 = vadd.f32 %v5160, 1e-05
      %v5193 = vadd.f32 %v5161, 1e-05
      %v5194 = vadd.f32 %v5162, 1e-05
      %v5195 = vadd.f32 %v5163, 1e-05
      %v5196 = vadd.f32 %v5164, 1e-05
      %v5197 = vadd.f32 %v5165, 1e-05
      %v5198 = vadd.f32 %v5166, 1e-05
      %v5199 = vadd.f32 %v5167, 1e-05
      %v5200 = vadd.f32 %v5168, 1e-05
      %v5201 = vadd.f32 %v5169, 1e-05
      %v5202 = vadd.f32 %v5170, 1e-05
      %v5203 = vadd.f32 %v5171, 1e-05
      %v5204 = vadd.f32 %v5172, 1e-05
      %v5205 = vadd.f32 %v5173, 1e-05
      %v5206 = vadd.f32 %v5174, 1e-05
      %v5207 = vadd.f32 %v5175, 1e-05
      %v5208 = vadd.f32 %v5176, 1e-05
      %v5209 = vadd.f32 %v5177, 1e-05
      %v5210 = vadd.f32 %v5178, 1e-05
      %v5211 = vadd.f32 %v5179, 1e-05
      %v5212 = vadd.f32 %v5180, 1e-05
      %v5213 = vadd.f32 %v5181, 1e-05
      %v5214 = vadd.f32 %v5182, 1e-05
      %v5215 = vadd.f32 %v5183, 1e-05
      %v5216 = vadd.f32 %v5184, 1e-05
      %v5217 = vadd.f32 %v5185, 1e-05
      %v5218 = vadd.f32 %v5186, 1e-05
      %v5219 = vadd.f32 %v5187, 1e-05
      %v5220 = vadd.f32 %v5188, 1e-05
      %v5221 = vadd.f32 %v5189, 1e-05
      %v5222 = vadd.f32 %v5190, 1e-05
      %v5223 = vrsqrt.pop %v5191
      %v5224 = vrsqrt.pop %v5192
      %v5225 = vrsqrt.pop %v5193
      %v5226 = vrsqrt.pop %v5194
      %v5227 = vrsqrt.pop %v5195
      %v5228 = vrsqrt.pop %v5196
      %v5229 = vrsqrt.pop %v5197
      %v5230 = vrsqrt.pop %v5198
      %v5231 = vrsqrt.pop %v5199
      %v5232 = vrsqrt.pop %v5200
      %v5233 = vrsqrt.pop %v5201
      %v5234 = vrsqrt.pop %v5202
      %v5235 = vrsqrt.pop %v5203
      %v5236 = vrsqrt.pop %v5204
      %v5237 = vrsqrt.pop %v5205
      %v5238 = vrsqrt.pop %v5206
      %v5239 = vrsqrt.pop %v5207
      %v5240 = vrsqrt.pop %v5208
      %v5241 = vrsqrt.pop %v5209
      %v5242 = vrsqrt.pop %v5210
      %v5243 = vrsqrt.pop %v5211
      %v5244 = vrsqrt.pop %v5212
      %v5245 = vrsqrt.pop %v5213
      %v5246 = vrsqrt.pop %v5214
      %v5247 = vrsqrt.pop %v5215
      %v5248 = vrsqrt.pop %v5216
      %v5249 = vrsqrt.pop %v5217
      %v5250 = vrsqrt.pop %v5218
      %v5251 = vrsqrt.pop %v5219
      %v5252 = vrsqrt.pop %v5220
      %v5253 = vrsqrt.pop %v5221
      %v5254 = vrsqrt.pop %v5222
      %v5255 = vmul.f32 %v4999, %v5223
      %v5256 = vmul.f32 %v5000, %v5224
      %v5257 = vmul.f32 %v5001, %v5225
      %v5258 = vmul.f32 %v5002, %v5226
      %v5259 = vmul.f32 %v5003, %v5227
      %v5260 = vmul.f32 %v5004, %v5228
      %v5261 = vmul.f32 %v5005, %v5229
      %v5262 = vmul.f32 %v5006, %v5230
      %v5263 = vmul.f32 %v5007, %v5231
      %v5264 = vmul.f32 %v5008, %v5232
      %v5265 = vmul.f32 %v5009, %v5233
      %v5266 = vmul.f32 %v5010, %v5234
      %v5267 = vmul.f32 %v5011, %v5235
      %v5268 = vmul.f32 %v5012, %v5236
      %v5269 = vmul.f32 %v5013, %v5237
      %v5270 = vmul.f32 %v5014, %v5238
      %v5271 = vmul.f32 %v5015, %v5239
      %v5272 = vmul.f32 %v5016, %v5240
      %v5273 = vmul.f32 %v5017, %v5241
      %v5274 = vmul.f32 %v5018, %v5242
      %v5275 = vmul.f32 %v5019, %v5243
      %v5276 = vmul.f32 %v5020, %v5244
      %v5277 = vmul.f32 %v5021, %v5245
      %v5278 = vmul.f32 %v5022, %v5246
      %v5279 = vmul.f32 %v5023, %v5247
      %v5280 = vmul.f32 %v5024, %v5248
      %v5281 = vmul.f32 %v5025, %v5249
      %v5282 = vmul.f32 %v5026, %v5250
      %v5283 = vmul.f32 %v5027, %v5251
      %v5284 = vmul.f32 %v5028, %v5252
      %v5285 = vmul.f32 %v5029, %v5253
      %v5286 = vmul.f32 %v5030, %v5254
      %v5287 = vlaneseq
      %v5288 = vshrl.u32 %v5287, 7
      %v5289 = vsub.s32 1, %v5288
      %v5290 = vrot.slane %v640, %v5289
      %v5291 = vmul.f32 %v5255, %v5290
      %v5292 = vmul.f32 %v5256, %v5290
      %v5293 = vmul.f32 %v5257, %v5290
      %v5294 = vmul.f32 %v5258, %v5290
      %v5295 = vmul.f32 %v5259, %v5290
      %v5296 = vmul.f32 %v5260, %v5290
      %v5297 = vmul.f32 %v5261, %v5290
      %v5298 = vmul.f32 %v5262, %v5290
      %v5299 = vmul.f32 %v5263, %v5290
      %v5300 = vmul.f32 %v5264, %v5290
      %v5301 = vmul.f32 %v5265, %v5290
      %v5302 = vmul.f32 %v5266, %v5290
      %v5303 = vmul.f32 %v5267, %v5290
      %v5304 = vmul.f32 %v5268, %v5290
      %v5305 = vmul.f32 %v5269, %v5290
      %v5306 = vmul.f32 %v5270, %v5290
      %v5307 = vmul.f32 %v5271, %v5290
      %v5308 = vmul.f32 %v5272, %v5290
      %v5309 = vmul.f32 %v5273, %v5290
      %v5310 = vmul.f32 %v5274, %v5290
      %v5311 = vmul.f32 %v5275, %v5290
      %v5312 = vmul.f32 %v5276, %v5290
      %v5313 = vmul.f32 %v5277, %v5290
      %v5314 = vmul.f32 %v5278, %v5290
      %v5315 = vmul.f32 %v5279, %v5290
      %v5316 = vmul.f32 %v5280, %v5290
      %v5317 = vmul.f32 %v5281, %v5290
      %v5318 = vmul.f32 %v5282, %v5290
      %v5319 = vmul.f32 %v5283, %v5290
      %v5320 = vmul.f32 %v5284, %v5290
      %v5321 = vmul.f32 %v5285, %v5290
      %v5322 = vmul.f32 %v5286, %v5290
      %v5323 = vlaneseq
      %v5324 = vshrl.u32 %v5323, 7
      %v5325 = vsub.s32 1, %v5324
      %v5326 = vrot.slane %v641, %v5325
      %v5327 = vadd.f32 %v5291, %v5326
      %v5328 = vadd.f32 %v5292, %v5326
      %v5329 = vadd.f32 %v5293, %v5326
      %v5330 = vadd.f32 %v5294, %v5326
      %v5331 = vadd.f32 %v5295, %v5326
      %v5332 = vadd.f32 %v5296, %v5326
      %v5333 = vadd.f32 %v5297, %v5326
      %v5334 = vadd.f32 %v5298, %v5326
      %v5335 = vadd.f32 %v5299, %v5326
      %v5336 = vadd.f32 %v5300, %v5326
      %v5337 = vadd.f32 %v5301, %v5326
      %v5338 = vadd.f32 %v5302, %v5326
      %v5339 = vadd.f32 %v5303, %v5326
      %v5340 = vadd.f32 %v5304, %v5326
      %v5341 = vadd.f32 %v5305, %v5326
      %v5342 = vadd.f32 %v5306, %v5326
      %v5343 = vadd.f32 %v5307, %v5326
      %v5344 = vadd.f32 %v5308, %v5326
      %v5345 = vadd.f32 %v5309, %v5326
      %v5346 = vadd.f32 %v5310, %v5326
      %v5347 = vadd.f32 %v5311, %v5326
      %v5348 = vadd.f32 %v5312, %v5326
      %v5349 = vadd.f32 %v5313, %v5326
      %v5350 = vadd.f32 %v5314, %v5326
      %v5351 = vadd.f32 %v5315, %v5326
      %v5352 = vadd.f32 %v5316, %v5326
      %v5353 = vadd.f32 %v5317, %v5326
      %v5354 = vadd.f32 %v5318, %v5326
      %v5355 = vadd.f32 %v5319, %v5326
      %v5356 = vadd.f32 %v5320, %v5326
      %v5357 = vadd.f32 %v5321, %v5326
      %v5358 = vadd.f32 %v5322, %v5326
      %5359 = vst.msk [vmem:[%s575] sm:$0xff] %vm1381, %v5327
      %5360 = vst.msk [vmem:[%s575 + $0x8] sm:$0xff] %vm1381, %v5328
      %5361 = vst.msk [vmem:[%s575 + $0x10] sm:$0xff] %vm1381, %v5329
      %5362 = vst.msk [vmem:[%s575 + $0x18] sm:$0xff] %vm1381, %v5330
      %5363 = vst.msk [vmem:[%s575 + $0x20] sm:$0xff] %vm1381, %v5331
      %5364 = vst.msk [vmem:[%s575 + $0x28] sm:$0xff] %vm1381, %v5332
      %5365 = vst.msk [vmem:[%s575 + $0x30] sm:$0xff] %vm1381, %v5333
      %5366 = vst.msk [vmem:[%s575 + $0x38] sm:$0xff] %vm1381, %v5334
      %5367 = vst.msk [vmem:[%s575 + $0x40] sm:$0xff] %vm1381, %v5335
      %5368 = vst.msk [vmem:[%s575 + $0x48] sm:$0xff] %vm1381, %v5336
      %5369 = vst.msk [vmem:[%s575 + $0x50] sm:$0xff] %vm1381, %v5337
      %5370 = vst.msk [vmem:[%s575 + $0x58] sm:$0xff] %vm1381, %v5338
      %5371 = vst.msk [vmem:[%s575 + $0x60] sm:$0xff] %vm1381, %v5339
      %5372 = vst.msk [vmem:[%s575 + $0x68] sm:$0xff] %vm1381, %v5340
      %5373 = vst.msk [vmem:[%s575 + $0x70] sm:$0xff] %vm1381, %v5341
      %5374 = vst.msk [vmem:[%s575 + $0x78] sm:$0xff] %vm1381, %v5342
      %5375 = vst.msk [vmem:[%s575 + $0x80] sm:$0xff] %vm1381, %v5343
      %5376 = vst.msk [vmem:[%s575 + $0x88] sm:$0xff] %vm1381, %v5344
      %5377 = vst.msk [vmem:[%s575 + $0x90] sm:$0xff] %vm1381, %v5345
      %5378 = vst.msk [vmem:[%s575 + $0x98] sm:$0xff] %vm1381, %v5346
      %5379 = vst.msk [vmem:[%s575 + $0xa0] sm:$0xff] %vm1381, %v5347
      %5380 = vst.msk [vmem:[%s575 + $0xa8] sm:$0xff] %vm1381, %v5348
      %5381 = vst.msk [vmem:[%s575 + $0xb0] sm:$0xff] %vm1381, %v5349
      %5382 = vst.msk [vmem:[%s575 + $0xb8] sm:$0xff] %vm1381, %v5350
      %5383 = vst.msk [vmem:[%s575 + $0xc0] sm:$0xff] %vm1381, %v5351
      %5384 = vst.msk [vmem:[%s575 + $0xc8] sm:$0xff] %vm1381, %v5352
      %5385 = vst.msk [vmem:[%s575 + $0xd0] sm:$0xff] %vm1381, %v5353
      %5386 = vst.msk [vmem:[%s575 + $0xd8] sm:$0xff] %vm1381, %v5354
      %5387 = vst.msk [vmem:[%s575 + $0xe0] sm:$0xff] %vm1381, %v5355
      %5388 = vst.msk [vmem:[%s575 + $0xe8] sm:$0xff] %vm1381, %v5356
      %5389 = vst.msk [vmem:[%s575 + $0xf0] sm:$0xff] %vm1381, %v5357
      %5390 = vst.msk [vmem:[%s575 + $0xf8] sm:$0xff] %vm1381, %v5358
      %p5391 = scmp.lt.s32.totalorder %s29, 1
      %s5392 = scalar_select %p5391, %s29, 1
      %s5393 = smul.addr %s5392, 32
      %s5394 = smul.addr %s5393, 8
      %s5395 = scalar_lea.vmem %s18, %s5394
      // Predicated region
      $region93: #{delicacynet_forward.2} parent=91 // pred_check
        %p5396 = pneg %p430
      $region94: #{delicacynet_forward.2} parent=91 // pred_check_branch
        %5398 = sbr.rel (%p5396) target = $region96
      $region95: #{delicacynet_forward.2} parent=91 // pred_region
        _
      $region96: #{delicacynet_forward.2} parent=91 // pred_fallthru
        _
    $region92: #{delicacynet_forward.2} parent=5 // pred_fallthru
      _
    %p5399 = scmp.le.s32.totalorder 2, %s24
    // Predicated region
    $region97: #{delicacynet_forward.2} parent=5 // pred_check
      %p5400 = pneg %p5399
    $region98: #{delicacynet_forward.2} parent=5 // pred_check_branch
      %5402 = sbr.rel (%p5400) target = $region100
    $region99: #{delicacynet_forward.2} parent=5 // pred_region
      %s5403 = ssub.s32 %s24, 2
      // Predicated region
      $region101: #{delicacynet_forward.2} parent=99 // pred_check
        %p5404 = pneg %p436
      $region102: #{delicacynet_forward.2} parent=99 // pred_check_branch
        %5406 = sbr.rel (%p5404) target = $region104
      $region103: #{delicacynet_forward.2} parent=99 // pred_region
        %p5407 = scmp.lt.s32.totalorder %s30, 1
        %s5408 = scalar_select %p5407, %s30, 1
        %s5409 = smul.addr %s5408, 32
        %s5410 = smul.addr %s5409, 8
        %s5411 = scalar_lea.vmem %s18, %s5410
      $region104: #{delicacynet_forward.2} parent=99 // pred_fallthru
        _
    $region100: #{delicacynet_forward.2} parent=5 // pred_fallthru
      _
  $region6: #{delicacynet_forward.2} parent=0 // loop_footer
    %s28 = sadd.s32 1, %s24
  $region7: #{delicacynet_forward.2} parent=0 // loop_footer_branch
    %23 = sbr.rel target = $region3
  $region8: #{delicacynet_forward.2} parent=0 // loop_exit
    _

</llo_original>
